<compile_context>
chip_gen: v7x
topology: tpu7x:2x2x1
jax: 0.10.0
libtpu: 0.0.40
codegen_flags: <defaults>
</compile_context>

<pallas_src>
import functools

import jax
import jax.numpy as jnp
from jax.experimental import pallas as pl
from jax.experimental.pallas import tpu as pltpu


# --------------------------------------------------------------------------
# Kernel 1: fused conv3x3+ReLU -> conv3x3+ReLU, whole image per grid step.
# --------------------------------------------------------------------------
def _fused_conv_kernel(xc_ref, w1_ref, b1_ref, w2_ref, b2_ref, o_ref, h1w_ref,
                       *, W, n1, n1w, n2):
    # xc_ref : (1, n1, 27) bf16   pre-im2col'd conv1 LHS, (kh, kw, cin) lanes
    # w1_ref : (27, C1)    bf16   b1_ref: (1, C1) f32
    # w2_ref : (3, 96, C2) bf16   (kh, (kw, c1), c2)   b2_ref: (1, C2) f32
    # o_ref  : (1, n2, C2) f32    uncompacted conv2+ReLU output (row stride W)
    # h1w_ref: (n1w, 96)   bf16   scratch: conv1 act with kw taps folded in K
    C2 = w2_ref.shape[-1]

    # conv1 + bias + ReLU: one K=27 bf16 matmul over the whole image.
    acc1 = jnp.dot(xc_ref[0, :, :], w1_ref[...],
                   preferred_element_type=jnp.float32)            # (n1, C1)
    h1 = jnp.maximum(acc1 + b1_ref[...], 0.0).astype(jnp.bfloat16)

    # Fold the kw taps into lanes: h1w[r] = concat(h1[r], h1[r+1], h1[r+2]).
    h1w_ref[...] = jnp.concatenate(
        [h1[0:n1w], h1[1:1 + n1w], h1[2:2 + n1w]], axis=-1)       # (n1w, 96)

    # conv2 + bias + ReLU: 3 bf16 matmuls of K=96 (kh taps; 8-aligned offsets).
    acc2 = jnp.zeros((n2, C2), jnp.float32)
    for kh in range(3):
        acc2 = acc2 + jnp.dot(h1w_ref[kh * W:kh * W + n2, :], w2_ref[kh],
                              preferred_element_type=jnp.float32)

    # One whole-block store; garbage columns are sliced off in the wrapper.
    o_ref[0, :, :] = jnp.maximum(acc2 + b2_ref[...], 0.0)


def fused_conv_relu_x2(x_nhwc, w1, b1, w2, b2):
    """conv3x3(valid)+ReLU -> conv3x3(valid)+ReLU in one pallas_call, grid=(N,).

    Returns the per-image features already flattened in (H, W, C) order.
    """
    N, H, W, Cin = x_nhwc.shape
    C1, C2 = w1.shape[-1], w2.shape[-1]
    Ho2, Wo2 = H - 4, W - 4
    n2 = Ho2 * W                    # conv2 rows computed (valid + wrap garbage)
    n1w = n2 + 2 * W                # conv1 rows needed in the kw-folded layout
    n1 = n1w + 2                    # conv1 rows computed
    K1 = 9 * Cin                    # 27

    # Row-flattened image + 4 zero rows (covers conv1 overreach, see proof).
    x_flat = jnp.pad(x_nhwc.reshape(N, H * W, Cin), ((0, 0), (0, 4), (0, 0)))
    # Lane-dense im2col for conv1: row r = concat_{kh,kw} x_flat[r + kh*W + kw].
    taps = [x_flat[:, kh * W + kw: kh * W + kw + n1, :]
            for kh in range(3) for kw in range(3)]
    xc = jnp.concatenate(taps, axis=-1).astype(jnp.bfloat16)       # (N, n1, 27)

    w1f = w1.reshape(K1, C1).astype(jnp.bfloat16)                  # (27, C1)
    w2f = w2.reshape(3, 3 * C1, C2).astype(jnp.bfloat16)           # (3, 96, C2)

    kernel = functools.partial(_fused_conv_kernel, W=W, n1=n1, n1w=n1w, n2=n2)
    y = pl.pallas_call(
        kernel,
        out_shape=jax.ShapeDtypeStruct((N, n2, C2), jnp.float32),
        grid=(N,),
        in_specs=[
            pl.BlockSpec((1, n1, K1), lambda n: (n, 0, 0)),
            pl.BlockSpec((K1, C1), lambda n: (0, 0)),
            pl.BlockSpec((1, C1), lambda n: (0, 0)),
            pl.BlockSpec((3, 3 * C1, C2), lambda n: (0, 0, 0)),
            pl.BlockSpec((1, C2), lambda n: (0, 0)),
        ],
        out_specs=pl.BlockSpec((1, n2, C2), lambda n: (n, 0, 0)),
        scratch_shapes=[pltpu.VMEM((n1w, 3 * C1), jnp.bfloat16)],
        compiler_params=pltpu.CompilerParams(dimension_semantics=("parallel",)),
    )(xc, w1f, b1, w2f, b2)

    # Drop the wrap-garbage columns (w >= Wo2) with a cheap wrapper slice.
    y = y.reshape(N, Ho2, W, C2)[:, :, :Wo2, :]                    # (N,Ho2,Wo2,C2)
    return y.reshape(N, Ho2 * Wo2 * C2)


# --------------------------------------------------------------------------
# Kernel 2: fc1  (x @ W + b -> ReLU).  Full-K block (no accumulation), 2
# "parallel" Nf tiles of 256 so v7x shards the weight stream across its TCs.
# --------------------------------------------------------------------------
def _linear_relu_kernel(x_ref, w_ref, b_ref, o_ref):
    y = jnp.dot(x_ref[...].astype(w_ref.dtype), w_ref[...],
                preferred_element_type=jnp.float32)
    o_ref[...] = jnp.maximum(y + b_ref[...], 0.0)


def linear_relu(x, w, b, *, tn=256):
    M, K = x.shape
    Nf = w.shape[1]
    tn = min(tn, Nf)
    assert Nf % tn == 0
    return pl.pallas_call(
        _linear_relu_kernel,
        out_shape=jax.ShapeDtypeStruct((M, Nf), jnp.float32),
        grid=(Nf // tn,),
        in_specs=[
            pl.BlockSpec((M, K), lambda j: (0, 0)),     # full-K activation
            pl.BlockSpec((K, tn), lambda j: (0, j)),    # 9216x256 bf16 ~ 4.7 MB
            pl.BlockSpec((1, tn), lambda j: (0, j)),
        ],
        out_specs=pl.BlockSpec((M, tn), lambda j: (0, j)),
        compiler_params=pltpu.CompilerParams(
            dimension_semantics=("parallel",),
            vmem_limit_bytes=32 * 1024 * 1024),
    )(x, w, b)


# --------------------------------------------------------------------------
# Kernel 3: fc2 + softmax, single step, everything resident in VMEM.
# (wf2 is only 20 KB; on single-TC chips this could instead be fused into the
#  fc1 epilogue, but we keep fc1's parallel Nf axis for v7x.)
# --------------------------------------------------------------------------
def _linear_softmax_kernel(x_ref, w_ref, b_ref, o_ref):
    y = jnp.dot(x_ref[...], w_ref[...], preferred_element_type=jnp.float32)
    y = y + b_ref[...]
    m = jnp.max(y, axis=-1, keepdims=True)
    e = jnp.exp(y - m)
    o_ref[...] = e / jnp.sum(e, axis=-1, keepdims=True)


def linear_softmax(x, w, b):
    M, K = x.shape
    Nf = w.shape[1]
    return pl.pallas_call(
        _linear_softmax_kernel,
        out_shape=jax.ShapeDtypeStruct((M, Nf), jnp.float32),
        grid=(1,),
        in_specs=[
            pl.BlockSpec((M, K), lambda i: (0, 0)),
            pl.BlockSpec((K, Nf), lambda i: (0, 0)),
            pl.BlockSpec((1, Nf), lambda i: (0, 0)),
        ],
        out_specs=pl.BlockSpec((M, Nf), lambda i: (0, 0)),
    )(x, w, b)


# --------------------------------------------------------------------------
# Full forward pass.
# --------------------------------------------------------------------------
def convnet_forward(x_nchw, params):
    x = jnp.transpose(x_nchw, (0, 2, 3, 1))                       # NCHW -> NHWC
    feat = fused_conv_relu_x2(x, params["w1"], params["b1"],
                              params["w2"], params["b2"])          # (N, 9216)
    # feat is (H, W, C)-flattened; wf1 rows are stored in the same order.
    h = linear_relu(feat, params["wf1"], params["bf1"])            # (N, 512)
    return linear_softmax(h, params["wf2"], params["bf2"])         # (N, 10)


def convnet_reference(x_nchw, params):
    """Pure-JAX reference with identical semantics (for a correctness check)."""
    f32 = lambda a: a.astype(jnp.float32)
    dn = ("NHWC", "HWIO", "NHWC")
    x = jnp.transpose(x_nchw, (0, 2, 3, 1))
    y = jax.lax.conv_general_dilated(x, f32(params["w1"]), (1, 1), "VALID",
                                     dimension_numbers=dn)
    y = jnp.maximum(y + params["b1"].reshape(1, 1, 1, -1), 0.0)
    y = jax.lax.conv_general_dilated(y, f32(params["w2"]), (1, 1), "VALID",
                                     dimension_numbers=dn)
    y = jnp.maximum(y + params["b2"].reshape(1, 1, 1, -1), 0.0)
    feat = y.reshape(y.shape[0], -1)                               # (H, W, C) order
    h = jnp.maximum(feat @ f32(params["wf1"]) + params["bf1"], 0.0)
    logits = h @ params["wf2"] + params["bf2"]
    return jax.nn.softmax(logits, axis=1)


def init_params(key, spatial):
    ho = spatial - 4                      # spatial size after the two valid convs
    fc_in = 64 * ho * ho
    ks = jax.random.split(key, 8)
    return {
        # conv weights stored HWIO (== PyTorch OIHW transposed), bf16 for the MXU
        "w1": (0.05 * jax.random.normal(ks[0], (3, 3, 3, 32), jnp.float32)
               ).astype(jnp.bfloat16),
        "b1": 0.05 * jax.random.normal(ks[1], (1, 32), jnp.float32),
        "w2": (0.05 * jax.random.normal(ks[2], (3, 3, 32, 64), jnp.float32)
               ).astype(jnp.bfloat16),
        "b2": 0.05 * jax.random.normal(ks[3], (1, 64), jnp.float32),
        # fc1 weight stored (in, out) with rows in (H, W, C) flatten order
        # (== PyTorch weight.T with rows permuted CHW->HWC); bf16 storage halves
        # the dominant HBM stream, accumulation stays f32.
        "wf1": (0.01 * jax.random.normal(ks[4], (fc_in, 512), jnp.float32)
                ).astype(jnp.bfloat16),
        "bf1": 0.01 * jax.random.normal(ks[5], (1, 512), jnp.float32),
        "wf2": 0.05 * jax.random.normal(ks[6], (512, 10), jnp.float32),
        "bf2": 0.05 * jax.random.normal(ks[7], (1, 10), jnp.float32),
    }


if __name__ == "__main__":
    key = jax.random.PRNGKey(0)
    k_x, k_p = jax.random.split(key)

    N, C, S = 2, 3, 16                    # small shapes consistent with the module
    x = jax.random.normal(k_x, (N, C, S, S), jnp.float32)          # NCHW input
    params = init_params(k_p, S)

    fwd = jax.jit(convnet_forward)
    out = jax.block_until_ready(fwd(x, params))

    ref = jax.block_until_ready(convnet_reference(x, params))

    assert out.shape == (N, 10)
    assert bool(jnp.all(jnp.isfinite(out)))
    assert jnp.allclose(jnp.sum(out, axis=1), 1.0, atol=1e-4)
    # tolerance accounts for bf16 conv/fc1 operands (f32 accumulation throughout)
    assert jnp.allclose(out, ref, atol=2e-2)
    print("KERNEL_OK")
</pallas_src>

<mosaic_0001>
module attributes {stable_mosaic.version = 11 : i64} {
  func.func @_fused_conv_kernel(%arg0: i32, %arg1: memref<1x226x27xbf16, #tpu.memory_space<vmem>>, %arg2: memref<27x32xbf16, #tpu.memory_space<vmem>>, %arg3: memref<1x32xf32, #tpu.memory_space<vmem>>, %arg4: memref<3x96x64xbf16, #tpu.memory_space<vmem>>, %arg5: memref<1x64xf32, #tpu.memory_space<vmem>>, %arg6: memref<1x192x64xf32, #tpu.memory_space<vmem>>, %arg7: memref<224x96xbf16, #tpu.memory_space<vmem>>) attributes {dimension_semantics = [#tpu.dimension_semantics<parallel>], iteration_bounds = array<i64: 2>, scalar_prefetch = 0 : i64, scratch_operands = 1 : i64, tpu.core_type = #tpu.core_type<tc>, window_params = [{transform_indices = @transform_0, window_bounds = array<i64: 1, 226, 27>}, {pipeline_mode = #tpu.pipeline_mode<synchronous>, transform_indices = @transform_1, window_bounds = array<i64: 27, 32>}, {pipeline_mode = #tpu.pipeline_mode<synchronous>, transform_indices = @transform_2, window_bounds = array<i64: 1, 32>}, {pipeline_mode = #tpu.pipeline_mode<synchronous>, transform_indices = @transform_3, window_bounds = array<i64: 3, 96, 64>}, {pipeline_mode = #tpu.pipeline_mode<synchronous>, transform_indices = @transform_4, window_bounds = array<i64: 1, 64>}, {transform_indices = @transform_5, window_bounds = array<i64: 1, 192, 64>}]} {
    %c0 = arith.constant 0 : index
    %c0_0 = arith.constant 0 : index
    %c0_1 = arith.constant 0 : index
    %0 = vector.load %arg1[%c0, %c0_0, %c0_1] : memref<1x226x27xbf16, #tpu.memory_space<vmem>>, vector<1x226x27xbf16>
    %1 = vector.shape_cast %0 : vector<1x226x27xbf16> to vector<226x27xbf16>
    %c0_2 = arith.constant 0 : index
    %c0_3 = arith.constant 0 : index
    %2 = vector.load %arg2[%c0_2, %c0_3] : memref<27x32xbf16, #tpu.memory_space<vmem>>, vector<27x32xbf16>
    %cst = arith.constant dense<0.000000e+00> : vector<226x32xf32>
    %3 = tpu.matmul %1, %2, %cst {dimension_numbers = #tpu.dot_dimension_numbers<[1], [0], [0], [1], [0, 0, 1, 1], [], []>} : vector<226x27xbf16>, vector<27x32xbf16>, vector<226x32xf32> -> vector<226x32xf32>
    %c0_4 = arith.constant 0 : index
    %c0_5 = arith.constant 0 : index
    %4 = vector.load %arg3[%c0_4, %c0_5] : memref<1x32xf32, #tpu.memory_space<vmem>>, vector<1x32xf32>
    %5 = vector.broadcast %4 : vector<1x32xf32> to vector<226x32xf32>
    %6 = arith.addf %3, %5 : vector<226x32xf32>
    %cst_6 = arith.constant 0.000000e+00 : f32
    %7 = vector.broadcast %cst_6 : f32 to vector<226x32xf32>
    %8 = arith.maximumf %6, %7 : vector<226x32xf32>
    %9 = arith.truncf %8 : vector<226x32xf32> to vector<226x32xbf16>
    %10 = vector.extract_strided_slice %9 {offsets = [0, 0], sizes = [224, 32], strides = [1, 1]} : vector<226x32xbf16> to vector<224x32xbf16>
    %11 = vector.extract_strided_slice %9 {offsets = [1, 0], sizes = [224, 32], strides = [1, 1]} : vector<226x32xbf16> to vector<224x32xbf16>
    %12 = vector.extract_strided_slice %9 {offsets = [2, 0], sizes = [224, 32], strides = [1, 1]} : vector<226x32xbf16> to vector<224x32xbf16>
    %13 = tpu.concatenate %10, %11, %12 in 1 : vector<224x32xbf16>, vector<224x32xbf16>, vector<224x32xbf16> -> vector<224x96xbf16>
    %c0_7 = arith.constant 0 : index
    %c0_8 = arith.constant 0 : index
    %14 = vector.load %arg7[%c0_7, %c0_8] : memref<224x96xbf16, #tpu.memory_space<vmem>>, vector<224x96xbf16>
    tpu.vector_store %arg7[%c0_7, %c0_8], %13 {strides = array<i32>} : memref<224x96xbf16, #tpu.memory_space<vmem>>, vector<224x96xbf16>,
    %cst_9 = arith.constant 0.000000e+00 : f32
    %15 = vector.broadcast %cst_9 : f32 to vector<192x64xf32>
    %c0_10 = arith.constant 0 : index
    %c0_11 = arith.constant 0 : index
    %16 = vector.load %arg7[%c0_10, %c0_11] : memref<224x96xbf16, #tpu.memory_space<vmem>>, vector<192x96xbf16>
    %c0_12 = arith.constant 0 : index
    %c0_13 = arith.constant 0 : index
    %c0_14 = arith.constant 0 : index
    %17 = vector.load %arg4[%c0_12, %c0_13, %c0_14] : memref<3x96x64xbf16, #tpu.memory_space<vmem>>, vector<1x96x64xbf16>
    %18 = vector.shape_cast %17 : vector<1x96x64xbf16> to vector<96x64xbf16>
    %cst_15 = arith.constant dense<0.000000e+00> : vector<192x64xf32>
    %19 = tpu.matmul %16, %18, %cst_15 {dimension_numbers = #tpu.dot_dimension_numbers<[1], [0], [0], [1], [0, 0, 1, 1], [], []>} : vector<192x96xbf16>, vector<96x64xbf16>, vector<192x64xf32> -> vector<192x64xf32>
    %20 = arith.addf %15, %19 : vector<192x64xf32>
    %c16 = arith.constant 16 : index
    %c0_16 = arith.constant 0 : index
    %21 = vector.load %arg7[%c16, %c0_16] : memref<224x96xbf16, #tpu.memory_space<vmem>>, vector<192x96xbf16>
    %c1 = arith.constant 1 : index
    %c0_17 = arith.constant 0 : index
    %c0_18 = arith.constant 0 : index
    %22 = vector.load %arg4[%c1, %c0_17, %c0_18] : memref<3x96x64xbf16, #tpu.memory_space<vmem>>, vector<1x96x64xbf16>
    %23 = vector.shape_cast %22 : vector<1x96x64xbf16> to vector<96x64xbf16>
    %cst_19 = arith.constant dense<0.000000e+00> : vector<192x64xf32>
    %24 = tpu.matmul %21, %23, %cst_19 {dimension_numbers = #tpu.dot_dimension_numbers<[1], [0], [0], [1], [0, 0, 1, 1], [], []>} : vector<192x96xbf16>, vector<96x64xbf16>, vector<192x64xf32> -> vector<192x64xf32>
    %25 = arith.addf %20, %24 : vector<192x64xf32>
    %c32 = arith.constant 32 : index
    %c0_20 = arith.constant 0 : index
    %26 = vector.load %arg7[%c32, %c0_20] : memref<224x96xbf16, #tpu.memory_space<vmem>>, vector<192x96xbf16>
    %c2 = arith.constant 2 : index
    %c0_21 = arith.constant 0 : index
    %c0_22 = arith.constant 0 : index
    %27 = vector.load %arg4[%c2, %c0_21, %c0_22] : memref<3x96x64xbf16, #tpu.memory_space<vmem>>, vector<1x96x64xbf16>
    %28 = vector.shape_cast %27 : vector<1x96x64xbf16> to vector<96x64xbf16>
    %cst_23 = arith.constant dense<0.000000e+00> : vector<192x64xf32>
    %29 = tpu.matmul %26, %28, %cst_23 {dimension_numbers = #tpu.dot_dimension_numbers<[1], [0], [0], [1], [0, 0, 1, 1], [], []>} : vector<192x96xbf16>, vector<96x64xbf16>, vector<192x64xf32> -> vector<192x64xf32>
    %30 = arith.addf %25, %29 : vector<192x64xf32>
    %c0_24 = arith.constant 0 : index
    %c0_25 = arith.constant 0 : index
    %31 = vector.load %arg5[%c0_24, %c0_25] : memref<1x64xf32, #tpu.memory_space<vmem>>, vector<1x64xf32>
    %32 = vector.broadcast %31 : vector<1x64xf32> to vector<192x64xf32>
    %33 = arith.addf %30, %32 : vector<192x64xf32>
    %cst_26 = arith.constant 0.000000e+00 : f32
    %34 = vector.broadcast %cst_26 : f32 to vector<192x64xf32>
    %35 = arith.maximumf %33, %34 : vector<192x64xf32>
    %c0_27 = arith.constant 0 : index
    %c0_28 = arith.constant 0 : index
    %c0_29 = arith.constant 0 : index
    %36 = vector.load %arg6[%c0_27, %c0_28, %c0_29] : memref<1x192x64xf32, #tpu.memory_space<vmem>>, vector<1x192x64xf32>
    %37 = vector.shape_cast %36 : vector<1x192x64xf32> to vector<192x64xf32>
    %38 = vector.shape_cast %35 : vector<192x64xf32> to vector<1x192x64xf32>
    tpu.vector_store %arg6[%c0_27, %c0_28, %c0_29], %38 {strides = array<i32>} : memref<1x192x64xf32, #tpu.memory_space<vmem>>, vector<1x192x64xf32>,
    return
  }
  func.func @transform_0(%arg0: i32) -> (i32, i32, i32) {
    %c0_i32 = arith.constant 0 : i32
    %c0_i32_0 = arith.constant 0 : i32
    %c0_i32_1 = arith.constant 0 : i32
    return %arg0, %c0_i32, %c0_i32_0 : i32, i32, i32
  }
  func.func @transform_1(%arg0: i32) -> (i32, i32) {
    %c0_i32 = arith.constant 0 : i32
    %c0_i32_0 = arith.constant 0 : i32
    %c0_i32_1 = arith.constant 0 : i32
    return %c0_i32, %c0_i32_0 : i32, i32
  }
  func.func @transform_2(%arg0: i32) -> (i32, i32) {
    %c0_i32 = arith.constant 0 : i32
    %c0_i32_0 = arith.constant 0 : i32
    %c0_i32_1 = arith.constant 0 : i32
    return %c0_i32, %c0_i32_0 : i32, i32
  }
  func.func @transform_3(%arg0: i32) -> (i32, i32, i32) {
    %c0_i32 = arith.constant 0 : i32
    %c0_i32_0 = arith.constant 0 : i32
    %c0_i32_1 = arith.constant 0 : i32
    %c0_i32_2 = arith.constant 0 : i32
    return %c0_i32, %c0_i32_0, %c0_i32_1 : i32, i32, i32
  }
  func.func @transform_4(%arg0: i32) -> (i32, i32) {
    %c0_i32 = arith.constant 0 : i32
    %c0_i32_0 = arith.constant 0 : i32
    %c0_i32_1 = arith.constant 0 : i32
    return %c0_i32, %c0_i32_0 : i32, i32
  }
  func.func @transform_5(%arg0: i32) -> (i32, i32, i32) {
    %c0_i32 = arith.constant 0 : i32
    %c0_i32_0 = arith.constant 0 : i32
    %c0_i32_1 = arith.constant 0 : i32
    return %arg0, %c0_i32, %c0_i32_0 : i32, i32, i32
  }
}

module attributes {stable_mosaic.version = 11 : i64} {
  func.func @_linear_relu_kernel(%arg0: i32, %arg1: memref<2x9216xf32, #tpu.memory_space<vmem>>, %arg2: memref<9216x256xbf16, #tpu.memory_space<vmem>>, %arg3: memref<1x256xf32, #tpu.memory_space<vmem>>, %arg4: memref<2x256xf32, #tpu.memory_space<vmem>>) attributes {dimension_semantics = [#tpu.dimension_semantics<parallel>], iteration_bounds = array<i64: 2>, scalar_prefetch = 0 : i64, scratch_operands = 0 : i64, tpu.core_type = #tpu.core_type<tc>, window_params = [{pipeline_mode = #tpu.pipeline_mode<synchronous>, transform_indices = @transform_0, window_bounds = array<i64: 2, 9216>}, {transform_indices = @transform_1, window_bounds = array<i64: 9216, 256>}, {transform_indices = @transform_2, window_bounds = array<i64: 1, 256>}, {transform_indices = @transform_3, window_bounds = array<i64: 2, 256>}]} {
    %c0 = arith.constant 0 : index
    %c0_0 = arith.constant 0 : index
    %0 = vector.load %arg1[%c0, %c0_0] : memref<2x9216xf32, #tpu.memory_space<vmem>>, vector<2x9216xf32>
    %1 = arith.truncf %0 : vector<2x9216xf32> to vector<2x9216xbf16>
    %c0_1 = arith.constant 0 : index
    %c0_2 = arith.constant 0 : index
    %2 = vector.load %arg2[%c0_1, %c0_2] : memref<9216x256xbf16, #tpu.memory_space<vmem>>, vector<9216x256xbf16>
    %cst = arith.constant dense<0.000000e+00> : vector<2x256xf32>
    %3 = tpu.matmul %1, %2, %cst {dimension_numbers = #tpu.dot_dimension_numbers<[1], [0], [0], [1], [0, 0, 1, 1], [], []>} : vector<2x9216xbf16>, vector<9216x256xbf16>, vector<2x256xf32> -> vector<2x256xf32>
    %c0_3 = arith.constant 0 : index
    %c0_4 = arith.constant 0 : index
    %4 = vector.load %arg3[%c0_3, %c0_4] : memref<1x256xf32, #tpu.memory_space<vmem>>, vector<1x256xf32>
    %5 = vector.broadcast %4 : vector<1x256xf32> to vector<2x256xf32>
    %6 = arith.addf %3, %5 : vector<2x256xf32>
    %cst_5 = arith.constant 0.000000e+00 : f32
    %7 = vector.broadcast %cst_5 : f32 to vector<2x256xf32>
    %8 = arith.maximumf %6, %7 : vector<2x256xf32>
    %c0_6 = arith.constant 0 : index
    %c0_7 = arith.constant 0 : index
    %9 = vector.load %arg4[%c0_6, %c0_7] : memref<2x256xf32, #tpu.memory_space<vmem>>, vector<2x256xf32>
    tpu.vector_store %arg4[%c0_6, %c0_7], %8 {strides = array<i32>} : memref<2x256xf32, #tpu.memory_space<vmem>>, vector<2x256xf32>,
    return
  }
  func.func @transform_0(%arg0: i32) -> (i32, i32) {
    %c0_i32 = arith.constant 0 : i32
    %c0_i32_0 = arith.constant 0 : i32
    %c0_i32_1 = arith.constant 0 : i32
    return %c0_i32, %c0_i32_0 : i32, i32
  }
  func.func @transform_1(%arg0: i32) -> (i32, i32) {
    %c0_i32 = arith.constant 0 : i32
    %c0_i32_0 = arith.constant 0 : i32
    return %c0_i32, %arg0 : i32, i32
  }
  func.func @transform_2(%arg0: i32) -> (i32, i32) {
    %c0_i32 = arith.constant 0 : i32
    %c0_i32_0 = arith.constant 0 : i32
    return %c0_i32, %arg0 : i32, i32
  }
  func.func @transform_3(%arg0: i32) -> (i32, i32) {
    %c0_i32 = arith.constant 0 : i32
    %c0_i32_0 = arith.constant 0 : i32
    return %c0_i32, %arg0 : i32, i32
  }
}

module attributes {stable_mosaic.version = 11 : i64} {
  func.func @_linear_softmax_kernel(%arg0: i32, %arg1: memref<2x512xf32, #tpu.memory_space<vmem>>, %arg2: memref<512x10xf32, #tpu.memory_space<vmem>>, %arg3: memref<1x10xf32, #tpu.memory_space<vmem>>, %arg4: memref<2x10xf32, #tpu.memory_space<vmem>>) attributes {dimension_semantics = [#tpu.dimension_semantics<arbitrary>], iteration_bounds = array<i64: 1>, scalar_prefetch = 0 : i64, scratch_operands = 0 : i64, tpu.core_type = #tpu.core_type<tc>, window_params = [{pipeline_mode = #tpu.pipeline_mode<synchronous>, transform_indices = @transform_0, window_bounds = array<i64: 2, 512>}, {pipeline_mode = #tpu.pipeline_mode<synchronous>, transform_indices = @transform_1, window_bounds = array<i64: 512, 10>}, {pipeline_mode = #tpu.pipeline_mode<synchronous>, transform_indices = @transform_2, window_bounds = array<i64: 1, 10>}, {pipeline_mode = #tpu.pipeline_mode<synchronous>, transform_indices = @transform_3, window_bounds = array<i64: 2, 10>}]} {
    %c0 = arith.constant 0 : index
    %c0_0 = arith.constant 0 : index
    %0 = vector.load %arg1[%c0, %c0_0] : memref<2x512xf32, #tpu.memory_space<vmem>>, vector<2x512xf32>
    %c0_1 = arith.constant 0 : index
    %c0_2 = arith.constant 0 : index
    %1 = vector.load %arg2[%c0_1, %c0_2] : memref<512x10xf32, #tpu.memory_space<vmem>>, vector<512x10xf32>
    %cst = arith.constant dense<0.000000e+00> : vector<2x10xf32>
    %2 = tpu.matmul %0, %1, %cst {dimension_numbers = #tpu.dot_dimension_numbers<[1], [0], [0], [1], [0, 0, 1, 1], [], []>} : vector<2x512xf32>, vector<512x10xf32>, vector<2x10xf32> -> vector<2x10xf32>
    %c0_3 = arith.constant 0 : index
    %c0_4 = arith.constant 0 : index
    %3 = vector.load %arg3[%c0_3, %c0_4] : memref<1x10xf32, #tpu.memory_space<vmem>>, vector<1x10xf32>
    %4 = vector.broadcast %3 : vector<1x10xf32> to vector<2x10xf32>
    %5 = arith.addf %2, %4 : vector<2x10xf32>
    %cst_5 = arith.constant dense<0xFF800000> : vector<2xf32>
    %6 = vector.multi_reduction <maximumf>, %5, %cst_5 [1] : vector<2x10xf32> to vector<2xf32>
    %7 = vector.shape_cast %6 : vector<2xf32> to vector<2x1xf32>
    %8 = vector.broadcast %7 : vector<2x1xf32> to vector<2x10xf32>
    %9 = arith.subf %5, %8 : vector<2x10xf32>
    %10 = math.exp %9 : vector<2x10xf32>
    %cst_6 = arith.constant dense<0.000000e+00> : vector<2xf32>
    %11 = vector.multi_reduction <add>, %10, %cst_6 [1] : vector<2x10xf32> to vector<2xf32>
    %12 = vector.shape_cast %11 : vector<2xf32> to vector<2x1xf32>
    %13 = vector.broadcast %12 : vector<2x1xf32> to vector<2x10xf32>
    %14 = arith.divf %10, %13 : vector<2x10xf32>
    %c0_7 = arith.constant 0 : index
    %c0_8 = arith.constant 0 : index
    %15 = vector.load %arg4[%c0_7, %c0_8] : memref<2x10xf32, #tpu.memory_space<vmem>>, vector<2x10xf32>
    tpu.vector_store %arg4[%c0_7, %c0_8], %14 {strides = array<i32>} : memref<2x10xf32, #tpu.memory_space<vmem>>, vector<2x10xf32>,
    return
  }
  func.func @transform_0(%arg0: i32) -> (i32, i32) {
    %c0_i32 = arith.constant 0 : i32
    %c0_i32_0 = arith.constant 0 : i32
    %c0_i32_1 = arith.constant 0 : i32
    return %c0_i32, %c0_i32_0 : i32, i32
  }
  func.func @transform_1(%arg0: i32) -> (i32, i32) {
    %c0_i32 = arith.constant 0 : i32
    %c0_i32_0 = arith.constant 0 : i32
    %c0_i32_1 = arith.constant 0 : i32
    return %c0_i32, %c0_i32_0 : i32, i32
  }
  func.func @transform_2(%arg0: i32) -> (i32, i32) {
    %c0_i32 = arith.constant 0 : i32
    %c0_i32_0 = arith.constant 0 : i32
    %c0_i32_1 = arith.constant 0 : i32
    return %c0_i32, %c0_i32_0 : i32, i32
  }
  func.func @transform_3(%arg0: i32) -> (i32, i32) {
    %c0_i32 = arith.constant 0 : i32
    %c0_i32_0 = arith.constant 0 : i32
    %c0_i32_1 = arith.constant 0 : i32
    return %c0_i32, %c0_i32_0 : i32, i32
  }
}

</mosaic_0001>

<llo_original>
// kernel: convnet_forward.5
$region0: #{convnet_forward.5}
  #allocation0 [shape = 'u32[]', space=smem, size = 0x4, offset = 0x4, fixed_abs, tag = 'smem constant byte address 0x4 - core index']
  #allocation1 [shape = 'u32[144,128]{1,0:T(1,128)}', space=vmem, size = 0x12000, scoped, tag = 'internal scratch']
  %s0 = inlined_call_operand.vmem [shape: f32[2,512], index: 0, kind: input, shape index: {}]
  %s1 = inlined_call_operand.vmem [shape: f32[512,10], index: 1, kind: input, shape index: {}]
  %s2 = inlined_call_operand.vmem [shape: f32[1,10], index: 2, kind: input, shape index: {}]
  %s3 = inlined_call_operand.hbm [shape: f32[2,10], index: 3, kind: output, shape index: {}]
  %s4 = sld [smem:[#allocation0]]
  $region22: #{convnet_forward.5} parent=0
    _
  %s6 = ssub.s32 1, %s4
  %s7 = scalar_select 0, %s6, %s4
  $region1: #{convnet_forward.5} parent=0
    #allocation2 [shape = 'u8[1024]{0}', space=vmem, size = 0x400, scoped, tag = 'output window, operand 0, single buffered']
    #allocation3 [shape = 's32[1]{0}', space=sflag, size = 0x4, scoped, tag = 'scoped memory for convnet_forward.5']
    %8 = vsyncpa [#allocation3], 0
    // Predicated region
    $region2: #{convnet_forward.5} parent=1 // pred_check
      _
    $region3: #{convnet_forward.5} parent=1 // pred_check_branch
      %10 = sbr.rel (0) target = $region5
    $region4: #{convnet_forward.5} parent=1 // pred_region
      _
    $region5: #{convnet_forward.5} parent=1 // pred_fallthru
      _
    // Predicated region
    $region6: #{convnet_forward.5} parent=1 // pred_check
      _
    $region7: #{convnet_forward.5} parent=1 // pred_check_branch
      %12 = sbr.rel (0) target = $region9
    $region8: #{convnet_forward.5} parent=1 // pred_region
      _
    $region9: #{convnet_forward.5} parent=1 // pred_fallthru
      _
    // Predicated region
    $region10: #{convnet_forward.5} parent=1 // pred_check
      _
    $region11: #{convnet_forward.5} parent=1 // pred_check_branch
      %14 = sbr.rel (0) target = $region13
    $region12: #{convnet_forward.5} parent=1 // pred_region
      _
    $region13: #{convnet_forward.5} parent=1 // pred_fallthru
      _
    %v15 = vld [vmem:[%s0] sm:$0xff]
    %v16 = vld [vmem:[%s1] sm:$0xff]
    %v17 = vld [vmem:[%s1 + $0x8] sm:$0xff]
    %v18 = vld [vmem:[%s1 + $0x10] sm:$0xff]
    %v19 = vld [vmem:[%s1 + $0x18] sm:$0xff]
    %v20 = vld [vmem:[%s1 + $0x20] sm:$0xff]
    %v21 = vld [vmem:[%s1 + $0x28] sm:$0xff]
    %v22 = vld [vmem:[%s1 + $0x30] sm:$0xff]
    %v23 = vld [vmem:[%s1 + $0x38] sm:$0xff]
    %v24 = vld [vmem:[%s1 + $0x40] sm:$0xff]
    %v25 = vld [vmem:[%s1 + $0x48] sm:$0xff]
    %v26 = vld [vmem:[%s1 + $0x50] sm:$0xff]
    %v27 = vld [vmem:[%s1 + $0x58] sm:$0xff]
    %v28 = vld [vmem:[%s1 + $0x60] sm:$0xff]
    %v29 = vld [vmem:[%s1 + $0x68] sm:$0xff]
    %v30 = vld [vmem:[%s1 + $0x70] sm:$0xff]
    %v31 = vld [vmem:[%s1 + $0x78] sm:$0xff]
    %v32 = vld [vmem:[%s1 + $0x80] sm:$0xff]
    %v33 = vld [vmem:[%s1 + $0x88] sm:$0xff]
    %v34 = vld [vmem:[%s1 + $0x90] sm:$0xff]
    %v35 = vld [vmem:[%s1 + $0x98] sm:$0xff]
    %v36 = vld [vmem:[%s1 + $0xa0] sm:$0xff]
    %v37 = vld [vmem:[%s1 + $0xa8] sm:$0xff]
    %v38 = vld [vmem:[%s1 + $0xb0] sm:$0xff]
    %v39 = vld [vmem:[%s1 + $0xb8] sm:$0xff]
    %v40 = vld [vmem:[%s1 + $0xc0] sm:$0xff]
    %v41 = vld [vmem:[%s1 + $0xc8] sm:$0xff]
    %v42 = vld [vmem:[%s1 + $0xd0] sm:$0xff]
    %v43 = vld [vmem:[%s1 + $0xd8] sm:$0xff]
    %v44 = vld [vmem:[%s1 + $0xe0] sm:$0xff]
    %v45 = vld [vmem:[%s1 + $0xe8] sm:$0xff]
    %v46 = vld [vmem:[%s1 + $0xf0] sm:$0xff]
    %v47 = vld [vmem:[%s1 + $0xf8] sm:$0xff]
    %v48 = vld [vmem:[%s1 + $0x100] sm:$0xff]
    %v49 = vld [vmem:[%s1 + $0x108] sm:$0xff]
    %v50 = vld [vmem:[%s1 + $0x110] sm:$0xff]
    %v51 = vld [vmem:[%s1 + $0x118] sm:$0xff]
    %v52 = vld [vmem:[%s1 + $0x120] sm:$0xff]
    %v53 = vld [vmem:[%s1 + $0x128] sm:$0xff]
    %v54 = vld [vmem:[%s1 + $0x130] sm:$0xff]
    %v55 = vld [vmem:[%s1 + $0x138] sm:$0xff]
    %v56 = vld [vmem:[%s1 + $0x140] sm:$0xff]
    %v57 = vld [vmem:[%s1 + $0x148] sm:$0xff]
    %v58 = vld [vmem:[%s1 + $0x150] sm:$0xff]
    %v59 = vld [vmem:[%s1 + $0x158] sm:$0xff]
    %v60 = vld [vmem:[%s1 + $0x160] sm:$0xff]
    %v61 = vld [vmem:[%s1 + $0x168] sm:$0xff]
    %v62 = vld [vmem:[%s1 + $0x170] sm:$0xff]
    %v63 = vld [vmem:[%s1 + $0x178] sm:$0xff]
    %v64 = vld [vmem:[%s1 + $0x180] sm:$0xff]
    %v65 = vld [vmem:[%s1 + $0x188] sm:$0xff]
    %v66 = vld [vmem:[%s1 + $0x190] sm:$0xff]
    %v67 = vld [vmem:[%s1 + $0x198] sm:$0xff]
    %v68 = vld [vmem:[%s1 + $0x1a0] sm:$0xff]
    %v69 = vld [vmem:[%s1 + $0x1a8] sm:$0xff]
    %v70 = vld [vmem:[%s1 + $0x1b0] sm:$0xff]
    %v71 = vld [vmem:[%s1 + $0x1b8] sm:$0xff]
    %v72 = vld [vmem:[%s1 + $0x1c0] sm:$0xff]
    %v73 = vld [vmem:[%s1 + $0x1c8] sm:$0xff]
    %v74 = vld [vmem:[%s1 + $0x1d0] sm:$0xff]
    %v75 = vld [vmem:[%s1 + $0x1d8] sm:$0xff]
    %v76 = vld [vmem:[%s1 + $0x1e0] sm:$0xff]
    %v77 = vld [vmem:[%s1 + $0x1e8] sm:$0xff]
    %v78 = vld [vmem:[%s1 + $0x1f0] sm:$0xff]
    %v79 = vld [vmem:[%s1 + $0x1f8] sm:$0xff]
    %v80 = vld [vmem:[%s2] sm:$0x1]
    %v82 = vlaneseq
    %v83 = vshrl.u32 %v82, 7
    %v84 = vsub.s32 0, %v83
    %v85 = vrot.slane %v80, %v84
    %v88 = vcombine.high %v15, %v15
    %v90 = vunpack.c.l.s4 1983009808
    %v91 = vunpack.c.0.s8 %v90
    %v92 = vlaneseq
    %v93 = vshrl.u32 %v92, 7
    %v94 = vsub.s32 %v91, %v93
    %v95 = vrot.slane %v15, %v94
    %v97 = vunpack.c.l.s4 1983009808
    %v98 = vunpack.c.0.s8 %v97
    %v99 = vlaneseq
    %v100 = vshrl.u32 %v99, 7
    %v101 = vsub.s32 %v98, %v100
    %v102 = vrot.slane %v88, %v101
    %v103 = vcombine.high %v95, %v95
    %v104 = vcombine.high %v102, %v102
    %109 = vmatprep.subr.mxu0 0.0
    %110 = vmatpush1.msra.mxu0 %v16
    %111 = vmatprep.subr.mxu0 0.0
    %112 = vmatpush1.msra.mxu0 %v17
    %113 = vmatprep.subr.mxu0 0.0
    %114 = vmatpush1.msra.mxu0 %v18
    %115 = vmatprep.subr.mxu0 0.0
    %116 = vmatpush1.msra.mxu0 %v19
    %117 = vmatprep.subr.mxu0 0.0
    %118 = vmatpush1.msra.mxu0 %v20
    %119 = vmatprep.subr.mxu0 0.0
    %120 = vmatpush1.msra.mxu0 %v21
    %121 = vmatprep.subr.mxu0 0.0
    %122 = vmatpush1.msra.mxu0 %v22
    %123 = vmatprep.subr.mxu0 0.0
    %124 = vmatpush1.msra.mxu0 %v23
    %125 = vmatprep.subr.mxu0 0.0
    %126 = vmatpush1.msra.mxu0 %v24
    %127 = vmatprep.subr.mxu0 0.0
    %128 = vmatpush1.msra.mxu0 %v25
    %129 = vmatprep.subr.mxu0 0.0
    %130 = vmatpush1.msra.mxu0 %v26
    %131 = vmatprep.subr.mxu0 0.0
    %132 = vmatpush1.msra.mxu0 %v27
    %133 = vmatprep.subr.mxu0 0.0
    %134 = vmatpush1.msra.mxu0 %v28
    %135 = vmatprep.subr.mxu0 0.0
    %136 = vmatpush1.msra.mxu0 %v29
    %137 = vmatprep.subr.mxu0 0.0
    %138 = vmatpush1.msra.mxu0 %v30
    %139 = vmatprep.subr.mxu0 0.0
    %140 = vmatpush1.msra.mxu0 %v31
    %141 = vmatprep.subr.mxu0 0.0
    %142 = vmatpush1.msra.mxu0 %v32
    %143 = vmatprep.subr.mxu0 0.0
    %144 = vmatpush1.msra.mxu0 %v33
    %145 = vmatprep.subr.mxu0 0.0
    %146 = vmatpush1.msra.mxu0 %v34
    %147 = vmatprep.subr.mxu0 0.0
    %148 = vmatpush1.msra.mxu0 %v35
    %149 = vmatprep.subr.mxu0 0.0
    %150 = vmatpush1.msra.mxu0 %v36
    %151 = vmatprep.subr.mxu0 0.0
    %152 = vmatpush1.msra.mxu0 %v37
    %153 = vmatprep.subr.mxu0 0.0
    %154 = vmatpush1.msra.mxu0 %v38
    %155 = vmatprep.subr.mxu0 0.0
    %156 = vmatpush1.msra.mxu0 %v39
    %157 = vmatprep.subr.mxu0 0.0
    %158 = vmatpush1.msra.mxu0 %v40
    %159 = vmatprep.subr.mxu0 0.0
    %160 = vmatpush1.msra.mxu0 %v41
    %161 = vmatprep.subr.mxu0 0.0
    %162 = vmatpush1.msra.mxu0 %v42
    %163 = vmatprep.subr.mxu0 0.0
    %164 = vmatpush1.msra.mxu0 %v43
    %165 = vmatprep.subr.mxu0 0.0
    %166 = vmatpush1.msra.mxu0 %v44
    %167 = vmatprep.subr.mxu0 0.0
    %168 = vmatpush1.msra.mxu0 %v45
    %169 = vmatprep.subr.mxu0 0.0
    %170 = vmatpush1.msra.mxu0 %v46
    %171 = vmatprep.subr.mxu0 0.0
    %172 = vmatpush1.msra.mxu0 %v47
    %173 = vmatprep.mubr.f32.mxu0 %v103
    %174 = vmatmul.mubr.f32.gmra.mrb[0].mxu0 %v95
    %v175 = vpop.f32.mrb[0].mxu0
    %v176 = vadd.f32 %v85, %v175
    %v177 = vpop.f32.mrb[0].mxu0
    %178 = vdwg.mxu0
    %179 = vmatprep.subr.mxu0 0.0
    %180 = vmatpush1.msra.mxu0 %v48
    %181 = vmatprep.subr.mxu0 0.0
    %182 = vmatpush1.msra.mxu0 %v49
    %183 = vmatprep.subr.mxu0 0.0
    %184 = vmatpush1.msra.mxu0 %v50
    %185 = vmatprep.subr.mxu0 0.0
    %186 = vmatpush1.msra.mxu0 %v51
    %187 = vmatprep.subr.mxu0 0.0
    %188 = vmatpush1.msra.mxu0 %v52
    %189 = vmatprep.subr.mxu0 0.0
    %190 = vmatpush1.msra.mxu0 %v53
    %191 = vmatprep.subr.mxu0 0.0
    %192 = vmatpush1.msra.mxu0 %v54
    %193 = vmatprep.subr.mxu0 0.0
    %194 = vmatpush1.msra.mxu0 %v55
    %195 = vmatprep.subr.mxu0 0.0
    %196 = vmatpush1.msra.mxu0 %v56
    %197 = vmatprep.subr.mxu0 0.0
    %198 = vmatpush1.msra.mxu0 %v57
    %199 = vmatprep.subr.mxu0 0.0
    %200 = vmatpush1.msra.mxu0 %v58
    %201 = vmatprep.subr.mxu0 0.0
    %202 = vmatpush1.msra.mxu0 %v59
    %203 = vmatprep.subr.mxu0 0.0
    %204 = vmatpush1.msra.mxu0 %v60
    %205 = vmatprep.subr.mxu0 0.0
    %206 = vmatpush1.msra.mxu0 %v61
    %207 = vmatprep.subr.mxu0 0.0
    %208 = vmatpush1.msra.mxu0 %v62
    %209 = vmatprep.subr.mxu0 0.0
    %210 = vmatpush1.msra.mxu0 %v63
    %211 = vmatprep.subr.mxu0 0.0
    %212 = vmatpush1.msra.mxu0 %v64
    %213 = vmatprep.subr.mxu0 0.0
    %214 = vmatpush1.msra.mxu0 %v65
    %215 = vmatprep.subr.mxu0 0.0
    %216 = vmatpush1.msra.mxu0 %v66
    %217 = vmatprep.subr.mxu0 0.0
    %218 = vmatpush1.msra.mxu0 %v67
    %219 = vmatprep.subr.mxu0 0.0
    %220 = vmatpush1.msra.mxu0 %v68
    %221 = vmatprep.subr.mxu0 0.0
    %222 = vmatpush1.msra.mxu0 %v69
    %223 = vmatprep.subr.mxu0 0.0
    %224 = vmatpush1.msra.mxu0 %v70
    %225 = vmatprep.subr.mxu0 0.0
    %226 = vmatpush1.msra.mxu0 %v71
    %227 = vmatprep.subr.mxu0 0.0
    %228 = vmatpush1.msra.mxu0 %v72
    %229 = vmatprep.subr.mxu0 0.0
    %230 = vmatpush1.msra.mxu0 %v73
    %231 = vmatprep.subr.mxu0 0.0
    %232 = vmatpush1.msra.mxu0 %v74
    %233 = vmatprep.subr.mxu0 0.0
    %234 = vmatpush1.msra.mxu0 %v75
    %235 = vmatprep.subr.mxu0 0.0
    %236 = vmatpush1.msra.mxu0 %v76
    %237 = vmatprep.subr.mxu0 0.0
    %238 = vmatpush1.msra.mxu0 %v77
    %239 = vmatprep.subr.mxu0 0.0
    %240 = vmatpush1.msra.mxu0 %v78
    %241 = vmatprep.subr.mxu0 0.0
    %242 = vmatpush1.msra.mxu0 %v79
    %243 = vmatprep.mubr.f32.mxu0 %v104
    %244 = vmatmul.mubr.f32.gmra.mrb[0].mxu0 %v102
    %v245 = vpop.f32.mrb[0].mxu0
    %v246 = vadd.f32 %v176, %v245
    %v247 = vpop.f32.mrb[0].mxu0
    %248 = vdwg.mxu0
    %vm249 = vcmask 74752
    %v250 = vsel %vm249, %v246, -inf
    %251 = vmax.xlane.f32.xlu0 %v250
    %v252 = vpop.xlane.xlu0 %251
    %v253 = vsub.f32 %v246, %v252
    %v254 = vmul.f32 %v253, 1.442695
    %v255 = vpow.pop %v254
    %v256 = vsel %vm249, %v255, 0.0
    %257 = vadd.xlane.f32.xlu0 %v256
    %v258 = vpop.xlane.xlu0 %257
    %v259 = vrcp.pop %v258
    %v260 = vmul.f32 %v255, %v259
    %261 = vst.msk [vmem:[#allocation2] sm:$0x3] %vm249, %v260
    // Predicated region
    $region14: #{convnet_forward.5} parent=1 // pred_check
      _
    $region15: #{convnet_forward.5} parent=1 // pred_check_branch
      %263 = sbr.rel (0) target = $region17
    $region16: #{convnet_forward.5} parent=1 // pred_region
      %s265 = ssub.s32 32, 32
      %266 = vsyncadd [#allocation3], %s265
      %s268 = sshll.u32 [#allocation2], 4
      %s269 = int_to_ptr.vmem [resolvable:$true] %s268
      %271 = dma.vmem_to_hbm [thread:$0]  %s269, 32, %s3, [#allocation3]
    $region17: #{convnet_forward.5} parent=1 // pred_fallthru
      _
    // Predicated region
    $region18: #{convnet_forward.5} parent=1 // pred_check
      _
    $region19: #{convnet_forward.5} parent=1 // pred_check_branch
      %273 = sbr.rel (0) target = $region21
    $region20: #{convnet_forward.5} parent=1 // pred_region
      %274 = dma.done [#allocation3], 32
    $region21: #{convnet_forward.5} parent=1 // pred_fallthru
      _
    %275 = vsyncpa [#allocation3], 1

// kernel: convnet_forward.3
$region0: #{convnet_forward.3}
  #allocation0 [shape = 'u32[]', space=smem, size = 0x4, offset = 0x4, fixed_abs, tag = 'smem constant byte address 0x4 - core index']
  #allocation1 [shape = 'u32[144,128]{1,0:T(1,128)}', space=vmem, size = 0x12000, scoped, tag = 'internal scratch']
  #allocation2 [shape = 'bf16[224,96]{1,0:T(16,128)(2,1)}', space=vmem, size = 0xe000, scoped, tag = 'scratch operand']
  %s0 = inlined_call_operand.vmem [shape: bf16[2,226,27], index: 0, kind: input, shape index: {}]
  %s1 = inlined_call_operand.vmem [shape: bf16[27,32], index: 1, kind: input, shape index: {}]
  %s2 = inlined_call_operand.hbm [shape: f32[1,32], index: 2, kind: input, shape index: {}]
  %s3 = inlined_call_operand.hbm [shape: bf16[3,96,64], index: 3, kind: input, shape index: {}]
  %s4 = inlined_call_operand.hbm [shape: f32[1,64], index: 4, kind: input, shape index: {}]
  %s5 = inlined_call_operand.vmem [shape: f32[2,192,64], index: 5, kind: output, shape index: {}]
  %s6 = sld [smem:[#allocation0]]
  $region65: #{convnet_forward.3} parent=0
    _
  %s8 = ssub.s32 1, %s6
  %s9 = scalar_select 0, %s8, %s6
  $region1: #{convnet_forward.3} parent=0
    #allocation3 [shape = 'u8[512]{0}', space=vmem, size = 0x400, scoped, tag = 'input window, operand 2, single buffered']
    #allocation4 [shape = 's32[2]{0}', space=sflag, size = 0x8, scoped, tag = 'scoped memory for convnet_forward.3']
    #allocation5 [shape = 'u8[73728]{0}', space=vmem, size = 0x12000, scoped, tag = 'input window, operand 3, single buffered']
    #allocation6 [shape = 's32[1]{0}', space=sflag, size = 0x4, scoped, tag = 'scoped memory for convnet_forward.3']
    #allocation7 [shape = 'u8[512]{0}', space=vmem, size = 0x400, scoped, tag = 'input window, operand 4, single buffered']
    %10 = vsyncpa [#allocation4], 0
    %11 = vsyncpa [#allocation6], 0
    loop: start=0, step=1, limit=4
    $region2: #{convnet_forward.3} parent=1 // loop_pre_header
      _
    $region3: #{convnet_forward.3} parent=1 // loop_header
      %s13 = sphi 0, %s17
      %p14 = scmp.ge.s32.totalorder %s13, 4
      %s23 = sphi 0, %s25
      %s26 = sphi 0, %s23
      %s27 = sphi 0, %s26
      %s43 = sphi 0, %s27
      %s47 = sphi 0, %s47
      %s49 = sphi 0, %s47
      %s50 = sphi 0, %s49
      %s64 = sphi 0, %s50
      %s68 = sphi 0, %s68
      %s70 = sphi 0, %s68
      %s71 = sphi 0, %s70
      %s85 = sphi 0, %s71
      %s89 = sphi 0, %s89
      %s91 = sphi 0, %s89
      %s92 = sphi 0, %s91
      %s106 = sphi 0, %s92
      %s110 = sphi 0, %s110
      %s112 = sphi 0, %s110
      %s113 = sphi 0, %s112
      %s127 = sphi 0, %s113
      %s133 = sphi 0, %s135
      %s136 = sphi 0, %s133
      %s137 = sphi 0, %s136
      %s153 = sphi 0, %s137
    $region4: #{convnet_forward.3} parent=1 // loop_header_branch
      %16 = sbr.rel (%p14) target = $region8
    $region5: #{convnet_forward.3} parent=1 // loop_body
      %s18 = ssub.s32 %s13, 1
      %s19 = ssub.s32 %s13, 2
      %s20 = sadd.s32 %s13, 1
      %s21 = ssub.s32 %s13, %s20
      %p22 = scmp.eq.s32.totalorder %s21, 0
      %s24 = sadd.s32 %s23, 1
      %s25 = scalar_select %p22, %s23, %s24
      %p28 = pneg %p22
      %p29 = scmp.eq.s32.totalorder %s13, 1
      %p30 = por %p28, %p29
      %p31 = scmp.ne.s32.totalorder %s23, %s26
      %p32 = scmp.eq.s32.totalorder %s13, 0
      %p33 = por %p31, %p32
      %p34 = scmp.ne.s32.totalorder %s23, %s26
      %p35 = scmp.eq.s32.totalorder %s18, 1
      %p36 = por %p34, %p35
      %p37 = scmp.ne.s32.totalorder %s26, %s27
      %p38 = scmp.eq.s32.totalorder %s18, 0
      %p39 = por %p37, %p38
      %p40 = scmp.ne.s32.totalorder %s26, %s27
      %p41 = scmp.eq.s32.totalorder %s19, 1
      %p42 = por %p40, %p41
      %p44 = scmp.ne.s32.totalorder %s27, %s43
      %p45 = scmp.eq.s32.totalorder %s19, 0
      %p46 = por %p44, %p45
      %s48 = sadd.s32 %s47, 1
      %p51 = scmp.eq.s32.totalorder %s13, 1
      %p52 = scmp.ne.s32.totalorder %s47, %s49
      %p53 = scmp.eq.s32.totalorder %s13, 0
      %p54 = por %p52, %p53
      %p55 = scmp.ne.s32.totalorder %s47, %s49
      %p56 = scmp.eq.s32.totalorder %s18, 1
      %p57 = por %p55, %p56
      %p58 = scmp.ne.s32.totalorder %s49, %s50
      %p59 = scmp.eq.s32.totalorder %s18, 0
      %p60 = por %p58, %p59
      %p61 = scmp.ne.s32.totalorder %s49, %s50
      %p62 = scmp.eq.s32.totalorder %s19, 1
      %p63 = por %p61, %p62
      %p65 = scmp.ne.s32.totalorder %s50, %s64
      %p66 = scmp.eq.s32.totalorder %s19, 0
      %p67 = por %p65, %p66
      %s69 = sadd.s32 %s68, 1
      %p72 = scmp.eq.s32.totalorder %s13, 1
      %p73 = scmp.ne.s32.totalorder %s68, %s70
      %p74 = scmp.eq.s32.totalorder %s13, 0
      %p75 = por %p73, %p74
      %p76 = scmp.ne.s32.totalorder %s68, %s70
      %p77 = scmp.eq.s32.totalorder %s18, 1
      %p78 = por %p76, %p77
      %p79 = scmp.ne.s32.totalorder %s70, %s71
      %p80 = scmp.eq.s32.totalorder %s18, 0
      %p81 = por %p79, %p80
      %p82 = scmp.ne.s32.totalorder %s70, %s71
      %p83 = scmp.eq.s32.totalorder %s19, 1
      %p84 = por %p82, %p83
      %p86 = scmp.ne.s32.totalorder %s71, %s85
      %p87 = scmp.eq.s32.totalorder %s19, 0
      %p88 = por %p86, %p87
      %s90 = sadd.s32 %s89, 1
      %p93 = scmp.eq.s32.totalorder %s13, 1
      %p94 = scmp.ne.s32.totalorder %s89, %s91
      %p95 = scmp.eq.s32.totalorder %s13, 0
      %p96 = por %p94, %p95
      %p97 = scmp.ne.s32.totalorder %s89, %s91
      %p98 = scmp.eq.s32.totalorder %s18, 1
      %p99 = por %p97, %p98
      %p100 = scmp.ne.s32.totalorder %s91, %s92
      %p101 = scmp.eq.s32.totalorder %s18, 0
      %p102 = por %p100, %p101
      %p103 = scmp.ne.s32.totalorder %s91, %s92
      %p104 = scmp.eq.s32.totalorder %s19, 1
      %p105 = por %p103, %p104
      %p107 = scmp.ne.s32.totalorder %s92, %s106
      %p108 = scmp.eq.s32.totalorder %s19, 0
      %p109 = por %p107, %p108
      %s111 = sadd.s32 %s110, 1
      %p114 = scmp.eq.s32.totalorder %s13, 1
      %p115 = scmp.ne.s32.totalorder %s110, %s112
      %p116 = scmp.eq.s32.totalorder %s13, 0
      %p117 = por %p115, %p116
      %p118 = scmp.ne.s32.totalorder %s110, %s112
      %p119 = scmp.eq.s32.totalorder %s18, 1
      %p120 = por %p118, %p119
      %p121 = scmp.ne.s32.totalorder %s112, %s113
      %p122 = scmp.eq.s32.totalorder %s18, 0
      %p123 = por %p121, %p122
      %p124 = scmp.ne.s32.totalorder %s112, %s113
      %p125 = scmp.eq.s32.totalorder %s19, 1
      %p126 = por %p124, %p125
      %p128 = scmp.ne.s32.totalorder %s113, %s127
      %p129 = scmp.eq.s32.totalorder %s19, 0
      %p130 = por %p128, %p129
      %s131 = ssub.s32 %s13, %s20
      %p132 = scmp.eq.s32.totalorder %s131, 0
      %s134 = sadd.s32 %s133, 1
      %s135 = scalar_select %p132, %s133, %s134
      %p138 = pneg %p132
      %p139 = scmp.eq.s32.totalorder %s13, 1
      %p140 = por %p138, %p139
      %p141 = scmp.ne.s32.totalorder %s133, %s136
      %p142 = scmp.eq.s32.totalorder %s13, 0
      %p143 = por %p141, %p142
      %p144 = scmp.ne.s32.totalorder %s133, %s136
      %p145 = scmp.eq.s32.totalorder %s18, 1
      %p146 = por %p144, %p145
      %p147 = scmp.ne.s32.totalorder %s136, %s137
      %p148 = scmp.eq.s32.totalorder %s18, 0
      %p149 = por %p147, %p148
      %p150 = scmp.ne.s32.totalorder %s136, %s137
      %p151 = scmp.eq.s32.totalorder %s19, 1
      %p152 = por %p150, %p151
      %p154 = scmp.ne.s32.totalorder %s137, %s153
      %p155 = scmp.eq.s32.totalorder %s19, 0
      %p156 = por %p154, %p155
      %p157 = scmp.le.s32.totalorder 1, %s13
      %p158 = scmp.lt.s32.totalorder %s13, 3
      %p159 = pnand %p157, %p158
      %p160 = pneg %p159
      // Predicated region
      $region9: #{convnet_forward.3} parent=5 // pred_check
        _
      $region10: #{convnet_forward.3} parent=5 // pred_check_branch
        %162 = sbr.rel (%p159) target = $region12
      $region11: #{convnet_forward.3} parent=5 // pred_region
        %s163 = ssub.s32 %s13, 1
        // Predicated region
        $region13: #{convnet_forward.3} parent=11 // pred_check
          %p164 = pneg %p60
        $region14: #{convnet_forward.3} parent=11 // pred_check_branch
          %166 = sbr.rel (%p164) target = $region16
        $region15: #{convnet_forward.3} parent=11 // pred_region
          _
        $region16: #{convnet_forward.3} parent=11 // pred_fallthru
          _
        // Predicated region
        $region17: #{convnet_forward.3} parent=11 // pred_check
          %p167 = pneg %p81
        $region18: #{convnet_forward.3} parent=11 // pred_check_branch
          %169 = sbr.rel (%p167) target = $region20
        $region19: #{convnet_forward.3} parent=11 // pred_region
          %s171 = ssub.s32 16, 16
          %172 = vsyncadd [#allocation4], %s171
          %s174 = sshll.u32 [#allocation3], 4
          %s175 = int_to_ptr.vmem [resolvable:$true] %s174
          %177 = dma.hbm_to_vmem [thread:$0]  %s2, 16, %s175, [#allocation4]
        $region20: #{convnet_forward.3} parent=11 // pred_fallthru
          _
        // Predicated region
        $region21: #{convnet_forward.3} parent=11 // pred_check
          %p178 = pneg %p102
        $region22: #{convnet_forward.3} parent=11 // pred_check_branch
          %180 = sbr.rel (%p178) target = $region24
        $region23: #{convnet_forward.3} parent=11 // pred_region
          %s182 = ssub.s32 2304, 2304
          %183 = vsyncadd [#allocation6], %s182
          %s184 = sshll.u32 [#allocation5], 4
          %s185 = int_to_ptr.vmem [resolvable:$true] %s184
          %190 = dma.hbm_to_vmem [thread:$0]  %s3, 2304, %s185, [#allocation6], 64, 64, 4
        $region24: #{convnet_forward.3} parent=11 // pred_fallthru
          _
        // Predicated region
        $region25: #{convnet_forward.3} parent=11 // pred_check
          %p191 = pneg %p123
        $region26: #{convnet_forward.3} parent=11 // pred_check_branch
          %193 = sbr.rel (%p191) target = $region28
        $region27: #{convnet_forward.3} parent=11 // pred_region
          %s195 = ssub.s32 16, 16
          %196 = vsyncadd [#allocation6], %s195
          %s198 = sshll.u32 [#allocation7], 4
          %s199 = int_to_ptr.vmem [resolvable:$true] %s198
          %201 = dma.hbm_to_vmem [thread:$0]  %s4, 16, %s199, [#allocation6]
        $region28: #{convnet_forward.3} parent=11 // pred_fallthru
          _
      $region12: #{convnet_forward.3} parent=5 // pred_fallthru
        _
      %p202 = scmp.lt.s32.totalorder %s13, 2
      // Predicated region
      $region29: #{convnet_forward.3} parent=5 // pred_check
        %p203 = pneg %p202
      $region30: #{convnet_forward.3} parent=5 // pred_check_branch
        %205 = sbr.rel (%p203) target = $region32
      $region31: #{convnet_forward.3} parent=5 // pred_region
        // Predicated region
        $region33: #{convnet_forward.3} parent=31 // pred_check
          %p206 = pneg %p33
        $region34: #{convnet_forward.3} parent=31 // pred_check_branch
          %208 = sbr.rel (%p206) target = $region36
        $region35: #{convnet_forward.3} parent=31 // pred_region
          %p209 = scmp.lt.s32.totalorder %s13, 1
          %s210 = scalar_select %p209, %s13, 1
          %s211 = smul.addr %s210, 29
          %s212 = smul.addr %s211, 4
          %s213 = scalar_lea.vmem %s0, %s212
        $region36: #{convnet_forward.3} parent=31 // pred_fallthru
          _
      $region32: #{convnet_forward.3} parent=5 // pred_fallthru
        _
      %p214 = scmp.le.s32.totalorder 1, %s13
      %p215 = scmp.lt.s32.totalorder %s13, 3
      %p216 = pnand %p214, %p215
      %p217 = pneg %p216
      // Predicated region
      $region37: #{convnet_forward.3} parent=5 // pred_check
        _
      $region38: #{convnet_forward.3} parent=5 // pred_check_branch
        %219 = sbr.rel (%p216) target = $region40
      $region39: #{convnet_forward.3} parent=5 // pred_region
        %s220 = ssub.s32 %s13, 1
        // Predicated region
        $region41: #{convnet_forward.3} parent=39 // pred_check
          %p221 = pneg %p81
        $region42: #{convnet_forward.3} parent=39 // pred_check_branch
          %223 = sbr.rel (%p221) target = $region44
        $region43: #{convnet_forward.3} parent=39 // pred_region
          %224 = dma.done [#allocation4], 16
        $region44: #{convnet_forward.3} parent=39 // pred_fallthru
          _
        // Predicated region
        $region45: #{convnet_forward.3} parent=39 // pred_check
          %p225 = pneg %p102
        $region46: #{convnet_forward.3} parent=39 // pred_check_branch
          %227 = sbr.rel (%p225) target = $region48
        $region47: #{convnet_forward.3} parent=39 // pred_region
          %228 = dma.done [#allocation6], 2304
        $region48: #{convnet_forward.3} parent=39 // pred_fallthru
          _
        // Predicated region
        $region49: #{convnet_forward.3} parent=39 // pred_check
          %p229 = pneg %p123
        $region50: #{convnet_forward.3} parent=39 // pred_check_branch
          %231 = sbr.rel (%p229) target = $region52
        $region51: #{convnet_forward.3} parent=39 // pred_region
          %232 = dma.done [#allocation6], 16
        $region52: #{convnet_forward.3} parent=39 // pred_fallthru
          _
        %p233 = scmp.lt.s32.totalorder %s18, 1
        %s234 = scalar_select %p233, %s18, 1
        %s235 = smul.addr %s234, 29
        %s236 = smul.addr %s235, 4
        %s237 = scalar_lea.vmem %s0, %s236
        %p238 = pneg %p39
        %p239 = pneg %p36
        %p240 = pneg %p60
        %p241 = pneg %p57
        %p242 = pneg %p81
        %p243 = pneg %p78
        %p244 = pneg %p102
        %p245 = pneg %p99
        %p246 = pneg %p123
        %p247 = pneg %p120
        %p248 = pneg %p149
        %p249 = pneg %p146
        %p250 = scmp.lt.s32.totalorder %s18, 1
        %s251 = scalar_select %p250, %s18, 1
        %s252 = smul.addr %s251, 24
        %s253 = smul.addr %s252, 8
        %s254 = scalar_lea.vmem %s5, %s253
        %p255 = scmp.lt.s32.totalorder %s18, 1
        %s256 = scalar_select %p255, %s18, 1
        %s257 = smul.addr %s256, 29
        %s258 = smul.addr %s257, 4
        %s259 = scalar_lea.vmem %s0, %s258
        %p260 = scmp.lt.s32.totalorder %s18, 1
        %s261 = scalar_select %p260, %s18, 1
        %s262 = smul.addr %s261, 24
        %s263 = smul.addr %s262, 8
        %s264 = scalar_lea.vmem %s5, %s263
        %v266 = vld [vmem:[%s259] sm:$0xf]
        %v267 = vld [vmem:[%s259 + $0x4] sm:$0xf]
        %v268 = vld [vmem:[%s259 + $0x8] sm:$0xf]
        %v269 = vld [vmem:[%s259 + $0xc] sm:$0xf]
        %v270 = vld [vmem:[%s259 + $0x10] sm:$0xf]
        %v271 = vld [vmem:[%s259 + $0x14] sm:$0xf]
        %v272 = vld [vmem:[%s259 + $0x18] sm:$0xf]
        %v273 = vld [vmem:[%s259 + $0x1c] sm:$0xf]
        %v274 = vld [vmem:[%s259 + $0x20] sm:$0xf]
        %v275 = vld [vmem:[%s259 + $0x24] sm:$0xf]
        %v276 = vld [vmem:[%s259 + $0x28] sm:$0xf]
        %v277 = vld [vmem:[%s259 + $0x2c] sm:$0xf]
        %v278 = vld [vmem:[%s259 + $0x30] sm:$0xf]
        %v279 = vld [vmem:[%s259 + $0x34] sm:$0xf]
        %v280 = vld [vmem:[%s259 + $0x38] sm:$0xf]
        %v281 = vld [vmem:[%s259 + $0x3c] sm:$0xf]
        %v282 = vld [vmem:[%s259 + $0x40] sm:$0xf]
        %v283 = vld [vmem:[%s259 + $0x44] sm:$0xf]
        %v284 = vld [vmem:[%s259 + $0x48] sm:$0xf]
        %v285 = vld [vmem:[%s259 + $0x4c] sm:$0xf]
        %v286 = vld [vmem:[%s259 + $0x50] sm:$0xf]
        %v287 = vld [vmem:[%s259 + $0x54] sm:$0xf]
        %v288 = vld [vmem:[%s259 + $0x58] sm:$0xf]
        %v289 = vld [vmem:[%s259 + $0x5c] sm:$0xf]
        %v290 = vld [vmem:[%s259 + $0x60] sm:$0xf]
        %v291 = vld [vmem:[%s259 + $0x64] sm:$0xf]
        %v292 = vld [vmem:[%s259 + $0x68] sm:$0xf]
        %v293 = vld [vmem:[%s259 + $0x6c] sm:$0xf]
        %v294 = vld [vmem:[%s259 + $0x70] sm:$0x1]
        %v295 = vld [vmem:[%s1] sm:$0xf]
        %v296 = vld [vmem:[%s1 + $0x4] sm:$0xf]
        %v297 = vld [vmem:[%s1 + $0x8] sm:$0xf]
        %v298 = vld [vmem:[%s1 + $0xc] sm:$0x3]
        %v299 = vld [vmem:[#allocation3] sm:$0x1]
        %v301 = vlaneseq
        %v302 = vshrl.u32 %v301, 7
        %v303 = vsub.s32 0, %v302
        %v304 = vrot.slane %v299, %v303
        %v335 = vunpack.c.l.b16 %v266
        %v336 = vunpack.c.l.b16 %v267
        %v337 = vunpack.c.l.b16 %v268
        %v338 = vunpack.c.l.b16 %v269
        %v339 = vunpack.c.l.b16 %v270
        %v340 = vunpack.c.l.b16 %v271
        %v341 = vunpack.c.l.b16 %v272
        %v342 = vunpack.c.l.b16 %v273
        %v343 = vunpack.c.l.b16 %v274
        %v344 = vunpack.c.l.b16 %v275
        %v345 = vunpack.c.l.b16 %v276
        %v346 = vunpack.c.l.b16 %v277
        %v347 = vunpack.c.l.b16 %v278
        %v348 = vunpack.c.l.b16 %v279
        %v349 = vunpack.c.l.b16 %v280
        %v350 = vunpack.c.l.b16 %v281
        %v351 = vunpack.c.l.b16 %v282
        %v352 = vunpack.c.l.b16 %v283
        %v353 = vunpack.c.l.b16 %v284
        %v354 = vunpack.c.l.b16 %v285
        %v355 = vunpack.c.l.b16 %v286
        %v356 = vunpack.c.l.b16 %v287
        %v357 = vunpack.c.l.b16 %v288
        %v358 = vunpack.c.l.b16 %v289
        %v359 = vunpack.c.l.b16 %v290
        %v360 = vunpack.c.l.b16 %v291
        %v361 = vunpack.c.l.b16 %v292
        %v362 = vunpack.c.l.b16 %v293
        %v363 = vunpack.c.l.b16 %v294
        %v364 = vpack.c.b16 %v336, %v335
        %v365 = vpack.c.b16 %v338, %v337
        %v366 = vpack.c.b16 %v340, %v339
        %v367 = vpack.c.b16 %v342, %v341
        %v368 = vpack.c.b16 %v344, %v343
        %v369 = vpack.c.b16 %v346, %v345
        %v370 = vpack.c.b16 %v348, %v347
        %v371 = vpack.c.b16 %v350, %v349
        %v372 = vpack.c.b16 %v352, %v351
        %v373 = vpack.c.b16 %v354, %v353
        %v374 = vpack.c.b16 %v356, %v355
        %v375 = vpack.c.b16 %v358, %v357
        %v376 = vpack.c.b16 %v360, %v359
        %v377 = vpack.c.b16 %v362, %v361
        %v378 = vpack.c.b16 %v363, %v363
        %v383 = vunpack.c.l.b16 %v295
        %v384 = vunpack.c.l.b16 %v296
        %v385 = vunpack.c.l.b16 %v297
        %v386 = vunpack.c.l.b16 %v298
        %v387 = vpack.c.b16 %v384, %v383
        %v388 = vpack.c.b16 %v386, %v385
        %vm390 = vcmask 220160
        %v392 = vsel %vm390, %v364, 0
        %v395 = vsel %vm390, %v365, 0
        %v398 = vsel %vm390, %v366, 0
        %v401 = vsel %vm390, %v367, 0
        %v404 = vsel %vm390, %v368, 0
        %v407 = vsel %vm390, %v369, 0
        %v410 = vsel %vm390, %v370, 0
        %v413 = vsel %vm390, %v371, 0
        %v416 = vsel %vm390, %v372, 0
        %v419 = vsel %vm390, %v373, 0
        %v422 = vsel %vm390, %v374, 0
        %v425 = vsel %vm390, %v375, 0
        %v428 = vsel %vm390, %v376, 0
        %v431 = vsel %vm390, %v377, 0
        %v434 = vsel %vm390, %v378, 0
        %vm436 = vcmask 1044480
        %vm437 = vcmask 1045504
        %v438 = vsel %vm436, 4294967295, 65535
        %v439 = vsel %vm437, %v438, 0
        %v441 = vand.u32 %v388, %v439
        %443 = vmatprep.subr.bf16.mxu0 0
        %444 = vmatpush1.bf16.msra.mxu0 %v387
        %445 = vmatprep.subr.bf16.mxu0 0
        %446 = vmatpush1.bf16.msra.mxu0 %v441
        %447 = vmatprep.subr.bf16.mxu0 0
        %448 = vmatpush1.bf16.msra.mxu0 0
        %449 = vmatprep.subr.bf16.mxu0 0
        %450 = vmatpush1.bf16.msra.mxu0 0
        %451 = vmatprep.subr.bf16.mxu0 0
        %452 = vmatpush1.bf16.msra.mxu0 0
        %453 = vmatprep.subr.bf16.mxu0 0
        %454 = vmatpush1.bf16.msra.mxu0 0
        %455 = vmatprep.subr.bf16.mxu0 0
        %456 = vmatpush1.bf16.msra.mxu0 0
        %457 = vmatprep.subr.bf16.mxu0 0
        %458 = vmatpush1.bf16.msra.mxu0 0
        %459 = vmatprep.subr.bf16.mxu0 0
        %460 = vmatpush1.bf16.msra.mxu0 0
        %461 = vmatprep.subr.bf16.mxu0 0
        %462 = vmatpush1.bf16.msra.mxu0 0
        %463 = vmatprep.subr.bf16.mxu0 0
        %464 = vmatpush1.bf16.msra.mxu0 0
        %465 = vmatprep.subr.bf16.mxu0 0
        %466 = vmatpush1.bf16.msra.mxu0 0
        %467 = vmatprep.subr.bf16.mxu0 0
        %468 = vmatpush1.bf16.msra.mxu0 0
        %469 = vmatprep.subr.bf16.mxu0 0
        %470 = vmatpush1.bf16.msra.mxu0 0
        %471 = vmatprep.subr.bf16.mxu0 0
        %472 = vmatpush1.bf16.msra.mxu0 0
        %473 = vmatprep.subr.bf16.mxu0 0
        %474 = vmatpush1.bf16.msra.mxu0 0
        %475 = vmatprep.mubr.bf16.mxu0 0
        %476 = vmatmul.mubr.bf16.gmra.mrb[0].mxu0 %v392
        %v477 = vpop.f32.mrb[0].mxu0
        %v478 = vadd.f32 %v304, %v477
        %v479 = vpop.f32.mrb[0].mxu0
        %v480 = vpop.f32.mrb[0].mxu0
        %v481 = vadd.f32 %v304, %v480
        %v482 = vpop.f32.mrb[0].mxu0
        %483 = vmatprep.mubr.bf16.mxu0 0
        %484 = vmatmul.mubr.bf16.gmra.mrb[0].mxu0 %v395
        %v485 = vpop.f32.mrb[0].mxu0
        %v486 = vadd.f32 %v304, %v485
        %v487 = vpop.f32.mrb[0].mxu0
        %v488 = vpop.f32.mrb[0].mxu0
        %v489 = vadd.f32 %v304, %v488
        %v490 = vpop.f32.mrb[0].mxu0
        %491 = vmatprep.mubr.bf16.mxu0 0
        %492 = vmatmul.mubr.bf16.gmra.mrb[0].mxu0 %v398
        %v493 = vpop.f32.mrb[0].mxu0
        %v494 = vadd.f32 %v304, %v493
        %v495 = vpop.f32.mrb[0].mxu0
        %v496 = vpop.f32.mrb[0].mxu0
        %v497 = vadd.f32 %v304, %v496
        %v498 = vpop.f32.mrb[0].mxu0
        %499 = vmatprep.mubr.bf16.mxu0 0
        %500 = vmatmul.mubr.bf16.gmra.mrb[0].mxu0 %v401
        %v501 = vpop.f32.mrb[0].mxu0
        %v502 = vadd.f32 %v304, %v501
        %v503 = vpop.f32.mrb[0].mxu0
        %v504 = vpop.f32.mrb[0].mxu0
        %v505 = vadd.f32 %v304, %v504
        %v506 = vpop.f32.mrb[0].mxu0
        %507 = vmatprep.mubr.bf16.mxu0 0
        %508 = vmatmul.mubr.bf16.gmra.mrb[0].mxu0 %v404
        %v509 = vpop.f32.mrb[0].mxu0
        %v510 = vadd.f32 %v304, %v509
        %v511 = vpop.f32.mrb[0].mxu0
        %v512 = vpop.f32.mrb[0].mxu0
        %v513 = vadd.f32 %v304, %v512
        %v514 = vpop.f32.mrb[0].mxu0
        %515 = vmatprep.mubr.bf16.mxu0 0
        %516 = vmatmul.mubr.bf16.gmra.mrb[0].mxu0 %v407
        %v517 = vpop.f32.mrb[0].mxu0
        %v518 = vadd.f32 %v304, %v517
        %v519 = vpop.f32.mrb[0].mxu0
        %v520 = vpop.f32.mrb[0].mxu0
        %v521 = vadd.f32 %v304, %v520
        %v522 = vpop.f32.mrb[0].mxu0
        %523 = vmatprep.mubr.bf16.mxu0 0
        %524 = vmatmul.mubr.bf16.gmra.mrb[0].mxu0 %v410
        %v525 = vpop.f32.mrb[0].mxu0
        %v526 = vadd.f32 %v304, %v525
        %v527 = vpop.f32.mrb[0].mxu0
        %v528 = vpop.f32.mrb[0].mxu0
        %v529 = vadd.f32 %v304, %v528
        %v530 = vpop.f32.mrb[0].mxu0
        %531 = vmatprep.mubr.bf16.mxu0 0
        %532 = vmatmul.mubr.bf16.gmra.mrb[0].mxu0 %v413
        %v533 = vpop.f32.mrb[0].mxu0
        %v534 = vadd.f32 %v304, %v533
        %v535 = vpop.f32.mrb[0].mxu0
        %v536 = vpop.f32.mrb[0].mxu0
        %v537 = vadd.f32 %v304, %v536
        %v538 = vpop.f32.mrb[0].mxu0
        %539 = vmatprep.mubr.bf16.mxu0 0
        %540 = vmatmul.mubr.bf16.gmra.mrb[0].mxu0 %v416
        %v541 = vpop.f32.mrb[0].mxu0
        %v542 = vadd.f32 %v304, %v541
        %v543 = vpop.f32.mrb[0].mxu0
        %v544 = vpop.f32.mrb[0].mxu0
        %v545 = vadd.f32 %v304, %v544
        %v546 = vpop.f32.mrb[0].mxu0
        %547 = vmatprep.mubr.bf16.mxu0 0
        %548 = vmatmul.mubr.bf16.gmra.mrb[0].mxu0 %v419
        %v549 = vpop.f32.mrb[0].mxu0
        %v550 = vadd.f32 %v304, %v549
        %v551 = vpop.f32.mrb[0].mxu0
        %v552 = vpop.f32.mrb[0].mxu0
        %v553 = vadd.f32 %v304, %v552
        %v554 = vpop.f32.mrb[0].mxu0
        %555 = vmatprep.mubr.bf16.mxu0 0
        %556 = vmatmul.mubr.bf16.gmra.mrb[0].mxu0 %v422
        %v557 = vpop.f32.mrb[0].mxu0
        %v558 = vadd.f32 %v304, %v557
        %v559 = vpop.f32.mrb[0].mxu0
        %v560 = vpop.f32.mrb[0].mxu0
        %v561 = vadd.f32 %v304, %v560
        %v562 = vpop.f32.mrb[0].mxu0
        %563 = vmatprep.mubr.bf16.mxu0 0
        %564 = vmatmul.mubr.bf16.gmra.mrb[0].mxu0 %v425
        %v565 = vpop.f32.mrb[0].mxu0
        %v566 = vadd.f32 %v304, %v565
        %v567 = vpop.f32.mrb[0].mxu0
        %v568 = vpop.f32.mrb[0].mxu0
        %v569 = vadd.f32 %v304, %v568
        %v570 = vpop.f32.mrb[0].mxu0
        %571 = vmatprep.mubr.bf16.mxu0 0
        %572 = vmatmul.mubr.bf16.gmra.mrb[0].mxu0 %v428
        %v573 = vpop.f32.mrb[0].mxu0
        %v574 = vadd.f32 %v304, %v573
        %v575 = vpop.f32.mrb[0].mxu0
        %v576 = vpop.f32.mrb[0].mxu0
        %v577 = vadd.f32 %v304, %v576
        %v578 = vpop.f32.mrb[0].mxu0
        %579 = vmatprep.mubr.bf16.mxu0 0
        %580 = vmatmul.mubr.bf16.gmra.mrb[0].mxu0 %v431
        %v581 = vpop.f32.mrb[0].mxu0
        %v582 = vadd.f32 %v304, %v581
        %v583 = vpop.f32.mrb[0].mxu0
        %v584 = vpop.f32.mrb[0].mxu0
        %v585 = vadd.f32 %v304, %v584
        %v586 = vpop.f32.mrb[0].mxu0
        %587 = vmatprep.mubr.bf16.mxu0 0
        %588 = vmatmul.mubr.bf16.gmra.mrb[0].mxu0 %v434
        %v589 = vpop.f32.mrb[0].mxu0
        %v590 = vadd.f32 %v304, %v589
        %v591 = vpop.f32.mrb[0].mxu0
        %v592 = vpop.f32.mrb[0].mxu0
        %v593 = vpop.f32.mrb[0].mxu0
        %594 = vdwg.mxu0
        %v595 = vmax.f32 %v478, 0.0
        %v596 = vmax.f32 %v481, 0.0
        %v597 = vmax.f32 %v486, 0.0
        %v598 = vmax.f32 %v489, 0.0
        %v599 = vmax.f32 %v494, 0.0
        %v600 = vmax.f32 %v497, 0.0
        %v601 = vmax.f32 %v502, 0.0
        %v602 = vmax.f32 %v505, 0.0
        %v603 = vmax.f32 %v510, 0.0
        %v604 = vmax.f32 %v513, 0.0
        %v605 = vmax.f32 %v518, 0.0
        %v606 = vmax.f32 %v521, 0.0
        %v607 = vmax.f32 %v526, 0.0
        %v608 = vmax.f32 %v529, 0.0
        %v609 = vmax.f32 %v534, 0.0
        %v610 = vmax.f32 %v537, 0.0
        %v611 = vmax.f32 %v542, 0.0
        %v612 = vmax.f32 %v545, 0.0
        %v613 = vmax.f32 %v550, 0.0
        %v614 = vmax.f32 %v553, 0.0
        %v615 = vmax.f32 %v558, 0.0
        %v616 = vmax.f32 %v561, 0.0
        %v617 = vmax.f32 %v566, 0.0
        %v618 = vmax.f32 %v569, 0.0
        %v619 = vmax.f32 %v574, 0.0
        %v620 = vmax.f32 %v577, 0.0
        %v621 = vmax.f32 %v582, 0.0
        %v622 = vmax.f32 %v585, 0.0
        %v623 = vmax.f32 %v590, 0.0
        %v624 = vpack.c.bf16 %v596, %v595
        %v625 = vpack.c.bf16 %v598, %v597
        %v626 = vpack.c.bf16 %v600, %v599
        %v627 = vpack.c.bf16 %v602, %v601
        %v628 = vpack.c.bf16 %v604, %v603
        %v629 = vpack.c.bf16 %v606, %v605
        %v630 = vpack.c.bf16 %v608, %v607
        %v631 = vpack.c.bf16 %v610, %v609
        %v632 = vpack.c.bf16 %v612, %v611
        %v633 = vpack.c.bf16 %v614, %v613
        %v634 = vpack.c.bf16 %v616, %v615
        %v635 = vpack.c.bf16 %v618, %v617
        %v636 = vpack.c.bf16 %v620, %v619
        %v637 = vpack.c.bf16 %v622, %v621
        %v638 = vpack.c.bf16 %v623, %v623
        %vm639 = vsmask.f32 7424
        %v641 = vshrl.u32 %v624, 16
        %v643 = vshll.u32 %v624, 16
        %v645 = vrot.slane %v643, 1
        %v646 = vor.u32 %v641, %v645
        %v648 = vshll.u32 %v625, 16
        %v650 = vrot.slane %v648, 1
        %v651 = vsel %vm639, %v646, %v650
        %v652 = vshrl.u32 %v625, 16
        %v654 = vor.u32 %v652, %v650
        %v656 = vshll.u32 %v626, 16
        %v658 = vrot.slane %v656, 1
        %v659 = vsel %vm639, %v654, %v658
        %v660 = vshrl.u32 %v626, 16
        %v662 = vor.u32 %v660, %v658
        %v664 = vshll.u32 %v627, 16
        %v666 = vrot.slane %v664, 1
        %v667 = vsel %vm639, %v662, %v666
        %v668 = vshrl.u32 %v627, 16
        %v670 = vor.u32 %v668, %v666
        %v672 = vshll.u32 %v628, 16
        %v674 = vrot.slane %v672, 1
        %v675 = vsel %vm639, %v670, %v674
        %v676 = vshrl.u32 %v628, 16
        %v678 = vor.u32 %v676, %v674
        %v680 = vshll.u32 %v629, 16
        %v682 = vrot.slane %v680, 1
        %v683 = vsel %vm639, %v678, %v682
        %v684 = vshrl.u32 %v629, 16
        %v686 = vor.u32 %v684, %v682
        %v688 = vshll.u32 %v630, 16
        %v690 = vrot.slane %v688, 1
        %v691 = vsel %vm639, %v686, %v690
        %v692 = vshrl.u32 %v630, 16
        %v694 = vor.u32 %v692, %v690
        %v696 = vshll.u32 %v631, 16
        %v698 = vrot.slane %v696, 1
        %v699 = vsel %vm639, %v694, %v698
        %v700 = vshrl.u32 %v631, 16
        %v702 = vor.u32 %v700, %v698
        %v704 = vshll.u32 %v632, 16
        %v706 = vrot.slane %v704, 1
        %v707 = vsel %vm639, %v702, %v706
        %v708 = vshrl.u32 %v632, 16
        %v710 = vor.u32 %v708, %v706
        %v712 = vshll.u32 %v633, 16
        %v714 = vrot.slane %v712, 1
        %v715 = vsel %vm639, %v710, %v714
        %v716 = vshrl.u32 %v633, 16
        %v718 = vor.u32 %v716, %v714
        %v720 = vshll.u32 %v634, 16
        %v722 = vrot.slane %v720, 1
        %v723 = vsel %vm639, %v718, %v722
        %v724 = vshrl.u32 %v634, 16
        %v726 = vor.u32 %v724, %v722
        %v728 = vshll.u32 %v635, 16
        %v730 = vrot.slane %v728, 1
        %v731 = vsel %vm639, %v726, %v730
        %v732 = vshrl.u32 %v635, 16
        %v734 = vor.u32 %v732, %v730
        %v736 = vshll.u32 %v636, 16
        %v738 = vrot.slane %v736, 1
        %v739 = vsel %vm639, %v734, %v738
        %v740 = vshrl.u32 %v636, 16
        %v742 = vor.u32 %v740, %v738
        %v744 = vshll.u32 %v637, 16
        %v746 = vrot.slane %v744, 1
        %v747 = vsel %vm639, %v742, %v746
        %v748 = vshrl.u32 %v637, 16
        %v750 = vor.u32 %v748, %v746
        %v752 = vshll.u32 %v638, 16
        %v754 = vrot.slane %v752, 1
        %v755 = vsel %vm639, %v750, %v754
        %756 = vrot.lane.b32.xlu0 %v651, 32
        %v757 = vpop.permute.xlu0 %756
        %758 = vrot.lane.b32.xlu0 %v659, 32
        %v759 = vpop.permute.xlu0 %758
        %760 = vrot.lane.b32.xlu0 %v667, 32
        %v761 = vpop.permute.xlu0 %760
        %762 = vrot.lane.b32.xlu0 %v675, 32
        %v763 = vpop.permute.xlu0 %762
        %764 = vrot.lane.b32.xlu0 %v683, 32
        %v765 = vpop.permute.xlu0 %764
        %766 = vrot.lane.b32.xlu0 %v691, 32
        %v767 = vpop.permute.xlu0 %766
        %768 = vrot.lane.b32.xlu0 %v699, 32
        %v769 = vpop.permute.xlu0 %768
        %770 = vrot.lane.b32.xlu0 %v707, 32
        %v771 = vpop.permute.xlu0 %770
        %772 = vrot.lane.b32.xlu0 %v715, 32
        %v773 = vpop.permute.xlu0 %772
        %774 = vrot.lane.b32.xlu0 %v723, 32
        %v775 = vpop.permute.xlu0 %774
        %776 = vrot.lane.b32.xlu0 %v731, 32
        %v777 = vpop.permute.xlu0 %776
        %778 = vrot.lane.b32.xlu0 %v739, 32
        %v779 = vpop.permute.xlu0 %778
        %780 = vrot.lane.b32.xlu0 %v747, 32
        %v781 = vpop.permute.xlu0 %780
        %782 = vrot.lane.b32.xlu0 %v755, 32
        %v783 = vpop.permute.xlu0 %782
        %vm799 = vcmask 1046528
        %v800 = vrot.slane %v624, 1
        %v801 = vrot.slane %v625, 1
        %v802 = vsel %vm799, %v800, %v801
        %v803 = vrot.slane %v626, 1
        %v804 = vsel %vm799, %v801, %v803
        %v805 = vrot.slane %v627, 1
        %v806 = vsel %vm799, %v803, %v805
        %v807 = vrot.slane %v628, 1
        %v808 = vsel %vm799, %v805, %v807
        %v809 = vrot.slane %v629, 1
        %v810 = vsel %vm799, %v807, %v809
        %v811 = vrot.slane %v630, 1
        %v812 = vsel %vm799, %v809, %v811
        %v813 = vrot.slane %v631, 1
        %v814 = vsel %vm799, %v811, %v813
        %v815 = vrot.slane %v632, 1
        %v816 = vsel %vm799, %v813, %v815
        %v817 = vrot.slane %v633, 1
        %v818 = vsel %vm799, %v815, %v817
        %v819 = vrot.slane %v634, 1
        %v820 = vsel %vm799, %v817, %v819
        %v821 = vrot.slane %v635, 1
        %v822 = vsel %vm799, %v819, %v821
        %v823 = vrot.slane %v636, 1
        %v824 = vsel %vm799, %v821, %v823
        %v825 = vrot.slane %v637, 1
        %v826 = vsel %vm799, %v823, %v825
        %v827 = vrot.slane %v638, 1
        %v828 = vsel %vm799, %v825, %v827
        %829 = vrot.lane.b32.xlu0 %v802, 64
        %v830 = vpop.permute.xlu0 %829
        %831 = vrot.lane.b32.xlu0 %v804, 64
        %v832 = vpop.permute.xlu0 %831
        %833 = vrot.lane.b32.xlu0 %v806, 64
        %v834 = vpop.permute.xlu0 %833
        %835 = vrot.lane.b32.xlu0 %v808, 64
        %v836 = vpop.permute.xlu0 %835
        %837 = vrot.lane.b32.xlu0 %v810, 64
        %v838 = vpop.permute.xlu0 %837
        %839 = vrot.lane.b32.xlu0 %v812, 64
        %v840 = vpop.permute.xlu0 %839
        %841 = vrot.lane.b32.xlu0 %v814, 64
        %v842 = vpop.permute.xlu0 %841
        %843 = vrot.lane.b32.xlu0 %v816, 64
        %v844 = vpop.permute.xlu0 %843
        %845 = vrot.lane.b32.xlu0 %v818, 64
        %v846 = vpop.permute.xlu0 %845
        %847 = vrot.lane.b32.xlu0 %v820, 64
        %v848 = vpop.permute.xlu0 %847
        %849 = vrot.lane.b32.xlu0 %v822, 64
        %v850 = vpop.permute.xlu0 %849
        %851 = vrot.lane.b32.xlu0 %v824, 64
        %v852 = vpop.permute.xlu0 %851
        %853 = vrot.lane.b32.xlu0 %v826, 64
        %v854 = vpop.permute.xlu0 %853
        %855 = vrot.lane.b32.xlu0 %v828, 64
        %v856 = vpop.permute.xlu0 %855
        %vm857 = vcmask 261120
        %v859 = vsel %vm857, %v624, %v757
        %v861 = vsel %vm857, %v625, %v759
        %v863 = vsel %vm857, %v626, %v761
        %v865 = vsel %vm857, %v627, %v763
        %v867 = vsel %vm857, %v628, %v765
        %v869 = vsel %vm857, %v629, %v767
        %v871 = vsel %vm857, %v630, %v769
        %v873 = vsel %vm857, %v631, %v771
        %v875 = vsel %vm857, %v632, %v773
        %v877 = vsel %vm857, %v633, %v775
        %v879 = vsel %vm857, %v634, %v777
        %v881 = vsel %vm857, %v635, %v779
        %v883 = vsel %vm857, %v636, %v781
        %v885 = vsel %vm857, %v637, %v783
        %vm886 = vcmask 523264
        %v888 = vsel %vm886, %v859, %v830
        %v891 = vsel %vm886, %v861, %v832
        %v894 = vsel %vm886, %v863, %v834
        %v897 = vsel %vm886, %v865, %v836
        %v900 = vsel %vm886, %v867, %v838
        %v903 = vsel %vm886, %v869, %v840
        %v906 = vsel %vm886, %v871, %v842
        %v909 = vsel %vm886, %v873, %v844
        %v912 = vsel %vm886, %v875, %v846
        %v915 = vsel %vm886, %v877, %v848
        %v918 = vsel %vm886, %v879, %v850
        %v921 = vsel %vm886, %v881, %v852
        %v924 = vsel %vm886, %v883, %v854
        %v927 = vsel %vm886, %v885, %v856
        %vm929 = vcmask 785408
        %930 = vst.msk [vmem:[#allocation2] sm:$0xff] %vm929, %v888
        %931 = vst.msk [vmem:[#allocation2 + $0x8] sm:$0xff] %vm929, %v891
        %932 = vst.msk [vmem:[#allocation2 + $0x10] sm:$0xff] %vm929, %v894
        %933 = vst.msk [vmem:[#allocation2 + $0x18] sm:$0xff] %vm929, %v897
        %934 = vst.msk [vmem:[#allocation2 + $0x20] sm:$0xff] %vm929, %v900
        %935 = vst.msk [vmem:[#allocation2 + $0x28] sm:$0xff] %vm929, %v903
        %936 = vst.msk [vmem:[#allocation2 + $0x30] sm:$0xff] %vm929, %v906
        %937 = vst.msk [vmem:[#allocation2 + $0x38] sm:$0xff] %vm929, %v909
        %938 = vst.msk [vmem:[#allocation2 + $0x40] sm:$0xff] %vm929, %v912
        %939 = vst.msk [vmem:[#allocation2 + $0x48] sm:$0xff] %vm929, %v915
        %940 = vst.msk [vmem:[#allocation2 + $0x50] sm:$0xff] %vm929, %v918
        %941 = vst.msk [vmem:[#allocation2 + $0x58] sm:$0xff] %vm929, %v921
        %942 = vst.msk [vmem:[#allocation2 + $0x60] sm:$0xff] %vm929, %v924
        %943 = vst.msk [vmem:[#allocation2 + $0x68] sm:$0xff] %vm929, %v927
        %v944 = vld [vmem:[#allocation2] sm:$0xff]
        %v945 = vld [vmem:[#allocation2 + $0x8] sm:$0xff]
        %v946 = vld [vmem:[#allocation2 + $0x10] sm:$0xff]
        %v947 = vld [vmem:[#allocation2 + $0x18] sm:$0xff]
        %v948 = vld [vmem:[#allocation2 + $0x20] sm:$0xff]
        %v949 = vld [vmem:[#allocation2 + $0x28] sm:$0xff]
        %v950 = vld [vmem:[#allocation2 + $0x30] sm:$0xff]
        %v951 = vld [vmem:[#allocation2 + $0x38] sm:$0xff]
        %v952 = vld [vmem:[#allocation2 + $0x40] sm:$0xff]
        %v953 = vld [vmem:[#allocation2 + $0x48] sm:$0xff]
        %v954 = vld [vmem:[#allocation2 + $0x50] sm:$0xff]
        %v955 = vld [vmem:[#allocation2 + $0x58] sm:$0xff]
        %v956 = vld [vmem:[#allocation5] sm:$0xf]
        %v957 = vld [vmem:[#allocation5 + $0x4] sm:$0xf]
        %v958 = vld [vmem:[#allocation5 + $0x8] sm:$0xf]
        %v959 = vld [vmem:[#allocation5 + $0xc] sm:$0xf]
        %v960 = vld [vmem:[#allocation5 + $0x10] sm:$0xf]
        %v961 = vld [vmem:[#allocation5 + $0x14] sm:$0xf]
        %v962 = vld [vmem:[#allocation5 + $0x18] sm:$0xf]
        %v963 = vld [vmem:[#allocation5 + $0x1c] sm:$0xf]
        %v964 = vld [vmem:[#allocation5 + $0x20] sm:$0xf]
        %v965 = vld [vmem:[#allocation5 + $0x24] sm:$0xf]
        %v966 = vld [vmem:[#allocation5 + $0x28] sm:$0xf]
        %v967 = vld [vmem:[#allocation5 + $0x2c] sm:$0xf]
        %v968 = vld [vmem:[#allocation2 + $0x60] sm:$0xff]
        %s969 = scalar_lea.vmem [#allocation5], 48
        %v970 = vld [vmem:[%s969] sm:$0xf]
        %v971 = vld [vmem:[%s969 + $0x4] sm:$0xf]
        %v972 = vld [vmem:[%s969 + $0x8] sm:$0xf]
        %v973 = vld [vmem:[%s969 + $0xc] sm:$0xf]
        %v974 = vld [vmem:[%s969 + $0x10] sm:$0xf]
        %v975 = vld [vmem:[%s969 + $0x14] sm:$0xf]
        %v976 = vld [vmem:[%s969 + $0x18] sm:$0xf]
        %v977 = vld [vmem:[%s969 + $0x1c] sm:$0xf]
        %v978 = vld [vmem:[%s969 + $0x20] sm:$0xf]
        %v979 = vld [vmem:[%s969 + $0x24] sm:$0xf]
        %v980 = vld [vmem:[%s969 + $0x28] sm:$0xf]
        %v981 = vld [vmem:[%s969 + $0x2c] sm:$0xf]
        %v994 = vunpack.c.l.b16 %v970
        %v995 = vunpack.c.l.b16 %v971
        %v996 = vunpack.c.l.b16 %v972
        %v997 = vunpack.c.l.b16 %v973
        %v998 = vunpack.c.l.b16 %v974
        %v999 = vunpack.c.l.b16 %v975
        %v1000 = vunpack.c.l.b16 %v976
        %v1001 = vunpack.c.l.b16 %v977
        %v1002 = vunpack.c.l.b16 %v978
        %v1003 = vunpack.c.l.b16 %v979
        %v1004 = vunpack.c.l.b16 %v980
        %v1005 = vunpack.c.l.b16 %v981
        %v1006 = vpack.c.b16 %v995, %v994
        %v1007 = vpack.c.b16 %v997, %v996
        %v1008 = vpack.c.b16 %v999, %v998
        %v1009 = vpack.c.b16 %v1001, %v1000
        %v1010 = vpack.c.b16 %v1003, %v1002
        %v1011 = vpack.c.b16 %v1005, %v1004
        %v1019 = vsel %vm929, %v945, 0
        %v1022 = vsel %vm929, %v946, 0
        %v1025 = vsel %vm929, %v947, 0
        %v1028 = vsel %vm929, %v948, 0
        %v1031 = vsel %vm929, %v949, 0
        %v1034 = vsel %vm929, %v950, 0
        %v1037 = vsel %vm929, %v951, 0
        %v1040 = vsel %vm929, %v952, 0
        %v1043 = vsel %vm929, %v953, 0
        %v1046 = vsel %vm929, %v954, 0
        %v1049 = vsel %vm929, %v955, 0
        %v1052 = vsel %vm929, %v968, 0
        %1054 = vmatprep.subr.bf16.mxu0 0
        %1055 = vmatpush1.bf16.msra.mxu0 %v1006
        %1056 = vmatprep.subr.bf16.mxu0 0
        %1057 = vmatpush1.bf16.msra.mxu0 %v1007
        %1058 = vmatprep.subr.bf16.mxu0 0
        %1059 = vmatpush1.bf16.msra.mxu0 %v1008
        %1060 = vmatprep.subr.bf16.mxu0 0
        %1061 = vmatpush1.bf16.msra.mxu0 %v1009
        %1062 = vmatprep.subr.bf16.mxu0 0
        %1063 = vmatpush1.bf16.msra.mxu0 %v1010
        %1064 = vmatprep.subr.bf16.mxu0 0
        %1065 = vmatpush1.bf16.msra.mxu0 %v1011
        %1066 = vmatprep.subr.bf16.mxu0 0
        %1067 = vmatpush1.bf16.msra.mxu0 0
        %1068 = vmatprep.subr.bf16.mxu0 0
        %1069 = vmatpush1.bf16.msra.mxu0 0
        %1070 = vmatprep.subr.bf16.mxu0 0
        %1071 = vmatpush1.bf16.msra.mxu0 0
        %1072 = vmatprep.subr.bf16.mxu0 0
        %1073 = vmatpush1.bf16.msra.mxu0 0
        %1074 = vmatprep.subr.bf16.mxu0 0
        %1075 = vmatpush1.bf16.msra.mxu0 0
        %1076 = vmatprep.subr.bf16.mxu0 0
        %1077 = vmatpush1.bf16.msra.mxu0 0
        %1078 = vmatprep.subr.bf16.mxu0 0
        %1079 = vmatpush1.bf16.msra.mxu0 0
        %1080 = vmatprep.subr.bf16.mxu0 0
        %1081 = vmatpush1.bf16.msra.mxu0 0
        %1082 = vmatprep.subr.bf16.mxu0 0
        %1083 = vmatpush1.bf16.msra.mxu0 0
        %1084 = vmatprep.subr.bf16.mxu0 0
        %1085 = vmatpush1.bf16.msra.mxu0 0
        %1086 = vmatprep.mubr.bf16.mxu0 0
        %1087 = vmatmul.mubr.bf16.gmra.mrb[0].mxu0 %v1019
        %v1088 = vpop.f32.mrb[0].mxu0
        %v1089 = vadd.f32 0.0, %v1088
        %v1090 = vpop.f32.mrb[0].mxu0
        %v1091 = vpop.f32.mrb[0].mxu0
        %v1092 = vadd.f32 0.0, %v1091
        %v1093 = vpop.f32.mrb[0].mxu0
        %1094 = vmatprep.mubr.bf16.mxu0 0
        %1095 = vmatmul.mubr.bf16.gmra.mrb[0].mxu0 %v1022
        %v1096 = vpop.f32.mrb[0].mxu0
        %v1097 = vadd.f32 0.0, %v1096
        %v1098 = vpop.f32.mrb[0].mxu0
        %v1099 = vpop.f32.mrb[0].mxu0
        %v1100 = vadd.f32 0.0, %v1099
        %v1101 = vpop.f32.mrb[0].mxu0
        %1102 = vmatprep.mubr.bf16.mxu0 0
        %1103 = vmatmul.mubr.bf16.gmra.mrb[0].mxu0 %v1025
        %v1104 = vpop.f32.mrb[0].mxu0
        %v1105 = vadd.f32 0.0, %v1104
        %v1106 = vpop.f32.mrb[0].mxu0
        %v1107 = vpop.f32.mrb[0].mxu0
        %v1108 = vadd.f32 0.0, %v1107
        %v1109 = vpop.f32.mrb[0].mxu0
        %1110 = vmatprep.mubr.bf16.mxu0 0
        %1111 = vmatmul.mubr.bf16.gmra.mrb[0].mxu0 %v1028
        %v1112 = vpop.f32.mrb[0].mxu0
        %v1113 = vadd.f32 0.0, %v1112
        %v1114 = vpop.f32.mrb[0].mxu0
        %v1115 = vpop.f32.mrb[0].mxu0
        %v1116 = vadd.f32 0.0, %v1115
        %v1117 = vpop.f32.mrb[0].mxu0
        %1118 = vmatprep.mubr.bf16.mxu0 0
        %1119 = vmatmul.mubr.bf16.gmra.mrb[0].mxu0 %v1031
        %v1120 = vpop.f32.mrb[0].mxu0
        %v1121 = vadd.f32 0.0, %v1120
        %v1122 = vpop.f32.mrb[0].mxu0
        %v1123 = vpop.f32.mrb[0].mxu0
        %v1124 = vadd.f32 0.0, %v1123
        %v1125 = vpop.f32.mrb[0].mxu0
        %1126 = vmatprep.mubr.bf16.mxu0 0
        %1127 = vmatmul.mubr.bf16.gmra.mrb[0].mxu0 %v1034
        %v1128 = vpop.f32.mrb[0].mxu0
        %v1129 = vadd.f32 0.0, %v1128
        %v1130 = vpop.f32.mrb[0].mxu0
        %v1131 = vpop.f32.mrb[0].mxu0
        %v1132 = vadd.f32 0.0, %v1131
        %v1133 = vpop.f32.mrb[0].mxu0
        %1134 = vmatprep.mubr.bf16.mxu0 0
        %1135 = vmatmul.mubr.bf16.gmra.mrb[0].mxu0 %v1037
        %v1136 = vpop.f32.mrb[0].mxu0
        %v1137 = vadd.f32 0.0, %v1136
        %v1138 = vpop.f32.mrb[0].mxu0
        %v1139 = vpop.f32.mrb[0].mxu0
        %v1140 = vadd.f32 0.0, %v1139
        %v1141 = vpop.f32.mrb[0].mxu0
        %1142 = vmatprep.mubr.bf16.mxu0 0
        %1143 = vmatmul.mubr.bf16.gmra.mrb[0].mxu0 %v1040
        %v1144 = vpop.f32.mrb[0].mxu0
        %v1145 = vadd.f32 0.0, %v1144
        %v1146 = vpop.f32.mrb[0].mxu0
        %v1147 = vpop.f32.mrb[0].mxu0
        %v1148 = vadd.f32 0.0, %v1147
        %v1149 = vpop.f32.mrb[0].mxu0
        %1150 = vmatprep.mubr.bf16.mxu0 0
        %1151 = vmatmul.mubr.bf16.gmra.mrb[0].mxu0 %v1043
        %v1152 = vpop.f32.mrb[0].mxu0
        %v1153 = vadd.f32 0.0, %v1152
        %v1154 = vpop.f32.mrb[0].mxu0
        %v1155 = vpop.f32.mrb[0].mxu0
        %v1156 = vadd.f32 0.0, %v1155
        %v1157 = vpop.f32.mrb[0].mxu0
        %1158 = vmatprep.mubr.bf16.mxu0 0
        %1159 = vmatmul.mubr.bf16.gmra.mrb[0].mxu0 %v1046
        %v1160 = vpop.f32.mrb[0].mxu0
        %v1161 = vadd.f32 0.0, %v1160
        %v1162 = vpop.f32.mrb[0].mxu0
        %v1163 = vpop.f32.mrb[0].mxu0
        %v1164 = vadd.f32 0.0, %v1163
        %v1165 = vpop.f32.mrb[0].mxu0
        %1166 = vmatprep.mubr.bf16.mxu0 0
        %1167 = vmatmul.mubr.bf16.gmra.mrb[0].mxu0 %v1049
        %v1168 = vpop.f32.mrb[0].mxu0
        %v1169 = vadd.f32 0.0, %v1168
        %v1170 = vpop.f32.mrb[0].mxu0
        %v1171 = vpop.f32.mrb[0].mxu0
        %v1172 = vadd.f32 0.0, %v1171
        %v1173 = vpop.f32.mrb[0].mxu0
        %1174 = vmatprep.mubr.bf16.mxu0 0
        %1175 = vmatmul.mubr.bf16.gmra.mrb[0].mxu0 %v1052
        %v1176 = vpop.f32.mrb[0].mxu0
        %v1177 = vadd.f32 0.0, %v1176
        %v1178 = vpop.f32.mrb[0].mxu0
        %v1179 = vpop.f32.mrb[0].mxu0
        %v1180 = vadd.f32 0.0, %v1179
        %v1181 = vpop.f32.mrb[0].mxu0
        %1182 = vdwg.mxu0
        %v1195 = vunpack.c.l.b16 %v956
        %v1196 = vunpack.c.l.b16 %v957
        %v1197 = vunpack.c.l.b16 %v958
        %v1198 = vunpack.c.l.b16 %v959
        %v1199 = vunpack.c.l.b16 %v960
        %v1200 = vunpack.c.l.b16 %v961
        %v1201 = vunpack.c.l.b16 %v962
        %v1202 = vunpack.c.l.b16 %v963
        %v1203 = vunpack.c.l.b16 %v964
        %v1204 = vunpack.c.l.b16 %v965
        %v1205 = vunpack.c.l.b16 %v966
        %v1206 = vunpack.c.l.b16 %v967
        %v1207 = vpack.c.b16 %v1196, %v1195
        %v1208 = vpack.c.b16 %v1198, %v1197
        %v1209 = vpack.c.b16 %v1200, %v1199
        %v1210 = vpack.c.b16 %v1202, %v1201
        %v1211 = vpack.c.b16 %v1204, %v1203
        %v1212 = vpack.c.b16 %v1206, %v1205
        %v1220 = vsel %vm929, %v944, 0
        %1222 = vmatprep.subr.bf16.mxu0 0
        %1223 = vmatpush1.bf16.msra.mxu0 %v1207
        %1224 = vmatprep.subr.bf16.mxu0 0
        %1225 = vmatpush1.bf16.msra.mxu0 %v1208
        %1226 = vmatprep.subr.bf16.mxu0 0
        %1227 = vmatpush1.bf16.msra.mxu0 %v1209
        %1228 = vmatprep.subr.bf16.mxu0 0
        %1229 = vmatpush1.bf16.msra.mxu0 %v1210
        %1230 = vmatprep.subr.bf16.mxu0 0
        %1231 = vmatpush1.bf16.msra.mxu0 %v1211
        %1232 = vmatprep.subr.bf16.mxu0 0
        %1233 = vmatpush1.bf16.msra.mxu0 %v1212
        %1234 = vmatprep.subr.bf16.mxu0 0
        %1235 = vmatpush1.bf16.msra.mxu0 0
        %1236 = vmatprep.subr.bf16.mxu0 0
        %1237 = vmatpush1.bf16.msra.mxu0 0
        %1238 = vmatprep.subr.bf16.mxu0 0
        %1239 = vmatpush1.bf16.msra.mxu0 0
        %1240 = vmatprep.subr.bf16.mxu0 0
        %1241 = vmatpush1.bf16.msra.mxu0 0
        %1242 = vmatprep.subr.bf16.mxu0 0
        %1243 = vmatpush1.bf16.msra.mxu0 0
        %1244 = vmatprep.subr.bf16.mxu0 0
        %1245 = vmatpush1.bf16.msra.mxu0 0
        %1246 = vmatprep.subr.bf16.mxu0 0
        %1247 = vmatpush1.bf16.msra.mxu0 0
        %1248 = vmatprep.subr.bf16.mxu0 0
        %1249 = vmatpush1.bf16.msra.mxu0 0
        %1250 = vmatprep.subr.bf16.mxu0 0
        %1251 = vmatpush1.bf16.msra.mxu0 0
        %1252 = vmatprep.subr.bf16.mxu0 0
        %1253 = vmatpush1.bf16.msra.mxu0 0
        %1254 = vmatprep.mubr.bf16.mxu0 0
        %1255 = vmatmul.mubr.bf16.gmra.mrb[0].mxu0 %v1220
        %v1256 = vpop.f32.mrb[0].mxu0
        %v1257 = vadd.f32 %v1089, %v1256
        %v1258 = vpop.f32.mrb[0].mxu0
        %v1259 = vpop.f32.mrb[0].mxu0
        %v1260 = vadd.f32 %v1092, %v1259
        %v1261 = vpop.f32.mrb[0].mxu0
        %1262 = vmatprep.mubr.bf16.mxu0 0
        %1263 = vmatmul.mubr.bf16.gmra.mrb[0].mxu0 %v1019
        %v1264 = vpop.f32.mrb[0].mxu0
        %v1265 = vadd.f32 %v1097, %v1264
        %v1266 = vpop.f32.mrb[0].mxu0
        %v1267 = vpop.f32.mrb[0].mxu0
        %v1268 = vadd.f32 %v1100, %v1267
        %v1269 = vpop.f32.mrb[0].mxu0
        %1270 = vmatprep.mubr.bf16.mxu0 0
        %1271 = vmatmul.mubr.bf16.gmra.mrb[0].mxu0 %v1022
        %v1272 = vpop.f32.mrb[0].mxu0
        %v1273 = vadd.f32 %v1105, %v1272
        %v1274 = vpop.f32.mrb[0].mxu0
        %v1275 = vpop.f32.mrb[0].mxu0
        %v1276 = vadd.f32 %v1108, %v1275
        %v1277 = vpop.f32.mrb[0].mxu0
        %1278 = vmatprep.mubr.bf16.mxu0 0
        %1279 = vmatmul.mubr.bf16.gmra.mrb[0].mxu0 %v1025
        %v1280 = vpop.f32.mrb[0].mxu0
        %v1281 = vadd.f32 %v1113, %v1280
        %v1282 = vpop.f32.mrb[0].mxu0
        %v1283 = vpop.f32.mrb[0].mxu0
        %v1284 = vadd.f32 %v1116, %v1283
        %v1285 = vpop.f32.mrb[0].mxu0
        %1286 = vmatprep.mubr.bf16.mxu0 0
        %1287 = vmatmul.mubr.bf16.gmra.mrb[0].mxu0 %v1028
        %v1288 = vpop.f32.mrb[0].mxu0
        %v1289 = vadd.f32 %v1121, %v1288
        %v1290 = vpop.f32.mrb[0].mxu0
        %v1291 = vpop.f32.mrb[0].mxu0
        %v1292 = vadd.f32 %v1124, %v1291
        %v1293 = vpop.f32.mrb[0].mxu0
        %1294 = vmatprep.mubr.bf16.mxu0 0
        %1295 = vmatmul.mubr.bf16.gmra.mrb[0].mxu0 %v1031
        %v1296 = vpop.f32.mrb[0].mxu0
        %v1297 = vadd.f32 %v1129, %v1296
        %v1298 = vpop.f32.mrb[0].mxu0
        %v1299 = vpop.f32.mrb[0].mxu0
        %v1300 = vadd.f32 %v1132, %v1299
        %v1301 = vpop.f32.mrb[0].mxu0
        %1302 = vmatprep.mubr.bf16.mxu0 0
        %1303 = vmatmul.mubr.bf16.gmra.mrb[0].mxu0 %v1034
        %v1304 = vpop.f32.mrb[0].mxu0
        %v1305 = vadd.f32 %v1137, %v1304
        %v1306 = vpop.f32.mrb[0].mxu0
        %v1307 = vpop.f32.mrb[0].mxu0
        %v1308 = vadd.f32 %v1140, %v1307
        %v1309 = vpop.f32.mrb[0].mxu0
        %1310 = vmatprep.mubr.bf16.mxu0 0
        %1311 = vmatmul.mubr.bf16.gmra.mrb[0].mxu0 %v1037
        %v1312 = vpop.f32.mrb[0].mxu0
        %v1313 = vadd.f32 %v1145, %v1312
        %v1314 = vpop.f32.mrb[0].mxu0
        %v1315 = vpop.f32.mrb[0].mxu0
        %v1316 = vadd.f32 %v1148, %v1315
        %v1317 = vpop.f32.mrb[0].mxu0
        %1318 = vmatprep.mubr.bf16.mxu0 0
        %1319 = vmatmul.mubr.bf16.gmra.mrb[0].mxu0 %v1040
        %v1320 = vpop.f32.mrb[0].mxu0
        %v1321 = vadd.f32 %v1153, %v1320
        %v1322 = vpop.f32.mrb[0].mxu0
        %v1323 = vpop.f32.mrb[0].mxu0
        %v1324 = vadd.f32 %v1156, %v1323
        %v1325 = vpop.f32.mrb[0].mxu0
        %1326 = vmatprep.mubr.bf16.mxu0 0
        %1327 = vmatmul.mubr.bf16.gmra.mrb[0].mxu0 %v1043
        %v1328 = vpop.f32.mrb[0].mxu0
        %v1329 = vadd.f32 %v1161, %v1328
        %v1330 = vpop.f32.mrb[0].mxu0
        %v1331 = vpop.f32.mrb[0].mxu0
        %v1332 = vadd.f32 %v1164, %v1331
        %v1333 = vpop.f32.mrb[0].mxu0
        %1334 = vmatprep.mubr.bf16.mxu0 0
        %1335 = vmatmul.mubr.bf16.gmra.mrb[0].mxu0 %v1046
        %v1336 = vpop.f32.mrb[0].mxu0
        %v1337 = vadd.f32 %v1169, %v1336
        %v1338 = vpop.f32.mrb[0].mxu0
        %v1339 = vpop.f32.mrb[0].mxu0
        %v1340 = vadd.f32 %v1172, %v1339
        %v1341 = vpop.f32.mrb[0].mxu0
        %1342 = vmatprep.mubr.bf16.mxu0 0
        %1343 = vmatmul.mubr.bf16.gmra.mrb[0].mxu0 %v1049
        %v1344 = vpop.f32.mrb[0].mxu0
        %v1345 = vadd.f32 %v1177, %v1344
        %v1346 = vpop.f32.mrb[0].mxu0
        %v1347 = vpop.f32.mrb[0].mxu0
        %v1348 = vadd.f32 %v1180, %v1347
        %v1349 = vpop.f32.mrb[0].mxu0
        %1350 = vdwg.mxu0
        %v1351 = vld [vmem:[#allocation2 + $0x10] sm:$0xff]
        %v1352 = vld [vmem:[#allocation2 + $0x18] sm:$0xff]
        %v1353 = vld [vmem:[#allocation2 + $0x20] sm:$0xff]
        %v1354 = vld [vmem:[#allocation2 + $0x28] sm:$0xff]
        %v1355 = vld [vmem:[#allocation2 + $0x30] sm:$0xff]
        %v1356 = vld [vmem:[#allocation2 + $0x38] sm:$0xff]
        %v1357 = vld [vmem:[#allocation2 + $0x40] sm:$0xff]
        %v1358 = vld [vmem:[#allocation2 + $0x48] sm:$0xff]
        %v1359 = vld [vmem:[#allocation2 + $0x50] sm:$0xff]
        %v1360 = vld [vmem:[#allocation2 + $0x58] sm:$0xff]
        %v1361 = vld [vmem:[#allocation2 + $0x60] sm:$0xff]
        %v1362 = vld [vmem:[#allocation2 + $0x68] sm:$0xff]
        %s1363 = scalar_lea.vmem [#allocation5], 96
        %v1364 = vld [vmem:[%s1363] sm:$0xf]
        %v1365 = vld [vmem:[%s1363 + $0x4] sm:$0xf]
        %v1366 = vld [vmem:[%s1363 + $0x8] sm:$0xf]
        %v1367 = vld [vmem:[%s1363 + $0xc] sm:$0xf]
        %v1368 = vld [vmem:[%s1363 + $0x10] sm:$0xf]
        %v1369 = vld [vmem:[%s1363 + $0x14] sm:$0xf]
        %v1370 = vld [vmem:[%s1363 + $0x18] sm:$0xf]
        %v1371 = vld [vmem:[%s1363 + $0x1c] sm:$0xf]
        %v1372 = vld [vmem:[%s1363 + $0x20] sm:$0xf]
        %v1373 = vld [vmem:[%s1363 + $0x24] sm:$0xf]
        %v1374 = vld [vmem:[%s1363 + $0x28] sm:$0xf]
        %v1375 = vld [vmem:[%s1363 + $0x2c] sm:$0xf]
        %v1388 = vunpack.c.l.b16 %v1364
        %v1389 = vunpack.c.l.b16 %v1365
        %v1390 = vunpack.c.l.b16 %v1366
        %v1391 = vunpack.c.l.b16 %v1367
        %v1392 = vunpack.c.l.b16 %v1368
        %v1393 = vunpack.c.l.b16 %v1369
        %v1394 = vunpack.c.l.b16 %v1370
        %v1395 = vunpack.c.l.b16 %v1371
        %v1396 = vunpack.c.l.b16 %v1372
        %v1397 = vunpack.c.l.b16 %v1373
        %v1398 = vunpack.c.l.b16 %v1374
        %v1399 = vunpack.c.l.b16 %v1375
        %v1400 = vpack.c.b16 %v1389, %v1388
        %v1401 = vpack.c.b16 %v1391, %v1390
        %v1402 = vpack.c.b16 %v1393, %v1392
        %v1403 = vpack.c.b16 %v1395, %v1394
        %v1404 = vpack.c.b16 %v1397, %v1396
        %v1405 = vpack.c.b16 %v1399, %v1398
        %v1413 = vsel %vm929, %v1351, 0
        %v1416 = vsel %vm929, %v1352, 0
        %v1419 = vsel %vm929, %v1353, 0
        %v1422 = vsel %vm929, %v1354, 0
        %v1425 = vsel %vm929, %v1355, 0
        %v1428 = vsel %vm929, %v1356, 0
        %v1431 = vsel %vm929, %v1357, 0
        %v1434 = vsel %vm929, %v1358, 0
        %v1437 = vsel %vm929, %v1359, 0
        %v1440 = vsel %vm929, %v1360, 0
        %v1443 = vsel %vm929, %v1361, 0
        %v1446 = vsel %vm929, %v1362, 0
        %1448 = vmatprep.subr.bf16.mxu0 0
        %1449 = vmatpush1.bf16.msra.mxu0 %v1400
        %1450 = vmatprep.subr.bf16.mxu0 0
        %1451 = vmatpush1.bf16.msra.mxu0 %v1401
        %1452 = vmatprep.subr.bf16.mxu0 0
        %1453 = vmatpush1.bf16.msra.mxu0 %v1402
        %1454 = vmatprep.subr.bf16.mxu0 0
        %1455 = vmatpush1.bf16.msra.mxu0 %v1403
        %1456 = vmatprep.subr.bf16.mxu0 0
        %1457 = vmatpush1.bf16.msra.mxu0 %v1404
        %1458 = vmatprep.subr.bf16.mxu0 0
        %1459 = vmatpush1.bf16.msra.mxu0 %v1405
        %1460 = vmatprep.subr.bf16.mxu0 0
        %1461 = vmatpush1.bf16.msra.mxu0 0
        %1462 = vmatprep.subr.bf16.mxu0 0
        %1463 = vmatpush1.bf16.msra.mxu0 0
        %1464 = vmatprep.subr.bf16.mxu0 0
        %1465 = vmatpush1.bf16.msra.mxu0 0
        %1466 = vmatprep.subr.bf16.mxu0 0
        %1467 = vmatpush1.bf16.msra.mxu0 0
        %1468 = vmatprep.subr.bf16.mxu0 0
        %1469 = vmatpush1.bf16.msra.mxu0 0
        %1470 = vmatprep.subr.bf16.mxu0 0
        %1471 = vmatpush1.bf16.msra.mxu0 0
        %1472 = vmatprep.subr.bf16.mxu0 0
        %1473 = vmatpush1.bf16.msra.mxu0 0
        %1474 = vmatprep.subr.bf16.mxu0 0
        %1475 = vmatpush1.bf16.msra.mxu0 0
        %1476 = vmatprep.subr.bf16.mxu0 0
        %1477 = vmatpush1.bf16.msra.mxu0 0
        %1478 = vmatprep.subr.bf16.mxu0 0
        %1479 = vmatpush1.bf16.msra.mxu0 0
        %1480 = vmatprep.mubr.bf16.mxu0 0
        %1481 = vmatmul.mubr.bf16.gmra.mrb[0].mxu0 %v1413
        %v1482 = vpop.f32.mrb[0].mxu0
        %v1483 = vadd.f32 0.0, %v1482
        %v1484 = vpop.f32.mrb[0].mxu0
        %v1485 = vpop.f32.mrb[0].mxu0
        %v1486 = vadd.f32 0.0, %v1485
        %v1487 = vpop.f32.mrb[0].mxu0
        %1488 = vmatprep.mubr.bf16.mxu0 0
        %1489 = vmatmul.mubr.bf16.gmra.mrb[0].mxu0 %v1416
        %v1490 = vpop.f32.mrb[0].mxu0
        %v1491 = vadd.f32 0.0, %v1490
        %v1492 = vpop.f32.mrb[0].mxu0
        %v1493 = vpop.f32.mrb[0].mxu0
        %v1494 = vadd.f32 0.0, %v1493
        %v1495 = vpop.f32.mrb[0].mxu0
        %1496 = vmatprep.mubr.bf16.mxu0 0
        %1497 = vmatmul.mubr.bf16.gmra.mrb[0].mxu0 %v1419
        %v1498 = vpop.f32.mrb[0].mxu0
        %v1499 = vadd.f32 0.0, %v1498
        %v1500 = vpop.f32.mrb[0].mxu0
        %v1501 = vpop.f32.mrb[0].mxu0
        %v1502 = vadd.f32 0.0, %v1501
        %v1503 = vpop.f32.mrb[0].mxu0
        %1504 = vmatprep.mubr.bf16.mxu0 0
        %1505 = vmatmul.mubr.bf16.gmra.mrb[0].mxu0 %v1422
        %v1506 = vpop.f32.mrb[0].mxu0
        %v1507 = vadd.f32 0.0, %v1506
        %v1508 = vpop.f32.mrb[0].mxu0
        %v1509 = vpop.f32.mrb[0].mxu0
        %v1510 = vadd.f32 0.0, %v1509
        %v1511 = vpop.f32.mrb[0].mxu0
        %1512 = vmatprep.mubr.bf16.mxu0 0
        %1513 = vmatmul.mubr.bf16.gmra.mrb[0].mxu0 %v1425
        %v1514 = vpop.f32.mrb[0].mxu0
        %v1515 = vadd.f32 0.0, %v1514
        %v1516 = vpop.f32.mrb[0].mxu0
        %v1517 = vpop.f32.mrb[0].mxu0
        %v1518 = vadd.f32 0.0, %v1517
        %v1519 = vpop.f32.mrb[0].mxu0
        %1520 = vmatprep.mubr.bf16.mxu0 0
        %1521 = vmatmul.mubr.bf16.gmra.mrb[0].mxu0 %v1428
        %v1522 = vpop.f32.mrb[0].mxu0
        %v1523 = vadd.f32 0.0, %v1522
        %v1524 = vpop.f32.mrb[0].mxu0
        %v1525 = vpop.f32.mrb[0].mxu0
        %v1526 = vadd.f32 0.0, %v1525
        %v1527 = vpop.f32.mrb[0].mxu0
        %1528 = vmatprep.mubr.bf16.mxu0 0
        %1529 = vmatmul.mubr.bf16.gmra.mrb[0].mxu0 %v1431
        %v1530 = vpop.f32.mrb[0].mxu0
        %v1531 = vadd.f32 0.0, %v1530
        %v1532 = vpop.f32.mrb[0].mxu0
        %v1533 = vpop.f32.mrb[0].mxu0
        %v1534 = vadd.f32 0.0, %v1533
        %v1535 = vpop.f32.mrb[0].mxu0
        %1536 = vmatprep.mubr.bf16.mxu0 0
        %1537 = vmatmul.mubr.bf16.gmra.mrb[0].mxu0 %v1434
        %v1538 = vpop.f32.mrb[0].mxu0
        %v1539 = vadd.f32 0.0, %v1538
        %v1540 = vpop.f32.mrb[0].mxu0
        %v1541 = vpop.f32.mrb[0].mxu0
        %v1542 = vadd.f32 0.0, %v1541
        %v1543 = vpop.f32.mrb[0].mxu0
        %1544 = vmatprep.mubr.bf16.mxu0 0
        %1545 = vmatmul.mubr.bf16.gmra.mrb[0].mxu0 %v1437
        %v1546 = vpop.f32.mrb[0].mxu0
        %v1547 = vadd.f32 0.0, %v1546
        %v1548 = vpop.f32.mrb[0].mxu0
        %v1549 = vpop.f32.mrb[0].mxu0
        %v1550 = vadd.f32 0.0, %v1549
        %v1551 = vpop.f32.mrb[0].mxu0
        %1552 = vmatprep.mubr.bf16.mxu0 0
        %1553 = vmatmul.mubr.bf16.gmra.mrb[0].mxu0 %v1440
        %v1554 = vpop.f32.mrb[0].mxu0
        %v1555 = vadd.f32 0.0, %v1554
        %v1556 = vpop.f32.mrb[0].mxu0
        %v1557 = vpop.f32.mrb[0].mxu0
        %v1558 = vadd.f32 0.0, %v1557
        %v1559 = vpop.f32.mrb[0].mxu0
        %1560 = vmatprep.mubr.bf16.mxu0 0
        %1561 = vmatmul.mubr.bf16.gmra.mrb[0].mxu0 %v1443
        %v1562 = vpop.f32.mrb[0].mxu0
        %v1563 = vadd.f32 0.0, %v1562
        %v1564 = vpop.f32.mrb[0].mxu0
        %v1565 = vpop.f32.mrb[0].mxu0
        %v1566 = vadd.f32 0.0, %v1565
        %v1567 = vpop.f32.mrb[0].mxu0
        %1568 = vmatprep.mubr.bf16.mxu0 0
        %1569 = vmatmul.mubr.bf16.gmra.mrb[0].mxu0 %v1446
        %v1570 = vpop.f32.mrb[0].mxu0
        %v1571 = vadd.f32 0.0, %v1570
        %v1572 = vpop.f32.mrb[0].mxu0
        %v1573 = vpop.f32.mrb[0].mxu0
        %v1574 = vadd.f32 0.0, %v1573
        %v1575 = vpop.f32.mrb[0].mxu0
        %1576 = vdwg.mxu0
        %v1577 = vadd.f32 %v1257, %v1483
        %v1578 = vadd.f32 %v1260, %v1486
        %v1579 = vadd.f32 %v1265, %v1491
        %v1580 = vadd.f32 %v1268, %v1494
        %v1581 = vadd.f32 %v1273, %v1499
        %v1582 = vadd.f32 %v1276, %v1502
        %v1583 = vadd.f32 %v1281, %v1507
        %v1584 = vadd.f32 %v1284, %v1510
        %v1585 = vadd.f32 %v1289, %v1515
        %v1586 = vadd.f32 %v1292, %v1518
        %v1587 = vadd.f32 %v1297, %v1523
        %v1588 = vadd.f32 %v1300, %v1526
        %v1589 = vadd.f32 %v1305, %v1531
        %v1590 = vadd.f32 %v1308, %v1534
        %v1591 = vadd.f32 %v1313, %v1539
        %v1592 = vadd.f32 %v1316, %v1542
        %v1593 = vadd.f32 %v1321, %v1547
        %v1594 = vadd.f32 %v1324, %v1550
        %v1595 = vadd.f32 %v1329, %v1555
        %v1596 = vadd.f32 %v1332, %v1558
        %v1597 = vadd.f32 %v1337, %v1563
        %v1598 = vadd.f32 %v1340, %v1566
        %v1599 = vadd.f32 %v1345, %v1571
        %v1600 = vadd.f32 %v1348, %v1574
        %v1601 = vld [vmem:[#allocation7] sm:$0x1]
        %v1603 = vlaneseq
        %v1604 = vshrl.u32 %v1603, 7
        %v1605 = vsub.s32 0, %v1604
        %v1606 = vrot.slane %v1601, %v1605
        %v1608 = vadd.f32 %v1577, %v1606
        %v1609 = vadd.f32 %v1578, %v1606
        %v1610 = vadd.f32 %v1579, %v1606
        %v1611 = vadd.f32 %v1580, %v1606
        %v1612 = vadd.f32 %v1581, %v1606
        %v1613 = vadd.f32 %v1582, %v1606
        %v1614 = vadd.f32 %v1583, %v1606
        %v1615 = vadd.f32 %v1584, %v1606
        %v1616 = vadd.f32 %v1585, %v1606
        %v1617 = vadd.f32 %v1586, %v1606
        %v1618 = vadd.f32 %v1587, %v1606
        %v1619 = vadd.f32 %v1588, %v1606
        %v1620 = vadd.f32 %v1589, %v1606
        %v1621 = vadd.f32 %v1590, %v1606
        %v1622 = vadd.f32 %v1591, %v1606
        %v1623 = vadd.f32 %v1592, %v1606
        %v1624 = vadd.f32 %v1593, %v1606
        %v1625 = vadd.f32 %v1594, %v1606
        %v1626 = vadd.f32 %v1595, %v1606
        %v1627 = vadd.f32 %v1596, %v1606
        %v1628 = vadd.f32 %v1597, %v1606
        %v1629 = vadd.f32 %v1598, %v1606
        %v1630 = vadd.f32 %v1599, %v1606
        %v1631 = vadd.f32 %v1600, %v1606
        %v1632 = vmax.f32 %v1608, 0.0
        %v1633 = vmax.f32 %v1609, 0.0
        %v1634 = vmax.f32 %v1610, 0.0
        %v1635 = vmax.f32 %v1611, 0.0
        %v1636 = vmax.f32 %v1612, 0.0
        %v1637 = vmax.f32 %v1613, 0.0
        %v1638 = vmax.f32 %v1614, 0.0
        %v1639 = vmax.f32 %v1615, 0.0
        %v1640 = vmax.f32 %v1616, 0.0
        %v1641 = vmax.f32 %v1617, 0.0
        %v1642 = vmax.f32 %v1618, 0.0
        %v1643 = vmax.f32 %v1619, 0.0
        %v1644 = vmax.f32 %v1620, 0.0
        %v1645 = vmax.f32 %v1621, 0.0
        %v1646 = vmax.f32 %v1622, 0.0
        %v1647 = vmax.f32 %v1623, 0.0
        %v1648 = vmax.f32 %v1624, 0.0
        %v1649 = vmax.f32 %v1625, 0.0
        %v1650 = vmax.f32 %v1626, 0.0
        %v1651 = vmax.f32 %v1627, 0.0
        %v1652 = vmax.f32 %v1628, 0.0
        %v1653 = vmax.f32 %v1629, 0.0
        %v1654 = vmax.f32 %v1630, 0.0
        %v1655 = vmax.f32 %v1631, 0.0
        %1656 = vst.msk [vmem:[%s264] sm:$0xff] %vm886, %v1632
        %1657 = vst.msk [vmem:[%s264 + $0x8] sm:$0xff] %vm886, %v1633
        %1658 = vst.msk [vmem:[%s264 + $0x10] sm:$0xff] %vm886, %v1634
        %1659 = vst.msk [vmem:[%s264 + $0x18] sm:$0xff] %vm886, %v1635
        %1660 = vst.msk [vmem:[%s264 + $0x20] sm:$0xff] %vm886, %v1636
        %1661 = vst.msk [vmem:[%s264 + $0x28] sm:$0xff] %vm886, %v1637
        %1662 = vst.msk [vmem:[%s264 + $0x30] sm:$0xff] %vm886, %v1638
        %1663 = vst.msk [vmem:[%s264 + $0x38] sm:$0xff] %vm886, %v1639
        %1664 = vst.msk [vmem:[%s264 + $0x40] sm:$0xff] %vm886, %v1640
        %1665 = vst.msk [vmem:[%s264 + $0x48] sm:$0xff] %vm886, %v1641
        %1666 = vst.msk [vmem:[%s264 + $0x50] sm:$0xff] %vm886, %v1642
        %1667 = vst.msk [vmem:[%s264 + $0x58] sm:$0xff] %vm886, %v1643
        %1668 = vst.msk [vmem:[%s264 + $0x60] sm:$0xff] %vm886, %v1644
        %1669 = vst.msk [vmem:[%s264 + $0x68] sm:$0xff] %vm886, %v1645
        %1670 = vst.msk [vmem:[%s264 + $0x70] sm:$0xff] %vm886, %v1646
        %1671 = vst.msk [vmem:[%s264 + $0x78] sm:$0xff] %vm886, %v1647
        %1672 = vst.msk [vmem:[%s264 + $0x80] sm:$0xff] %vm886, %v1648
        %1673 = vst.msk [vmem:[%s264 + $0x88] sm:$0xff] %vm886, %v1649
        %1674 = vst.msk [vmem:[%s264 + $0x90] sm:$0xff] %vm886, %v1650
        %1675 = vst.msk [vmem:[%s264 + $0x98] sm:$0xff] %vm886, %v1651
        %1676 = vst.msk [vmem:[%s264 + $0xa0] sm:$0xff] %vm886, %v1652
        %1677 = vst.msk [vmem:[%s264 + $0xa8] sm:$0xff] %vm886, %v1653
        %1678 = vst.msk [vmem:[%s264 + $0xb0] sm:$0xff] %vm886, %v1654
        %1679 = vst.msk [vmem:[%s264 + $0xb8] sm:$0xff] %vm886, %v1655
        %p1680 = scmp.lt.s32.totalorder %s18, 1
        %s1681 = scalar_select %p1680, %s18, 1
        %s1682 = smul.addr %s1681, 24
        %s1683 = smul.addr %s1682, 8
        %s1684 = scalar_lea.vmem %s5, %s1683
        // Predicated region
        $region53: #{convnet_forward.3} parent=39 // pred_check
          %p1685 = pneg %p146
        $region54: #{convnet_forward.3} parent=39 // pred_check_branch
          %1687 = sbr.rel (%p1685) target = $region56
        $region55: #{convnet_forward.3} parent=39 // pred_region
          _
        $region56: #{convnet_forward.3} parent=39 // pred_fallthru
          _
      $region40: #{convnet_forward.3} parent=5 // pred_fallthru
        _
      %p1688 = scmp.le.s32.totalorder 2, %s13
      // Predicated region
      $region57: #{convnet_forward.3} parent=5 // pred_check
        %p1689 = pneg %p1688
      $region58: #{convnet_forward.3} parent=5 // pred_check_branch
        %1691 = sbr.rel (%p1689) target = $region60
      $region59: #{convnet_forward.3} parent=5 // pred_region
        %s1692 = ssub.s32 %s13, 2
        // Predicated region
        $region61: #{convnet_forward.3} parent=59 // pred_check
          %p1693 = pneg %p152
        $region62: #{convnet_forward.3} parent=59 // pred_check_branch
          %1695 = sbr.rel (%p1693) target = $region64
        $region63: #{convnet_forward.3} parent=59 // pred_region
          %p1696 = scmp.lt.s32.totalorder %s19, 1
          %s1697 = scalar_select %p1696, %s19, 1
          %s1698 = smul.addr %s1697, 24
          %s1699 = smul.addr %s1698, 8
          %s1700 = scalar_lea.vmem %s5, %s1699
        $region64: #{convnet_forward.3} parent=59 // pred_fallthru
          _
      $region60: #{convnet_forward.3} parent=5 // pred_fallthru
        _
    $region6: #{convnet_forward.3} parent=1 // loop_footer
      %s17 = sadd.s32 1, %s13
    $region7: #{convnet_forward.3} parent=1 // loop_footer_branch
      %12 = sbr.rel target = $region3
    $region8: #{convnet_forward.3} parent=1 // loop_exit
      _
    %1701 = vsyncpa [#allocation4], 1
    %s1702 = scalar_lea.sflag [#allocation4], 1
    %1703 = vsyncpa %s1702, 1
    %1704 = vsyncpa [#allocation6], 1

// kernel: convnet_forward.4
$region0: #{convnet_forward.4}
  #allocation0 [shape = 'u32[]', space=smem, size = 0x4, offset = 0x4, fixed_abs, tag = 'smem constant byte address 0x4 - core index']
  #allocation1 [shape = 'u32[144,128]{1,0:T(1,128)}', space=vmem, size = 0x12000, scoped, tag = 'internal scratch']
  %s0 = inlined_call_operand.vmem [shape: f32[2,9216], index: 0, kind: input, shape index: {}]
  %s1 = inlined_call_operand.hbm [shape: bf16[9216,512], index: 1, kind: input, shape index: {}]
  %s2 = inlined_call_operand.hbm [shape: f32[1,512], index: 2, kind: input, shape index: {}]
  %s3 = inlined_call_operand.vmem [shape: f32[2,512], index: 3, kind: output, shape index: {}]
  %s4 = sld [smem:[#allocation0]]
  $region53: #{convnet_forward.4} parent=0
    _
  %s6 = ssub.s32 1, %s4
  %s7 = scalar_select 0, %s6, %s4
  $region1: #{convnet_forward.4} parent=0
    #allocation2 [shape = 'u8[9437184]{0}', space=vmem, size = 0x900000, scoped, tag = 'input window, operand 1']
    #allocation3 [shape = 's32[2]{0}', space=sflag, size = 0x8, scoped, tag = 'scoped memory for convnet_forward.4']
    #allocation4 [shape = 'u8[2048]{0}', space=vmem, size = 0x800, scoped, tag = 'input window, operand 2']
    #allocation5 [shape = 's32[2]{0}', space=sflag, size = 0x8, scoped, tag = 'scoped memory for convnet_forward.4']
    %8 = vsyncpa [#allocation3], 0
    %s9 = scalar_lea.sflag [#allocation3], 1
    %10 = vsyncpa %s9, 0
    %11 = vsyncpa [#allocation5], 0
    %s12 = scalar_lea.sflag [#allocation5], 1
    %13 = vsyncpa %s12, 0
    loop: start=0, step=1, limit=4
    $region2: #{convnet_forward.4} parent=1 // loop_pre_header
      _
    $region3: #{convnet_forward.4} parent=1 // loop_header
      %s15 = sphi 0, %s19
      %p16 = scmp.ge.s32.totalorder %s15, 4
      %s23 = sphi 0, %s23
      %s25 = sphi 0, %s23
      %s26 = sphi 0, %s25
      %s40 = sphi 0, %s26
      %s46 = sphi 0, %s48
      %s49 = sphi 0, %s46
      %s50 = sphi 0, %s49
      %s66 = sphi 0, %s50
      %s72 = sphi 0, %s74
      %s75 = sphi 0, %s72
      %s76 = sphi 0, %s75
      %s92 = sphi 0, %s76
      %s98 = sphi 0, %s100
      %s101 = sphi 0, %s98
      %s102 = sphi 0, %s101
      %s118 = sphi 0, %s102
    $region4: #{convnet_forward.4} parent=1 // loop_header_branch
      %18 = sbr.rel (%p16) target = $region8
    $region5: #{convnet_forward.4} parent=1 // loop_body
      %s20 = ssub.s32 %s15, 1
      %s21 = ssub.s32 %s15, 2
      %s22 = sadd.s32 %s15, 1
      %s24 = sadd.s32 %s23, 1
      %p27 = scmp.eq.s32.totalorder %s15, 1
      %p28 = scmp.ne.s32.totalorder %s23, %s25
      %p29 = scmp.eq.s32.totalorder %s15, 0
      %p30 = por %p28, %p29
      %p31 = scmp.ne.s32.totalorder %s23, %s25
      %p32 = scmp.eq.s32.totalorder %s20, 1
      %p33 = por %p31, %p32
      %p34 = scmp.ne.s32.totalorder %s25, %s26
      %p35 = scmp.eq.s32.totalorder %s20, 0
      %p36 = por %p34, %p35
      %p37 = scmp.ne.s32.totalorder %s25, %s26
      %p38 = scmp.eq.s32.totalorder %s21, 1
      %p39 = por %p37, %p38
      %p41 = scmp.ne.s32.totalorder %s26, %s40
      %p42 = scmp.eq.s32.totalorder %s21, 0
      %p43 = por %p41, %p42
      %s44 = ssub.s32 %s15, %s22
      %p45 = scmp.eq.s32.totalorder %s44, 0
      %s47 = sadd.s32 %s46, 1
      %s48 = scalar_select %p45, %s46, %s47
      %p51 = pneg %p45
      %p52 = scmp.eq.s32.totalorder %s15, 1
      %p53 = por %p51, %p52
      %p54 = scmp.ne.s32.totalorder %s46, %s49
      %p55 = scmp.eq.s32.totalorder %s15, 0
      %p56 = por %p54, %p55
      %p57 = scmp.ne.s32.totalorder %s46, %s49
      %p58 = scmp.eq.s32.totalorder %s20, 1
      %p59 = por %p57, %p58
      %p60 = scmp.ne.s32.totalorder %s49, %s50
      %p61 = scmp.eq.s32.totalorder %s20, 0
      %p62 = por %p60, %p61
      %p63 = scmp.ne.s32.totalorder %s49, %s50
      %p64 = scmp.eq.s32.totalorder %s21, 1
      %p65 = por %p63, %p64
      %p67 = scmp.ne.s32.totalorder %s50, %s66
      %p68 = scmp.eq.s32.totalorder %s21, 0
      %p69 = por %p67, %p68
      %s70 = ssub.s32 %s15, %s22
      %p71 = scmp.eq.s32.totalorder %s70, 0
      %s73 = sadd.s32 %s72, 1
      %s74 = scalar_select %p71, %s72, %s73
      %p77 = pneg %p71
      %p78 = scmp.eq.s32.totalorder %s15, 1
      %p79 = por %p77, %p78
      %p80 = scmp.ne.s32.totalorder %s72, %s75
      %p81 = scmp.eq.s32.totalorder %s15, 0
      %p82 = por %p80, %p81
      %p83 = scmp.ne.s32.totalorder %s72, %s75
      %p84 = scmp.eq.s32.totalorder %s20, 1
      %p85 = por %p83, %p84
      %p86 = scmp.ne.s32.totalorder %s75, %s76
      %p87 = scmp.eq.s32.totalorder %s20, 0
      %p88 = por %p86, %p87
      %p89 = scmp.ne.s32.totalorder %s75, %s76
      %p90 = scmp.eq.s32.totalorder %s21, 1
      %p91 = por %p89, %p90
      %p93 = scmp.ne.s32.totalorder %s76, %s92
      %p94 = scmp.eq.s32.totalorder %s21, 0
      %p95 = por %p93, %p94
      %s96 = ssub.s32 %s15, %s22
      %p97 = scmp.eq.s32.totalorder %s96, 0
      %s99 = sadd.s32 %s98, 1
      %s100 = scalar_select %p97, %s98, %s99
      %p103 = pneg %p97
      %p104 = scmp.eq.s32.totalorder %s15, 1
      %p105 = por %p103, %p104
      %p106 = scmp.ne.s32.totalorder %s98, %s101
      %p107 = scmp.eq.s32.totalorder %s15, 0
      %p108 = por %p106, %p107
      %p109 = scmp.ne.s32.totalorder %s98, %s101
      %p110 = scmp.eq.s32.totalorder %s20, 1
      %p111 = por %p109, %p110
      %p112 = scmp.ne.s32.totalorder %s101, %s102
      %p113 = scmp.eq.s32.totalorder %s20, 0
      %p114 = por %p112, %p113
      %p115 = scmp.ne.s32.totalorder %s101, %s102
      %p116 = scmp.eq.s32.totalorder %s21, 1
      %p117 = por %p115, %p116
      %p119 = scmp.ne.s32.totalorder %s102, %s118
      %p120 = scmp.eq.s32.totalorder %s21, 0
      %p121 = por %p119, %p120
      %p122 = scmp.le.s32.totalorder 1, %s15
      %p123 = scmp.lt.s32.totalorder %s15, 3
      %p124 = pnand %p122, %p123
      %p125 = pneg %p124
      // Predicated region
      $region9: #{convnet_forward.4} parent=5 // pred_check
        _
      $region10: #{convnet_forward.4} parent=5 // pred_check_branch
        %127 = sbr.rel (%p124) target = $region12
      $region11: #{convnet_forward.4} parent=5 // pred_region
        %s128 = ssub.s32 %s15, 1
        // Predicated region
        $region13: #{convnet_forward.4} parent=11 // pred_check
          %p129 = pneg %p36
        $region14: #{convnet_forward.4} parent=11 // pred_check_branch
          %131 = sbr.rel (%p129) target = $region16
        $region15: #{convnet_forward.4} parent=11 // pred_region
          _
        $region16: #{convnet_forward.4} parent=11 // pred_fallthru
          _
      $region12: #{convnet_forward.4} parent=5 // pred_fallthru
        _
      %p132 = scmp.lt.s32.totalorder %s15, 2
      // Predicated region
      $region17: #{convnet_forward.4} parent=5 // pred_check
        %p133 = pneg %p132
      $region18: #{convnet_forward.4} parent=5 // pred_check_branch
        %135 = sbr.rel (%p133) target = $region20
      $region19: #{convnet_forward.4} parent=5 // pred_region
        // Predicated region
        $region21: #{convnet_forward.4} parent=19 // pred_check
          %p136 = pneg %p56
        $region22: #{convnet_forward.4} parent=19 // pred_check_branch
          %138 = sbr.rel (%p136) target = $region24
        $region23: #{convnet_forward.4} parent=19 // pred_region
          %s139 = sand.u32 %s46, 1
          %s140 = scalar_lea.sflag [#allocation3], %s139
          %s141 = sand.u32 %s46, 1
          %s142 = smul.addr %s141, 9216
          %s143 = scalar_lea.vmem [#allocation2], %s142
          %s144 = smul.u32 2, %s15
          %s146 = ssub.s32 147456, 147456
          %147 = vsyncadd %s140, %s146
          %s148 = smul.addr %s144, 64
          %s149 = scalar_lea.hbm %s1, %s148
          %s150 = sshll.u32 %s143, 4
          %s151 = int_to_ptr.vmem [resolvable:$true] %s150
          %156 = dma.hbm_to_vmem [thread:$0]  %s149, 147456, %s151, %s140, 256, 128, 8
        $region24: #{convnet_forward.4} parent=19 // pred_fallthru
          _
        // Predicated region
        $region25: #{convnet_forward.4} parent=19 // pred_check
          %p157 = pneg %p82
        $region26: #{convnet_forward.4} parent=19 // pred_check_branch
          %159 = sbr.rel (%p157) target = $region28
        $region27: #{convnet_forward.4} parent=19 // pred_region
          %s160 = sand.u32 %s72, 1
          %s161 = scalar_lea.sflag [#allocation5], %s160
          %s162 = sand.u32 %s72, 1
          %s163 = smul.addr %s162, 2
          %s164 = scalar_lea.vmem [#allocation4], %s163
          %s165 = smul.u32 2, %s15
          %s167 = ssub.s32 32, 32
          %168 = vsyncadd %s161, %s167
          %s169 = smul.addr %s165, 16
          %s170 = scalar_lea.hbm %s2, %s169
          %s172 = sshll.u32 %s164, 4
          %s173 = int_to_ptr.vmem [resolvable:$true] %s172
          %175 = dma.hbm_to_vmem [thread:$0]  %s170, 32, %s173, %s161
        $region28: #{convnet_forward.4} parent=19 // pred_fallthru
          _
      $region20: #{convnet_forward.4} parent=5 // pred_fallthru
        _
      %p176 = scmp.le.s32.totalorder 1, %s15
      %p177 = scmp.lt.s32.totalorder %s15, 3
      %p178 = pnand %p176, %p177
      %p179 = pneg %p178
      // Predicated region
      $region29: #{convnet_forward.4} parent=5 // pred_check
        _
      $region30: #{convnet_forward.4} parent=5 // pred_check_branch
        %181 = sbr.rel (%p178) target = $region32
      $region31: #{convnet_forward.4} parent=5 // pred_region
        %s182 = ssub.s32 %s15, 1
        %s183 = sand.u32 %s49, 1
        %s184 = scalar_lea.sflag [#allocation3], %s183
        %s185 = sand.u32 %s49, 1
        %s186 = smul.addr %s185, 9216
        %s187 = scalar_lea.vmem [#allocation2], %s186
        // Predicated region
        $region33: #{convnet_forward.4} parent=31 // pred_check
          %p188 = pneg %p62
        $region34: #{convnet_forward.4} parent=31 // pred_check_branch
          %190 = sbr.rel (%p188) target = $region36
        $region35: #{convnet_forward.4} parent=31 // pred_region
          %191 = dma.done %s184, 147456
        $region36: #{convnet_forward.4} parent=31 // pred_fallthru
          _
        %s192 = sand.u32 %s75, 1
        %s193 = scalar_lea.sflag [#allocation5], %s192
        %s194 = sand.u32 %s75, 1
        %s195 = smul.addr %s194, 2
        %s196 = scalar_lea.vmem [#allocation4], %s195
        // Predicated region
        $region37: #{convnet_forward.4} parent=31 // pred_check
          %p197 = pneg %p88
        $region38: #{convnet_forward.4} parent=31 // pred_check_branch
          %199 = sbr.rel (%p197) target = $region40
        $region39: #{convnet_forward.4} parent=31 // pred_region
          %200 = dma.done %s193, 32
        $region40: #{convnet_forward.4} parent=31 // pred_fallthru
          _
        %p201 = pneg %p36
        %p202 = pneg %p33
        %s203 = sand.u32 %s49, 1
        %s204 = scalar_lea.sflag [#allocation3], %s203
        %s205 = sand.u32 %s49, 1
        %s206 = smul.addr %s205, 9216
        %s207 = scalar_lea.vmem [#allocation2], %s206
        %p208 = pneg %p62
        %p209 = pneg %p59
        %s210 = sand.u32 %s75, 1
        %s211 = scalar_lea.sflag [#allocation5], %s210
        %s212 = sand.u32 %s75, 1
        %s213 = smul.addr %s212, 2
        %s214 = scalar_lea.vmem [#allocation4], %s213
        %p215 = pneg %p88
        %p216 = pneg %p85
        %p217 = pneg %p114
        %p218 = pneg %p111
        %s219 = smul.u32 2, %s20
        %p220 = scmp.lt.s32.totalorder %s219, 3
        %s221 = scalar_select %p220, %s219, 3
        %s222 = smul.addr %s221, 2
        %s223 = scalar_lea.vmem %s3, %s222
        %s224 = smul.u32 2, %s20
        %s225 = smul.u32 2, %s20
        %s226 = smul.u32 2, %s20
        %p227 = scmp.lt.s32.totalorder %s226, 3
        %s228 = scalar_select %p227, %s226, 3
        %s229 = smul.addr %s228, 2
        %s230 = scalar_lea.vmem %s3, %s229
        %s231 = smul.u32 2, %s20
        %v232 = vld [vmem:[%s0] sm:$0xff]
        %v233 = vld [vmem:[%s0 + $0x8] sm:$0xff]
        %v234 = vld [vmem:[%s0 + $0x10] sm:$0xff]
        %v235 = vld [vmem:[%s0 + $0x18] sm:$0xff]
        %v236 = vld [vmem:[%s0 + $0x20] sm:$0xff]
        %v237 = vld [vmem:[%s0 + $0x28] sm:$0xff]
        %v238 = vld [vmem:[%s0 + $0x30] sm:$0xff]
        %v239 = vld [vmem:[%s0 + $0x38] sm:$0xff]
        %v240 = vld [vmem:[%s0 + $0x40] sm:$0xff]
        %v241 = vld [vmem:[%s0 + $0x48] sm:$0xff]
        %v242 = vld [vmem:[%s0 + $0x50] sm:$0xff]
        %v243 = vld [vmem:[%s0 + $0x58] sm:$0xff]
        %v244 = vld [vmem:[%s0 + $0x60] sm:$0xff]
        %v245 = vld [vmem:[%s0 + $0x68] sm:$0xff]
        %v246 = vld [vmem:[%s0 + $0x70] sm:$0xff]
        %v247 = vld [vmem:[%s0 + $0x78] sm:$0xff]
        %v248 = vld [vmem:[%s0 + $0x80] sm:$0xff]
        %v249 = vld [vmem:[%s0 + $0x88] sm:$0xff]
        %v268 = vcombine.high %v232, %v232
        %v270 = vunpack.c.l.s4 1983009808
        %v271 = vunpack.c.0.s8 %v270
        %v272 = vlaneseq
        %v273 = vshrl.u32 %v272, 7
        %v274 = vsub.s32 %v271, %v273
        %v275 = vrot.slane %v232, %v274
        %v277 = vunpack.c.l.s4 1983009808
        %v278 = vunpack.c.0.s8 %v277
        %v279 = vlaneseq
        %v280 = vshrl.u32 %v279, 7
        %v281 = vsub.s32 %v278, %v280
        %v282 = vrot.slane %v268, %v281
        %v283 = vcombine.high %v275, %v275
        %v284 = vcombine.high %v282, %v282
        %v285 = vcombine.high %v233, %v233
        %v287 = vunpack.c.l.s4 1983009808
        %v288 = vunpack.c.0.s8 %v287
        %v289 = vlaneseq
        %v290 = vshrl.u32 %v289, 7
        %v291 = vsub.s32 %v288, %v290
        %v292 = vrot.slane %v233, %v291
        %v294 = vunpack.c.l.s4 1983009808
        %v295 = vunpack.c.0.s8 %v294
        %v296 = vlaneseq
        %v297 = vshrl.u32 %v296, 7
        %v298 = vsub.s32 %v295, %v297
        %v299 = vrot.slane %v285, %v298
        %v300 = vcombine.high %v292, %v292
        %v301 = vcombine.high %v299, %v299
        %v302 = vcombine.high %v234, %v234
        %v304 = vunpack.c.l.s4 1983009808
        %v305 = vunpack.c.0.s8 %v304
        %v306 = vlaneseq
        %v307 = vshrl.u32 %v306, 7
        %v308 = vsub.s32 %v305, %v307
        %v309 = vrot.slane %v234, %v308
        %v311 = vunpack.c.l.s4 1983009808
        %v312 = vunpack.c.0.s8 %v311
        %v313 = vlaneseq
        %v314 = vshrl.u32 %v313, 7
        %v315 = vsub.s32 %v312, %v314
        %v316 = vrot.slane %v302, %v315
        %v317 = vcombine.high %v309, %v309
        %v318 = vcombine.high %v316, %v316
        %v319 = vcombine.high %v235, %v235
        %v321 = vunpack.c.l.s4 1983009808
        %v322 = vunpack.c.0.s8 %v321
        %v323 = vlaneseq
        %v324 = vshrl.u32 %v323, 7
        %v325 = vsub.s32 %v322, %v324
        %v326 = vrot.slane %v235, %v325
        %v328 = vunpack.c.l.s4 1983009808
        %v329 = vunpack.c.0.s8 %v328
        %v330 = vlaneseq
        %v331 = vshrl.u32 %v330, 7
        %v332 = vsub.s32 %v329, %v331
        %v333 = vrot.slane %v319, %v332
        %v334 = vcombine.high %v326, %v326
        %v335 = vcombine.high %v333, %v333
        %v336 = vcombine.high %v236, %v236
        %v338 = vunpack.c.l.s4 1983009808
        %v339 = vunpack.c.0.s8 %v338
        %v340 = vlaneseq
        %v341 = vshrl.u32 %v340, 7
        %v342 = vsub.s32 %v339, %v341
        %v343 = vrot.slane %v236, %v342
        %v345 = vunpack.c.l.s4 1983009808
        %v346 = vunpack.c.0.s8 %v345
        %v347 = vlaneseq
        %v348 = vshrl.u32 %v347, 7
        %v349 = vsub.s32 %v346, %v348
        %v350 = vrot.slane %v336, %v349
        %v351 = vcombine.high %v343, %v343
        %v352 = vcombine.high %v350, %v350
        %v353 = vcombine.high %v237, %v237
        %v355 = vunpack.c.l.s4 1983009808
        %v356 = vunpack.c.0.s8 %v355
        %v357 = vlaneseq
        %v358 = vshrl.u32 %v357, 7
        %v359 = vsub.s32 %v356, %v358
        %v360 = vrot.slane %v237, %v359
        %v362 = vunpack.c.l.s4 1983009808
        %v363 = vunpack.c.0.s8 %v362
        %v364 = vlaneseq
        %v365 = vshrl.u32 %v364, 7
        %v366 = vsub.s32 %v363, %v365
        %v367 = vrot.slane %v353, %v366
        %v368 = vcombine.high %v360, %v360
        %v369 = vcombine.high %v367, %v367
        %v370 = vcombine.high %v238, %v238
        %v372 = vunpack.c.l.s4 1983009808
        %v373 = vunpack.c.0.s8 %v372
        %v374 = vlaneseq
        %v375 = vshrl.u32 %v374, 7
        %v376 = vsub.s32 %v373, %v375
        %v377 = vrot.slane %v238, %v376
        %v379 = vunpack.c.l.s4 1983009808
        %v380 = vunpack.c.0.s8 %v379
        %v381 = vlaneseq
        %v382 = vshrl.u32 %v381, 7
        %v383 = vsub.s32 %v380, %v382
        %v384 = vrot.slane %v370, %v383
        %v385 = vcombine.high %v377, %v377
        %v386 = vcombine.high %v384, %v384
        %v387 = vcombine.high %v239, %v239
        %v389 = vunpack.c.l.s4 1983009808
        %v390 = vunpack.c.0.s8 %v389
        %v391 = vlaneseq
        %v392 = vshrl.u32 %v391, 7
        %v393 = vsub.s32 %v390, %v392
        %v394 = vrot.slane %v239, %v393
        %v396 = vunpack.c.l.s4 1983009808
        %v397 = vunpack.c.0.s8 %v396
        %v398 = vlaneseq
        %v399 = vshrl.u32 %v398, 7
        %v400 = vsub.s32 %v397, %v399
        %v401 = vrot.slane %v387, %v400
        %v402 = vcombine.high %v394, %v394
        %v403 = vcombine.high %v401, %v401
        %v404 = vcombine.high %v240, %v240
        %v406 = vunpack.c.l.s4 1983009808
        %v407 = vunpack.c.0.s8 %v406
        %v408 = vlaneseq
        %v409 = vshrl.u32 %v408, 7
        %v410 = vsub.s32 %v407, %v409
        %v411 = vrot.slane %v240, %v410
        %v413 = vunpack.c.l.s4 1983009808
        %v414 = vunpack.c.0.s8 %v413
        %v415 = vlaneseq
        %v416 = vshrl.u32 %v415, 7
        %v417 = vsub.s32 %v414, %v416
        %v418 = vrot.slane %v404, %v417
        %v419 = vcombine.high %v411, %v411
        %v420 = vcombine.high %v418, %v418
        %v421 = vcombine.high %v241, %v241
        %v423 = vunpack.c.l.s4 1983009808
        %v424 = vunpack.c.0.s8 %v423
        %v425 = vlaneseq
        %v426 = vshrl.u32 %v425, 7
        %v427 = vsub.s32 %v424, %v426
        %v428 = vrot.slane %v241, %v427
        %v430 = vunpack.c.l.s4 1983009808
        %v431 = vunpack.c.0.s8 %v430
        %v432 = vlaneseq
        %v433 = vshrl.u32 %v432, 7
        %v434 = vsub.s32 %v431, %v433
        %v435 = vrot.slane %v421, %v434
        %v436 = vcombine.high %v428, %v428
        %v437 = vcombine.high %v435, %v435
        %v438 = vcombine.high %v242, %v242
        %v440 = vunpack.c.l.s4 1983009808
        %v441 = vunpack.c.0.s8 %v440
        %v442 = vlaneseq
        %v443 = vshrl.u32 %v442, 7
        %v444 = vsub.s32 %v441, %v443
        %v445 = vrot.slane %v242, %v444
        %v447 = vunpack.c.l.s4 1983009808
        %v448 = vunpack.c.0.s8 %v447
        %v449 = vlaneseq
        %v450 = vshrl.u32 %v449, 7
        %v451 = vsub.s32 %v448, %v450
        %v452 = vrot.slane %v438, %v451
        %v453 = vcombine.high %v445, %v445
        %v454 = vcombine.high %v452, %v452
        %v455 = vcombine.high %v243, %v243
        %v457 = vunpack.c.l.s4 1983009808
        %v458 = vunpack.c.0.s8 %v457
        %v459 = vlaneseq
        %v460 = vshrl.u32 %v459, 7
        %v461 = vsub.s32 %v458, %v460
        %v462 = vrot.slane %v243, %v461
        %v464 = vunpack.c.l.s4 1983009808
        %v465 = vunpack.c.0.s8 %v464
        %v466 = vlaneseq
        %v467 = vshrl.u32 %v466, 7
        %v468 = vsub.s32 %v465, %v467
        %v469 = vrot.slane %v455, %v468
        %v470 = vcombine.high %v462, %v462
        %v471 = vcombine.high %v469, %v469
        %v472 = vcombine.high %v244, %v244
        %v474 = vunpack.c.l.s4 1983009808
        %v475 = vunpack.c.0.s8 %v474
        %v476 = vlaneseq
        %v477 = vshrl.u32 %v476, 7
        %v478 = vsub.s32 %v475, %v477
        %v479 = vrot.slane %v244, %v478
        %v481 = vunpack.c.l.s4 1983009808
        %v482 = vunpack.c.0.s8 %v481
        %v483 = vlaneseq
        %v484 = vshrl.u32 %v483, 7
        %v485 = vsub.s32 %v482, %v484
        %v486 = vrot.slane %v472, %v485
        %v487 = vcombine.high %v479, %v479
        %v488 = vcombine.high %v486, %v486
        %v489 = vcombine.high %v245, %v245
        %v491 = vunpack.c.l.s4 1983009808
        %v492 = vunpack.c.0.s8 %v491
        %v493 = vlaneseq
        %v494 = vshrl.u32 %v493, 7
        %v495 = vsub.s32 %v492, %v494
        %v496 = vrot.slane %v245, %v495
        %v498 = vunpack.c.l.s4 1983009808
        %v499 = vunpack.c.0.s8 %v498
        %v500 = vlaneseq
        %v501 = vshrl.u32 %v500, 7
        %v502 = vsub.s32 %v499, %v501
        %v503 = vrot.slane %v489, %v502
        %v504 = vcombine.high %v496, %v496
        %v505 = vcombine.high %v503, %v503
        %v506 = vcombine.high %v246, %v246
        %v508 = vunpack.c.l.s4 1983009808
        %v509 = vunpack.c.0.s8 %v508
        %v510 = vlaneseq
        %v511 = vshrl.u32 %v510, 7
        %v512 = vsub.s32 %v509, %v511
        %v513 = vrot.slane %v246, %v512
        %v515 = vunpack.c.l.s4 1983009808
        %v516 = vunpack.c.0.s8 %v515
        %v517 = vlaneseq
        %v518 = vshrl.u32 %v517, 7
        %v519 = vsub.s32 %v516, %v518
        %v520 = vrot.slane %v506, %v519
        %v521 = vcombine.high %v513, %v513
        %v522 = vcombine.high %v520, %v520
        %v523 = vcombine.high %v247, %v247
        %v525 = vunpack.c.l.s4 1983009808
        %v526 = vunpack.c.0.s8 %v525
        %v527 = vlaneseq
        %v528 = vshrl.u32 %v527, 7
        %v529 = vsub.s32 %v526, %v528
        %v530 = vrot.slane %v247, %v529
        %v532 = vunpack.c.l.s4 1983009808
        %v533 = vunpack.c.0.s8 %v532
        %v534 = vlaneseq
        %v535 = vshrl.u32 %v534, 7
        %v536 = vsub.s32 %v533, %v535
        %v537 = vrot.slane %v523, %v536
        %v538 = vcombine.high %v530, %v530
        %v539 = vcombine.high %v537, %v537
        %v540 = vcombine.high %v248, %v248
        %v542 = vunpack.c.l.s4 1983009808
        %v543 = vunpack.c.0.s8 %v542
        %v544 = vlaneseq
        %v545 = vshrl.u32 %v544, 7
        %v546 = vsub.s32 %v543, %v545
        %v547 = vrot.slane %v248, %v546
        %v549 = vunpack.c.l.s4 1983009808
        %v550 = vunpack.c.0.s8 %v549
        %v551 = vlaneseq
        %v552 = vshrl.u32 %v551, 7
        %v553 = vsub.s32 %v550, %v552
        %v554 = vrot.slane %v540, %v553
        %v555 = vcombine.high %v547, %v547
        %v556 = vcombine.high %v554, %v554
        %v557 = vcombine.high %v249, %v249
        %v559 = vunpack.c.l.s4 1983009808
        %v560 = vunpack.c.0.s8 %v559
        %v561 = vlaneseq
        %v562 = vshrl.u32 %v561, 7
        %v563 = vsub.s32 %v560, %v562
        %v564 = vrot.slane %v249, %v563
        %v566 = vunpack.c.l.s4 1983009808
        %v567 = vunpack.c.0.s8 %v566
        %v568 = vlaneseq
        %v569 = vshrl.u32 %v568, 7
        %v570 = vsub.s32 %v567, %v569
        %v571 = vrot.slane %v557, %v570
        %v572 = vcombine.high %v564, %v564
        %v573 = vcombine.high %v571, %v571
        %v646 = vpack.c.bf16 %v275, %v275
        %v647 = vpack.c.bf16 %v283, %v283
        %v648 = vpack.c.bf16 %v282, %v282
        %v649 = vpack.c.bf16 %v284, %v284
        %v650 = vpack.c.bf16 %v292, %v292
        %v651 = vpack.c.bf16 %v300, %v300
        %v652 = vpack.c.bf16 %v299, %v299
        %v653 = vpack.c.bf16 %v301, %v301
        %v654 = vpack.c.bf16 %v309, %v309
        %v655 = vpack.c.bf16 %v317, %v317
        %v656 = vpack.c.bf16 %v316, %v316
        %v657 = vpack.c.bf16 %v318, %v318
        %v658 = vpack.c.bf16 %v326, %v326
        %v659 = vpack.c.bf16 %v334, %v334
        %v660 = vpack.c.bf16 %v333, %v333
        %v661 = vpack.c.bf16 %v335, %v335
        %v662 = vpack.c.bf16 %v343, %v343
        %v663 = vpack.c.bf16 %v351, %v351
        %v664 = vpack.c.bf16 %v350, %v350
        %v665 = vpack.c.bf16 %v352, %v352
        %v666 = vpack.c.bf16 %v360, %v360
        %v667 = vpack.c.bf16 %v368, %v368
        %v668 = vpack.c.bf16 %v367, %v367
        %v669 = vpack.c.bf16 %v369, %v369
        %v670 = vpack.c.bf16 %v377, %v377
        %v671 = vpack.c.bf16 %v385, %v385
        %v672 = vpack.c.bf16 %v384, %v384
        %v673 = vpack.c.bf16 %v386, %v386
        %v674 = vpack.c.bf16 %v394, %v394
        %v675 = vpack.c.bf16 %v402, %v402
        %v676 = vpack.c.bf16 %v401, %v401
        %v677 = vpack.c.bf16 %v403, %v403
        %v678 = vpack.c.bf16 %v411, %v411
        %v679 = vpack.c.bf16 %v419, %v419
        %v680 = vpack.c.bf16 %v418, %v418
        %v681 = vpack.c.bf16 %v420, %v420
        %v682 = vpack.c.bf16 %v428, %v428
        %v683 = vpack.c.bf16 %v436, %v436
        %v684 = vpack.c.bf16 %v435, %v435
        %v685 = vpack.c.bf16 %v437, %v437
        %v686 = vpack.c.bf16 %v445, %v445
        %v687 = vpack.c.bf16 %v453, %v453
        %v688 = vpack.c.bf16 %v452, %v452
        %v689 = vpack.c.bf16 %v454, %v454
        %v690 = vpack.c.bf16 %v462, %v462
        %v691 = vpack.c.bf16 %v470, %v470
        %v692 = vpack.c.bf16 %v469, %v469
        %v693 = vpack.c.bf16 %v471, %v471
        %v694 = vpack.c.bf16 %v479, %v479
        %v695 = vpack.c.bf16 %v487, %v487
        %v696 = vpack.c.bf16 %v486, %v486
        %v697 = vpack.c.bf16 %v488, %v488
        %v698 = vpack.c.bf16 %v496, %v496
        %v699 = vpack.c.bf16 %v504, %v504
        %v700 = vpack.c.bf16 %v503, %v503
        %v701 = vpack.c.bf16 %v505, %v505
        %v702 = vpack.c.bf16 %v513, %v513
        %v703 = vpack.c.bf16 %v521, %v521
        %v704 = vpack.c.bf16 %v520, %v520
        %v705 = vpack.c.bf16 %v522, %v522
        %v706 = vpack.c.bf16 %v530, %v530
        %v707 = vpack.c.bf16 %v538, %v538
        %v708 = vpack.c.bf16 %v537, %v537
        %v709 = vpack.c.bf16 %v539, %v539
        %v710 = vpack.c.bf16 %v547, %v547
        %v711 = vpack.c.bf16 %v555, %v555
        %v712 = vpack.c.bf16 %v554, %v554
        %v713 = vpack.c.bf16 %v556, %v556
        %v714 = vpack.c.bf16 %v564, %v564
        %v715 = vpack.c.bf16 %v572, %v572
        %v716 = vpack.c.bf16 %v571, %v571
        %v717 = vpack.c.bf16 %v573, %v573
        %v718 = vld [vmem:[%s187] sm:$0xff]
        %v719 = vld [vmem:[%s187 + $0x8] sm:$0xff]
        %v720 = vld [vmem:[%s187 + $0x10] sm:$0xff]
        %v721 = vld [vmem:[%s187 + $0x18] sm:$0xff]
        %v722 = vld [vmem:[%s187 + $0x20] sm:$0xff]
        %v723 = vld [vmem:[%s187 + $0x28] sm:$0xff]
        %v724 = vld [vmem:[%s187 + $0x30] sm:$0xff]
        %v725 = vld [vmem:[%s187 + $0x38] sm:$0xff]
        %v726 = vld [vmem:[%s187 + $0x40] sm:$0xff]
        %v727 = vld [vmem:[%s187 + $0x48] sm:$0xff]
        %v728 = vld [vmem:[%s187 + $0x50] sm:$0xff]
        %v729 = vld [vmem:[%s187 + $0x58] sm:$0xff]
        %v730 = vld [vmem:[%s187 + $0x60] sm:$0xff]
        %v731 = vld [vmem:[%s187 + $0x68] sm:$0xff]
        %v732 = vld [vmem:[%s187 + $0x70] sm:$0xff]
        %v733 = vld [vmem:[%s187 + $0x78] sm:$0xff]
        %v734 = vld [vmem:[%s187 + $0x80] sm:$0xff]
        %v735 = vld [vmem:[%s187 + $0x88] sm:$0xff]
        %v736 = vld [vmem:[%s187 + $0x90] sm:$0xff]
        %v737 = vld [vmem:[%s187 + $0x98] sm:$0xff]
        %v738 = vld [vmem:[%s187 + $0xa0] sm:$0xff]
        %v739 = vld [vmem:[%s187 + $0xa8] sm:$0xff]
        %v740 = vld [vmem:[%s187 + $0xb0] sm:$0xff]
        %v741 = vld [vmem:[%s187 + $0xb8] sm:$0xff]
        %v742 = vld [vmem:[%s187 + $0xc0] sm:$0xff]
        %v743 = vld [vmem:[%s187 + $0xc8] sm:$0xff]
        %v744 = vld [vmem:[%s187 + $0xd0] sm:$0xff]
        %v745 = vld [vmem:[%s187 + $0xd8] sm:$0xff]
        %v746 = vld [vmem:[%s187 + $0xe0] sm:$0xff]
        %v747 = vld [vmem:[%s187 + $0xe8] sm:$0xff]
        %v748 = vld [vmem:[%s187 + $0xf0] sm:$0xff]
        %v749 = vld [vmem:[%s187 + $0xf8] sm:$0xff]
        %v750 = vld [vmem:[%s187 + $0x100] sm:$0xff]
        %v751 = vld [vmem:[%s187 + $0x108] sm:$0xff]
        %v752 = vld [vmem:[%s187 + $0x110] sm:$0xff]
        %v753 = vld [vmem:[%s187 + $0x118] sm:$0xff]
        %v754 = vld [vmem:[%s187 + $0x120] sm:$0xff]
        %v755 = vld [vmem:[%s187 + $0x128] sm:$0xff]
        %v756 = vld [vmem:[%s187 + $0x130] sm:$0xff]
        %v757 = vld [vmem:[%s187 + $0x138] sm:$0xff]
        %v758 = vld [vmem:[%s187 + $0x140] sm:$0xff]
        %v759 = vld [vmem:[%s187 + $0x148] sm:$0xff]
        %v760 = vld [vmem:[%s187 + $0x150] sm:$0xff]
        %v761 = vld [vmem:[%s187 + $0x158] sm:$0xff]
        %v762 = vld [vmem:[%s187 + $0x160] sm:$0xff]
        %v763 = vld [vmem:[%s187 + $0x168] sm:$0xff]
        %v764 = vld [vmem:[%s187 + $0x170] sm:$0xff]
        %v765 = vld [vmem:[%s187 + $0x178] sm:$0xff]
        %v766 = vld [vmem:[%s187 + $0x180] sm:$0xff]
        %v767 = vld [vmem:[%s187 + $0x188] sm:$0xff]
        %v768 = vld [vmem:[%s187 + $0x190] sm:$0xff]
        %v769 = vld [vmem:[%s187 + $0x198] sm:$0xff]
        %v770 = vld [vmem:[%s187 + $0x1a0] sm:$0xff]
        %v771 = vld [vmem:[%s187 + $0x1a8] sm:$0xff]
        %v772 = vld [vmem:[%s187 + $0x1b0] sm:$0xff]
        %v773 = vld [vmem:[%s187 + $0x1b8] sm:$0xff]
        %v774 = vld [vmem:[%s187 + $0x1c0] sm:$0xff]
        %v775 = vld [vmem:[%s187 + $0x1c8] sm:$0xff]
        %v776 = vld [vmem:[%s187 + $0x1d0] sm:$0xff]
        %v777 = vld [vmem:[%s187 + $0x1d8] sm:$0xff]
        %v778 = vld [vmem:[%s187 + $0x1e0] sm:$0xff]
        %v779 = vld [vmem:[%s187 + $0x1e8] sm:$0xff]
        %v780 = vld [vmem:[%s187 + $0x1f0] sm:$0xff]
        %v781 = vld [vmem:[%s187 + $0x1f8] sm:$0xff]
        %v782 = vld [vmem:[%s187 + $0x200] sm:$0xff]
        %v783 = vld [vmem:[%s187 + $0x208] sm:$0xff]
        %v784 = vld [vmem:[%s187 + $0x210] sm:$0xff]
        %v785 = vld [vmem:[%s187 + $0x218] sm:$0xff]
        %v786 = vld [vmem:[%s187 + $0x220] sm:$0xff]
        %v787 = vld [vmem:[%s187 + $0x228] sm:$0xff]
        %v788 = vld [vmem:[%s187 + $0x230] sm:$0xff]
        %v789 = vld [vmem:[%s187 + $0x238] sm:$0xff]
        %v790 = vld [vmem:[%s187 + $0x240] sm:$0xff]
        %v791 = vld [vmem:[%s187 + $0x248] sm:$0xff]
        %v792 = vld [vmem:[%s187 + $0x250] sm:$0xff]
        %v793 = vld [vmem:[%s187 + $0x258] sm:$0xff]
        %v794 = vld [vmem:[%s187 + $0x260] sm:$0xff]
        %v795 = vld [vmem:[%s187 + $0x268] sm:$0xff]
        %v796 = vld [vmem:[%s187 + $0x270] sm:$0xff]
        %v797 = vld [vmem:[%s187 + $0x278] sm:$0xff]
        %v798 = vld [vmem:[%s187 + $0x280] sm:$0xff]
        %v799 = vld [vmem:[%s187 + $0x288] sm:$0xff]
        %v800 = vld [vmem:[%s187 + $0x290] sm:$0xff]
        %v801 = vld [vmem:[%s187 + $0x298] sm:$0xff]
        %v802 = vld [vmem:[%s187 + $0x2a0] sm:$0xff]
        %v803 = vld [vmem:[%s187 + $0x2a8] sm:$0xff]
        %v804 = vld [vmem:[%s187 + $0x2b0] sm:$0xff]
        %v805 = vld [vmem:[%s187 + $0x2b8] sm:$0xff]
        %v806 = vld [vmem:[%s187 + $0x2c0] sm:$0xff]
        %v807 = vld [vmem:[%s187 + $0x2c8] sm:$0xff]
        %v808 = vld [vmem:[%s187 + $0x2d0] sm:$0xff]
        %v809 = vld [vmem:[%s187 + $0x2d8] sm:$0xff]
        %v810 = vld [vmem:[%s187 + $0x2e0] sm:$0xff]
        %v811 = vld [vmem:[%s187 + $0x2e8] sm:$0xff]
        %v812 = vld [vmem:[%s187 + $0x2f0] sm:$0xff]
        %v813 = vld [vmem:[%s187 + $0x2f8] sm:$0xff]
        %v814 = vld [vmem:[%s187 + $0x300] sm:$0xff]
        %v815 = vld [vmem:[%s187 + $0x308] sm:$0xff]
        %v816 = vld [vmem:[%s187 + $0x310] sm:$0xff]
        %v817 = vld [vmem:[%s187 + $0x318] sm:$0xff]
        %v818 = vld [vmem:[%s187 + $0x320] sm:$0xff]
        %v819 = vld [vmem:[%s187 + $0x328] sm:$0xff]
        %v820 = vld [vmem:[%s187 + $0x330] sm:$0xff]
        %v821 = vld [vmem:[%s187 + $0x338] sm:$0xff]
        %v822 = vld [vmem:[%s187 + $0x340] sm:$0xff]
        %v823 = vld [vmem:[%s187 + $0x348] sm:$0xff]
        %v824 = vld [vmem:[%s187 + $0x350] sm:$0xff]
        %v825 = vld [vmem:[%s187 + $0x358] sm:$0xff]
        %v826 = vld [vmem:[%s187 + $0x360] sm:$0xff]
        %v827 = vld [vmem:[%s187 + $0x368] sm:$0xff]
        %v828 = vld [vmem:[%s187 + $0x370] sm:$0xff]
        %v829 = vld [vmem:[%s187 + $0x378] sm:$0xff]
        %v830 = vld [vmem:[%s187 + $0x380] sm:$0xff]
        %v831 = vld [vmem:[%s187 + $0x388] sm:$0xff]
        %v832 = vld [vmem:[%s187 + $0x390] sm:$0xff]
        %v833 = vld [vmem:[%s187 + $0x398] sm:$0xff]
        %v834 = vld [vmem:[%s187 + $0x3a0] sm:$0xff]
        %v835 = vld [vmem:[%s187 + $0x3a8] sm:$0xff]
        %v836 = vld [vmem:[%s187 + $0x3b0] sm:$0xff]
        %v837 = vld [vmem:[%s187 + $0x3b8] sm:$0xff]
        %v838 = vld [vmem:[%s187 + $0x3c0] sm:$0xff]
        %v839 = vld [vmem:[%s187 + $0x3c8] sm:$0xff]
        %v840 = vld [vmem:[%s187 + $0x3d0] sm:$0xff]
        %v841 = vld [vmem:[%s187 + $0x3d8] sm:$0xff]
        %v842 = vld [vmem:[%s187 + $0x3e0] sm:$0xff]
        %v843 = vld [vmem:[%s187 + $0x3e8] sm:$0xff]
        %v844 = vld [vmem:[%s187 + $0x3f0] sm:$0xff]
        %v845 = vld [vmem:[%s187 + $0x3f8] sm:$0xff]
        %v846 = vld [vmem:[%s187 + $0x400] sm:$0xff]
        %v847 = vld [vmem:[%s187 + $0x408] sm:$0xff]
        %v848 = vld [vmem:[%s187 + $0x410] sm:$0xff]
        %v849 = vld [vmem:[%s187 + $0x418] sm:$0xff]
        %v850 = vld [vmem:[%s187 + $0x420] sm:$0xff]
        %v851 = vld [vmem:[%s187 + $0x428] sm:$0xff]
        %v852 = vld [vmem:[%s187 + $0x430] sm:$0xff]
        %v853 = vld [vmem:[%s187 + $0x438] sm:$0xff]
        %v854 = vld [vmem:[%s187 + $0x440] sm:$0xff]
        %v855 = vld [vmem:[%s187 + $0x448] sm:$0xff]
        %v856 = vld [vmem:[%s187 + $0x450] sm:$0xff]
        %v857 = vld [vmem:[%s187 + $0x458] sm:$0xff]
        %v858 = vld [vmem:[%s187 + $0x460] sm:$0xff]
        %v859 = vld [vmem:[%s187 + $0x468] sm:$0xff]
        %v860 = vld [vmem:[%s187 + $0x470] sm:$0xff]
        %v861 = vld [vmem:[%s187 + $0x478] sm:$0xff]
        %v862 = vld [vmem:[%s187 + $0x480] sm:$0xff]
        %v863 = vld [vmem:[%s187 + $0x488] sm:$0xff]
        %v864 = vld [vmem:[%s187 + $0x490] sm:$0xff]
        %v865 = vld [vmem:[%s187 + $0x498] sm:$0xff]
        %v866 = vld [vmem:[%s187 + $0x4a0] sm:$0xff]
        %v867 = vld [vmem:[%s187 + $0x4a8] sm:$0xff]
        %v868 = vld [vmem:[%s187 + $0x4b0] sm:$0xff]
        %v869 = vld [vmem:[%s187 + $0x4b8] sm:$0xff]
        %v870 = vld [vmem:[%s187 + $0x4c0] sm:$0xff]
        %v871 = vld [vmem:[%s187 + $0x4c8] sm:$0xff]
        %v872 = vld [vmem:[%s187 + $0x4d0] sm:$0xff]
        %v873 = vld [vmem:[%s187 + $0x4d8] sm:$0xff]
        %v874 = vld [vmem:[%s187 + $0x4e0] sm:$0xff]
        %v875 = vld [vmem:[%s187 + $0x4e8] sm:$0xff]
        %v876 = vld [vmem:[%s187 + $0x4f0] sm:$0xff]
        %v877 = vld [vmem:[%s187 + $0x4f8] sm:$0xff]
        %v878 = vld [vmem:[%s187 + $0x500] sm:$0xff]
        %v879 = vld [vmem:[%s187 + $0x508] sm:$0xff]
        %v880 = vld [vmem:[%s187 + $0x510] sm:$0xff]
        %v881 = vld [vmem:[%s187 + $0x518] sm:$0xff]
        %v882 = vld [vmem:[%s187 + $0x520] sm:$0xff]
        %v883 = vld [vmem:[%s187 + $0x528] sm:$0xff]
        %v884 = vld [vmem:[%s187 + $0x530] sm:$0xff]
        %v885 = vld [vmem:[%s187 + $0x538] sm:$0xff]
        %v886 = vld [vmem:[%s187 + $0x540] sm:$0xff]
        %v887 = vld [vmem:[%s187 + $0x548] sm:$0xff]
        %v888 = vld [vmem:[%s187 + $0x550] sm:$0xff]
        %v889 = vld [vmem:[%s187 + $0x558] sm:$0xff]
        %v890 = vld [vmem:[%s187 + $0x560] sm:$0xff]
        %v891 = vld [vmem:[%s187 + $0x568] sm:$0xff]
        %v892 = vld [vmem:[%s187 + $0x570] sm:$0xff]
        %v893 = vld [vmem:[%s187 + $0x578] sm:$0xff]
        %v894 = vld [vmem:[%s187 + $0x580] sm:$0xff]
        %v895 = vld [vmem:[%s187 + $0x588] sm:$0xff]
        %v896 = vld [vmem:[%s187 + $0x590] sm:$0xff]
        %v897 = vld [vmem:[%s187 + $0x598] sm:$0xff]
        %v898 = vld [vmem:[%s187 + $0x5a0] sm:$0xff]
        %v899 = vld [vmem:[%s187 + $0x5a8] sm:$0xff]
        %v900 = vld [vmem:[%s187 + $0x5b0] sm:$0xff]
        %v901 = vld [vmem:[%s187 + $0x5b8] sm:$0xff]
        %v902 = vld [vmem:[%s187 + $0x5c0] sm:$0xff]
        %v903 = vld [vmem:[%s187 + $0x5c8] sm:$0xff]
        %v904 = vld [vmem:[%s187 + $0x5d0] sm:$0xff]
        %v905 = vld [vmem:[%s187 + $0x5d8] sm:$0xff]
        %v906 = vld [vmem:[%s187 + $0x5e0] sm:$0xff]
        %v907 = vld [vmem:[%s187 + $0x5e8] sm:$0xff]
        %v908 = vld [vmem:[%s187 + $0x5f0] sm:$0xff]
        %v909 = vld [vmem:[%s187 + $0x5f8] sm:$0xff]
        %v910 = vld [vmem:[%s187 + $0x600] sm:$0xff]
        %v911 = vld [vmem:[%s187 + $0x608] sm:$0xff]
        %v912 = vld [vmem:[%s187 + $0x610] sm:$0xff]
        %v913 = vld [vmem:[%s187 + $0x618] sm:$0xff]
        %v914 = vld [vmem:[%s187 + $0x620] sm:$0xff]
        %v915 = vld [vmem:[%s187 + $0x628] sm:$0xff]
        %v916 = vld [vmem:[%s187 + $0x630] sm:$0xff]
        %v917 = vld [vmem:[%s187 + $0x638] sm:$0xff]
        %v918 = vld [vmem:[%s187 + $0x640] sm:$0xff]
        %v919 = vld [vmem:[%s187 + $0x648] sm:$0xff]
        %v920 = vld [vmem:[%s187 + $0x650] sm:$0xff]
        %v921 = vld [vmem:[%s187 + $0x658] sm:$0xff]
        %v922 = vld [vmem:[%s187 + $0x660] sm:$0xff]
        %v923 = vld [vmem:[%s187 + $0x668] sm:$0xff]
        %v924 = vld [vmem:[%s187 + $0x670] sm:$0xff]
        %v925 = vld [vmem:[%s187 + $0x678] sm:$0xff]
        %v926 = vld [vmem:[%s187 + $0x680] sm:$0xff]
        %v927 = vld [vmem:[%s187 + $0x688] sm:$0xff]
        %v928 = vld [vmem:[%s187 + $0x690] sm:$0xff]
        %v929 = vld [vmem:[%s187 + $0x698] sm:$0xff]
        %v930 = vld [vmem:[%s187 + $0x6a0] sm:$0xff]
        %v931 = vld [vmem:[%s187 + $0x6a8] sm:$0xff]
        %v932 = vld [vmem:[%s187 + $0x6b0] sm:$0xff]
        %v933 = vld [vmem:[%s187 + $0x6b8] sm:$0xff]
        %v934 = vld [vmem:[%s187 + $0x6c0] sm:$0xff]
        %v935 = vld [vmem:[%s187 + $0x6c8] sm:$0xff]
        %v936 = vld [vmem:[%s187 + $0x6d0] sm:$0xff]
        %v937 = vld [vmem:[%s187 + $0x6d8] sm:$0xff]
        %v938 = vld [vmem:[%s187 + $0x6e0] sm:$0xff]
        %v939 = vld [vmem:[%s187 + $0x6e8] sm:$0xff]
        %v940 = vld [vmem:[%s187 + $0x6f0] sm:$0xff]
        %v941 = vld [vmem:[%s187 + $0x6f8] sm:$0xff]
        %v942 = vld [vmem:[%s187 + $0x700] sm:$0xff]
        %v943 = vld [vmem:[%s187 + $0x708] sm:$0xff]
        %v944 = vld [vmem:[%s187 + $0x710] sm:$0xff]
        %v945 = vld [vmem:[%s187 + $0x718] sm:$0xff]
        %v946 = vld [vmem:[%s187 + $0x720] sm:$0xff]
        %v947 = vld [vmem:[%s187 + $0x728] sm:$0xff]
        %v948 = vld [vmem:[%s187 + $0x730] sm:$0xff]
        %v949 = vld [vmem:[%s187 + $0x738] sm:$0xff]
        %v950 = vld [vmem:[%s187 + $0x740] sm:$0xff]
        %v951 = vld [vmem:[%s187 + $0x748] sm:$0xff]
        %v952 = vld [vmem:[%s187 + $0x750] sm:$0xff]
        %v953 = vld [vmem:[%s187 + $0x758] sm:$0xff]
        %v954 = vld [vmem:[%s187 + $0x760] sm:$0xff]
        %v955 = vld [vmem:[%s187 + $0x768] sm:$0xff]
        %v956 = vld [vmem:[%s187 + $0x770] sm:$0xff]
        %v957 = vld [vmem:[%s187 + $0x778] sm:$0xff]
        %v958 = vld [vmem:[%s187 + $0x780] sm:$0xff]
        %v959 = vld [vmem:[%s187 + $0x788] sm:$0xff]
        %v960 = vld [vmem:[%s187 + $0x790] sm:$0xff]
        %v961 = vld [vmem:[%s187 + $0x798] sm:$0xff]
        %v962 = vld [vmem:[%s187 + $0x7a0] sm:$0xff]
        %v963 = vld [vmem:[%s187 + $0x7a8] sm:$0xff]
        %v964 = vld [vmem:[%s187 + $0x7b0] sm:$0xff]
        %v965 = vld [vmem:[%s187 + $0x7b8] sm:$0xff]
        %v966 = vld [vmem:[%s187 + $0x7c0] sm:$0xff]
        %v967 = vld [vmem:[%s187 + $0x7c8] sm:$0xff]
        %v968 = vld [vmem:[%s187 + $0x7d0] sm:$0xff]
        %v969 = vld [vmem:[%s187 + $0x7d8] sm:$0xff]
        %v970 = vld [vmem:[%s187 + $0x7e0] sm:$0xff]
        %v971 = vld [vmem:[%s187 + $0x7e8] sm:$0xff]
        %v972 = vld [vmem:[%s187 + $0x7f0] sm:$0xff]
        %v973 = vld [vmem:[%s187 + $0x7f8] sm:$0xff]
        %v974 = vld [vmem:[%s187 + $0x800] sm:$0xff]
        %v975 = vld [vmem:[%s187 + $0x808] sm:$0xff]
        %v976 = vld [vmem:[%s187 + $0x810] sm:$0xff]
        %v977 = vld [vmem:[%s187 + $0x818] sm:$0xff]
        %v978 = vld [vmem:[%s187 + $0x820] sm:$0xff]
        %v979 = vld [vmem:[%s187 + $0x828] sm:$0xff]
        %v980 = vld [vmem:[%s187 + $0x830] sm:$0xff]
        %v981 = vld [vmem:[%s187 + $0x838] sm:$0xff]
        %v982 = vld [vmem:[%s187 + $0x840] sm:$0xff]
        %v983 = vld [vmem:[%s187 + $0x848] sm:$0xff]
        %v984 = vld [vmem:[%s187 + $0x850] sm:$0xff]
        %v985 = vld [vmem:[%s187 + $0x858] sm:$0xff]
        %v986 = vld [vmem:[%s187 + $0x860] sm:$0xff]
        %v987 = vld [vmem:[%s187 + $0x868] sm:$0xff]
        %v988 = vld [vmem:[%s187 + $0x870] sm:$0xff]
        %v989 = vld [vmem:[%s187 + $0x878] sm:$0xff]
        %v990 = vld [vmem:[%s187 + $0x880] sm:$0xff]
        %v991 = vld [vmem:[%s187 + $0x888] sm:$0xff]
        %v992 = vld [vmem:[%s187 + $0x890] sm:$0xff]
        %v993 = vld [vmem:[%s187 + $0x898] sm:$0xff]
        %v994 = vld [vmem:[%s187 + $0x8a0] sm:$0xff]
        %v995 = vld [vmem:[%s187 + $0x8a8] sm:$0xff]
        %v996 = vld [vmem:[%s187 + $0x8b0] sm:$0xff]
        %v997 = vld [vmem:[%s187 + $0x8b8] sm:$0xff]
        %v998 = vld [vmem:[%s187 + $0x8c0] sm:$0xff]
        %v999 = vld [vmem:[%s187 + $0x8c8] sm:$0xff]
        %v1000 = vld [vmem:[%s187 + $0x8d0] sm:$0xff]
        %v1001 = vld [vmem:[%s187 + $0x8d8] sm:$0xff]
        %v1002 = vld [vmem:[%s187 + $0x8e0] sm:$0xff]
        %v1003 = vld [vmem:[%s187 + $0x8e8] sm:$0xff]
        %v1004 = vld [vmem:[%s187 + $0x8f0] sm:$0xff]
        %v1005 = vld [vmem:[%s187 + $0x8f8] sm:$0xff]
        %v1006 = vld [vmem:[%s187 + $0x900] sm:$0xff]
        %v1007 = vld [vmem:[%s187 + $0x908] sm:$0xff]
        %v1008 = vld [vmem:[%s187 + $0x910] sm:$0xff]
        %v1009 = vld [vmem:[%s187 + $0x918] sm:$0xff]
        %v1010 = vld [vmem:[%s187 + $0x920] sm:$0xff]
        %v1011 = vld [vmem:[%s187 + $0x928] sm:$0xff]
        %v1012 = vld [vmem:[%s187 + $0x930] sm:$0xff]
        %v1013 = vld [vmem:[%s187 + $0x938] sm:$0xff]
        %v1014 = vld [vmem:[%s187 + $0x940] sm:$0xff]
        %v1015 = vld [vmem:[%s187 + $0x948] sm:$0xff]
        %v1016 = vld [vmem:[%s187 + $0x950] sm:$0xff]
        %v1017 = vld [vmem:[%s187 + $0x958] sm:$0xff]
        %v1018 = vld [vmem:[%s187 + $0x960] sm:$0xff]
        %v1019 = vld [vmem:[%s187 + $0x968] sm:$0xff]
        %v1020 = vld [vmem:[%s187 + $0x970] sm:$0xff]
        %v1021 = vld [vmem:[%s187 + $0x978] sm:$0xff]
        %v1022 = vld [vmem:[%s187 + $0x980] sm:$0xff]
        %v1023 = vld [vmem:[%s187 + $0x988] sm:$0xff]
        %v1024 = vld [vmem:[%s187 + $0x990] sm:$0xff]
        %v1025 = vld [vmem:[%s187 + $0x998] sm:$0xff]
        %v1026 = vld [vmem:[%s187 + $0x9a0] sm:$0xff]
        %v1027 = vld [vmem:[%s187 + $0x9a8] sm:$0xff]
        %v1028 = vld [vmem:[%s187 + $0x9b0] sm:$0xff]
        %v1029 = vld [vmem:[%s187 + $0x9b8] sm:$0xff]
        %v1030 = vld [vmem:[%s187 + $0x9c0] sm:$0xff]
        %v1031 = vld [vmem:[%s187 + $0x9c8] sm:$0xff]
        %v1032 = vld [vmem:[%s187 + $0x9d0] sm:$0xff]
        %v1033 = vld [vmem:[%s187 + $0x9d8] sm:$0xff]
        %v1034 = vld [vmem:[%s187 + $0x9e0] sm:$0xff]
        %v1035 = vld [vmem:[%s187 + $0x9e8] sm:$0xff]
        %v1036 = vld [vmem:[%s187 + $0x9f0] sm:$0xff]
        %v1037 = vld [vmem:[%s187 + $0x9f8] sm:$0xff]
        %v1038 = vld [vmem:[%s187 + $0xa00] sm:$0xff]
        %v1039 = vld [vmem:[%s187 + $0xa08] sm:$0xff]
        %v1040 = vld [vmem:[%s187 + $0xa10] sm:$0xff]
        %v1041 = vld [vmem:[%s187 + $0xa18] sm:$0xff]
        %v1042 = vld [vmem:[%s187 + $0xa20] sm:$0xff]
        %v1043 = vld [vmem:[%s187 + $0xa28] sm:$0xff]
        %v1044 = vld [vmem:[%s187 + $0xa30] sm:$0xff]
        %v1045 = vld [vmem:[%s187 + $0xa38] sm:$0xff]
        %v1046 = vld [vmem:[%s187 + $0xa40] sm:$0xff]
        %v1047 = vld [vmem:[%s187 + $0xa48] sm:$0xff]
        %v1048 = vld [vmem:[%s187 + $0xa50] sm:$0xff]
        %v1049 = vld [vmem:[%s187 + $0xa58] sm:$0xff]
        %v1050 = vld [vmem:[%s187 + $0xa60] sm:$0xff]
        %v1051 = vld [vmem:[%s187 + $0xa68] sm:$0xff]
        %v1052 = vld [vmem:[%s187 + $0xa70] sm:$0xff]
        %v1053 = vld [vmem:[%s187 + $0xa78] sm:$0xff]
        %v1054 = vld [vmem:[%s187 + $0xa80] sm:$0xff]
        %v1055 = vld [vmem:[%s187 + $0xa88] sm:$0xff]
        %v1056 = vld [vmem:[%s187 + $0xa90] sm:$0xff]
        %v1057 = vld [vmem:[%s187 + $0xa98] sm:$0xff]
        %v1058 = vld [vmem:[%s187 + $0xaa0] sm:$0xff]
        %v1059 = vld [vmem:[%s187 + $0xaa8] sm:$0xff]
        %v1060 = vld [vmem:[%s187 + $0xab0] sm:$0xff]
        %v1061 = vld [vmem:[%s187 + $0xab8] sm:$0xff]
        %v1062 = vld [vmem:[%s187 + $0xac0] sm:$0xff]
        %v1063 = vld [vmem:[%s187 + $0xac8] sm:$0xff]
        %v1064 = vld [vmem:[%s187 + $0xad0] sm:$0xff]
        %v1065 = vld [vmem:[%s187 + $0xad8] sm:$0xff]
        %v1066 = vld [vmem:[%s187 + $0xae0] sm:$0xff]
        %v1067 = vld [vmem:[%s187 + $0xae8] sm:$0xff]
        %v1068 = vld [vmem:[%s187 + $0xaf0] sm:$0xff]
        %v1069 = vld [vmem:[%s187 + $0xaf8] sm:$0xff]
        %v1070 = vld [vmem:[%s187 + $0xb00] sm:$0xff]
        %v1071 = vld [vmem:[%s187 + $0xb08] sm:$0xff]
        %v1072 = vld [vmem:[%s187 + $0xb10] sm:$0xff]
        %v1073 = vld [vmem:[%s187 + $0xb18] sm:$0xff]
        %v1074 = vld [vmem:[%s187 + $0xb20] sm:$0xff]
        %v1075 = vld [vmem:[%s187 + $0xb28] sm:$0xff]
        %v1076 = vld [vmem:[%s187 + $0xb30] sm:$0xff]
        %v1077 = vld [vmem:[%s187 + $0xb38] sm:$0xff]
        %v1078 = vld [vmem:[%s187 + $0xb40] sm:$0xff]
        %v1079 = vld [vmem:[%s187 + $0xb48] sm:$0xff]
        %v1080 = vld [vmem:[%s187 + $0xb50] sm:$0xff]
        %v1081 = vld [vmem:[%s187 + $0xb58] sm:$0xff]
        %v1082 = vld [vmem:[%s187 + $0xb60] sm:$0xff]
        %v1083 = vld [vmem:[%s187 + $0xb68] sm:$0xff]
        %v1084 = vld [vmem:[%s187 + $0xb70] sm:$0xff]
        %v1085 = vld [vmem:[%s187 + $0xb78] sm:$0xff]
        %v1086 = vld [vmem:[%s187 + $0xb80] sm:$0xff]
        %v1087 = vld [vmem:[%s187 + $0xb88] sm:$0xff]
        %v1088 = vld [vmem:[%s187 + $0xb90] sm:$0xff]
        %v1089 = vld [vmem:[%s187 + $0xb98] sm:$0xff]
        %v1090 = vld [vmem:[%s187 + $0xba0] sm:$0xff]
        %v1091 = vld [vmem:[%s187 + $0xba8] sm:$0xff]
        %v1092 = vld [vmem:[%s187 + $0xbb0] sm:$0xff]
        %v1093 = vld [vmem:[%s187 + $0xbb8] sm:$0xff]
        %v1094 = vld [vmem:[%s187 + $0xbc0] sm:$0xff]
        %v1095 = vld [vmem:[%s187 + $0xbc8] sm:$0xff]
        %v1096 = vld [vmem:[%s187 + $0xbd0] sm:$0xff]
        %v1097 = vld [vmem:[%s187 + $0xbd8] sm:$0xff]
        %v1098 = vld [vmem:[%s187 + $0xbe0] sm:$0xff]
        %v1099 = vld [vmem:[%s187 + $0xbe8] sm:$0xff]
        %v1100 = vld [vmem:[%s187 + $0xbf0] sm:$0xff]
        %v1101 = vld [vmem:[%s187 + $0xbf8] sm:$0xff]
        %v1102 = vld [vmem:[%s187 + $0xc00] sm:$0xff]
        %v1103 = vld [vmem:[%s187 + $0xc08] sm:$0xff]
        %v1104 = vld [vmem:[%s187 + $0xc10] sm:$0xff]
        %v1105 = vld [vmem:[%s187 + $0xc18] sm:$0xff]
        %v1106 = vld [vmem:[%s187 + $0xc20] sm:$0xff]
        %v1107 = vld [vmem:[%s187 + $0xc28] sm:$0xff]
        %v1108 = vld [vmem:[%s187 + $0xc30] sm:$0xff]
        %v1109 = vld [vmem:[%s187 + $0xc38] sm:$0xff]
        %v1110 = vld [vmem:[%s187 + $0xc40] sm:$0xff]
        %v1111 = vld [vmem:[%s187 + $0xc48] sm:$0xff]
        %v1112 = vld [vmem:[%s187 + $0xc50] sm:$0xff]
        %v1113 = vld [vmem:[%s187 + $0xc58] sm:$0xff]
        %v1114 = vld [vmem:[%s187 + $0xc60] sm:$0xff]
        %v1115 = vld [vmem:[%s187 + $0xc68] sm:$0xff]
        %v1116 = vld [vmem:[%s187 + $0xc70] sm:$0xff]
        %v1117 = vld [vmem:[%s187 + $0xc78] sm:$0xff]
        %v1118 = vld [vmem:[%s187 + $0xc80] sm:$0xff]
        %v1119 = vld [vmem:[%s187 + $0xc88] sm:$0xff]
        %v1120 = vld [vmem:[%s187 + $0xc90] sm:$0xff]
        %v1121 = vld [vmem:[%s187 + $0xc98] sm:$0xff]
        %v1122 = vld [vmem:[%s187 + $0xca0] sm:$0xff]
        %v1123 = vld [vmem:[%s187 + $0xca8] sm:$0xff]
        %v1124 = vld [vmem:[%s187 + $0xcb0] sm:$0xff]
        %v1125 = vld [vmem:[%s187 + $0xcb8] sm:$0xff]
        %v1126 = vld [vmem:[%s187 + $0xcc0] sm:$0xff]
        %v1127 = vld [vmem:[%s187 + $0xcc8] sm:$0xff]
        %v1128 = vld [vmem:[%s187 + $0xcd0] sm:$0xff]
        %v1129 = vld [vmem:[%s187 + $0xcd8] sm:$0xff]
        %v1130 = vld [vmem:[%s187 + $0xce0] sm:$0xff]
        %v1131 = vld [vmem:[%s187 + $0xce8] sm:$0xff]
        %v1132 = vld [vmem:[%s187 + $0xcf0] sm:$0xff]
        %v1133 = vld [vmem:[%s187 + $0xcf8] sm:$0xff]
        %v1134 = vld [vmem:[%s187 + $0xd00] sm:$0xff]
        %v1135 = vld [vmem:[%s187 + $0xd08] sm:$0xff]
        %v1136 = vld [vmem:[%s187 + $0xd10] sm:$0xff]
        %v1137 = vld [vmem:[%s187 + $0xd18] sm:$0xff]
        %v1138 = vld [vmem:[%s187 + $0xd20] sm:$0xff]
        %v1139 = vld [vmem:[%s187 + $0xd28] sm:$0xff]
        %v1140 = vld [vmem:[%s187 + $0xd30] sm:$0xff]
        %v1141 = vld [vmem:[%s187 + $0xd38] sm:$0xff]
        %v1142 = vld [vmem:[%s187 + $0xd40] sm:$0xff]
        %v1143 = vld [vmem:[%s187 + $0xd48] sm:$0xff]
        %v1144 = vld [vmem:[%s187 + $0xd50] sm:$0xff]
        %v1145 = vld [vmem:[%s187 + $0xd58] sm:$0xff]
        %v1146 = vld [vmem:[%s187 + $0xd60] sm:$0xff]
        %v1147 = vld [vmem:[%s187 + $0xd68] sm:$0xff]
        %v1148 = vld [vmem:[%s187 + $0xd70] sm:$0xff]
        %v1149 = vld [vmem:[%s187 + $0xd78] sm:$0xff]
        %v1150 = vld [vmem:[%s187 + $0xd80] sm:$0xff]
        %v1151 = vld [vmem:[%s187 + $0xd88] sm:$0xff]
        %v1152 = vld [vmem:[%s187 + $0xd90] sm:$0xff]
        %v1153 = vld [vmem:[%s187 + $0xd98] sm:$0xff]
        %v1154 = vld [vmem:[%s187 + $0xda0] sm:$0xff]
        %v1155 = vld [vmem:[%s187 + $0xda8] sm:$0xff]
        %v1156 = vld [vmem:[%s187 + $0xdb0] sm:$0xff]
        %v1157 = vld [vmem:[%s187 + $0xdb8] sm:$0xff]
        %v1158 = vld [vmem:[%s187 + $0xdc0] sm:$0xff]
        %v1159 = vld [vmem:[%s187 + $0xdc8] sm:$0xff]
        %v1160 = vld [vmem:[%s187 + $0xdd0] sm:$0xff]
        %v1161 = vld [vmem:[%s187 + $0xdd8] sm:$0xff]
        %v1162 = vld [vmem:[%s187 + $0xde0] sm:$0xff]
        %v1163 = vld [vmem:[%s187 + $0xde8] sm:$0xff]
        %v1164 = vld [vmem:[%s187 + $0xdf0] sm:$0xff]
        %v1165 = vld [vmem:[%s187 + $0xdf8] sm:$0xff]
        %v1166 = vld [vmem:[%s187 + $0xe00] sm:$0xff]
        %v1167 = vld [vmem:[%s187 + $0xe08] sm:$0xff]
        %v1168 = vld [vmem:[%s187 + $0xe10] sm:$0xff]
        %v1169 = vld [vmem:[%s187 + $0xe18] sm:$0xff]
        %v1170 = vld [vmem:[%s187 + $0xe20] sm:$0xff]
        %v1171 = vld [vmem:[%s187 + $0xe28] sm:$0xff]
        %v1172 = vld [vmem:[%s187 + $0xe30] sm:$0xff]
        %v1173 = vld [vmem:[%s187 + $0xe38] sm:$0xff]
        %v1174 = vld [vmem:[%s187 + $0xe40] sm:$0xff]
        %v1175 = vld [vmem:[%s187 + $0xe48] sm:$0xff]
        %v1176 = vld [vmem:[%s187 + $0xe50] sm:$0xff]
        %v1177 = vld [vmem:[%s187 + $0xe58] sm:$0xff]
        %v1178 = vld [vmem:[%s187 + $0xe60] sm:$0xff]
        %v1179 = vld [vmem:[%s187 + $0xe68] sm:$0xff]
        %v1180 = vld [vmem:[%s187 + $0xe70] sm:$0xff]
        %v1181 = vld [vmem:[%s187 + $0xe78] sm:$0xff]
        %v1182 = vld [vmem:[%s187 + $0xe80] sm:$0xff]
        %v1183 = vld [vmem:[%s187 + $0xe88] sm:$0xff]
        %v1184 = vld [vmem:[%s187 + $0xe90] sm:$0xff]
        %v1185 = vld [vmem:[%s187 + $0xe98] sm:$0xff]
        %v1186 = vld [vmem:[%s187 + $0xea0] sm:$0xff]
        %v1187 = vld [vmem:[%s187 + $0xea8] sm:$0xff]
        %v1188 = vld [vmem:[%s187 + $0xeb0] sm:$0xff]
        %v1189 = vld [vmem:[%s187 + $0xeb8] sm:$0xff]
        %v1190 = vld [vmem:[%s187 + $0xec0] sm:$0xff]
        %v1191 = vld [vmem:[%s187 + $0xec8] sm:$0xff]
        %v1192 = vld [vmem:[%s187 + $0xed0] sm:$0xff]
        %v1193 = vld [vmem:[%s187 + $0xed8] sm:$0xff]
        %v1194 = vld [vmem:[%s187 + $0xee0] sm:$0xff]
        %v1195 = vld [vmem:[%s187 + $0xee8] sm:$0xff]
        %v1196 = vld [vmem:[%s187 + $0xef0] sm:$0xff]
        %v1197 = vld [vmem:[%s187 + $0xef8] sm:$0xff]
        %v1198 = vld [vmem:[%s187 + $0xf00] sm:$0xff]
        %v1199 = vld [vmem:[%s187 + $0xf08] sm:$0xff]
        %v1200 = vld [vmem:[%s187 + $0xf10] sm:$0xff]
        %v1201 = vld [vmem:[%s187 + $0xf18] sm:$0xff]
        %v1202 = vld [vmem:[%s187 + $0xf20] sm:$0xff]
        %v1203 = vld [vmem:[%s187 + $0xf28] sm:$0xff]
        %v1204 = vld [vmem:[%s187 + $0xf30] sm:$0xff]
        %v1205 = vld [vmem:[%s187 + $0xf38] sm:$0xff]
        %v1206 = vld [vmem:[%s187 + $0xf40] sm:$0xff]
        %v1207 = vld [vmem:[%s187 + $0xf48] sm:$0xff]
        %v1208 = vld [vmem:[%s187 + $0xf50] sm:$0xff]
        %v1209 = vld [vmem:[%s187 + $0xf58] sm:$0xff]
        %v1210 = vld [vmem:[%s187 + $0xf60] sm:$0xff]
        %v1211 = vld [vmem:[%s187 + $0xf68] sm:$0xff]
        %v1212 = vld [vmem:[%s187 + $0xf70] sm:$0xff]
        %v1213 = vld [vmem:[%s187 + $0xf78] sm:$0xff]
        %v1214 = vld [vmem:[%s187 + $0xf80] sm:$0xff]
        %v1215 = vld [vmem:[%s187 + $0xf88] sm:$0xff]
        %v1216 = vld [vmem:[%s187 + $0xf90] sm:$0xff]
        %v1217 = vld [vmem:[%s187 + $0xf98] sm:$0xff]
        %v1218 = vld [vmem:[%s187 + $0xfa0] sm:$0xff]
        %v1219 = vld [vmem:[%s187 + $0xfa8] sm:$0xff]
        %v1220 = vld [vmem:[%s187 + $0xfb0] sm:$0xff]
        %v1221 = vld [vmem:[%s187 + $0xfb8] sm:$0xff]
        %v1222 = vld [vmem:[%s187 + $0xfc0] sm:$0xff]
        %v1223 = vld [vmem:[%s187 + $0xfc8] sm:$0xff]
        %v1224 = vld [vmem:[%s187 + $0xfd0] sm:$0xff]
        %v1225 = vld [vmem:[%s187 + $0xfd8] sm:$0xff]
        %v1226 = vld [vmem:[%s187 + $0xfe0] sm:$0xff]
        %v1227 = vld [vmem:[%s187 + $0xfe8] sm:$0xff]
        %v1228 = vld [vmem:[%s187 + $0xff0] sm:$0xff]
        %v1229 = vld [vmem:[%s187 + $0xff8] sm:$0xff]
        %v1230 = vld [vmem:[%s187 + $0x1000] sm:$0xff]
        %v1231 = vld [vmem:[%s187 + $0x1008] sm:$0xff]
        %v1232 = vld [vmem:[%s187 + $0x1010] sm:$0xff]
        %v1233 = vld [vmem:[%s187 + $0x1018] sm:$0xff]
        %v1234 = vld [vmem:[%s187 + $0x1020] sm:$0xff]
        %v1235 = vld [vmem:[%s187 + $0x1028] sm:$0xff]
        %v1236 = vld [vmem:[%s187 + $0x1030] sm:$0xff]
        %v1237 = vld [vmem:[%s187 + $0x1038] sm:$0xff]
        %v1238 = vld [vmem:[%s187 + $0x1040] sm:$0xff]
        %v1239 = vld [vmem:[%s187 + $0x1048] sm:$0xff]
        %v1240 = vld [vmem:[%s187 + $0x1050] sm:$0xff]
        %v1241 = vld [vmem:[%s187 + $0x1058] sm:$0xff]
        %v1242 = vld [vmem:[%s187 + $0x1060] sm:$0xff]
        %v1243 = vld [vmem:[%s187 + $0x1068] sm:$0xff]
        %v1244 = vld [vmem:[%s187 + $0x1070] sm:$0xff]
        %v1245 = vld [vmem:[%s187 + $0x1078] sm:$0xff]
        %v1246 = vld [vmem:[%s187 + $0x1080] sm:$0xff]
        %v1247 = vld [vmem:[%s187 + $0x1088] sm:$0xff]
        %v1248 = vld [vmem:[%s187 + $0x1090] sm:$0xff]
        %v1249 = vld [vmem:[%s187 + $0x1098] sm:$0xff]
        %v1250 = vld [vmem:[%s187 + $0x10a0] sm:$0xff]
        %v1251 = vld [vmem:[%s187 + $0x10a8] sm:$0xff]
        %v1252 = vld [vmem:[%s187 + $0x10b0] sm:$0xff]
        %v1253 = vld [vmem:[%s187 + $0x10b8] sm:$0xff]
        %v1254 = vld [vmem:[%s187 + $0x10c0] sm:$0xff]
        %v1255 = vld [vmem:[%s187 + $0x10c8] sm:$0xff]
        %v1256 = vld [vmem:[%s187 + $0x10d0] sm:$0xff]
        %v1257 = vld [vmem:[%s187 + $0x10d8] sm:$0xff]
        %v1258 = vld [vmem:[%s187 + $0x10e0] sm:$0xff]
        %v1259 = vld [vmem:[%s187 + $0x10e8] sm:$0xff]
        %v1260 = vld [vmem:[%s187 + $0x10f0] sm:$0xff]
        %v1261 = vld [vmem:[%s187 + $0x10f8] sm:$0xff]
        %v1262 = vld [vmem:[%s187 + $0x1100] sm:$0xff]
        %v1263 = vld [vmem:[%s187 + $0x1108] sm:$0xff]
        %v1264 = vld [vmem:[%s187 + $0x1110] sm:$0xff]
        %v1265 = vld [vmem:[%s187 + $0x1118] sm:$0xff]
        %v1266 = vld [vmem:[%s187 + $0x1120] sm:$0xff]
        %v1267 = vld [vmem:[%s187 + $0x1128] sm:$0xff]
        %v1268 = vld [vmem:[%s187 + $0x1130] sm:$0xff]
        %v1269 = vld [vmem:[%s187 + $0x1138] sm:$0xff]
        %v1270 = vld [vmem:[%s187 + $0x1140] sm:$0xff]
        %v1271 = vld [vmem:[%s187 + $0x1148] sm:$0xff]
        %v1272 = vld [vmem:[%s187 + $0x1150] sm:$0xff]
        %v1273 = vld [vmem:[%s187 + $0x1158] sm:$0xff]
        %v1274 = vld [vmem:[%s187 + $0x1160] sm:$0xff]
        %v1275 = vld [vmem:[%s187 + $0x1168] sm:$0xff]
        %v1276 = vld [vmem:[%s187 + $0x1170] sm:$0xff]
        %v1277 = vld [vmem:[%s187 + $0x1178] sm:$0xff]
        %v1278 = vld [vmem:[%s187 + $0x1180] sm:$0xff]
        %v1279 = vld [vmem:[%s187 + $0x1188] sm:$0xff]
        %v1280 = vld [vmem:[%s187 + $0x1190] sm:$0xff]
        %v1281 = vld [vmem:[%s187 + $0x1198] sm:$0xff]
        %v1282 = vld [vmem:[%s187 + $0x11a0] sm:$0xff]
        %v1283 = vld [vmem:[%s187 + $0x11a8] sm:$0xff]
        %v1284 = vld [vmem:[%s187 + $0x11b0] sm:$0xff]
        %v1285 = vld [vmem:[%s187 + $0x11b8] sm:$0xff]
        %v1286 = vld [vmem:[%s187 + $0x11c0] sm:$0xff]
        %v1287 = vld [vmem:[%s187 + $0x11c8] sm:$0xff]
        %v1288 = vld [vmem:[%s187 + $0x11d0] sm:$0xff]
        %v1289 = vld [vmem:[%s187 + $0x11d8] sm:$0xff]
        %v1290 = vld [vmem:[%s187 + $0x11e0] sm:$0xff]
        %v1291 = vld [vmem:[%s187 + $0x11e8] sm:$0xff]
        %v1292 = vld [vmem:[%s187 + $0x11f0] sm:$0xff]
        %v1293 = vld [vmem:[%s187 + $0x11f8] sm:$0xff]
        %v1294 = vld [vmem:[%s187 + $0x1200] sm:$0xff]
        %v1295 = vld [vmem:[%s187 + $0x1208] sm:$0xff]
        %v1296 = vld [vmem:[%s187 + $0x1210] sm:$0xff]
        %v1297 = vld [vmem:[%s187 + $0x1218] sm:$0xff]
        %v1298 = vld [vmem:[%s187 + $0x1220] sm:$0xff]
        %v1299 = vld [vmem:[%s187 + $0x1228] sm:$0xff]
        %v1300 = vld [vmem:[%s187 + $0x1230] sm:$0xff]
        %v1301 = vld [vmem:[%s187 + $0x1238] sm:$0xff]
        %v1302 = vld [vmem:[%s187 + $0x1240] sm:$0xff]
        %v1303 = vld [vmem:[%s187 + $0x1248] sm:$0xff]
        %v1304 = vld [vmem:[%s187 + $0x1250] sm:$0xff]
        %v1305 = vld [vmem:[%s187 + $0x1258] sm:$0xff]
        %v1306 = vld [vmem:[%s187 + $0x1260] sm:$0xff]
        %v1307 = vld [vmem:[%s187 + $0x1268] sm:$0xff]
        %v1308 = vld [vmem:[%s187 + $0x1270] sm:$0xff]
        %v1309 = vld [vmem:[%s187 + $0x1278] sm:$0xff]
        %v1310 = vld [vmem:[%s187 + $0x1280] sm:$0xff]
        %v1311 = vld [vmem:[%s187 + $0x1288] sm:$0xff]
        %v1312 = vld [vmem:[%s187 + $0x1290] sm:$0xff]
        %v1313 = vld [vmem:[%s187 + $0x1298] sm:$0xff]
        %v1314 = vld [vmem:[%s187 + $0x12a0] sm:$0xff]
        %v1315 = vld [vmem:[%s187 + $0x12a8] sm:$0xff]
        %v1316 = vld [vmem:[%s187 + $0x12b0] sm:$0xff]
        %v1317 = vld [vmem:[%s187 + $0x12b8] sm:$0xff]
        %v1318 = vld [vmem:[%s187 + $0x12c0] sm:$0xff]
        %v1319 = vld [vmem:[%s187 + $0x12c8] sm:$0xff]
        %v1320 = vld [vmem:[%s187 + $0x12d0] sm:$0xff]
        %v1321 = vld [vmem:[%s187 + $0x12d8] sm:$0xff]
        %v1322 = vld [vmem:[%s187 + $0x12e0] sm:$0xff]
        %v1323 = vld [vmem:[%s187 + $0x12e8] sm:$0xff]
        %v1324 = vld [vmem:[%s187 + $0x12f0] sm:$0xff]
        %v1325 = vld [vmem:[%s187 + $0x12f8] sm:$0xff]
        %v1326 = vld [vmem:[%s187 + $0x1300] sm:$0xff]
        %v1327 = vld [vmem:[%s187 + $0x1308] sm:$0xff]
        %v1328 = vld [vmem:[%s187 + $0x1310] sm:$0xff]
        %v1329 = vld [vmem:[%s187 + $0x1318] sm:$0xff]
        %v1330 = vld [vmem:[%s187 + $0x1320] sm:$0xff]
        %v1331 = vld [vmem:[%s187 + $0x1328] sm:$0xff]
        %v1332 = vld [vmem:[%s187 + $0x1330] sm:$0xff]
        %v1333 = vld [vmem:[%s187 + $0x1338] sm:$0xff]
        %v1334 = vld [vmem:[%s187 + $0x1340] sm:$0xff]
        %v1335 = vld [vmem:[%s187 + $0x1348] sm:$0xff]
        %v1336 = vld [vmem:[%s187 + $0x1350] sm:$0xff]
        %v1337 = vld [vmem:[%s187 + $0x1358] sm:$0xff]
        %v1338 = vld [vmem:[%s187 + $0x1360] sm:$0xff]
        %v1339 = vld [vmem:[%s187 + $0x1368] sm:$0xff]
        %v1340 = vld [vmem:[%s187 + $0x1370] sm:$0xff]
        %v1341 = vld [vmem:[%s187 + $0x1378] sm:$0xff]
        %v1342 = vld [vmem:[%s187 + $0x1380] sm:$0xff]
        %v1343 = vld [vmem:[%s187 + $0x1388] sm:$0xff]
        %v1344 = vld [vmem:[%s187 + $0x1390] sm:$0xff]
        %v1345 = vld [vmem:[%s187 + $0x1398] sm:$0xff]
        %v1346 = vld [vmem:[%s187 + $0x13a0] sm:$0xff]
        %v1347 = vld [vmem:[%s187 + $0x13a8] sm:$0xff]
        %v1348 = vld [vmem:[%s187 + $0x13b0] sm:$0xff]
        %v1349 = vld [vmem:[%s187 + $0x13b8] sm:$0xff]
        %v1350 = vld [vmem:[%s187 + $0x13c0] sm:$0xff]
        %v1351 = vld [vmem:[%s187 + $0x13c8] sm:$0xff]
        %v1352 = vld [vmem:[%s187 + $0x13d0] sm:$0xff]
        %v1353 = vld [vmem:[%s187 + $0x13d8] sm:$0xff]
        %v1354 = vld [vmem:[%s187 + $0x13e0] sm:$0xff]
        %v1355 = vld [vmem:[%s187 + $0x13e8] sm:$0xff]
        %v1356 = vld [vmem:[%s187 + $0x13f0] sm:$0xff]
        %v1357 = vld [vmem:[%s187 + $0x13f8] sm:$0xff]
        %v1358 = vld [vmem:[%s187 + $0x1400] sm:$0xff]
        %v1359 = vld [vmem:[%s187 + $0x1408] sm:$0xff]
        %v1360 = vld [vmem:[%s187 + $0x1410] sm:$0xff]
        %v1361 = vld [vmem:[%s187 + $0x1418] sm:$0xff]
        %v1362 = vld [vmem:[%s187 + $0x1420] sm:$0xff]
        %v1363 = vld [vmem:[%s187 + $0x1428] sm:$0xff]
        %v1364 = vld [vmem:[%s187 + $0x1430] sm:$0xff]
        %v1365 = vld [vmem:[%s187 + $0x1438] sm:$0xff]
        %v1366 = vld [vmem:[%s187 + $0x1440] sm:$0xff]
        %v1367 = vld [vmem:[%s187 + $0x1448] sm:$0xff]
        %v1368 = vld [vmem:[%s187 + $0x1450] sm:$0xff]
        %v1369 = vld [vmem:[%s187 + $0x1458] sm:$0xff]
        %v1370 = vld [vmem:[%s187 + $0x1460] sm:$0xff]
        %v1371 = vld [vmem:[%s187 + $0x1468] sm:$0xff]
        %v1372 = vld [vmem:[%s187 + $0x1470] sm:$0xff]
        %v1373 = vld [vmem:[%s187 + $0x1478] sm:$0xff]
        %v1374 = vld [vmem:[%s187 + $0x1480] sm:$0xff]
        %v1375 = vld [vmem:[%s187 + $0x1488] sm:$0xff]
        %v1376 = vld [vmem:[%s187 + $0x1490] sm:$0xff]
        %v1377 = vld [vmem:[%s187 + $0x1498] sm:$0xff]
        %v1378 = vld [vmem:[%s187 + $0x14a0] sm:$0xff]
        %v1379 = vld [vmem:[%s187 + $0x14a8] sm:$0xff]
        %v1380 = vld [vmem:[%s187 + $0x14b0] sm:$0xff]
        %v1381 = vld [vmem:[%s187 + $0x14b8] sm:$0xff]
        %v1382 = vld [vmem:[%s187 + $0x14c0] sm:$0xff]
        %v1383 = vld [vmem:[%s187 + $0x14c8] sm:$0xff]
        %v1384 = vld [vmem:[%s187 + $0x14d0] sm:$0xff]
        %v1385 = vld [vmem:[%s187 + $0x14d8] sm:$0xff]
        %v1386 = vld [vmem:[%s187 + $0x14e0] sm:$0xff]
        %v1387 = vld [vmem:[%s187 + $0x14e8] sm:$0xff]
        %v1388 = vld [vmem:[%s187 + $0x14f0] sm:$0xff]
        %v1389 = vld [vmem:[%s187 + $0x14f8] sm:$0xff]
        %v1390 = vld [vmem:[%s187 + $0x1500] sm:$0xff]
        %v1391 = vld [vmem:[%s187 + $0x1508] sm:$0xff]
        %v1392 = vld [vmem:[%s187 + $0x1510] sm:$0xff]
        %v1393 = vld [vmem:[%s187 + $0x1518] sm:$0xff]
        %v1394 = vld [vmem:[%s187 + $0x1520] sm:$0xff]
        %v1395 = vld [vmem:[%s187 + $0x1528] sm:$0xff]
        %v1396 = vld [vmem:[%s187 + $0x1530] sm:$0xff]
        %v1397 = vld [vmem:[%s187 + $0x1538] sm:$0xff]
        %v1398 = vld [vmem:[%s187 + $0x1540] sm:$0xff]
        %v1399 = vld [vmem:[%s187 + $0x1548] sm:$0xff]
        %v1400 = vld [vmem:[%s187 + $0x1550] sm:$0xff]
        %v1401 = vld [vmem:[%s187 + $0x1558] sm:$0xff]
        %v1402 = vld [vmem:[%s187 + $0x1560] sm:$0xff]
        %v1403 = vld [vmem:[%s187 + $0x1568] sm:$0xff]
        %v1404 = vld [vmem:[%s187 + $0x1570] sm:$0xff]
        %v1405 = vld [vmem:[%s187 + $0x1578] sm:$0xff]
        %v1406 = vld [vmem:[%s187 + $0x1580] sm:$0xff]
        %v1407 = vld [vmem:[%s187 + $0x1588] sm:$0xff]
        %v1408 = vld [vmem:[%s187 + $0x1590] sm:$0xff]
        %v1409 = vld [vmem:[%s187 + $0x1598] sm:$0xff]
        %v1410 = vld [vmem:[%s187 + $0x15a0] sm:$0xff]
        %v1411 = vld [vmem:[%s187 + $0x15a8] sm:$0xff]
        %v1412 = vld [vmem:[%s187 + $0x15b0] sm:$0xff]
        %v1413 = vld [vmem:[%s187 + $0x15b8] sm:$0xff]
        %v1414 = vld [vmem:[%s187 + $0x15c0] sm:$0xff]
        %v1415 = vld [vmem:[%s187 + $0x15c8] sm:$0xff]
        %v1416 = vld [vmem:[%s187 + $0x15d0] sm:$0xff]
        %v1417 = vld [vmem:[%s187 + $0x15d8] sm:$0xff]
        %v1418 = vld [vmem:[%s187 + $0x15e0] sm:$0xff]
        %v1419 = vld [vmem:[%s187 + $0x15e8] sm:$0xff]
        %v1420 = vld [vmem:[%s187 + $0x15f0] sm:$0xff]
        %v1421 = vld [vmem:[%s187 + $0x15f8] sm:$0xff]
        %v1422 = vld [vmem:[%s187 + $0x1600] sm:$0xff]
        %v1423 = vld [vmem:[%s187 + $0x1608] sm:$0xff]
        %v1424 = vld [vmem:[%s187 + $0x1610] sm:$0xff]
        %v1425 = vld [vmem:[%s187 + $0x1618] sm:$0xff]
        %v1426 = vld [vmem:[%s187 + $0x1620] sm:$0xff]
        %v1427 = vld [vmem:[%s187 + $0x1628] sm:$0xff]
        %v1428 = vld [vmem:[%s187 + $0x1630] sm:$0xff]
        %v1429 = vld [vmem:[%s187 + $0x1638] sm:$0xff]
        %v1430 = vld [vmem:[%s187 + $0x1640] sm:$0xff]
        %v1431 = vld [vmem:[%s187 + $0x1648] sm:$0xff]
        %v1432 = vld [vmem:[%s187 + $0x1650] sm:$0xff]
        %v1433 = vld [vmem:[%s187 + $0x1658] sm:$0xff]
        %v1434 = vld [vmem:[%s187 + $0x1660] sm:$0xff]
        %v1435 = vld [vmem:[%s187 + $0x1668] sm:$0xff]
        %v1436 = vld [vmem:[%s187 + $0x1670] sm:$0xff]
        %v1437 = vld [vmem:[%s187 + $0x1678] sm:$0xff]
        %v1438 = vld [vmem:[%s187 + $0x1680] sm:$0xff]
        %v1439 = vld [vmem:[%s187 + $0x1688] sm:$0xff]
        %v1440 = vld [vmem:[%s187 + $0x1690] sm:$0xff]
        %v1441 = vld [vmem:[%s187 + $0x1698] sm:$0xff]
        %v1442 = vld [vmem:[%s187 + $0x16a0] sm:$0xff]
        %v1443 = vld [vmem:[%s187 + $0x16a8] sm:$0xff]
        %v1444 = vld [vmem:[%s187 + $0x16b0] sm:$0xff]
        %v1445 = vld [vmem:[%s187 + $0x16b8] sm:$0xff]
        %v1446 = vld [vmem:[%s187 + $0x16c0] sm:$0xff]
        %v1447 = vld [vmem:[%s187 + $0x16c8] sm:$0xff]
        %v1448 = vld [vmem:[%s187 + $0x16d0] sm:$0xff]
        %v1449 = vld [vmem:[%s187 + $0x16d8] sm:$0xff]
        %v1450 = vld [vmem:[%s187 + $0x16e0] sm:$0xff]
        %v1451 = vld [vmem:[%s187 + $0x16e8] sm:$0xff]
        %v1452 = vld [vmem:[%s187 + $0x16f0] sm:$0xff]
        %v1453 = vld [vmem:[%s187 + $0x16f8] sm:$0xff]
        %v1454 = vld [vmem:[%s187 + $0x1700] sm:$0xff]
        %v1455 = vld [vmem:[%s187 + $0x1708] sm:$0xff]
        %v1456 = vld [vmem:[%s187 + $0x1710] sm:$0xff]
        %v1457 = vld [vmem:[%s187 + $0x1718] sm:$0xff]
        %v1458 = vld [vmem:[%s187 + $0x1720] sm:$0xff]
        %v1459 = vld [vmem:[%s187 + $0x1728] sm:$0xff]
        %v1460 = vld [vmem:[%s187 + $0x1730] sm:$0xff]
        %v1461 = vld [vmem:[%s187 + $0x1738] sm:$0xff]
        %v1462 = vld [vmem:[%s187 + $0x1740] sm:$0xff]
        %v1463 = vld [vmem:[%s187 + $0x1748] sm:$0xff]
        %v1464 = vld [vmem:[%s187 + $0x1750] sm:$0xff]
        %v1465 = vld [vmem:[%s187 + $0x1758] sm:$0xff]
        %v1466 = vld [vmem:[%s187 + $0x1760] sm:$0xff]
        %v1467 = vld [vmem:[%s187 + $0x1768] sm:$0xff]
        %v1468 = vld [vmem:[%s187 + $0x1770] sm:$0xff]
        %v1469 = vld [vmem:[%s187 + $0x1778] sm:$0xff]
        %v1470 = vld [vmem:[%s187 + $0x1780] sm:$0xff]
        %v1471 = vld [vmem:[%s187 + $0x1788] sm:$0xff]
        %v1472 = vld [vmem:[%s187 + $0x1790] sm:$0xff]
        %v1473 = vld [vmem:[%s187 + $0x1798] sm:$0xff]
        %v1474 = vld [vmem:[%s187 + $0x17a0] sm:$0xff]
        %v1475 = vld [vmem:[%s187 + $0x17a8] sm:$0xff]
        %v1476 = vld [vmem:[%s187 + $0x17b0] sm:$0xff]
        %v1477 = vld [vmem:[%s187 + $0x17b8] sm:$0xff]
        %v1478 = vld [vmem:[%s187 + $0x17c0] sm:$0xff]
        %v1479 = vld [vmem:[%s187 + $0x17c8] sm:$0xff]
        %v1480 = vld [vmem:[%s187 + $0x17d0] sm:$0xff]
        %v1481 = vld [vmem:[%s187 + $0x17d8] sm:$0xff]
        %v1482 = vld [vmem:[%s187 + $0x17e0] sm:$0xff]
        %v1483 = vld [vmem:[%s187 + $0x17e8] sm:$0xff]
        %v1484 = vld [vmem:[%s187 + $0x17f0] sm:$0xff]
        %v1485 = vld [vmem:[%s187 + $0x17f8] sm:$0xff]
        %v1486 = vld [vmem:[%s187 + $0x1800] sm:$0xff]
        %v1487 = vld [vmem:[%s187 + $0x1808] sm:$0xff]
        %v1488 = vld [vmem:[%s187 + $0x1810] sm:$0xff]
        %v1489 = vld [vmem:[%s187 + $0x1818] sm:$0xff]
        %v1490 = vld [vmem:[%s187 + $0x1820] sm:$0xff]
        %v1491 = vld [vmem:[%s187 + $0x1828] sm:$0xff]
        %v1492 = vld [vmem:[%s187 + $0x1830] sm:$0xff]
        %v1493 = vld [vmem:[%s187 + $0x1838] sm:$0xff]
        %v1494 = vld [vmem:[%s187 + $0x1840] sm:$0xff]
        %v1495 = vld [vmem:[%s187 + $0x1848] sm:$0xff]
        %v1496 = vld [vmem:[%s187 + $0x1850] sm:$0xff]
        %v1497 = vld [vmem:[%s187 + $0x1858] sm:$0xff]
        %v1498 = vld [vmem:[%s187 + $0x1860] sm:$0xff]
        %v1499 = vld [vmem:[%s187 + $0x1868] sm:$0xff]
        %v1500 = vld [vmem:[%s187 + $0x1870] sm:$0xff]
        %v1501 = vld [vmem:[%s187 + $0x1878] sm:$0xff]
        %v1502 = vld [vmem:[%s187 + $0x1880] sm:$0xff]
        %v1503 = vld [vmem:[%s187 + $0x1888] sm:$0xff]
        %v1504 = vld [vmem:[%s187 + $0x1890] sm:$0xff]
        %v1505 = vld [vmem:[%s187 + $0x1898] sm:$0xff]
        %v1506 = vld [vmem:[%s187 + $0x18a0] sm:$0xff]
        %v1507 = vld [vmem:[%s187 + $0x18a8] sm:$0xff]
        %v1508 = vld [vmem:[%s187 + $0x18b0] sm:$0xff]
        %v1509 = vld [vmem:[%s187 + $0x18b8] sm:$0xff]
        %v1510 = vld [vmem:[%s187 + $0x18c0] sm:$0xff]
        %v1511 = vld [vmem:[%s187 + $0x18c8] sm:$0xff]
        %v1512 = vld [vmem:[%s187 + $0x18d0] sm:$0xff]
        %v1513 = vld [vmem:[%s187 + $0x18d8] sm:$0xff]
        %v1514 = vld [vmem:[%s187 + $0x18e0] sm:$0xff]
        %v1515 = vld [vmem:[%s187 + $0x18e8] sm:$0xff]
        %v1516 = vld [vmem:[%s187 + $0x18f0] sm:$0xff]
        %v1517 = vld [vmem:[%s187 + $0x18f8] sm:$0xff]
        %v1518 = vld [vmem:[%s187 + $0x1900] sm:$0xff]
        %v1519 = vld [vmem:[%s187 + $0x1908] sm:$0xff]
        %v1520 = vld [vmem:[%s187 + $0x1910] sm:$0xff]
        %v1521 = vld [vmem:[%s187 + $0x1918] sm:$0xff]
        %v1522 = vld [vmem:[%s187 + $0x1920] sm:$0xff]
        %v1523 = vld [vmem:[%s187 + $0x1928] sm:$0xff]
        %v1524 = vld [vmem:[%s187 + $0x1930] sm:$0xff]
        %v1525 = vld [vmem:[%s187 + $0x1938] sm:$0xff]
        %v1526 = vld [vmem:[%s187 + $0x1940] sm:$0xff]
        %v1527 = vld [vmem:[%s187 + $0x1948] sm:$0xff]
        %v1528 = vld [vmem:[%s187 + $0x1950] sm:$0xff]
        %v1529 = vld [vmem:[%s187 + $0x1958] sm:$0xff]
        %v1530 = vld [vmem:[%s187 + $0x1960] sm:$0xff]
        %v1531 = vld [vmem:[%s187 + $0x1968] sm:$0xff]
        %v1532 = vld [vmem:[%s187 + $0x1970] sm:$0xff]
        %v1533 = vld [vmem:[%s187 + $0x1978] sm:$0xff]
        %v1534 = vld [vmem:[%s187 + $0x1980] sm:$0xff]
        %v1535 = vld [vmem:[%s187 + $0x1988] sm:$0xff]
        %v1536 = vld [vmem:[%s187 + $0x1990] sm:$0xff]
        %v1537 = vld [vmem:[%s187 + $0x1998] sm:$0xff]
        %v1538 = vld [vmem:[%s187 + $0x19a0] sm:$0xff]
        %v1539 = vld [vmem:[%s187 + $0x19a8] sm:$0xff]
        %v1540 = vld [vmem:[%s187 + $0x19b0] sm:$0xff]
        %v1541 = vld [vmem:[%s187 + $0x19b8] sm:$0xff]
        %v1542 = vld [vmem:[%s187 + $0x19c0] sm:$0xff]
        %v1543 = vld [vmem:[%s187 + $0x19c8] sm:$0xff]
        %v1544 = vld [vmem:[%s187 + $0x19d0] sm:$0xff]
        %v1545 = vld [vmem:[%s187 + $0x19d8] sm:$0xff]
        %v1546 = vld [vmem:[%s187 + $0x19e0] sm:$0xff]
        %v1547 = vld [vmem:[%s187 + $0x19e8] sm:$0xff]
        %v1548 = vld [vmem:[%s187 + $0x19f0] sm:$0xff]
        %v1549 = vld [vmem:[%s187 + $0x19f8] sm:$0xff]
        %v1550 = vld [vmem:[%s187 + $0x1a00] sm:$0xff]
        %v1551 = vld [vmem:[%s187 + $0x1a08] sm:$0xff]
        %v1552 = vld [vmem:[%s187 + $0x1a10] sm:$0xff]
        %v1553 = vld [vmem:[%s187 + $0x1a18] sm:$0xff]
        %v1554 = vld [vmem:[%s187 + $0x1a20] sm:$0xff]
        %v1555 = vld [vmem:[%s187 + $0x1a28] sm:$0xff]
        %v1556 = vld [vmem:[%s187 + $0x1a30] sm:$0xff]
        %v1557 = vld [vmem:[%s187 + $0x1a38] sm:$0xff]
        %v1558 = vld [vmem:[%s187 + $0x1a40] sm:$0xff]
        %v1559 = vld [vmem:[%s187 + $0x1a48] sm:$0xff]
        %v1560 = vld [vmem:[%s187 + $0x1a50] sm:$0xff]
        %v1561 = vld [vmem:[%s187 + $0x1a58] sm:$0xff]
        %v1562 = vld [vmem:[%s187 + $0x1a60] sm:$0xff]
        %v1563 = vld [vmem:[%s187 + $0x1a68] sm:$0xff]
        %v1564 = vld [vmem:[%s187 + $0x1a70] sm:$0xff]
        %v1565 = vld [vmem:[%s187 + $0x1a78] sm:$0xff]
        %v1566 = vld [vmem:[%s187 + $0x1a80] sm:$0xff]
        %v1567 = vld [vmem:[%s187 + $0x1a88] sm:$0xff]
        %v1568 = vld [vmem:[%s187 + $0x1a90] sm:$0xff]
        %v1569 = vld [vmem:[%s187 + $0x1a98] sm:$0xff]
        %v1570 = vld [vmem:[%s187 + $0x1aa0] sm:$0xff]
        %v1571 = vld [vmem:[%s187 + $0x1aa8] sm:$0xff]
        %v1572 = vld [vmem:[%s187 + $0x1ab0] sm:$0xff]
        %v1573 = vld [vmem:[%s187 + $0x1ab8] sm:$0xff]
        %v1574 = vld [vmem:[%s187 + $0x1ac0] sm:$0xff]
        %v1575 = vld [vmem:[%s187 + $0x1ac8] sm:$0xff]
        %v1576 = vld [vmem:[%s187 + $0x1ad0] sm:$0xff]
        %v1577 = vld [vmem:[%s187 + $0x1ad8] sm:$0xff]
        %v1578 = vld [vmem:[%s187 + $0x1ae0] sm:$0xff]
        %v1579 = vld [vmem:[%s187 + $0x1ae8] sm:$0xff]
        %v1580 = vld [vmem:[%s187 + $0x1af0] sm:$0xff]
        %v1581 = vld [vmem:[%s187 + $0x1af8] sm:$0xff]
        %v1582 = vld [vmem:[%s187 + $0x1b00] sm:$0xff]
        %v1583 = vld [vmem:[%s187 + $0x1b08] sm:$0xff]
        %v1584 = vld [vmem:[%s187 + $0x1b10] sm:$0xff]
        %v1585 = vld [vmem:[%s187 + $0x1b18] sm:$0xff]
        %v1586 = vld [vmem:[%s187 + $0x1b20] sm:$0xff]
        %v1587 = vld [vmem:[%s187 + $0x1b28] sm:$0xff]
        %v1588 = vld [vmem:[%s187 + $0x1b30] sm:$0xff]
        %v1589 = vld [vmem:[%s187 + $0x1b38] sm:$0xff]
        %v1590 = vld [vmem:[%s187 + $0x1b40] sm:$0xff]
        %v1591 = vld [vmem:[%s187 + $0x1b48] sm:$0xff]
        %v1592 = vld [vmem:[%s187 + $0x1b50] sm:$0xff]
        %v1593 = vld [vmem:[%s187 + $0x1b58] sm:$0xff]
        %v1594 = vld [vmem:[%s187 + $0x1b60] sm:$0xff]
        %v1595 = vld [vmem:[%s187 + $0x1b68] sm:$0xff]
        %v1596 = vld [vmem:[%s187 + $0x1b70] sm:$0xff]
        %v1597 = vld [vmem:[%s187 + $0x1b78] sm:$0xff]
        %v1598 = vld [vmem:[%s187 + $0x1b80] sm:$0xff]
        %v1599 = vld [vmem:[%s187 + $0x1b88] sm:$0xff]
        %v1600 = vld [vmem:[%s187 + $0x1b90] sm:$0xff]
        %v1601 = vld [vmem:[%s187 + $0x1b98] sm:$0xff]
        %v1602 = vld [vmem:[%s187 + $0x1ba0] sm:$0xff]
        %v1603 = vld [vmem:[%s187 + $0x1ba8] sm:$0xff]
        %v1604 = vld [vmem:[%s187 + $0x1bb0] sm:$0xff]
        %v1605 = vld [vmem:[%s187 + $0x1bb8] sm:$0xff]
        %v1606 = vld [vmem:[%s187 + $0x1bc0] sm:$0xff]
        %v1607 = vld [vmem:[%s187 + $0x1bc8] sm:$0xff]
        %v1608 = vld [vmem:[%s187 + $0x1bd0] sm:$0xff]
        %v1609 = vld [vmem:[%s187 + $0x1bd8] sm:$0xff]
        %v1610 = vld [vmem:[%s187 + $0x1be0] sm:$0xff]
        %v1611 = vld [vmem:[%s187 + $0x1be8] sm:$0xff]
        %v1612 = vld [vmem:[%s187 + $0x1bf0] sm:$0xff]
        %v1613 = vld [vmem:[%s187 + $0x1bf8] sm:$0xff]
        %v1614 = vld [vmem:[%s187 + $0x1c00] sm:$0xff]
        %v1615 = vld [vmem:[%s187 + $0x1c08] sm:$0xff]
        %v1616 = vld [vmem:[%s187 + $0x1c10] sm:$0xff]
        %v1617 = vld [vmem:[%s187 + $0x1c18] sm:$0xff]
        %v1618 = vld [vmem:[%s187 + $0x1c20] sm:$0xff]
        %v1619 = vld [vmem:[%s187 + $0x1c28] sm:$0xff]
        %v1620 = vld [vmem:[%s187 + $0x1c30] sm:$0xff]
        %v1621 = vld [vmem:[%s187 + $0x1c38] sm:$0xff]
        %v1622 = vld [vmem:[%s187 + $0x1c40] sm:$0xff]
        %v1623 = vld [vmem:[%s187 + $0x1c48] sm:$0xff]
        %v1624 = vld [vmem:[%s187 + $0x1c50] sm:$0xff]
        %v1625 = vld [vmem:[%s187 + $0x1c58] sm:$0xff]
        %v1626 = vld [vmem:[%s187 + $0x1c60] sm:$0xff]
        %v1627 = vld [vmem:[%s187 + $0x1c68] sm:$0xff]
        %v1628 = vld [vmem:[%s187 + $0x1c70] sm:$0xff]
        %v1629 = vld [vmem:[%s187 + $0x1c78] sm:$0xff]
        %v1630 = vld [vmem:[%s187 + $0x1c80] sm:$0xff]
        %v1631 = vld [vmem:[%s187 + $0x1c88] sm:$0xff]
        %v1632 = vld [vmem:[%s187 + $0x1c90] sm:$0xff]
        %v1633 = vld [vmem:[%s187 + $0x1c98] sm:$0xff]
        %v1634 = vld [vmem:[%s187 + $0x1ca0] sm:$0xff]
        %v1635 = vld [vmem:[%s187 + $0x1ca8] sm:$0xff]
        %v1636 = vld [vmem:[%s187 + $0x1cb0] sm:$0xff]
        %v1637 = vld [vmem:[%s187 + $0x1cb8] sm:$0xff]
        %v1638 = vld [vmem:[%s187 + $0x1cc0] sm:$0xff]
        %v1639 = vld [vmem:[%s187 + $0x1cc8] sm:$0xff]
        %v1640 = vld [vmem:[%s187 + $0x1cd0] sm:$0xff]
        %v1641 = vld [vmem:[%s187 + $0x1cd8] sm:$0xff]
        %v1642 = vld [vmem:[%s187 + $0x1ce0] sm:$0xff]
        %v1643 = vld [vmem:[%s187 + $0x1ce8] sm:$0xff]
        %v1644 = vld [vmem:[%s187 + $0x1cf0] sm:$0xff]
        %v1645 = vld [vmem:[%s187 + $0x1cf8] sm:$0xff]
        %v1646 = vld [vmem:[%s187 + $0x1d00] sm:$0xff]
        %v1647 = vld [vmem:[%s187 + $0x1d08] sm:$0xff]
        %v1648 = vld [vmem:[%s187 + $0x1d10] sm:$0xff]
        %v1649 = vld [vmem:[%s187 + $0x1d18] sm:$0xff]
        %v1650 = vld [vmem:[%s187 + $0x1d20] sm:$0xff]
        %v1651 = vld [vmem:[%s187 + $0x1d28] sm:$0xff]
        %v1652 = vld [vmem:[%s187 + $0x1d30] sm:$0xff]
        %v1653 = vld [vmem:[%s187 + $0x1d38] sm:$0xff]
        %v1654 = vld [vmem:[%s187 + $0x1d40] sm:$0xff]
        %v1655 = vld [vmem:[%s187 + $0x1d48] sm:$0xff]
        %v1656 = vld [vmem:[%s187 + $0x1d50] sm:$0xff]
        %v1657 = vld [vmem:[%s187 + $0x1d58] sm:$0xff]
        %v1658 = vld [vmem:[%s187 + $0x1d60] sm:$0xff]
        %v1659 = vld [vmem:[%s187 + $0x1d68] sm:$0xff]
        %v1660 = vld [vmem:[%s187 + $0x1d70] sm:$0xff]
        %v1661 = vld [vmem:[%s187 + $0x1d78] sm:$0xff]
        %v1662 = vld [vmem:[%s187 + $0x1d80] sm:$0xff]
        %v1663 = vld [vmem:[%s187 + $0x1d88] sm:$0xff]
        %v1664 = vld [vmem:[%s187 + $0x1d90] sm:$0xff]
        %v1665 = vld [vmem:[%s187 + $0x1d98] sm:$0xff]
        %v1666 = vld [vmem:[%s187 + $0x1da0] sm:$0xff]
        %v1667 = vld [vmem:[%s187 + $0x1da8] sm:$0xff]
        %v1668 = vld [vmem:[%s187 + $0x1db0] sm:$0xff]
        %v1669 = vld [vmem:[%s187 + $0x1db8] sm:$0xff]
        %v1670 = vld [vmem:[%s187 + $0x1dc0] sm:$0xff]
        %v1671 = vld [vmem:[%s187 + $0x1dc8] sm:$0xff]
        %v1672 = vld [vmem:[%s187 + $0x1dd0] sm:$0xff]
        %v1673 = vld [vmem:[%s187 + $0x1dd8] sm:$0xff]
        %v1674 = vld [vmem:[%s187 + $0x1de0] sm:$0xff]
        %v1675 = vld [vmem:[%s187 + $0x1de8] sm:$0xff]
        %v1676 = vld [vmem:[%s187 + $0x1df0] sm:$0xff]
        %v1677 = vld [vmem:[%s187 + $0x1df8] sm:$0xff]
        %v1678 = vld [vmem:[%s187 + $0x1e00] sm:$0xff]
        %v1679 = vld [vmem:[%s187 + $0x1e08] sm:$0xff]
        %v1680 = vld [vmem:[%s187 + $0x1e10] sm:$0xff]
        %v1681 = vld [vmem:[%s187 + $0x1e18] sm:$0xff]
        %v1682 = vld [vmem:[%s187 + $0x1e20] sm:$0xff]
        %v1683 = vld [vmem:[%s187 + $0x1e28] sm:$0xff]
        %v1684 = vld [vmem:[%s187 + $0x1e30] sm:$0xff]
        %v1685 = vld [vmem:[%s187 + $0x1e38] sm:$0xff]
        %v1686 = vld [vmem:[%s187 + $0x1e40] sm:$0xff]
        %v1687 = vld [vmem:[%s187 + $0x1e48] sm:$0xff]
        %v1688 = vld [vmem:[%s187 + $0x1e50] sm:$0xff]
        %v1689 = vld [vmem:[%s187 + $0x1e58] sm:$0xff]
        %v1690 = vld [vmem:[%s187 + $0x1e60] sm:$0xff]
        %v1691 = vld [vmem:[%s187 + $0x1e68] sm:$0xff]
        %v1692 = vld [vmem:[%s187 + $0x1e70] sm:$0xff]
        %v1693 = vld [vmem:[%s187 + $0x1e78] sm:$0xff]
        %v1694 = vld [vmem:[%s187 + $0x1e80] sm:$0xff]
        %v1695 = vld [vmem:[%s187 + $0x1e88] sm:$0xff]
        %v1696 = vld [vmem:[%s187 + $0x1e90] sm:$0xff]
        %v1697 = vld [vmem:[%s187 + $0x1e98] sm:$0xff]
        %v1698 = vld [vmem:[%s187 + $0x1ea0] sm:$0xff]
        %v1699 = vld [vmem:[%s187 + $0x1ea8] sm:$0xff]
        %v1700 = vld [vmem:[%s187 + $0x1eb0] sm:$0xff]
        %v1701 = vld [vmem:[%s187 + $0x1eb8] sm:$0xff]
        %v1702 = vld [vmem:[%s187 + $0x1ec0] sm:$0xff]
        %v1703 = vld [vmem:[%s187 + $0x1ec8] sm:$0xff]
        %v1704 = vld [vmem:[%s187 + $0x1ed0] sm:$0xff]
        %v1705 = vld [vmem:[%s187 + $0x1ed8] sm:$0xff]
        %v1706 = vld [vmem:[%s187 + $0x1ee0] sm:$0xff]
        %v1707 = vld [vmem:[%s187 + $0x1ee8] sm:$0xff]
        %v1708 = vld [vmem:[%s187 + $0x1ef0] sm:$0xff]
        %v1709 = vld [vmem:[%s187 + $0x1ef8] sm:$0xff]
        %v1710 = vld [vmem:[%s187 + $0x1f00] sm:$0xff]
        %v1711 = vld [vmem:[%s187 + $0x1f08] sm:$0xff]
        %v1712 = vld [vmem:[%s187 + $0x1f10] sm:$0xff]
        %v1713 = vld [vmem:[%s187 + $0x1f18] sm:$0xff]
        %v1714 = vld [vmem:[%s187 + $0x1f20] sm:$0xff]
        %v1715 = vld [vmem:[%s187 + $0x1f28] sm:$0xff]
        %v1716 = vld [vmem:[%s187 + $0x1f30] sm:$0xff]
        %v1717 = vld [vmem:[%s187 + $0x1f38] sm:$0xff]
        %v1718 = vld [vmem:[%s187 + $0x1f40] sm:$0xff]
        %v1719 = vld [vmem:[%s187 + $0x1f48] sm:$0xff]
        %v1720 = vld [vmem:[%s187 + $0x1f50] sm:$0xff]
        %v1721 = vld [vmem:[%s187 + $0x1f58] sm:$0xff]
        %v1722 = vld [vmem:[%s187 + $0x1f60] sm:$0xff]
        %v1723 = vld [vmem:[%s187 + $0x1f68] sm:$0xff]
        %v1724 = vld [vmem:[%s187 + $0x1f70] sm:$0xff]
        %v1725 = vld [vmem:[%s187 + $0x1f78] sm:$0xff]
        %v1726 = vld [vmem:[%s187 + $0x1f80] sm:$0xff]
        %v1727 = vld [vmem:[%s187 + $0x1f88] sm:$0xff]
        %v1728 = vld [vmem:[%s187 + $0x1f90] sm:$0xff]
        %v1729 = vld [vmem:[%s187 + $0x1f98] sm:$0xff]
        %v1730 = vld [vmem:[%s187 + $0x1fa0] sm:$0xff]
        %v1731 = vld [vmem:[%s187 + $0x1fa8] sm:$0xff]
        %v1732 = vld [vmem:[%s187 + $0x1fb0] sm:$0xff]
        %v1733 = vld [vmem:[%s187 + $0x1fb8] sm:$0xff]
        %v1734 = vld [vmem:[%s187 + $0x1fc0] sm:$0xff]
        %v1735 = vld [vmem:[%s187 + $0x1fc8] sm:$0xff]
        %v1736 = vld [vmem:[%s187 + $0x1fd0] sm:$0xff]
        %v1737 = vld [vmem:[%s187 + $0x1fd8] sm:$0xff]
        %v1738 = vld [vmem:[%s187 + $0x1fe0] sm:$0xff]
        %v1739 = vld [vmem:[%s187 + $0x1fe8] sm:$0xff]
        %v1740 = vld [vmem:[%s187 + $0x1ff0] sm:$0xff]
        %v1741 = vld [vmem:[%s187 + $0x1ff8] sm:$0xff]
        %v1742 = vld [vmem:[%s187 + $0x2000] sm:$0xff]
        %v1743 = vld [vmem:[%s187 + $0x2008] sm:$0xff]
        %v1744 = vld [vmem:[%s187 + $0x2010] sm:$0xff]
        %v1745 = vld [vmem:[%s187 + $0x2018] sm:$0xff]
        %v1746 = vld [vmem:[%s187 + $0x2020] sm:$0xff]
        %v1747 = vld [vmem:[%s187 + $0x2028] sm:$0xff]
        %v1748 = vld [vmem:[%s187 + $0x2030] sm:$0xff]
        %v1749 = vld [vmem:[%s187 + $0x2038] sm:$0xff]
        %v1750 = vld [vmem:[%s187 + $0x2040] sm:$0xff]
        %v1751 = vld [vmem:[%s187 + $0x2048] sm:$0xff]
        %v1752 = vld [vmem:[%s187 + $0x2050] sm:$0xff]
        %v1753 = vld [vmem:[%s187 + $0x2058] sm:$0xff]
        %v1754 = vld [vmem:[%s187 + $0x2060] sm:$0xff]
        %v1755 = vld [vmem:[%s187 + $0x2068] sm:$0xff]
        %v1756 = vld [vmem:[%s187 + $0x2070] sm:$0xff]
        %v1757 = vld [vmem:[%s187 + $0x2078] sm:$0xff]
        %v1758 = vld [vmem:[%s187 + $0x2080] sm:$0xff]
        %v1759 = vld [vmem:[%s187 + $0x2088] sm:$0xff]
        %v1760 = vld [vmem:[%s187 + $0x2090] sm:$0xff]
        %v1761 = vld [vmem:[%s187 + $0x2098] sm:$0xff]
        %v1762 = vld [vmem:[%s187 + $0x20a0] sm:$0xff]
        %v1763 = vld [vmem:[%s187 + $0x20a8] sm:$0xff]
        %v1764 = vld [vmem:[%s187 + $0x20b0] sm:$0xff]
        %v1765 = vld [vmem:[%s187 + $0x20b8] sm:$0xff]
        %v1766 = vld [vmem:[%s187 + $0x20c0] sm:$0xff]
        %v1767 = vld [vmem:[%s187 + $0x20c8] sm:$0xff]
        %v1768 = vld [vmem:[%s187 + $0x20d0] sm:$0xff]
        %v1769 = vld [vmem:[%s187 + $0x20d8] sm:$0xff]
        %v1770 = vld [vmem:[%s187 + $0x20e0] sm:$0xff]
        %v1771 = vld [vmem:[%s187 + $0x20e8] sm:$0xff]
        %v1772 = vld [vmem:[%s187 + $0x20f0] sm:$0xff]
        %v1773 = vld [vmem:[%s187 + $0x20f8] sm:$0xff]
        %v1774 = vld [vmem:[%s187 + $0x2100] sm:$0xff]
        %v1775 = vld [vmem:[%s187 + $0x2108] sm:$0xff]
        %v1776 = vld [vmem:[%s187 + $0x2110] sm:$0xff]
        %v1777 = vld [vmem:[%s187 + $0x2118] sm:$0xff]
        %v1778 = vld [vmem:[%s187 + $0x2120] sm:$0xff]
        %v1779 = vld [vmem:[%s187 + $0x2128] sm:$0xff]
        %v1780 = vld [vmem:[%s187 + $0x2130] sm:$0xff]
        %v1781 = vld [vmem:[%s187 + $0x2138] sm:$0xff]
        %v1782 = vld [vmem:[%s187 + $0x2140] sm:$0xff]
        %v1783 = vld [vmem:[%s187 + $0x2148] sm:$0xff]
        %v1784 = vld [vmem:[%s187 + $0x2150] sm:$0xff]
        %v1785 = vld [vmem:[%s187 + $0x2158] sm:$0xff]
        %v1786 = vld [vmem:[%s187 + $0x2160] sm:$0xff]
        %v1787 = vld [vmem:[%s187 + $0x2168] sm:$0xff]
        %v1788 = vld [vmem:[%s187 + $0x2170] sm:$0xff]
        %v1789 = vld [vmem:[%s187 + $0x2178] sm:$0xff]
        %v1790 = vld [vmem:[%s187 + $0x2180] sm:$0xff]
        %v1791 = vld [vmem:[%s187 + $0x2188] sm:$0xff]
        %v1792 = vld [vmem:[%s187 + $0x2190] sm:$0xff]
        %v1793 = vld [vmem:[%s187 + $0x2198] sm:$0xff]
        %v1794 = vld [vmem:[%s187 + $0x21a0] sm:$0xff]
        %v1795 = vld [vmem:[%s187 + $0x21a8] sm:$0xff]
        %v1796 = vld [vmem:[%s187 + $0x21b0] sm:$0xff]
        %v1797 = vld [vmem:[%s187 + $0x21b8] sm:$0xff]
        %v1798 = vld [vmem:[%s187 + $0x21c0] sm:$0xff]
        %v1799 = vld [vmem:[%s187 + $0x21c8] sm:$0xff]
        %v1800 = vld [vmem:[%s187 + $0x21d0] sm:$0xff]
        %v1801 = vld [vmem:[%s187 + $0x21d8] sm:$0xff]
        %v1802 = vld [vmem:[%s187 + $0x21e0] sm:$0xff]
        %v1803 = vld [vmem:[%s187 + $0x21e8] sm:$0xff]
        %v1804 = vld [vmem:[%s187 + $0x21f0] sm:$0xff]
        %v1805 = vld [vmem:[%s187 + $0x21f8] sm:$0xff]
        %v1806 = vld [vmem:[%s187 + $0x2200] sm:$0xff]
        %v1807 = vld [vmem:[%s187 + $0x2208] sm:$0xff]
        %v1808 = vld [vmem:[%s187 + $0x2210] sm:$0xff]
        %v1809 = vld [vmem:[%s187 + $0x2218] sm:$0xff]
        %v1810 = vld [vmem:[%s187 + $0x2220] sm:$0xff]
        %v1811 = vld [vmem:[%s187 + $0x2228] sm:$0xff]
        %v1812 = vld [vmem:[%s187 + $0x2230] sm:$0xff]
        %v1813 = vld [vmem:[%s187 + $0x2238] sm:$0xff]
        %v1814 = vld [vmem:[%s187 + $0x2240] sm:$0xff]
        %v1815 = vld [vmem:[%s187 + $0x2248] sm:$0xff]
        %v1816 = vld [vmem:[%s187 + $0x2250] sm:$0xff]
        %v1817 = vld [vmem:[%s187 + $0x2258] sm:$0xff]
        %v1818 = vld [vmem:[%s187 + $0x2260] sm:$0xff]
        %v1819 = vld [vmem:[%s187 + $0x2268] sm:$0xff]
        %v1820 = vld [vmem:[%s187 + $0x2270] sm:$0xff]
        %v1821 = vld [vmem:[%s187 + $0x2278] sm:$0xff]
        %v1822 = vld [vmem:[%s187 + $0x2280] sm:$0xff]
        %v1823 = vld [vmem:[%s187 + $0x2288] sm:$0xff]
        %v1824 = vld [vmem:[%s187 + $0x2290] sm:$0xff]
        %v1825 = vld [vmem:[%s187 + $0x2298] sm:$0xff]
        %v1826 = vld [vmem:[%s187 + $0x22a0] sm:$0xff]
        %v1827 = vld [vmem:[%s187 + $0x22a8] sm:$0xff]
        %v1828 = vld [vmem:[%s187 + $0x22b0] sm:$0xff]
        %v1829 = vld [vmem:[%s187 + $0x22b8] sm:$0xff]
        %v1830 = vld [vmem:[%s187 + $0x22c0] sm:$0xff]
        %v1831 = vld [vmem:[%s187 + $0x22c8] sm:$0xff]
        %v1832 = vld [vmem:[%s187 + $0x22d0] sm:$0xff]
        %v1833 = vld [vmem:[%s187 + $0x22d8] sm:$0xff]
        %v1834 = vld [vmem:[%s187 + $0x22e0] sm:$0xff]
        %v1835 = vld [vmem:[%s187 + $0x22e8] sm:$0xff]
        %v1836 = vld [vmem:[%s187 + $0x22f0] sm:$0xff]
        %v1837 = vld [vmem:[%s187 + $0x22f8] sm:$0xff]
        %v1838 = vld [vmem:[%s187 + $0x2300] sm:$0xff]
        %v1839 = vld [vmem:[%s187 + $0x2308] sm:$0xff]
        %v1840 = vld [vmem:[%s187 + $0x2310] sm:$0xff]
        %v1841 = vld [vmem:[%s187 + $0x2318] sm:$0xff]
        %v1842 = vld [vmem:[%s187 + $0x2320] sm:$0xff]
        %v1843 = vld [vmem:[%s187 + $0x2328] sm:$0xff]
        %v1844 = vld [vmem:[%s187 + $0x2330] sm:$0xff]
        %v1845 = vld [vmem:[%s187 + $0x2338] sm:$0xff]
        %v1846 = vld [vmem:[%s187 + $0x2340] sm:$0xff]
        %v1847 = vld [vmem:[%s187 + $0x2348] sm:$0xff]
        %v1848 = vld [vmem:[%s187 + $0x2350] sm:$0xff]
        %v1849 = vld [vmem:[%s187 + $0x2358] sm:$0xff]
        %v1850 = vld [vmem:[%s187 + $0x2360] sm:$0xff]
        %v1851 = vld [vmem:[%s187 + $0x2368] sm:$0xff]
        %v1852 = vld [vmem:[%s187 + $0x2370] sm:$0xff]
        %v1853 = vld [vmem:[%s187 + $0x2378] sm:$0xff]
        %v1854 = vld [vmem:[%s187 + $0x2380] sm:$0xff]
        %v1855 = vld [vmem:[%s187 + $0x2388] sm:$0xff]
        %v1856 = vld [vmem:[%s187 + $0x2390] sm:$0xff]
        %v1857 = vld [vmem:[%s187 + $0x2398] sm:$0xff]
        %v1858 = vld [vmem:[%s187 + $0x23a0] sm:$0xff]
        %v1859 = vld [vmem:[%s187 + $0x23a8] sm:$0xff]
        %v1860 = vld [vmem:[%s187 + $0x23b0] sm:$0xff]
        %v1861 = vld [vmem:[%s187 + $0x23b8] sm:$0xff]
        %v1862 = vld [vmem:[%s187 + $0x23c0] sm:$0xff]
        %v1863 = vld [vmem:[%s187 + $0x23c8] sm:$0xff]
        %v1864 = vld [vmem:[%s187 + $0x23d0] sm:$0xff]
        %v1865 = vld [vmem:[%s187 + $0x23d8] sm:$0xff]
        %v1866 = vld [vmem:[%s187 + $0x23e0] sm:$0xff]
        %v1867 = vld [vmem:[%s187 + $0x23e8] sm:$0xff]
        %v1868 = vld [vmem:[%s187 + $0x23f0] sm:$0xff]
        %v1869 = vld [vmem:[%s187 + $0x23f8] sm:$0xff]
        %v1870 = vld [vmem:[%s196] sm:$0x3]
        %v1872 = vlaneseq
        %v1873 = vshrl.u32 %v1872, 7
        %v1874 = vsub.s32 0, %v1873
        %v1875 = vrot.slane %v1870, %v1874
        %v1876 = vlaneseq
        %v1877 = vshrl.u32 %v1876, 7
        %v1878 = vsub.s32 1, %v1877
        %v1879 = vrot.slane %v1870, %v1878
        %v3034 = vunpack.c.l.b16 %v718
        %v3035 = vunpack.c.h.b16 %v718
        %v3036 = vunpack.c.l.b16 %v719
        %v3037 = vunpack.c.h.b16 %v719
        %v3038 = vunpack.c.l.b16 %v720
        %v3039 = vunpack.c.h.b16 %v720
        %v3040 = vunpack.c.l.b16 %v721
        %v3041 = vunpack.c.h.b16 %v721
        %v3042 = vunpack.c.l.b16 %v722
        %v3043 = vunpack.c.h.b16 %v722
        %v3044 = vunpack.c.l.b16 %v723
        %v3045 = vunpack.c.h.b16 %v723
        %v3046 = vunpack.c.l.b16 %v724
        %v3047 = vunpack.c.h.b16 %v724
        %v3048 = vunpack.c.l.b16 %v725
        %v3049 = vunpack.c.h.b16 %v725
        %v3050 = vunpack.c.l.b16 %v726
        %v3051 = vunpack.c.h.b16 %v726
        %v3052 = vunpack.c.l.b16 %v727
        %v3053 = vunpack.c.h.b16 %v727
        %v3054 = vunpack.c.l.b16 %v728
        %v3055 = vunpack.c.h.b16 %v728
        %v3056 = vunpack.c.l.b16 %v729
        %v3057 = vunpack.c.h.b16 %v729
        %v3058 = vunpack.c.l.b16 %v730
        %v3059 = vunpack.c.h.b16 %v730
        %v3060 = vunpack.c.l.b16 %v731
        %v3061 = vunpack.c.h.b16 %v731
        %v3062 = vunpack.c.l.b16 %v732
        %v3063 = vunpack.c.h.b16 %v732
        %v3064 = vunpack.c.l.b16 %v733
        %v3065 = vunpack.c.h.b16 %v733
        %v3066 = vunpack.c.l.b16 %v734
        %v3067 = vunpack.c.h.b16 %v734
        %v3068 = vunpack.c.l.b16 %v735
        %v3069 = vunpack.c.h.b16 %v735
        %v3070 = vunpack.c.l.b16 %v736
        %v3071 = vunpack.c.h.b16 %v736
        %v3072 = vunpack.c.l.b16 %v737
        %v3073 = vunpack.c.h.b16 %v737
        %v3074 = vunpack.c.l.b16 %v738
        %v3075 = vunpack.c.h.b16 %v738
        %v3076 = vunpack.c.l.b16 %v739
        %v3077 = vunpack.c.h.b16 %v739
        %v3078 = vunpack.c.l.b16 %v740
        %v3079 = vunpack.c.h.b16 %v740
        %v3080 = vunpack.c.l.b16 %v741
        %v3081 = vunpack.c.h.b16 %v741
        %v3082 = vunpack.c.l.b16 %v742
        %v3083 = vunpack.c.h.b16 %v742
        %v3084 = vunpack.c.l.b16 %v743
        %v3085 = vunpack.c.h.b16 %v743
        %v3086 = vunpack.c.l.b16 %v744
        %v3087 = vunpack.c.h.b16 %v744
        %v3088 = vunpack.c.l.b16 %v745
        %v3089 = vunpack.c.h.b16 %v745
        %v3090 = vunpack.c.l.b16 %v746
        %v3091 = vunpack.c.h.b16 %v746
        %v3092 = vunpack.c.l.b16 %v747
        %v3093 = vunpack.c.h.b16 %v747
        %v3094 = vunpack.c.l.b16 %v748
        %v3095 = vunpack.c.h.b16 %v748
        %v3096 = vunpack.c.l.b16 %v749
        %v3097 = vunpack.c.h.b16 %v749
        %v3098 = vunpack.c.l.b16 %v750
        %v3099 = vunpack.c.h.b16 %v750
        %v3100 = vunpack.c.l.b16 %v751
        %v3101 = vunpack.c.h.b16 %v751
        %v3102 = vunpack.c.l.b16 %v752
        %v3103 = vunpack.c.h.b16 %v752
        %v3104 = vunpack.c.l.b16 %v753
        %v3105 = vunpack.c.h.b16 %v753
        %v3106 = vunpack.c.l.b16 %v754
        %v3107 = vunpack.c.h.b16 %v754
        %v3108 = vunpack.c.l.b16 %v755
        %v3109 = vunpack.c.h.b16 %v755
        %v3110 = vunpack.c.l.b16 %v756
        %v3111 = vunpack.c.h.b16 %v756
        %v3112 = vunpack.c.l.b16 %v757
        %v3113 = vunpack.c.h.b16 %v757
        %v3114 = vunpack.c.l.b16 %v758
        %v3115 = vunpack.c.h.b16 %v758
        %v3116 = vunpack.c.l.b16 %v759
        %v3117 = vunpack.c.h.b16 %v759
        %v3118 = vunpack.c.l.b16 %v760
        %v3119 = vunpack.c.h.b16 %v760
        %v3120 = vunpack.c.l.b16 %v761
        %v3121 = vunpack.c.h.b16 %v761
        %v3122 = vunpack.c.l.b16 %v762
        %v3123 = vunpack.c.h.b16 %v762
        %v3124 = vunpack.c.l.b16 %v763
        %v3125 = vunpack.c.h.b16 %v763
        %v3126 = vunpack.c.l.b16 %v764
        %v3127 = vunpack.c.h.b16 %v764
        %v3128 = vunpack.c.l.b16 %v765
        %v3129 = vunpack.c.h.b16 %v765
        %v3130 = vunpack.c.l.b16 %v766
        %v3131 = vunpack.c.h.b16 %v766
        %v3132 = vunpack.c.l.b16 %v767
        %v3133 = vunpack.c.h.b16 %v767
        %v3134 = vunpack.c.l.b16 %v768
        %v3135 = vunpack.c.h.b16 %v768
        %v3136 = vunpack.c.l.b16 %v769
        %v3137 = vunpack.c.h.b16 %v769
        %v3138 = vunpack.c.l.b16 %v770
        %v3139 = vunpack.c.h.b16 %v770
        %v3140 = vunpack.c.l.b16 %v771
        %v3141 = vunpack.c.h.b16 %v771
        %v3142 = vunpack.c.l.b16 %v772
        %v3143 = vunpack.c.h.b16 %v772
        %v3144 = vunpack.c.l.b16 %v773
        %v3145 = vunpack.c.h.b16 %v773
        %v3146 = vunpack.c.l.b16 %v774
        %v3147 = vunpack.c.h.b16 %v774
        %v3148 = vunpack.c.l.b16 %v775
        %v3149 = vunpack.c.h.b16 %v775
        %v3150 = vunpack.c.l.b16 %v776
        %v3151 = vunpack.c.h.b16 %v776
        %v3152 = vunpack.c.l.b16 %v777
        %v3153 = vunpack.c.h.b16 %v777
        %v3154 = vunpack.c.l.b16 %v778
        %v3155 = vunpack.c.h.b16 %v778
        %v3156 = vunpack.c.l.b16 %v779
        %v3157 = vunpack.c.h.b16 %v779
        %v3158 = vunpack.c.l.b16 %v780
        %v3159 = vunpack.c.h.b16 %v780
        %v3160 = vunpack.c.l.b16 %v781
        %v3161 = vunpack.c.h.b16 %v781
        %v3162 = vunpack.c.l.b16 %v782
        %v3163 = vunpack.c.h.b16 %v782
        %v3164 = vunpack.c.l.b16 %v783
        %v3165 = vunpack.c.h.b16 %v783
        %v3166 = vunpack.c.l.b16 %v784
        %v3167 = vunpack.c.h.b16 %v784
        %v3168 = vunpack.c.l.b16 %v785
        %v3169 = vunpack.c.h.b16 %v785
        %v3170 = vunpack.c.l.b16 %v786
        %v3171 = vunpack.c.h.b16 %v786
        %v3172 = vunpack.c.l.b16 %v787
        %v3173 = vunpack.c.h.b16 %v787
        %v3174 = vunpack.c.l.b16 %v788
        %v3175 = vunpack.c.h.b16 %v788
        %v3176 = vunpack.c.l.b16 %v789
        %v3177 = vunpack.c.h.b16 %v789
        %v3178 = vunpack.c.l.b16 %v790
        %v3179 = vunpack.c.h.b16 %v790
        %v3180 = vunpack.c.l.b16 %v791
        %v3181 = vunpack.c.h.b16 %v791
        %v3182 = vunpack.c.l.b16 %v792
        %v3183 = vunpack.c.h.b16 %v792
        %v3184 = vunpack.c.l.b16 %v793
        %v3185 = vunpack.c.h.b16 %v793
        %v3186 = vunpack.c.l.b16 %v794
        %v3187 = vunpack.c.h.b16 %v794
        %v3188 = vunpack.c.l.b16 %v795
        %v3189 = vunpack.c.h.b16 %v795
        %v3190 = vunpack.c.l.b16 %v796
        %v3191 = vunpack.c.h.b16 %v796
        %v3192 = vunpack.c.l.b16 %v797
        %v3193 = vunpack.c.h.b16 %v797
        %v3194 = vunpack.c.l.b16 %v798
        %v3195 = vunpack.c.h.b16 %v798
        %v3196 = vunpack.c.l.b16 %v799
        %v3197 = vunpack.c.h.b16 %v799
        %v3198 = vunpack.c.l.b16 %v800
        %v3199 = vunpack.c.h.b16 %v800
        %v3200 = vunpack.c.l.b16 %v801
        %v3201 = vunpack.c.h.b16 %v801
        %v3202 = vunpack.c.l.b16 %v802
        %v3203 = vunpack.c.h.b16 %v802
        %v3204 = vunpack.c.l.b16 %v803
        %v3205 = vunpack.c.h.b16 %v803
        %v3206 = vunpack.c.l.b16 %v804
        %v3207 = vunpack.c.h.b16 %v804
        %v3208 = vunpack.c.l.b16 %v805
        %v3209 = vunpack.c.h.b16 %v805
        %v3210 = vunpack.c.l.b16 %v806
        %v3211 = vunpack.c.h.b16 %v806
        %v3212 = vunpack.c.l.b16 %v807
        %v3213 = vunpack.c.h.b16 %v807
        %v3214 = vunpack.c.l.b16 %v808
        %v3215 = vunpack.c.h.b16 %v808
        %v3216 = vunpack.c.l.b16 %v809
        %v3217 = vunpack.c.h.b16 %v809
        %v3218 = vunpack.c.l.b16 %v810
        %v3219 = vunpack.c.h.b16 %v810
        %v3220 = vunpack.c.l.b16 %v811
        %v3221 = vunpack.c.h.b16 %v811
        %v3222 = vunpack.c.l.b16 %v812
        %v3223 = vunpack.c.h.b16 %v812
        %v3224 = vunpack.c.l.b16 %v813
        %v3225 = vunpack.c.h.b16 %v813
        %v3226 = vunpack.c.l.b16 %v814
        %v3227 = vunpack.c.h.b16 %v814
        %v3228 = vunpack.c.l.b16 %v815
        %v3229 = vunpack.c.h.b16 %v815
        %v3230 = vunpack.c.l.b16 %v816
        %v3231 = vunpack.c.h.b16 %v816
        %v3232 = vunpack.c.l.b16 %v817
        %v3233 = vunpack.c.h.b16 %v817
        %v3234 = vunpack.c.l.b16 %v818
        %v3235 = vunpack.c.h.b16 %v818
        %v3236 = vunpack.c.l.b16 %v819
        %v3237 = vunpack.c.h.b16 %v819
        %v3238 = vunpack.c.l.b16 %v820
        %v3239 = vunpack.c.h.b16 %v820
        %v3240 = vunpack.c.l.b16 %v821
        %v3241 = vunpack.c.h.b16 %v821
        %v3242 = vunpack.c.l.b16 %v822
        %v3243 = vunpack.c.h.b16 %v822
        %v3244 = vunpack.c.l.b16 %v823
        %v3245 = vunpack.c.h.b16 %v823
        %v3246 = vunpack.c.l.b16 %v824
        %v3247 = vunpack.c.h.b16 %v824
        %v3248 = vunpack.c.l.b16 %v825
        %v3249 = vunpack.c.h.b16 %v825
        %v3250 = vunpack.c.l.b16 %v826
        %v3251 = vunpack.c.h.b16 %v826
        %v3252 = vunpack.c.l.b16 %v827
        %v3253 = vunpack.c.h.b16 %v827
        %v3254 = vunpack.c.l.b16 %v828
        %v3255 = vunpack.c.h.b16 %v828
        %v3256 = vunpack.c.l.b16 %v829
        %v3257 = vunpack.c.h.b16 %v829
        %v3258 = vunpack.c.l.b16 %v830
        %v3259 = vunpack.c.h.b16 %v830
        %v3260 = vunpack.c.l.b16 %v831
        %v3261 = vunpack.c.h.b16 %v831
        %v3262 = vunpack.c.l.b16 %v832
        %v3263 = vunpack.c.h.b16 %v832
        %v3264 = vunpack.c.l.b16 %v833
        %v3265 = vunpack.c.h.b16 %v833
        %v3266 = vunpack.c.l.b16 %v834
        %v3267 = vunpack.c.h.b16 %v834
        %v3268 = vunpack.c.l.b16 %v835
        %v3269 = vunpack.c.h.b16 %v835
        %v3270 = vunpack.c.l.b16 %v836
        %v3271 = vunpack.c.h.b16 %v836
        %v3272 = vunpack.c.l.b16 %v837
        %v3273 = vunpack.c.h.b16 %v837
        %v3274 = vunpack.c.l.b16 %v838
        %v3275 = vunpack.c.h.b16 %v838
        %v3276 = vunpack.c.l.b16 %v839
        %v3277 = vunpack.c.h.b16 %v839
        %v3278 = vunpack.c.l.b16 %v840
        %v3279 = vunpack.c.h.b16 %v840
        %v3280 = vunpack.c.l.b16 %v841
        %v3281 = vunpack.c.h.b16 %v841
        %v3282 = vunpack.c.l.b16 %v842
        %v3283 = vunpack.c.h.b16 %v842
        %v3284 = vunpack.c.l.b16 %v843
        %v3285 = vunpack.c.h.b16 %v843
        %v3286 = vunpack.c.l.b16 %v844
        %v3287 = vunpack.c.h.b16 %v844
        %v3288 = vunpack.c.l.b16 %v845
        %v3289 = vunpack.c.h.b16 %v845
        %v3290 = vunpack.c.l.b16 %v846
        %v3291 = vunpack.c.h.b16 %v846
        %v3292 = vunpack.c.l.b16 %v847
        %v3293 = vunpack.c.h.b16 %v847
        %v3294 = vunpack.c.l.b16 %v848
        %v3295 = vunpack.c.h.b16 %v848
        %v3296 = vunpack.c.l.b16 %v849
        %v3297 = vunpack.c.h.b16 %v849
        %v3298 = vunpack.c.l.b16 %v850
        %v3299 = vunpack.c.h.b16 %v850
        %v3300 = vunpack.c.l.b16 %v851
        %v3301 = vunpack.c.h.b16 %v851
        %v3302 = vunpack.c.l.b16 %v852
        %v3303 = vunpack.c.h.b16 %v852
        %v3304 = vunpack.c.l.b16 %v853
        %v3305 = vunpack.c.h.b16 %v853
        %v3306 = vunpack.c.l.b16 %v854
        %v3307 = vunpack.c.h.b16 %v854
        %v3308 = vunpack.c.l.b16 %v855
        %v3309 = vunpack.c.h.b16 %v855
        %v3310 = vunpack.c.l.b16 %v856
        %v3311 = vunpack.c.h.b16 %v856
        %v3312 = vunpack.c.l.b16 %v857
        %v3313 = vunpack.c.h.b16 %v857
        %v3314 = vunpack.c.l.b16 %v858
        %v3315 = vunpack.c.h.b16 %v858
        %v3316 = vunpack.c.l.b16 %v859
        %v3317 = vunpack.c.h.b16 %v859
        %v3318 = vunpack.c.l.b16 %v860
        %v3319 = vunpack.c.h.b16 %v860
        %v3320 = vunpack.c.l.b16 %v861
        %v3321 = vunpack.c.h.b16 %v861
        %v3322 = vunpack.c.l.b16 %v862
        %v3323 = vunpack.c.h.b16 %v862
        %v3324 = vunpack.c.l.b16 %v863
        %v3325 = vunpack.c.h.b16 %v863
        %v3326 = vunpack.c.l.b16 %v864
        %v3327 = vunpack.c.h.b16 %v864
        %v3328 = vunpack.c.l.b16 %v865
        %v3329 = vunpack.c.h.b16 %v865
        %v3330 = vunpack.c.l.b16 %v866
        %v3331 = vunpack.c.h.b16 %v866
        %v3332 = vunpack.c.l.b16 %v867
        %v3333 = vunpack.c.h.b16 %v867
        %v3334 = vunpack.c.l.b16 %v868
        %v3335 = vunpack.c.h.b16 %v868
        %v3336 = vunpack.c.l.b16 %v869
        %v3337 = vunpack.c.h.b16 %v869
        %v3338 = vunpack.c.l.b16 %v870
        %v3339 = vunpack.c.h.b16 %v870
        %v3340 = vunpack.c.l.b16 %v871
        %v3341 = vunpack.c.h.b16 %v871
        %v3342 = vunpack.c.l.b16 %v872
        %v3343 = vunpack.c.h.b16 %v872
        %v3344 = vunpack.c.l.b16 %v873
        %v3345 = vunpack.c.h.b16 %v873
        %v3346 = vunpack.c.l.b16 %v874
        %v3347 = vunpack.c.h.b16 %v874
        %v3348 = vunpack.c.l.b16 %v875
        %v3349 = vunpack.c.h.b16 %v875
        %v3350 = vunpack.c.l.b16 %v876
        %v3351 = vunpack.c.h.b16 %v876
        %v3352 = vunpack.c.l.b16 %v877
        %v3353 = vunpack.c.h.b16 %v877
        %v3354 = vunpack.c.l.b16 %v878
        %v3355 = vunpack.c.h.b16 %v878
        %v3356 = vunpack.c.l.b16 %v879
        %v3357 = vunpack.c.h.b16 %v879
        %v3358 = vunpack.c.l.b16 %v880
        %v3359 = vunpack.c.h.b16 %v880
        %v3360 = vunpack.c.l.b16 %v881
        %v3361 = vunpack.c.h.b16 %v881
        %v3362 = vunpack.c.l.b16 %v882
        %v3363 = vunpack.c.h.b16 %v882
        %v3364 = vunpack.c.l.b16 %v883
        %v3365 = vunpack.c.h.b16 %v883
        %v3366 = vunpack.c.l.b16 %v884
        %v3367 = vunpack.c.h.b16 %v884
        %v3368 = vunpack.c.l.b16 %v885
        %v3369 = vunpack.c.h.b16 %v885
        %v3370 = vunpack.c.l.b16 %v886
        %v3371 = vunpack.c.h.b16 %v886
        %v3372 = vunpack.c.l.b16 %v887
        %v3373 = vunpack.c.h.b16 %v887
        %v3374 = vunpack.c.l.b16 %v888
        %v3375 = vunpack.c.h.b16 %v888
        %v3376 = vunpack.c.l.b16 %v889
        %v3377 = vunpack.c.h.b16 %v889
        %v3378 = vunpack.c.l.b16 %v890
        %v3379 = vunpack.c.h.b16 %v890
        %v3380 = vunpack.c.l.b16 %v891
        %v3381 = vunpack.c.h.b16 %v891
        %v3382 = vunpack.c.l.b16 %v892
        %v3383 = vunpack.c.h.b16 %v892
        %v3384 = vunpack.c.l.b16 %v893
        %v3385 = vunpack.c.h.b16 %v893
        %v3386 = vunpack.c.l.b16 %v894
        %v3387 = vunpack.c.h.b16 %v894
        %v3388 = vunpack.c.l.b16 %v895
        %v3389 = vunpack.c.h.b16 %v895
        %v3390 = vunpack.c.l.b16 %v896
        %v3391 = vunpack.c.h.b16 %v896
        %v3392 = vunpack.c.l.b16 %v897
        %v3393 = vunpack.c.h.b16 %v897
        %v3394 = vunpack.c.l.b16 %v898
        %v3395 = vunpack.c.h.b16 %v898
        %v3396 = vunpack.c.l.b16 %v899
        %v3397 = vunpack.c.h.b16 %v899
        %v3398 = vunpack.c.l.b16 %v900
        %v3399 = vunpack.c.h.b16 %v900
        %v3400 = vunpack.c.l.b16 %v901
        %v3401 = vunpack.c.h.b16 %v901
        %v3402 = vunpack.c.l.b16 %v902
        %v3403 = vunpack.c.h.b16 %v902
        %v3404 = vunpack.c.l.b16 %v903
        %v3405 = vunpack.c.h.b16 %v903
        %v3406 = vunpack.c.l.b16 %v904
        %v3407 = vunpack.c.h.b16 %v904
        %v3408 = vunpack.c.l.b16 %v905
        %v3409 = vunpack.c.h.b16 %v905
        %v3410 = vunpack.c.l.b16 %v906
        %v3411 = vunpack.c.h.b16 %v906
        %v3412 = vunpack.c.l.b16 %v907
        %v3413 = vunpack.c.h.b16 %v907
        %v3414 = vunpack.c.l.b16 %v908
        %v3415 = vunpack.c.h.b16 %v908
        %v3416 = vunpack.c.l.b16 %v909
        %v3417 = vunpack.c.h.b16 %v909
        %v3418 = vunpack.c.l.b16 %v910
        %v3419 = vunpack.c.h.b16 %v910
        %v3420 = vunpack.c.l.b16 %v911
        %v3421 = vunpack.c.h.b16 %v911
        %v3422 = vunpack.c.l.b16 %v912
        %v3423 = vunpack.c.h.b16 %v912
        %v3424 = vunpack.c.l.b16 %v913
        %v3425 = vunpack.c.h.b16 %v913
        %v3426 = vunpack.c.l.b16 %v914
        %v3427 = vunpack.c.h.b16 %v914
        %v3428 = vunpack.c.l.b16 %v915
        %v3429 = vunpack.c.h.b16 %v915
        %v3430 = vunpack.c.l.b16 %v916
        %v3431 = vunpack.c.h.b16 %v916
        %v3432 = vunpack.c.l.b16 %v917
        %v3433 = vunpack.c.h.b16 %v917
        %v3434 = vunpack.c.l.b16 %v918
        %v3435 = vunpack.c.h.b16 %v918
        %v3436 = vunpack.c.l.b16 %v919
        %v3437 = vunpack.c.h.b16 %v919
        %v3438 = vunpack.c.l.b16 %v920
        %v3439 = vunpack.c.h.b16 %v920
        %v3440 = vunpack.c.l.b16 %v921
        %v3441 = vunpack.c.h.b16 %v921
        %v3442 = vunpack.c.l.b16 %v922
        %v3443 = vunpack.c.h.b16 %v922
        %v3444 = vunpack.c.l.b16 %v923
        %v3445 = vunpack.c.h.b16 %v923
        %v3446 = vunpack.c.l.b16 %v924
        %v3447 = vunpack.c.h.b16 %v924
        %v3448 = vunpack.c.l.b16 %v925
        %v3449 = vunpack.c.h.b16 %v925
        %v3450 = vunpack.c.l.b16 %v926
        %v3451 = vunpack.c.h.b16 %v926
        %v3452 = vunpack.c.l.b16 %v927
        %v3453 = vunpack.c.h.b16 %v927
        %v3454 = vunpack.c.l.b16 %v928
        %v3455 = vunpack.c.h.b16 %v928
        %v3456 = vunpack.c.l.b16 %v929
        %v3457 = vunpack.c.h.b16 %v929
        %v3458 = vunpack.c.l.b16 %v930
        %v3459 = vunpack.c.h.b16 %v930
        %v3460 = vunpack.c.l.b16 %v931
        %v3461 = vunpack.c.h.b16 %v931
        %v3462 = vunpack.c.l.b16 %v932
        %v3463 = vunpack.c.h.b16 %v932
        %v3464 = vunpack.c.l.b16 %v933
        %v3465 = vunpack.c.h.b16 %v933
        %v3466 = vunpack.c.l.b16 %v934
        %v3467 = vunpack.c.h.b16 %v934
        %v3468 = vunpack.c.l.b16 %v935
        %v3469 = vunpack.c.h.b16 %v935
        %v3470 = vunpack.c.l.b16 %v936
        %v3471 = vunpack.c.h.b16 %v936
        %v3472 = vunpack.c.l.b16 %v937
        %v3473 = vunpack.c.h.b16 %v937
        %v3474 = vunpack.c.l.b16 %v938
        %v3475 = vunpack.c.h.b16 %v938
        %v3476 = vunpack.c.l.b16 %v939
        %v3477 = vunpack.c.h.b16 %v939
        %v3478 = vunpack.c.l.b16 %v940
        %v3479 = vunpack.c.h.b16 %v940
        %v3480 = vunpack.c.l.b16 %v941
        %v3481 = vunpack.c.h.b16 %v941
        %v3482 = vunpack.c.l.b16 %v942
        %v3483 = vunpack.c.h.b16 %v942
        %v3484 = vunpack.c.l.b16 %v943
        %v3485 = vunpack.c.h.b16 %v943
        %v3486 = vunpack.c.l.b16 %v944
        %v3487 = vunpack.c.h.b16 %v944
        %v3488 = vunpack.c.l.b16 %v945
        %v3489 = vunpack.c.h.b16 %v945
        %v3490 = vunpack.c.l.b16 %v946
        %v3491 = vunpack.c.h.b16 %v946
        %v3492 = vunpack.c.l.b16 %v947
        %v3493 = vunpack.c.h.b16 %v947
        %v3494 = vunpack.c.l.b16 %v948
        %v3495 = vunpack.c.h.b16 %v948
        %v3496 = vunpack.c.l.b16 %v949
        %v3497 = vunpack.c.h.b16 %v949
        %v3498 = vunpack.c.l.b16 %v950
        %v3499 = vunpack.c.h.b16 %v950
        %v3500 = vunpack.c.l.b16 %v951
        %v3501 = vunpack.c.h.b16 %v951
        %v3502 = vunpack.c.l.b16 %v952
        %v3503 = vunpack.c.h.b16 %v952
        %v3504 = vunpack.c.l.b16 %v953
        %v3505 = vunpack.c.h.b16 %v953
        %v3506 = vunpack.c.l.b16 %v954
        %v3507 = vunpack.c.h.b16 %v954
        %v3508 = vunpack.c.l.b16 %v955
        %v3509 = vunpack.c.h.b16 %v955
        %v3510 = vunpack.c.l.b16 %v956
        %v3511 = vunpack.c.h.b16 %v956
        %v3512 = vunpack.c.l.b16 %v957
        %v3513 = vunpack.c.h.b16 %v957
        %v3514 = vunpack.c.l.b16 %v958
        %v3515 = vunpack.c.h.b16 %v958
        %v3516 = vunpack.c.l.b16 %v959
        %v3517 = vunpack.c.h.b16 %v959
        %v3518 = vunpack.c.l.b16 %v960
        %v3519 = vunpack.c.h.b16 %v960
        %v3520 = vunpack.c.l.b16 %v961
        %v3521 = vunpack.c.h.b16 %v961
        %v3522 = vunpack.c.l.b16 %v962
        %v3523 = vunpack.c.h.b16 %v962
        %v3524 = vunpack.c.l.b16 %v963
        %v3525 = vunpack.c.h.b16 %v963
        %v3526 = vunpack.c.l.b16 %v964
        %v3527 = vunpack.c.h.b16 %v964
        %v3528 = vunpack.c.l.b16 %v965
        %v3529 = vunpack.c.h.b16 %v965
        %v3530 = vunpack.c.l.b16 %v966
        %v3531 = vunpack.c.h.b16 %v966
        %v3532 = vunpack.c.l.b16 %v967
        %v3533 = vunpack.c.h.b16 %v967
        %v3534 = vunpack.c.l.b16 %v968
        %v3535 = vunpack.c.h.b16 %v968
        %v3536 = vunpack.c.l.b16 %v969
        %v3537 = vunpack.c.h.b16 %v969
        %v3538 = vunpack.c.l.b16 %v970
        %v3539 = vunpack.c.h.b16 %v970
        %v3540 = vunpack.c.l.b16 %v971
        %v3541 = vunpack.c.h.b16 %v971
        %v3542 = vunpack.c.l.b16 %v972
        %v3543 = vunpack.c.h.b16 %v972
        %v3544 = vunpack.c.l.b16 %v973
        %v3545 = vunpack.c.h.b16 %v973
        %v3546 = vunpack.c.l.b16 %v974
        %v3547 = vunpack.c.h.b16 %v974
        %v3548 = vunpack.c.l.b16 %v975
        %v3549 = vunpack.c.h.b16 %v975
        %v3550 = vunpack.c.l.b16 %v976
        %v3551 = vunpack.c.h.b16 %v976
        %v3552 = vunpack.c.l.b16 %v977
        %v3553 = vunpack.c.h.b16 %v977
        %v3554 = vunpack.c.l.b16 %v978
        %v3555 = vunpack.c.h.b16 %v978
        %v3556 = vunpack.c.l.b16 %v979
        %v3557 = vunpack.c.h.b16 %v979
        %v3558 = vunpack.c.l.b16 %v980
        %v3559 = vunpack.c.h.b16 %v980
        %v3560 = vunpack.c.l.b16 %v981
        %v3561 = vunpack.c.h.b16 %v981
        %v3562 = vunpack.c.l.b16 %v982
        %v3563 = vunpack.c.h.b16 %v982
        %v3564 = vunpack.c.l.b16 %v983
        %v3565 = vunpack.c.h.b16 %v983
        %v3566 = vunpack.c.l.b16 %v984
        %v3567 = vunpack.c.h.b16 %v984
        %v3568 = vunpack.c.l.b16 %v985
        %v3569 = vunpack.c.h.b16 %v985
        %v3570 = vunpack.c.l.b16 %v986
        %v3571 = vunpack.c.h.b16 %v986
        %v3572 = vunpack.c.l.b16 %v987
        %v3573 = vunpack.c.h.b16 %v987
        %v3574 = vunpack.c.l.b16 %v988
        %v3575 = vunpack.c.h.b16 %v988
        %v3576 = vunpack.c.l.b16 %v989
        %v3577 = vunpack.c.h.b16 %v989
        %v3578 = vunpack.c.l.b16 %v990
        %v3579 = vunpack.c.h.b16 %v990
        %v3580 = vunpack.c.l.b16 %v991
        %v3581 = vunpack.c.h.b16 %v991
        %v3582 = vunpack.c.l.b16 %v992
        %v3583 = vunpack.c.h.b16 %v992
        %v3584 = vunpack.c.l.b16 %v993
        %v3585 = vunpack.c.h.b16 %v993
        %v3586 = vunpack.c.l.b16 %v994
        %v3587 = vunpack.c.h.b16 %v994
        %v3588 = vunpack.c.l.b16 %v995
        %v3589 = vunpack.c.h.b16 %v995
        %v3590 = vunpack.c.l.b16 %v996
        %v3591 = vunpack.c.h.b16 %v996
        %v3592 = vunpack.c.l.b16 %v997
        %v3593 = vunpack.c.h.b16 %v997
        %v3594 = vunpack.c.l.b16 %v998
        %v3595 = vunpack.c.h.b16 %v998
        %v3596 = vunpack.c.l.b16 %v999
        %v3597 = vunpack.c.h.b16 %v999
        %v3598 = vunpack.c.l.b16 %v1000
        %v3599 = vunpack.c.h.b16 %v1000
        %v3600 = vunpack.c.l.b16 %v1001
        %v3601 = vunpack.c.h.b16 %v1001
        %v3602 = vunpack.c.l.b16 %v1002
        %v3603 = vunpack.c.h.b16 %v1002
        %v3604 = vunpack.c.l.b16 %v1003
        %v3605 = vunpack.c.h.b16 %v1003
        %v3606 = vunpack.c.l.b16 %v1004
        %v3607 = vunpack.c.h.b16 %v1004
        %v3608 = vunpack.c.l.b16 %v1005
        %v3609 = vunpack.c.h.b16 %v1005
        %v3610 = vunpack.c.l.b16 %v1006
        %v3611 = vunpack.c.h.b16 %v1006
        %v3612 = vunpack.c.l.b16 %v1007
        %v3613 = vunpack.c.h.b16 %v1007
        %v3614 = vunpack.c.l.b16 %v1008
        %v3615 = vunpack.c.h.b16 %v1008
        %v3616 = vunpack.c.l.b16 %v1009
        %v3617 = vunpack.c.h.b16 %v1009
        %v3618 = vunpack.c.l.b16 %v1010
        %v3619 = vunpack.c.h.b16 %v1010
        %v3620 = vunpack.c.l.b16 %v1011
        %v3621 = vunpack.c.h.b16 %v1011
        %v3622 = vunpack.c.l.b16 %v1012
        %v3623 = vunpack.c.h.b16 %v1012
        %v3624 = vunpack.c.l.b16 %v1013
        %v3625 = vunpack.c.h.b16 %v1013
        %v3626 = vunpack.c.l.b16 %v1014
        %v3627 = vunpack.c.h.b16 %v1014
        %v3628 = vunpack.c.l.b16 %v1015
        %v3629 = vunpack.c.h.b16 %v1015
        %v3630 = vunpack.c.l.b16 %v1016
        %v3631 = vunpack.c.h.b16 %v1016
        %v3632 = vunpack.c.l.b16 %v1017
        %v3633 = vunpack.c.h.b16 %v1017
        %v3634 = vunpack.c.l.b16 %v1018
        %v3635 = vunpack.c.h.b16 %v1018
        %v3636 = vunpack.c.l.b16 %v1019
        %v3637 = vunpack.c.h.b16 %v1019
        %v3638 = vunpack.c.l.b16 %v1020
        %v3639 = vunpack.c.h.b16 %v1020
        %v3640 = vunpack.c.l.b16 %v1021
        %v3641 = vunpack.c.h.b16 %v1021
        %v3642 = vunpack.c.l.b16 %v1022
        %v3643 = vunpack.c.h.b16 %v1022
        %v3644 = vunpack.c.l.b16 %v1023
        %v3645 = vunpack.c.h.b16 %v1023
        %v3646 = vunpack.c.l.b16 %v1024
        %v3647 = vunpack.c.h.b16 %v1024
        %v3648 = vunpack.c.l.b16 %v1025
        %v3649 = vunpack.c.h.b16 %v1025
        %v3650 = vunpack.c.l.b16 %v1026
        %v3651 = vunpack.c.h.b16 %v1026
        %v3652 = vunpack.c.l.b16 %v1027
        %v3653 = vunpack.c.h.b16 %v1027
        %v3654 = vunpack.c.l.b16 %v1028
        %v3655 = vunpack.c.h.b16 %v1028
        %v3656 = vunpack.c.l.b16 %v1029
        %v3657 = vunpack.c.h.b16 %v1029
        %v3658 = vunpack.c.l.b16 %v1030
        %v3659 = vunpack.c.h.b16 %v1030
        %v3660 = vunpack.c.l.b16 %v1031
        %v3661 = vunpack.c.h.b16 %v1031
        %v3662 = vunpack.c.l.b16 %v1032
        %v3663 = vunpack.c.h.b16 %v1032
        %v3664 = vunpack.c.l.b16 %v1033
        %v3665 = vunpack.c.h.b16 %v1033
        %v3666 = vunpack.c.l.b16 %v1034
        %v3667 = vunpack.c.h.b16 %v1034
        %v3668 = vunpack.c.l.b16 %v1035
        %v3669 = vunpack.c.h.b16 %v1035
        %v3670 = vunpack.c.l.b16 %v1036
        %v3671 = vunpack.c.h.b16 %v1036
        %v3672 = vunpack.c.l.b16 %v1037
        %v3673 = vunpack.c.h.b16 %v1037
        %v3674 = vunpack.c.l.b16 %v1038
        %v3675 = vunpack.c.h.b16 %v1038
        %v3676 = vunpack.c.l.b16 %v1039
        %v3677 = vunpack.c.h.b16 %v1039
        %v3678 = vunpack.c.l.b16 %v1040
        %v3679 = vunpack.c.h.b16 %v1040
        %v3680 = vunpack.c.l.b16 %v1041
        %v3681 = vunpack.c.h.b16 %v1041
        %v3682 = vunpack.c.l.b16 %v1042
        %v3683 = vunpack.c.h.b16 %v1042
        %v3684 = vunpack.c.l.b16 %v1043
        %v3685 = vunpack.c.h.b16 %v1043
        %v3686 = vunpack.c.l.b16 %v1044
        %v3687 = vunpack.c.h.b16 %v1044
        %v3688 = vunpack.c.l.b16 %v1045
        %v3689 = vunpack.c.h.b16 %v1045
        %v3690 = vunpack.c.l.b16 %v1046
        %v3691 = vunpack.c.h.b16 %v1046
        %v3692 = vunpack.c.l.b16 %v1047
        %v3693 = vunpack.c.h.b16 %v1047
        %v3694 = vunpack.c.l.b16 %v1048
        %v3695 = vunpack.c.h.b16 %v1048
        %v3696 = vunpack.c.l.b16 %v1049
        %v3697 = vunpack.c.h.b16 %v1049
        %v3698 = vunpack.c.l.b16 %v1050
        %v3699 = vunpack.c.h.b16 %v1050
        %v3700 = vunpack.c.l.b16 %v1051
        %v3701 = vunpack.c.h.b16 %v1051
        %v3702 = vunpack.c.l.b16 %v1052
        %v3703 = vunpack.c.h.b16 %v1052
        %v3704 = vunpack.c.l.b16 %v1053
        %v3705 = vunpack.c.h.b16 %v1053
        %v3706 = vunpack.c.l.b16 %v1054
        %v3707 = vunpack.c.h.b16 %v1054
        %v3708 = vunpack.c.l.b16 %v1055
        %v3709 = vunpack.c.h.b16 %v1055
        %v3710 = vunpack.c.l.b16 %v1056
        %v3711 = vunpack.c.h.b16 %v1056
        %v3712 = vunpack.c.l.b16 %v1057
        %v3713 = vunpack.c.h.b16 %v1057
        %v3714 = vunpack.c.l.b16 %v1058
        %v3715 = vunpack.c.h.b16 %v1058
        %v3716 = vunpack.c.l.b16 %v1059
        %v3717 = vunpack.c.h.b16 %v1059
        %v3718 = vunpack.c.l.b16 %v1060
        %v3719 = vunpack.c.h.b16 %v1060
        %v3720 = vunpack.c.l.b16 %v1061
        %v3721 = vunpack.c.h.b16 %v1061
        %v3722 = vunpack.c.l.b16 %v1062
        %v3723 = vunpack.c.h.b16 %v1062
        %v3724 = vunpack.c.l.b16 %v1063
        %v3725 = vunpack.c.h.b16 %v1063
        %v3726 = vunpack.c.l.b16 %v1064
        %v3727 = vunpack.c.h.b16 %v1064
        %v3728 = vunpack.c.l.b16 %v1065
        %v3729 = vunpack.c.h.b16 %v1065
        %v3730 = vunpack.c.l.b16 %v1066
        %v3731 = vunpack.c.h.b16 %v1066
        %v3732 = vunpack.c.l.b16 %v1067
        %v3733 = vunpack.c.h.b16 %v1067
        %v3734 = vunpack.c.l.b16 %v1068
        %v3735 = vunpack.c.h.b16 %v1068
        %v3736 = vunpack.c.l.b16 %v1069
        %v3737 = vunpack.c.h.b16 %v1069
        %v3738 = vunpack.c.l.b16 %v1070
        %v3739 = vunpack.c.h.b16 %v1070
        %v3740 = vunpack.c.l.b16 %v1071
        %v3741 = vunpack.c.h.b16 %v1071
        %v3742 = vunpack.c.l.b16 %v1072
        %v3743 = vunpack.c.h.b16 %v1072
        %v3744 = vunpack.c.l.b16 %v1073
        %v3745 = vunpack.c.h.b16 %v1073
        %v3746 = vunpack.c.l.b16 %v1074
        %v3747 = vunpack.c.h.b16 %v1074
        %v3748 = vunpack.c.l.b16 %v1075
        %v3749 = vunpack.c.h.b16 %v1075
        %v3750 = vunpack.c.l.b16 %v1076
        %v3751 = vunpack.c.h.b16 %v1076
        %v3752 = vunpack.c.l.b16 %v1077
        %v3753 = vunpack.c.h.b16 %v1077
        %v3754 = vunpack.c.l.b16 %v1078
        %v3755 = vunpack.c.h.b16 %v1078
        %v3756 = vunpack.c.l.b16 %v1079
        %v3757 = vunpack.c.h.b16 %v1079
        %v3758 = vunpack.c.l.b16 %v1080
        %v3759 = vunpack.c.h.b16 %v1080
        %v3760 = vunpack.c.l.b16 %v1081
        %v3761 = vunpack.c.h.b16 %v1081
        %v3762 = vunpack.c.l.b16 %v1082
        %v3763 = vunpack.c.h.b16 %v1082
        %v3764 = vunpack.c.l.b16 %v1083
        %v3765 = vunpack.c.h.b16 %v1083
        %v3766 = vunpack.c.l.b16 %v1084
        %v3767 = vunpack.c.h.b16 %v1084
        %v3768 = vunpack.c.l.b16 %v1085
        %v3769 = vunpack.c.h.b16 %v1085
        %v3770 = vunpack.c.l.b16 %v1086
        %v3771 = vunpack.c.h.b16 %v1086
        %v3772 = vunpack.c.l.b16 %v1087
        %v3773 = vunpack.c.h.b16 %v1087
        %v3774 = vunpack.c.l.b16 %v1088
        %v3775 = vunpack.c.h.b16 %v1088
        %v3776 = vunpack.c.l.b16 %v1089
        %v3777 = vunpack.c.h.b16 %v1089
        %v3778 = vunpack.c.l.b16 %v1090
        %v3779 = vunpack.c.h.b16 %v1090
        %v3780 = vunpack.c.l.b16 %v1091
        %v3781 = vunpack.c.h.b16 %v1091
        %v3782 = vunpack.c.l.b16 %v1092
        %v3783 = vunpack.c.h.b16 %v1092
        %v3784 = vunpack.c.l.b16 %v1093
        %v3785 = vunpack.c.h.b16 %v1093
        %v3786 = vunpack.c.l.b16 %v1094
        %v3787 = vunpack.c.h.b16 %v1094
        %v3788 = vunpack.c.l.b16 %v1095
        %v3789 = vunpack.c.h.b16 %v1095
        %v3790 = vunpack.c.l.b16 %v1096
        %v3791 = vunpack.c.h.b16 %v1096
        %v3792 = vunpack.c.l.b16 %v1097
        %v3793 = vunpack.c.h.b16 %v1097
        %v3794 = vunpack.c.l.b16 %v1098
        %v3795 = vunpack.c.h.b16 %v1098
        %v3796 = vunpack.c.l.b16 %v1099
        %v3797 = vunpack.c.h.b16 %v1099
        %v3798 = vunpack.c.l.b16 %v1100
        %v3799 = vunpack.c.h.b16 %v1100
        %v3800 = vunpack.c.l.b16 %v1101
        %v3801 = vunpack.c.h.b16 %v1101
        %v3802 = vunpack.c.l.b16 %v1102
        %v3803 = vunpack.c.h.b16 %v1102
        %v3804 = vunpack.c.l.b16 %v1103
        %v3805 = vunpack.c.h.b16 %v1103
        %v3806 = vunpack.c.l.b16 %v1104
        %v3807 = vunpack.c.h.b16 %v1104
        %v3808 = vunpack.c.l.b16 %v1105
        %v3809 = vunpack.c.h.b16 %v1105
        %v3810 = vunpack.c.l.b16 %v1106
        %v3811 = vunpack.c.h.b16 %v1106
        %v3812 = vunpack.c.l.b16 %v1107
        %v3813 = vunpack.c.h.b16 %v1107
        %v3814 = vunpack.c.l.b16 %v1108
        %v3815 = vunpack.c.h.b16 %v1108
        %v3816 = vunpack.c.l.b16 %v1109
        %v3817 = vunpack.c.h.b16 %v1109
        %v3818 = vunpack.c.l.b16 %v1110
        %v3819 = vunpack.c.h.b16 %v1110
        %v3820 = vunpack.c.l.b16 %v1111
        %v3821 = vunpack.c.h.b16 %v1111
        %v3822 = vunpack.c.l.b16 %v1112
        %v3823 = vunpack.c.h.b16 %v1112
        %v3824 = vunpack.c.l.b16 %v1113
        %v3825 = vunpack.c.h.b16 %v1113
        %v3826 = vunpack.c.l.b16 %v1114
        %v3827 = vunpack.c.h.b16 %v1114
        %v3828 = vunpack.c.l.b16 %v1115
        %v3829 = vunpack.c.h.b16 %v1115
        %v3830 = vunpack.c.l.b16 %v1116
        %v3831 = vunpack.c.h.b16 %v1116
        %v3832 = vunpack.c.l.b16 %v1117
        %v3833 = vunpack.c.h.b16 %v1117
        %v3834 = vunpack.c.l.b16 %v1118
        %v3835 = vunpack.c.h.b16 %v1118
        %v3836 = vunpack.c.l.b16 %v1119
        %v3837 = vunpack.c.h.b16 %v1119
        %v3838 = vunpack.c.l.b16 %v1120
        %v3839 = vunpack.c.h.b16 %v1120
        %v3840 = vunpack.c.l.b16 %v1121
        %v3841 = vunpack.c.h.b16 %v1121
        %v3842 = vunpack.c.l.b16 %v1122
        %v3843 = vunpack.c.h.b16 %v1122
        %v3844 = vunpack.c.l.b16 %v1123
        %v3845 = vunpack.c.h.b16 %v1123
        %v3846 = vunpack.c.l.b16 %v1124
        %v3847 = vunpack.c.h.b16 %v1124
        %v3848 = vunpack.c.l.b16 %v1125
        %v3849 = vunpack.c.h.b16 %v1125
        %v3850 = vunpack.c.l.b16 %v1126
        %v3851 = vunpack.c.h.b16 %v1126
        %v3852 = vunpack.c.l.b16 %v1127
        %v3853 = vunpack.c.h.b16 %v1127
        %v3854 = vunpack.c.l.b16 %v1128
        %v3855 = vunpack.c.h.b16 %v1128
        %v3856 = vunpack.c.l.b16 %v1129
        %v3857 = vunpack.c.h.b16 %v1129
        %v3858 = vunpack.c.l.b16 %v1130
        %v3859 = vunpack.c.h.b16 %v1130
        %v3860 = vunpack.c.l.b16 %v1131
        %v3861 = vunpack.c.h.b16 %v1131
        %v3862 = vunpack.c.l.b16 %v1132
        %v3863 = vunpack.c.h.b16 %v1132
        %v3864 = vunpack.c.l.b16 %v1133
        %v3865 = vunpack.c.h.b16 %v1133
        %v3866 = vunpack.c.l.b16 %v1134
        %v3867 = vunpack.c.h.b16 %v1134
        %v3868 = vunpack.c.l.b16 %v1135
        %v3869 = vunpack.c.h.b16 %v1135
        %v3870 = vunpack.c.l.b16 %v1136
        %v3871 = vunpack.c.h.b16 %v1136
        %v3872 = vunpack.c.l.b16 %v1137
        %v3873 = vunpack.c.h.b16 %v1137
        %v3874 = vunpack.c.l.b16 %v1138
        %v3875 = vunpack.c.h.b16 %v1138
        %v3876 = vunpack.c.l.b16 %v1139
        %v3877 = vunpack.c.h.b16 %v1139
        %v3878 = vunpack.c.l.b16 %v1140
        %v3879 = vunpack.c.h.b16 %v1140
        %v3880 = vunpack.c.l.b16 %v1141
        %v3881 = vunpack.c.h.b16 %v1141
        %v3882 = vunpack.c.l.b16 %v1142
        %v3883 = vunpack.c.h.b16 %v1142
        %v3884 = vunpack.c.l.b16 %v1143
        %v3885 = vunpack.c.h.b16 %v1143
        %v3886 = vunpack.c.l.b16 %v1144
        %v3887 = vunpack.c.h.b16 %v1144
        %v3888 = vunpack.c.l.b16 %v1145
        %v3889 = vunpack.c.h.b16 %v1145
        %v3890 = vunpack.c.l.b16 %v1146
        %v3891 = vunpack.c.h.b16 %v1146
        %v3892 = vunpack.c.l.b16 %v1147
        %v3893 = vunpack.c.h.b16 %v1147
        %v3894 = vunpack.c.l.b16 %v1148
        %v3895 = vunpack.c.h.b16 %v1148
        %v3896 = vunpack.c.l.b16 %v1149
        %v3897 = vunpack.c.h.b16 %v1149
        %v3898 = vunpack.c.l.b16 %v1150
        %v3899 = vunpack.c.h.b16 %v1150
        %v3900 = vunpack.c.l.b16 %v1151
        %v3901 = vunpack.c.h.b16 %v1151
        %v3902 = vunpack.c.l.b16 %v1152
        %v3903 = vunpack.c.h.b16 %v1152
        %v3904 = vunpack.c.l.b16 %v1153
        %v3905 = vunpack.c.h.b16 %v1153
        %v3906 = vunpack.c.l.b16 %v1154
        %v3907 = vunpack.c.h.b16 %v1154
        %v3908 = vunpack.c.l.b16 %v1155
        %v3909 = vunpack.c.h.b16 %v1155
        %v3910 = vunpack.c.l.b16 %v1156
        %v3911 = vunpack.c.h.b16 %v1156
        %v3912 = vunpack.c.l.b16 %v1157
        %v3913 = vunpack.c.h.b16 %v1157
        %v3914 = vunpack.c.l.b16 %v1158
        %v3915 = vunpack.c.h.b16 %v1158
        %v3916 = vunpack.c.l.b16 %v1159
        %v3917 = vunpack.c.h.b16 %v1159
        %v3918 = vunpack.c.l.b16 %v1160
        %v3919 = vunpack.c.h.b16 %v1160
        %v3920 = vunpack.c.l.b16 %v1161
        %v3921 = vunpack.c.h.b16 %v1161
        %v3922 = vunpack.c.l.b16 %v1162
        %v3923 = vunpack.c.h.b16 %v1162
        %v3924 = vunpack.c.l.b16 %v1163
        %v3925 = vunpack.c.h.b16 %v1163
        %v3926 = vunpack.c.l.b16 %v1164
        %v3927 = vunpack.c.h.b16 %v1164
        %v3928 = vunpack.c.l.b16 %v1165
        %v3929 = vunpack.c.h.b16 %v1165
        %v3930 = vunpack.c.l.b16 %v1166
        %v3931 = vunpack.c.h.b16 %v1166
        %v3932 = vunpack.c.l.b16 %v1167
        %v3933 = vunpack.c.h.b16 %v1167
        %v3934 = vunpack.c.l.b16 %v1168
        %v3935 = vunpack.c.h.b16 %v1168
        %v3936 = vunpack.c.l.b16 %v1169
        %v3937 = vunpack.c.h.b16 %v1169
        %v3938 = vunpack.c.l.b16 %v1170
        %v3939 = vunpack.c.h.b16 %v1170
        %v3940 = vunpack.c.l.b16 %v1171
        %v3941 = vunpack.c.h.b16 %v1171
        %v3942 = vunpack.c.l.b16 %v1172
        %v3943 = vunpack.c.h.b16 %v1172
        %v3944 = vunpack.c.l.b16 %v1173
        %v3945 = vunpack.c.h.b16 %v1173
        %v3946 = vunpack.c.l.b16 %v1174
        %v3947 = vunpack.c.h.b16 %v1174
        %v3948 = vunpack.c.l.b16 %v1175
        %v3949 = vunpack.c.h.b16 %v1175
        %v3950 = vunpack.c.l.b16 %v1176
        %v3951 = vunpack.c.h.b16 %v1176
        %v3952 = vunpack.c.l.b16 %v1177
        %v3953 = vunpack.c.h.b16 %v1177
        %v3954 = vunpack.c.l.b16 %v1178
        %v3955 = vunpack.c.h.b16 %v1178
        %v3956 = vunpack.c.l.b16 %v1179
        %v3957 = vunpack.c.h.b16 %v1179
        %v3958 = vunpack.c.l.b16 %v1180
        %v3959 = vunpack.c.h.b16 %v1180
        %v3960 = vunpack.c.l.b16 %v1181
        %v3961 = vunpack.c.h.b16 %v1181
        %v3962 = vunpack.c.l.b16 %v1182
        %v3963 = vunpack.c.h.b16 %v1182
        %v3964 = vunpack.c.l.b16 %v1183
        %v3965 = vunpack.c.h.b16 %v1183
        %v3966 = vunpack.c.l.b16 %v1184
        %v3967 = vunpack.c.h.b16 %v1184
        %v3968 = vunpack.c.l.b16 %v1185
        %v3969 = vunpack.c.h.b16 %v1185
        %v3970 = vunpack.c.l.b16 %v1186
        %v3971 = vunpack.c.h.b16 %v1186
        %v3972 = vunpack.c.l.b16 %v1187
        %v3973 = vunpack.c.h.b16 %v1187
        %v3974 = vunpack.c.l.b16 %v1188
        %v3975 = vunpack.c.h.b16 %v1188
        %v3976 = vunpack.c.l.b16 %v1189
        %v3977 = vunpack.c.h.b16 %v1189
        %v3978 = vunpack.c.l.b16 %v1190
        %v3979 = vunpack.c.h.b16 %v1190
        %v3980 = vunpack.c.l.b16 %v1191
        %v3981 = vunpack.c.h.b16 %v1191
        %v3982 = vunpack.c.l.b16 %v1192
        %v3983 = vunpack.c.h.b16 %v1192
        %v3984 = vunpack.c.l.b16 %v1193
        %v3985 = vunpack.c.h.b16 %v1193
        %v3986 = vunpack.c.l.b16 %v1194
        %v3987 = vunpack.c.h.b16 %v1194
        %v3988 = vunpack.c.l.b16 %v1195
        %v3989 = vunpack.c.h.b16 %v1195
        %v3990 = vunpack.c.l.b16 %v1196
        %v3991 = vunpack.c.h.b16 %v1196
        %v3992 = vunpack.c.l.b16 %v1197
        %v3993 = vunpack.c.h.b16 %v1197
        %v3994 = vunpack.c.l.b16 %v1198
        %v3995 = vunpack.c.h.b16 %v1198
        %v3996 = vunpack.c.l.b16 %v1199
        %v3997 = vunpack.c.h.b16 %v1199
        %v3998 = vunpack.c.l.b16 %v1200
        %v3999 = vunpack.c.h.b16 %v1200
        %v4000 = vunpack.c.l.b16 %v1201
        %v4001 = vunpack.c.h.b16 %v1201
        %v4002 = vunpack.c.l.b16 %v1202
        %v4003 = vunpack.c.h.b16 %v1202
        %v4004 = vunpack.c.l.b16 %v1203
        %v4005 = vunpack.c.h.b16 %v1203
        %v4006 = vunpack.c.l.b16 %v1204
        %v4007 = vunpack.c.h.b16 %v1204
        %v4008 = vunpack.c.l.b16 %v1205
        %v4009 = vunpack.c.h.b16 %v1205
        %v4010 = vunpack.c.l.b16 %v1206
        %v4011 = vunpack.c.h.b16 %v1206
        %v4012 = vunpack.c.l.b16 %v1207
        %v4013 = vunpack.c.h.b16 %v1207
        %v4014 = vunpack.c.l.b16 %v1208
        %v4015 = vunpack.c.h.b16 %v1208
        %v4016 = vunpack.c.l.b16 %v1209
        %v4017 = vunpack.c.h.b16 %v1209
        %v4018 = vunpack.c.l.b16 %v1210
        %v4019 = vunpack.c.h.b16 %v1210
        %v4020 = vunpack.c.l.b16 %v1211
        %v4021 = vunpack.c.h.b16 %v1211
        %v4022 = vunpack.c.l.b16 %v1212
        %v4023 = vunpack.c.h.b16 %v1212
        %v4024 = vunpack.c.l.b16 %v1213
        %v4025 = vunpack.c.h.b16 %v1213
        %v4026 = vunpack.c.l.b16 %v1214
        %v4027 = vunpack.c.h.b16 %v1214
        %v4028 = vunpack.c.l.b16 %v1215
        %v4029 = vunpack.c.h.b16 %v1215
        %v4030 = vunpack.c.l.b16 %v1216
        %v4031 = vunpack.c.h.b16 %v1216
        %v4032 = vunpack.c.l.b16 %v1217
        %v4033 = vunpack.c.h.b16 %v1217
        %v4034 = vunpack.c.l.b16 %v1218
        %v4035 = vunpack.c.h.b16 %v1218
        %v4036 = vunpack.c.l.b16 %v1219
        %v4037 = vunpack.c.h.b16 %v1219
        %v4038 = vunpack.c.l.b16 %v1220
        %v4039 = vunpack.c.h.b16 %v1220
        %v4040 = vunpack.c.l.b16 %v1221
        %v4041 = vunpack.c.h.b16 %v1221
        %v4042 = vunpack.c.l.b16 %v1222
        %v4043 = vunpack.c.h.b16 %v1222
        %v4044 = vunpack.c.l.b16 %v1223
        %v4045 = vunpack.c.h.b16 %v1223
        %v4046 = vunpack.c.l.b16 %v1224
        %v4047 = vunpack.c.h.b16 %v1224
        %v4048 = vunpack.c.l.b16 %v1225
        %v4049 = vunpack.c.h.b16 %v1225
        %v4050 = vunpack.c.l.b16 %v1226
        %v4051 = vunpack.c.h.b16 %v1226
        %v4052 = vunpack.c.l.b16 %v1227
        %v4053 = vunpack.c.h.b16 %v1227
        %v4054 = vunpack.c.l.b16 %v1228
        %v4055 = vunpack.c.h.b16 %v1228
        %v4056 = vunpack.c.l.b16 %v1229
        %v4057 = vunpack.c.h.b16 %v1229
        %v4058 = vunpack.c.l.b16 %v1230
        %v4059 = vunpack.c.h.b16 %v1230
        %v4060 = vunpack.c.l.b16 %v1231
        %v4061 = vunpack.c.h.b16 %v1231
        %v4062 = vunpack.c.l.b16 %v1232
        %v4063 = vunpack.c.h.b16 %v1232
        %v4064 = vunpack.c.l.b16 %v1233
        %v4065 = vunpack.c.h.b16 %v1233
        %v4066 = vunpack.c.l.b16 %v1234
        %v4067 = vunpack.c.h.b16 %v1234
        %v4068 = vunpack.c.l.b16 %v1235
        %v4069 = vunpack.c.h.b16 %v1235
        %v4070 = vunpack.c.l.b16 %v1236
        %v4071 = vunpack.c.h.b16 %v1236
        %v4072 = vunpack.c.l.b16 %v1237
        %v4073 = vunpack.c.h.b16 %v1237
        %v4074 = vunpack.c.l.b16 %v1238
        %v4075 = vunpack.c.h.b16 %v1238
        %v4076 = vunpack.c.l.b16 %v1239
        %v4077 = vunpack.c.h.b16 %v1239
        %v4078 = vunpack.c.l.b16 %v1240
        %v4079 = vunpack.c.h.b16 %v1240
        %v4080 = vunpack.c.l.b16 %v1241
        %v4081 = vunpack.c.h.b16 %v1241
        %v4082 = vunpack.c.l.b16 %v1242
        %v4083 = vunpack.c.h.b16 %v1242
        %v4084 = vunpack.c.l.b16 %v1243
        %v4085 = vunpack.c.h.b16 %v1243
        %v4086 = vunpack.c.l.b16 %v1244
        %v4087 = vunpack.c.h.b16 %v1244
        %v4088 = vunpack.c.l.b16 %v1245
        %v4089 = vunpack.c.h.b16 %v1245
        %v4090 = vunpack.c.l.b16 %v1246
        %v4091 = vunpack.c.h.b16 %v1246
        %v4092 = vunpack.c.l.b16 %v1247
        %v4093 = vunpack.c.h.b16 %v1247
        %v4094 = vunpack.c.l.b16 %v1248
        %v4095 = vunpack.c.h.b16 %v1248
        %v4096 = vunpack.c.l.b16 %v1249
        %v4097 = vunpack.c.h.b16 %v1249
        %v4098 = vunpack.c.l.b16 %v1250
        %v4099 = vunpack.c.h.b16 %v1250
        %v4100 = vunpack.c.l.b16 %v1251
        %v4101 = vunpack.c.h.b16 %v1251
        %v4102 = vunpack.c.l.b16 %v1252
        %v4103 = vunpack.c.h.b16 %v1252
        %v4104 = vunpack.c.l.b16 %v1253
        %v4105 = vunpack.c.h.b16 %v1253
        %v4106 = vunpack.c.l.b16 %v1254
        %v4107 = vunpack.c.h.b16 %v1254
        %v4108 = vunpack.c.l.b16 %v1255
        %v4109 = vunpack.c.h.b16 %v1255
        %v4110 = vunpack.c.l.b16 %v1256
        %v4111 = vunpack.c.h.b16 %v1256
        %v4112 = vunpack.c.l.b16 %v1257
        %v4113 = vunpack.c.h.b16 %v1257
        %v4114 = vunpack.c.l.b16 %v1258
        %v4115 = vunpack.c.h.b16 %v1258
        %v4116 = vunpack.c.l.b16 %v1259
        %v4117 = vunpack.c.h.b16 %v1259
        %v4118 = vunpack.c.l.b16 %v1260
        %v4119 = vunpack.c.h.b16 %v1260
        %v4120 = vunpack.c.l.b16 %v1261
        %v4121 = vunpack.c.h.b16 %v1261
        %v4122 = vunpack.c.l.b16 %v1262
        %v4123 = vunpack.c.h.b16 %v1262
        %v4124 = vunpack.c.l.b16 %v1263
        %v4125 = vunpack.c.h.b16 %v1263
        %v4126 = vunpack.c.l.b16 %v1264
        %v4127 = vunpack.c.h.b16 %v1264
        %v4128 = vunpack.c.l.b16 %v1265
        %v4129 = vunpack.c.h.b16 %v1265
        %v4130 = vunpack.c.l.b16 %v1266
        %v4131 = vunpack.c.h.b16 %v1266
        %v4132 = vunpack.c.l.b16 %v1267
        %v4133 = vunpack.c.h.b16 %v1267
        %v4134 = vunpack.c.l.b16 %v1268
        %v4135 = vunpack.c.h.b16 %v1268
        %v4136 = vunpack.c.l.b16 %v1269
        %v4137 = vunpack.c.h.b16 %v1269
        %v4138 = vunpack.c.l.b16 %v1270
        %v4139 = vunpack.c.h.b16 %v1270
        %v4140 = vunpack.c.l.b16 %v1271
        %v4141 = vunpack.c.h.b16 %v1271
        %v4142 = vunpack.c.l.b16 %v1272
        %v4143 = vunpack.c.h.b16 %v1272
        %v4144 = vunpack.c.l.b16 %v1273
        %v4145 = vunpack.c.h.b16 %v1273
        %v4146 = vunpack.c.l.b16 %v1274
        %v4147 = vunpack.c.h.b16 %v1274
        %v4148 = vunpack.c.l.b16 %v1275
        %v4149 = vunpack.c.h.b16 %v1275
        %v4150 = vunpack.c.l.b16 %v1276
        %v4151 = vunpack.c.h.b16 %v1276
        %v4152 = vunpack.c.l.b16 %v1277
        %v4153 = vunpack.c.h.b16 %v1277
        %v4154 = vunpack.c.l.b16 %v1278
        %v4155 = vunpack.c.h.b16 %v1278
        %v4156 = vunpack.c.l.b16 %v1279
        %v4157 = vunpack.c.h.b16 %v1279
        %v4158 = vunpack.c.l.b16 %v1280
        %v4159 = vunpack.c.h.b16 %v1280
        %v4160 = vunpack.c.l.b16 %v1281
        %v4161 = vunpack.c.h.b16 %v1281
        %v4162 = vunpack.c.l.b16 %v1282
        %v4163 = vunpack.c.h.b16 %v1282
        %v4164 = vunpack.c.l.b16 %v1283
        %v4165 = vunpack.c.h.b16 %v1283
        %v4166 = vunpack.c.l.b16 %v1284
        %v4167 = vunpack.c.h.b16 %v1284
        %v4168 = vunpack.c.l.b16 %v1285
        %v4169 = vunpack.c.h.b16 %v1285
        %v4170 = vunpack.c.l.b16 %v1286
        %v4171 = vunpack.c.h.b16 %v1286
        %v4172 = vunpack.c.l.b16 %v1287
        %v4173 = vunpack.c.h.b16 %v1287
        %v4174 = vunpack.c.l.b16 %v1288
        %v4175 = vunpack.c.h.b16 %v1288
        %v4176 = vunpack.c.l.b16 %v1289
        %v4177 = vunpack.c.h.b16 %v1289
        %v4178 = vunpack.c.l.b16 %v1290
        %v4179 = vunpack.c.h.b16 %v1290
        %v4180 = vunpack.c.l.b16 %v1291
        %v4181 = vunpack.c.h.b16 %v1291
        %v4182 = vunpack.c.l.b16 %v1292
        %v4183 = vunpack.c.h.b16 %v1292
        %v4184 = vunpack.c.l.b16 %v1293
        %v4185 = vunpack.c.h.b16 %v1293
        %v4186 = vunpack.c.l.b16 %v1294
        %v4187 = vunpack.c.h.b16 %v1294
        %v4188 = vunpack.c.l.b16 %v1295
        %v4189 = vunpack.c.h.b16 %v1295
        %v4190 = vunpack.c.l.b16 %v1296
        %v4191 = vunpack.c.h.b16 %v1296
        %v4192 = vunpack.c.l.b16 %v1297
        %v4193 = vunpack.c.h.b16 %v1297
        %v4194 = vunpack.c.l.b16 %v1298
        %v4195 = vunpack.c.h.b16 %v1298
        %v4196 = vunpack.c.l.b16 %v1299
        %v4197 = vunpack.c.h.b16 %v1299
        %v4198 = vunpack.c.l.b16 %v1300
        %v4199 = vunpack.c.h.b16 %v1300
        %v4200 = vunpack.c.l.b16 %v1301
        %v4201 = vunpack.c.h.b16 %v1301
        %v4202 = vunpack.c.l.b16 %v1302
        %v4203 = vunpack.c.h.b16 %v1302
        %v4204 = vunpack.c.l.b16 %v1303
        %v4205 = vunpack.c.h.b16 %v1303
        %v4206 = vunpack.c.l.b16 %v1304
        %v4207 = vunpack.c.h.b16 %v1304
        %v4208 = vunpack.c.l.b16 %v1305
        %v4209 = vunpack.c.h.b16 %v1305
        %v4210 = vunpack.c.l.b16 %v1306
        %v4211 = vunpack.c.h.b16 %v1306
        %v4212 = vunpack.c.l.b16 %v1307
        %v4213 = vunpack.c.h.b16 %v1307
        %v4214 = vunpack.c.l.b16 %v1308
        %v4215 = vunpack.c.h.b16 %v1308
        %v4216 = vunpack.c.l.b16 %v1309
        %v4217 = vunpack.c.h.b16 %v1309
        %v4218 = vunpack.c.l.b16 %v1310
        %v4219 = vunpack.c.h.b16 %v1310
        %v4220 = vunpack.c.l.b16 %v1311
        %v4221 = vunpack.c.h.b16 %v1311
        %v4222 = vunpack.c.l.b16 %v1312
        %v4223 = vunpack.c.h.b16 %v1312
        %v4224 = vunpack.c.l.b16 %v1313
        %v4225 = vunpack.c.h.b16 %v1313
        %v4226 = vunpack.c.l.b16 %v1314
        %v4227 = vunpack.c.h.b16 %v1314
        %v4228 = vunpack.c.l.b16 %v1315
        %v4229 = vunpack.c.h.b16 %v1315
        %v4230 = vunpack.c.l.b16 %v1316
        %v4231 = vunpack.c.h.b16 %v1316
        %v4232 = vunpack.c.l.b16 %v1317
        %v4233 = vunpack.c.h.b16 %v1317
        %v4234 = vunpack.c.l.b16 %v1318
        %v4235 = vunpack.c.h.b16 %v1318
        %v4236 = vunpack.c.l.b16 %v1319
        %v4237 = vunpack.c.h.b16 %v1319
        %v4238 = vunpack.c.l.b16 %v1320
        %v4239 = vunpack.c.h.b16 %v1320
        %v4240 = vunpack.c.l.b16 %v1321
        %v4241 = vunpack.c.h.b16 %v1321
        %v4242 = vunpack.c.l.b16 %v1322
        %v4243 = vunpack.c.h.b16 %v1322
        %v4244 = vunpack.c.l.b16 %v1323
        %v4245 = vunpack.c.h.b16 %v1323
        %v4246 = vunpack.c.l.b16 %v1324
        %v4247 = vunpack.c.h.b16 %v1324
        %v4248 = vunpack.c.l.b16 %v1325
        %v4249 = vunpack.c.h.b16 %v1325
        %v4250 = vunpack.c.l.b16 %v1326
        %v4251 = vunpack.c.h.b16 %v1326
        %v4252 = vunpack.c.l.b16 %v1327
        %v4253 = vunpack.c.h.b16 %v1327
        %v4254 = vunpack.c.l.b16 %v1328
        %v4255 = vunpack.c.h.b16 %v1328
        %v4256 = vunpack.c.l.b16 %v1329
        %v4257 = vunpack.c.h.b16 %v1329
        %v4258 = vunpack.c.l.b16 %v1330
        %v4259 = vunpack.c.h.b16 %v1330
        %v4260 = vunpack.c.l.b16 %v1331
        %v4261 = vunpack.c.h.b16 %v1331
        %v4262 = vunpack.c.l.b16 %v1332
        %v4263 = vunpack.c.h.b16 %v1332
        %v4264 = vunpack.c.l.b16 %v1333
        %v4265 = vunpack.c.h.b16 %v1333
        %v4266 = vunpack.c.l.b16 %v1334
        %v4267 = vunpack.c.h.b16 %v1334
        %v4268 = vunpack.c.l.b16 %v1335
        %v4269 = vunpack.c.h.b16 %v1335
        %v4270 = vunpack.c.l.b16 %v1336
        %v4271 = vunpack.c.h.b16 %v1336
        %v4272 = vunpack.c.l.b16 %v1337
        %v4273 = vunpack.c.h.b16 %v1337
        %v4274 = vunpack.c.l.b16 %v1338
        %v4275 = vunpack.c.h.b16 %v1338
        %v4276 = vunpack.c.l.b16 %v1339
        %v4277 = vunpack.c.h.b16 %v1339
        %v4278 = vunpack.c.l.b16 %v1340
        %v4279 = vunpack.c.h.b16 %v1340
        %v4280 = vunpack.c.l.b16 %v1341
        %v4281 = vunpack.c.h.b16 %v1341
        %v4282 = vunpack.c.l.b16 %v1342
        %v4283 = vunpack.c.h.b16 %v1342
        %v4284 = vunpack.c.l.b16 %v1343
        %v4285 = vunpack.c.h.b16 %v1343
        %v4286 = vunpack.c.l.b16 %v1344
        %v4287 = vunpack.c.h.b16 %v1344
        %v4288 = vunpack.c.l.b16 %v1345
        %v4289 = vunpack.c.h.b16 %v1345
        %v4290 = vunpack.c.l.b16 %v1346
        %v4291 = vunpack.c.h.b16 %v1346
        %v4292 = vunpack.c.l.b16 %v1347
        %v4293 = vunpack.c.h.b16 %v1347
        %v4294 = vunpack.c.l.b16 %v1348
        %v4295 = vunpack.c.h.b16 %v1348
        %v4296 = vunpack.c.l.b16 %v1349
        %v4297 = vunpack.c.h.b16 %v1349
        %v4298 = vunpack.c.l.b16 %v1350
        %v4299 = vunpack.c.h.b16 %v1350
        %v4300 = vunpack.c.l.b16 %v1351
        %v4301 = vunpack.c.h.b16 %v1351
        %v4302 = vunpack.c.l.b16 %v1352
        %v4303 = vunpack.c.h.b16 %v1352
        %v4304 = vunpack.c.l.b16 %v1353
        %v4305 = vunpack.c.h.b16 %v1353
        %v4306 = vunpack.c.l.b16 %v1354
        %v4307 = vunpack.c.h.b16 %v1354
        %v4308 = vunpack.c.l.b16 %v1355
        %v4309 = vunpack.c.h.b16 %v1355
        %v4310 = vunpack.c.l.b16 %v1356
        %v4311 = vunpack.c.h.b16 %v1356
        %v4312 = vunpack.c.l.b16 %v1357
        %v4313 = vunpack.c.h.b16 %v1357
        %v4314 = vunpack.c.l.b16 %v1358
        %v4315 = vunpack.c.h.b16 %v1358
        %v4316 = vunpack.c.l.b16 %v1359
        %v4317 = vunpack.c.h.b16 %v1359
        %v4318 = vunpack.c.l.b16 %v1360
        %v4319 = vunpack.c.h.b16 %v1360
        %v4320 = vunpack.c.l.b16 %v1361
        %v4321 = vunpack.c.h.b16 %v1361
        %v4322 = vunpack.c.l.b16 %v1362
        %v4323 = vunpack.c.h.b16 %v1362
        %v4324 = vunpack.c.l.b16 %v1363
        %v4325 = vunpack.c.h.b16 %v1363
        %v4326 = vunpack.c.l.b16 %v1364
        %v4327 = vunpack.c.h.b16 %v1364
        %v4328 = vunpack.c.l.b16 %v1365
        %v4329 = vunpack.c.h.b16 %v1365
        %v4330 = vunpack.c.l.b16 %v1366
        %v4331 = vunpack.c.h.b16 %v1366
        %v4332 = vunpack.c.l.b16 %v1367
        %v4333 = vunpack.c.h.b16 %v1367
        %v4334 = vunpack.c.l.b16 %v1368
        %v4335 = vunpack.c.h.b16 %v1368
        %v4336 = vunpack.c.l.b16 %v1369
        %v4337 = vunpack.c.h.b16 %v1369
        %v4338 = vunpack.c.l.b16 %v1370
        %v4339 = vunpack.c.h.b16 %v1370
        %v4340 = vunpack.c.l.b16 %v1371
        %v4341 = vunpack.c.h.b16 %v1371
        %v4342 = vunpack.c.l.b16 %v1372
        %v4343 = vunpack.c.h.b16 %v1372
        %v4344 = vunpack.c.l.b16 %v1373
        %v4345 = vunpack.c.h.b16 %v1373
        %v4346 = vunpack.c.l.b16 %v1374
        %v4347 = vunpack.c.h.b16 %v1374
        %v4348 = vunpack.c.l.b16 %v1375
        %v4349 = vunpack.c.h.b16 %v1375
        %v4350 = vunpack.c.l.b16 %v1376
        %v4351 = vunpack.c.h.b16 %v1376
        %v4352 = vunpack.c.l.b16 %v1377
        %v4353 = vunpack.c.h.b16 %v1377
        %v4354 = vunpack.c.l.b16 %v1378
        %v4355 = vunpack.c.h.b16 %v1378
        %v4356 = vunpack.c.l.b16 %v1379
        %v4357 = vunpack.c.h.b16 %v1379
        %v4358 = vunpack.c.l.b16 %v1380
        %v4359 = vunpack.c.h.b16 %v1380
        %v4360 = vunpack.c.l.b16 %v1381
        %v4361 = vunpack.c.h.b16 %v1381
        %v4362 = vunpack.c.l.b16 %v1382
        %v4363 = vunpack.c.h.b16 %v1382
        %v4364 = vunpack.c.l.b16 %v1383
        %v4365 = vunpack.c.h.b16 %v1383
        %v4366 = vunpack.c.l.b16 %v1384
        %v4367 = vunpack.c.h.b16 %v1384
        %v4368 = vunpack.c.l.b16 %v1385
        %v4369 = vunpack.c.h.b16 %v1385
        %v4370 = vunpack.c.l.b16 %v1386
        %v4371 = vunpack.c.h.b16 %v1386
        %v4372 = vunpack.c.l.b16 %v1387
        %v4373 = vunpack.c.h.b16 %v1387
        %v4374 = vunpack.c.l.b16 %v1388
        %v4375 = vunpack.c.h.b16 %v1388
        %v4376 = vunpack.c.l.b16 %v1389
        %v4377 = vunpack.c.h.b16 %v1389
        %v4378 = vunpack.c.l.b16 %v1390
        %v4379 = vunpack.c.h.b16 %v1390
        %v4380 = vunpack.c.l.b16 %v1391
        %v4381 = vunpack.c.h.b16 %v1391
        %v4382 = vunpack.c.l.b16 %v1392
        %v4383 = vunpack.c.h.b16 %v1392
        %v4384 = vunpack.c.l.b16 %v1393
        %v4385 = vunpack.c.h.b16 %v1393
        %v4386 = vunpack.c.l.b16 %v1394
        %v4387 = vunpack.c.h.b16 %v1394
        %v4388 = vunpack.c.l.b16 %v1395
        %v4389 = vunpack.c.h.b16 %v1395
        %v4390 = vunpack.c.l.b16 %v1396
        %v4391 = vunpack.c.h.b16 %v1396
        %v4392 = vunpack.c.l.b16 %v1397
        %v4393 = vunpack.c.h.b16 %v1397
        %v4394 = vunpack.c.l.b16 %v1398
        %v4395 = vunpack.c.h.b16 %v1398
        %v4396 = vunpack.c.l.b16 %v1399
        %v4397 = vunpack.c.h.b16 %v1399
        %v4398 = vunpack.c.l.b16 %v1400
        %v4399 = vunpack.c.h.b16 %v1400
        %v4400 = vunpack.c.l.b16 %v1401
        %v4401 = vunpack.c.h.b16 %v1401
        %v4402 = vunpack.c.l.b16 %v1402
        %v4403 = vunpack.c.h.b16 %v1402
        %v4404 = vunpack.c.l.b16 %v1403
        %v4405 = vunpack.c.h.b16 %v1403
        %v4406 = vunpack.c.l.b16 %v1404
        %v4407 = vunpack.c.h.b16 %v1404
        %v4408 = vunpack.c.l.b16 %v1405
        %v4409 = vunpack.c.h.b16 %v1405
        %v4410 = vunpack.c.l.b16 %v1406
        %v4411 = vunpack.c.h.b16 %v1406
        %v4412 = vunpack.c.l.b16 %v1407
        %v4413 = vunpack.c.h.b16 %v1407
        %v4414 = vunpack.c.l.b16 %v1408
        %v4415 = vunpack.c.h.b16 %v1408
        %v4416 = vunpack.c.l.b16 %v1409
        %v4417 = vunpack.c.h.b16 %v1409
        %v4418 = vunpack.c.l.b16 %v1410
        %v4419 = vunpack.c.h.b16 %v1410
        %v4420 = vunpack.c.l.b16 %v1411
        %v4421 = vunpack.c.h.b16 %v1411
        %v4422 = vunpack.c.l.b16 %v1412
        %v4423 = vunpack.c.h.b16 %v1412
        %v4424 = vunpack.c.l.b16 %v1413
        %v4425 = vunpack.c.h.b16 %v1413
        %v4426 = vunpack.c.l.b16 %v1414
        %v4427 = vunpack.c.h.b16 %v1414
        %v4428 = vunpack.c.l.b16 %v1415
        %v4429 = vunpack.c.h.b16 %v1415
        %v4430 = vunpack.c.l.b16 %v1416
        %v4431 = vunpack.c.h.b16 %v1416
        %v4432 = vunpack.c.l.b16 %v1417
        %v4433 = vunpack.c.h.b16 %v1417
        %v4434 = vunpack.c.l.b16 %v1418
        %v4435 = vunpack.c.h.b16 %v1418
        %v4436 = vunpack.c.l.b16 %v1419
        %v4437 = vunpack.c.h.b16 %v1419
        %v4438 = vunpack.c.l.b16 %v1420
        %v4439 = vunpack.c.h.b16 %v1420
        %v4440 = vunpack.c.l.b16 %v1421
        %v4441 = vunpack.c.h.b16 %v1421
        %v4442 = vunpack.c.l.b16 %v1422
        %v4443 = vunpack.c.h.b16 %v1422
        %v4444 = vunpack.c.l.b16 %v1423
        %v4445 = vunpack.c.h.b16 %v1423
        %v4446 = vunpack.c.l.b16 %v1424
        %v4447 = vunpack.c.h.b16 %v1424
        %v4448 = vunpack.c.l.b16 %v1425
        %v4449 = vunpack.c.h.b16 %v1425
        %v4450 = vunpack.c.l.b16 %v1426
        %v4451 = vunpack.c.h.b16 %v1426
        %v4452 = vunpack.c.l.b16 %v1427
        %v4453 = vunpack.c.h.b16 %v1427
        %v4454 = vunpack.c.l.b16 %v1428
        %v4455 = vunpack.c.h.b16 %v1428
        %v4456 = vunpack.c.l.b16 %v1429
        %v4457 = vunpack.c.h.b16 %v1429
        %v4458 = vunpack.c.l.b16 %v1430
        %v4459 = vunpack.c.h.b16 %v1430
        %v4460 = vunpack.c.l.b16 %v1431
        %v4461 = vunpack.c.h.b16 %v1431
        %v4462 = vunpack.c.l.b16 %v1432
        %v4463 = vunpack.c.h.b16 %v1432
        %v4464 = vunpack.c.l.b16 %v1433
        %v4465 = vunpack.c.h.b16 %v1433
        %v4466 = vunpack.c.l.b16 %v1434
        %v4467 = vunpack.c.h.b16 %v1434
        %v4468 = vunpack.c.l.b16 %v1435
        %v4469 = vunpack.c.h.b16 %v1435
        %v4470 = vunpack.c.l.b16 %v1436
        %v4471 = vunpack.c.h.b16 %v1436
        %v4472 = vunpack.c.l.b16 %v1437
        %v4473 = vunpack.c.h.b16 %v1437
        %v4474 = vunpack.c.l.b16 %v1438
        %v4475 = vunpack.c.h.b16 %v1438
        %v4476 = vunpack.c.l.b16 %v1439
        %v4477 = vunpack.c.h.b16 %v1439
        %v4478 = vunpack.c.l.b16 %v1440
        %v4479 = vunpack.c.h.b16 %v1440
        %v4480 = vunpack.c.l.b16 %v1441
        %v4481 = vunpack.c.h.b16 %v1441
        %v4482 = vunpack.c.l.b16 %v1442
        %v4483 = vunpack.c.h.b16 %v1442
        %v4484 = vunpack.c.l.b16 %v1443
        %v4485 = vunpack.c.h.b16 %v1443
        %v4486 = vunpack.c.l.b16 %v1444
        %v4487 = vunpack.c.h.b16 %v1444
        %v4488 = vunpack.c.l.b16 %v1445
        %v4489 = vunpack.c.h.b16 %v1445
        %v4490 = vunpack.c.l.b16 %v1446
        %v4491 = vunpack.c.h.b16 %v1446
        %v4492 = vunpack.c.l.b16 %v1447
        %v4493 = vunpack.c.h.b16 %v1447
        %v4494 = vunpack.c.l.b16 %v1448
        %v4495 = vunpack.c.h.b16 %v1448
        %v4496 = vunpack.c.l.b16 %v1449
        %v4497 = vunpack.c.h.b16 %v1449
        %v4498 = vunpack.c.l.b16 %v1450
        %v4499 = vunpack.c.h.b16 %v1450
        %v4500 = vunpack.c.l.b16 %v1451
        %v4501 = vunpack.c.h.b16 %v1451
        %v4502 = vunpack.c.l.b16 %v1452
        %v4503 = vunpack.c.h.b16 %v1452
        %v4504 = vunpack.c.l.b16 %v1453
        %v4505 = vunpack.c.h.b16 %v1453
        %v4506 = vunpack.c.l.b16 %v1454
        %v4507 = vunpack.c.h.b16 %v1454
        %v4508 = vunpack.c.l.b16 %v1455
        %v4509 = vunpack.c.h.b16 %v1455
        %v4510 = vunpack.c.l.b16 %v1456
        %v4511 = vunpack.c.h.b16 %v1456
        %v4512 = vunpack.c.l.b16 %v1457
        %v4513 = vunpack.c.h.b16 %v1457
        %v4514 = vunpack.c.l.b16 %v1458
        %v4515 = vunpack.c.h.b16 %v1458
        %v4516 = vunpack.c.l.b16 %v1459
        %v4517 = vunpack.c.h.b16 %v1459
        %v4518 = vunpack.c.l.b16 %v1460
        %v4519 = vunpack.c.h.b16 %v1460
        %v4520 = vunpack.c.l.b16 %v1461
        %v4521 = vunpack.c.h.b16 %v1461
        %v4522 = vunpack.c.l.b16 %v1462
        %v4523 = vunpack.c.h.b16 %v1462
        %v4524 = vunpack.c.l.b16 %v1463
        %v4525 = vunpack.c.h.b16 %v1463
        %v4526 = vunpack.c.l.b16 %v1464
        %v4527 = vunpack.c.h.b16 %v1464
        %v4528 = vunpack.c.l.b16 %v1465
        %v4529 = vunpack.c.h.b16 %v1465
        %v4530 = vunpack.c.l.b16 %v1466
        %v4531 = vunpack.c.h.b16 %v1466
        %v4532 = vunpack.c.l.b16 %v1467
        %v4533 = vunpack.c.h.b16 %v1467
        %v4534 = vunpack.c.l.b16 %v1468
        %v4535 = vunpack.c.h.b16 %v1468
        %v4536 = vunpack.c.l.b16 %v1469
        %v4537 = vunpack.c.h.b16 %v1469
        %v4538 = vunpack.c.l.b16 %v1470
        %v4539 = vunpack.c.h.b16 %v1470
        %v4540 = vunpack.c.l.b16 %v1471
        %v4541 = vunpack.c.h.b16 %v1471
        %v4542 = vunpack.c.l.b16 %v1472
        %v4543 = vunpack.c.h.b16 %v1472
        %v4544 = vunpack.c.l.b16 %v1473
        %v4545 = vunpack.c.h.b16 %v1473
        %v4546 = vunpack.c.l.b16 %v1474
        %v4547 = vunpack.c.h.b16 %v1474
        %v4548 = vunpack.c.l.b16 %v1475
        %v4549 = vunpack.c.h.b16 %v1475
        %v4550 = vunpack.c.l.b16 %v1476
        %v4551 = vunpack.c.h.b16 %v1476
        %v4552 = vunpack.c.l.b16 %v1477
        %v4553 = vunpack.c.h.b16 %v1477
        %v4554 = vunpack.c.l.b16 %v1478
        %v4555 = vunpack.c.h.b16 %v1478
        %v4556 = vunpack.c.l.b16 %v1479
        %v4557 = vunpack.c.h.b16 %v1479
        %v4558 = vunpack.c.l.b16 %v1480
        %v4559 = vunpack.c.h.b16 %v1480
        %v4560 = vunpack.c.l.b16 %v1481
        %v4561 = vunpack.c.h.b16 %v1481
        %v4562 = vunpack.c.l.b16 %v1482
        %v4563 = vunpack.c.h.b16 %v1482
        %v4564 = vunpack.c.l.b16 %v1483
        %v4565 = vunpack.c.h.b16 %v1483
        %v4566 = vunpack.c.l.b16 %v1484
        %v4567 = vunpack.c.h.b16 %v1484
        %v4568 = vunpack.c.l.b16 %v1485
        %v4569 = vunpack.c.h.b16 %v1485
        %v4570 = vunpack.c.l.b16 %v1486
        %v4571 = vunpack.c.h.b16 %v1486
        %v4572 = vunpack.c.l.b16 %v1487
        %v4573 = vunpack.c.h.b16 %v1487
        %v4574 = vunpack.c.l.b16 %v1488
        %v4575 = vunpack.c.h.b16 %v1488
        %v4576 = vunpack.c.l.b16 %v1489
        %v4577 = vunpack.c.h.b16 %v1489
        %v4578 = vunpack.c.l.b16 %v1490
        %v4579 = vunpack.c.h.b16 %v1490
        %v4580 = vunpack.c.l.b16 %v1491
        %v4581 = vunpack.c.h.b16 %v1491
        %v4582 = vunpack.c.l.b16 %v1492
        %v4583 = vunpack.c.h.b16 %v1492
        %v4584 = vunpack.c.l.b16 %v1493
        %v4585 = vunpack.c.h.b16 %v1493
        %v4586 = vunpack.c.l.b16 %v1494
        %v4587 = vunpack.c.h.b16 %v1494
        %v4588 = vunpack.c.l.b16 %v1495
        %v4589 = vunpack.c.h.b16 %v1495
        %v4590 = vunpack.c.l.b16 %v1496
        %v4591 = vunpack.c.h.b16 %v1496
        %v4592 = vunpack.c.l.b16 %v1497
        %v4593 = vunpack.c.h.b16 %v1497
        %v4594 = vunpack.c.l.b16 %v1498
        %v4595 = vunpack.c.h.b16 %v1498
        %v4596 = vunpack.c.l.b16 %v1499
        %v4597 = vunpack.c.h.b16 %v1499
        %v4598 = vunpack.c.l.b16 %v1500
        %v4599 = vunpack.c.h.b16 %v1500
        %v4600 = vunpack.c.l.b16 %v1501
        %v4601 = vunpack.c.h.b16 %v1501
        %v4602 = vunpack.c.l.b16 %v1502
        %v4603 = vunpack.c.h.b16 %v1502
        %v4604 = vunpack.c.l.b16 %v1503
        %v4605 = vunpack.c.h.b16 %v1503
        %v4606 = vunpack.c.l.b16 %v1504
        %v4607 = vunpack.c.h.b16 %v1504
        %v4608 = vunpack.c.l.b16 %v1505
        %v4609 = vunpack.c.h.b16 %v1505
        %v4610 = vunpack.c.l.b16 %v1506
        %v4611 = vunpack.c.h.b16 %v1506
        %v4612 = vunpack.c.l.b16 %v1507
        %v4613 = vunpack.c.h.b16 %v1507
        %v4614 = vunpack.c.l.b16 %v1508
        %v4615 = vunpack.c.h.b16 %v1508
        %v4616 = vunpack.c.l.b16 %v1509
        %v4617 = vunpack.c.h.b16 %v1509
        %v4618 = vunpack.c.l.b16 %v1510
        %v4619 = vunpack.c.h.b16 %v1510
        %v4620 = vunpack.c.l.b16 %v1511
        %v4621 = vunpack.c.h.b16 %v1511
        %v4622 = vunpack.c.l.b16 %v1512
        %v4623 = vunpack.c.h.b16 %v1512
        %v4624 = vunpack.c.l.b16 %v1513
        %v4625 = vunpack.c.h.b16 %v1513
        %v4626 = vunpack.c.l.b16 %v1514
        %v4627 = vunpack.c.h.b16 %v1514
        %v4628 = vunpack.c.l.b16 %v1515
        %v4629 = vunpack.c.h.b16 %v1515
        %v4630 = vunpack.c.l.b16 %v1516
        %v4631 = vunpack.c.h.b16 %v1516
        %v4632 = vunpack.c.l.b16 %v1517
        %v4633 = vunpack.c.h.b16 %v1517
        %v4634 = vunpack.c.l.b16 %v1518
        %v4635 = vunpack.c.h.b16 %v1518
        %v4636 = vunpack.c.l.b16 %v1519
        %v4637 = vunpack.c.h.b16 %v1519
        %v4638 = vunpack.c.l.b16 %v1520
        %v4639 = vunpack.c.h.b16 %v1520
        %v4640 = vunpack.c.l.b16 %v1521
        %v4641 = vunpack.c.h.b16 %v1521
        %v4642 = vunpack.c.l.b16 %v1522
        %v4643 = vunpack.c.h.b16 %v1522
        %v4644 = vunpack.c.l.b16 %v1523
        %v4645 = vunpack.c.h.b16 %v1523
        %v4646 = vunpack.c.l.b16 %v1524
        %v4647 = vunpack.c.h.b16 %v1524
        %v4648 = vunpack.c.l.b16 %v1525
        %v4649 = vunpack.c.h.b16 %v1525
        %v4650 = vunpack.c.l.b16 %v1526
        %v4651 = vunpack.c.h.b16 %v1526
        %v4652 = vunpack.c.l.b16 %v1527
        %v4653 = vunpack.c.h.b16 %v1527
        %v4654 = vunpack.c.l.b16 %v1528
        %v4655 = vunpack.c.h.b16 %v1528
        %v4656 = vunpack.c.l.b16 %v1529
        %v4657 = vunpack.c.h.b16 %v1529
        %v4658 = vunpack.c.l.b16 %v1530
        %v4659 = vunpack.c.h.b16 %v1530
        %v4660 = vunpack.c.l.b16 %v1531
        %v4661 = vunpack.c.h.b16 %v1531
        %v4662 = vunpack.c.l.b16 %v1532
        %v4663 = vunpack.c.h.b16 %v1532
        %v4664 = vunpack.c.l.b16 %v1533
        %v4665 = vunpack.c.h.b16 %v1533
        %v4666 = vunpack.c.l.b16 %v1534
        %v4667 = vunpack.c.h.b16 %v1534
        %v4668 = vunpack.c.l.b16 %v1535
        %v4669 = vunpack.c.h.b16 %v1535
        %v4670 = vunpack.c.l.b16 %v1536
        %v4671 = vunpack.c.h.b16 %v1536
        %v4672 = vunpack.c.l.b16 %v1537
        %v4673 = vunpack.c.h.b16 %v1537
        %v4674 = vunpack.c.l.b16 %v1538
        %v4675 = vunpack.c.h.b16 %v1538
        %v4676 = vunpack.c.l.b16 %v1539
        %v4677 = vunpack.c.h.b16 %v1539
        %v4678 = vunpack.c.l.b16 %v1540
        %v4679 = vunpack.c.h.b16 %v1540
        %v4680 = vunpack.c.l.b16 %v1541
        %v4681 = vunpack.c.h.b16 %v1541
        %v4682 = vunpack.c.l.b16 %v1542
        %v4683 = vunpack.c.h.b16 %v1542
        %v4684 = vunpack.c.l.b16 %v1543
        %v4685 = vunpack.c.h.b16 %v1543
        %v4686 = vunpack.c.l.b16 %v1544
        %v4687 = vunpack.c.h.b16 %v1544
        %v4688 = vunpack.c.l.b16 %v1545
        %v4689 = vunpack.c.h.b16 %v1545
        %v4690 = vunpack.c.l.b16 %v1546
        %v4691 = vunpack.c.h.b16 %v1546
        %v4692 = vunpack.c.l.b16 %v1547
        %v4693 = vunpack.c.h.b16 %v1547
        %v4694 = vunpack.c.l.b16 %v1548
        %v4695 = vunpack.c.h.b16 %v1548
        %v4696 = vunpack.c.l.b16 %v1549
        %v4697 = vunpack.c.h.b16 %v1549
        %v4698 = vunpack.c.l.b16 %v1550
        %v4699 = vunpack.c.h.b16 %v1550
        %v4700 = vunpack.c.l.b16 %v1551
        %v4701 = vunpack.c.h.b16 %v1551
        %v4702 = vunpack.c.l.b16 %v1552
        %v4703 = vunpack.c.h.b16 %v1552
        %v4704 = vunpack.c.l.b16 %v1553
        %v4705 = vunpack.c.h.b16 %v1553
        %v4706 = vunpack.c.l.b16 %v1554
        %v4707 = vunpack.c.h.b16 %v1554
        %v4708 = vunpack.c.l.b16 %v1555
        %v4709 = vunpack.c.h.b16 %v1555
        %v4710 = vunpack.c.l.b16 %v1556
        %v4711 = vunpack.c.h.b16 %v1556
        %v4712 = vunpack.c.l.b16 %v1557
        %v4713 = vunpack.c.h.b16 %v1557
        %v4714 = vunpack.c.l.b16 %v1558
        %v4715 = vunpack.c.h.b16 %v1558
        %v4716 = vunpack.c.l.b16 %v1559
        %v4717 = vunpack.c.h.b16 %v1559
        %v4718 = vunpack.c.l.b16 %v1560
        %v4719 = vunpack.c.h.b16 %v1560
        %v4720 = vunpack.c.l.b16 %v1561
        %v4721 = vunpack.c.h.b16 %v1561
        %v4722 = vunpack.c.l.b16 %v1562
        %v4723 = vunpack.c.h.b16 %v1562
        %v4724 = vunpack.c.l.b16 %v1563
        %v4725 = vunpack.c.h.b16 %v1563
        %v4726 = vunpack.c.l.b16 %v1564
        %v4727 = vunpack.c.h.b16 %v1564
        %v4728 = vunpack.c.l.b16 %v1565
        %v4729 = vunpack.c.h.b16 %v1565
        %v4730 = vunpack.c.l.b16 %v1566
        %v4731 = vunpack.c.h.b16 %v1566
        %v4732 = vunpack.c.l.b16 %v1567
        %v4733 = vunpack.c.h.b16 %v1567
        %v4734 = vunpack.c.l.b16 %v1568
        %v4735 = vunpack.c.h.b16 %v1568
        %v4736 = vunpack.c.l.b16 %v1569
        %v4737 = vunpack.c.h.b16 %v1569
        %v4738 = vunpack.c.l.b16 %v1570
        %v4739 = vunpack.c.h.b16 %v1570
        %v4740 = vunpack.c.l.b16 %v1571
        %v4741 = vunpack.c.h.b16 %v1571
        %v4742 = vunpack.c.l.b16 %v1572
        %v4743 = vunpack.c.h.b16 %v1572
        %v4744 = vunpack.c.l.b16 %v1573
        %v4745 = vunpack.c.h.b16 %v1573
        %v4746 = vunpack.c.l.b16 %v1574
        %v4747 = vunpack.c.h.b16 %v1574
        %v4748 = vunpack.c.l.b16 %v1575
        %v4749 = vunpack.c.h.b16 %v1575
        %v4750 = vunpack.c.l.b16 %v1576
        %v4751 = vunpack.c.h.b16 %v1576
        %v4752 = vunpack.c.l.b16 %v1577
        %v4753 = vunpack.c.h.b16 %v1577
        %v4754 = vunpack.c.l.b16 %v1578
        %v4755 = vunpack.c.h.b16 %v1578
        %v4756 = vunpack.c.l.b16 %v1579
        %v4757 = vunpack.c.h.b16 %v1579
        %v4758 = vunpack.c.l.b16 %v1580
        %v4759 = vunpack.c.h.b16 %v1580
        %v4760 = vunpack.c.l.b16 %v1581
        %v4761 = vunpack.c.h.b16 %v1581
        %v4762 = vunpack.c.l.b16 %v1582
        %v4763 = vunpack.c.h.b16 %v1582
        %v4764 = vunpack.c.l.b16 %v1583
        %v4765 = vunpack.c.h.b16 %v1583
        %v4766 = vunpack.c.l.b16 %v1584
        %v4767 = vunpack.c.h.b16 %v1584
        %v4768 = vunpack.c.l.b16 %v1585
        %v4769 = vunpack.c.h.b16 %v1585
        %v4770 = vunpack.c.l.b16 %v1586
        %v4771 = vunpack.c.h.b16 %v1586
        %v4772 = vunpack.c.l.b16 %v1587
        %v4773 = vunpack.c.h.b16 %v1587
        %v4774 = vunpack.c.l.b16 %v1588
        %v4775 = vunpack.c.h.b16 %v1588
        %v4776 = vunpack.c.l.b16 %v1589
        %v4777 = vunpack.c.h.b16 %v1589
        %v4778 = vunpack.c.l.b16 %v1590
        %v4779 = vunpack.c.h.b16 %v1590
        %v4780 = vunpack.c.l.b16 %v1591
        %v4781 = vunpack.c.h.b16 %v1591
        %v4782 = vunpack.c.l.b16 %v1592
        %v4783 = vunpack.c.h.b16 %v1592
        %v4784 = vunpack.c.l.b16 %v1593
        %v4785 = vunpack.c.h.b16 %v1593
        %v4786 = vunpack.c.l.b16 %v1594
        %v4787 = vunpack.c.h.b16 %v1594
        %v4788 = vunpack.c.l.b16 %v1595
        %v4789 = vunpack.c.h.b16 %v1595
        %v4790 = vunpack.c.l.b16 %v1596
        %v4791 = vunpack.c.h.b16 %v1596
        %v4792 = vunpack.c.l.b16 %v1597
        %v4793 = vunpack.c.h.b16 %v1597
        %v4794 = vunpack.c.l.b16 %v1598
        %v4795 = vunpack.c.h.b16 %v1598
        %v4796 = vunpack.c.l.b16 %v1599
        %v4797 = vunpack.c.h.b16 %v1599
        %v4798 = vunpack.c.l.b16 %v1600
        %v4799 = vunpack.c.h.b16 %v1600
        %v4800 = vunpack.c.l.b16 %v1601
        %v4801 = vunpack.c.h.b16 %v1601
        %v4802 = vunpack.c.l.b16 %v1602
        %v4803 = vunpack.c.h.b16 %v1602
        %v4804 = vunpack.c.l.b16 %v1603
        %v4805 = vunpack.c.h.b16 %v1603
        %v4806 = vunpack.c.l.b16 %v1604
        %v4807 = vunpack.c.h.b16 %v1604
        %v4808 = vunpack.c.l.b16 %v1605
        %v4809 = vunpack.c.h.b16 %v1605
        %v4810 = vunpack.c.l.b16 %v1606
        %v4811 = vunpack.c.h.b16 %v1606
        %v4812 = vunpack.c.l.b16 %v1607
        %v4813 = vunpack.c.h.b16 %v1607
        %v4814 = vunpack.c.l.b16 %v1608
        %v4815 = vunpack.c.h.b16 %v1608
        %v4816 = vunpack.c.l.b16 %v1609
        %v4817 = vunpack.c.h.b16 %v1609
        %v4818 = vunpack.c.l.b16 %v1610
        %v4819 = vunpack.c.h.b16 %v1610
        %v4820 = vunpack.c.l.b16 %v1611
        %v4821 = vunpack.c.h.b16 %v1611
        %v4822 = vunpack.c.l.b16 %v1612
        %v4823 = vunpack.c.h.b16 %v1612
        %v4824 = vunpack.c.l.b16 %v1613
        %v4825 = vunpack.c.h.b16 %v1613
        %v4826 = vunpack.c.l.b16 %v1614
        %v4827 = vunpack.c.h.b16 %v1614
        %v4828 = vunpack.c.l.b16 %v1615
        %v4829 = vunpack.c.h.b16 %v1615
        %v4830 = vunpack.c.l.b16 %v1616
        %v4831 = vunpack.c.h.b16 %v1616
        %v4832 = vunpack.c.l.b16 %v1617
        %v4833 = vunpack.c.h.b16 %v1617
        %v4834 = vunpack.c.l.b16 %v1618
        %v4835 = vunpack.c.h.b16 %v1618
        %v4836 = vunpack.c.l.b16 %v1619
        %v4837 = vunpack.c.h.b16 %v1619
        %v4838 = vunpack.c.l.b16 %v1620
        %v4839 = vunpack.c.h.b16 %v1620
        %v4840 = vunpack.c.l.b16 %v1621
        %v4841 = vunpack.c.h.b16 %v1621
        %v4842 = vunpack.c.l.b16 %v1622
        %v4843 = vunpack.c.h.b16 %v1622
        %v4844 = vunpack.c.l.b16 %v1623
        %v4845 = vunpack.c.h.b16 %v1623
        %v4846 = vunpack.c.l.b16 %v1624
        %v4847 = vunpack.c.h.b16 %v1624
        %v4848 = vunpack.c.l.b16 %v1625
        %v4849 = vunpack.c.h.b16 %v1625
        %v4850 = vunpack.c.l.b16 %v1626
        %v4851 = vunpack.c.h.b16 %v1626
        %v4852 = vunpack.c.l.b16 %v1627
        %v4853 = vunpack.c.h.b16 %v1627
        %v4854 = vunpack.c.l.b16 %v1628
        %v4855 = vunpack.c.h.b16 %v1628
        %v4856 = vunpack.c.l.b16 %v1629
        %v4857 = vunpack.c.h.b16 %v1629
        %v4858 = vunpack.c.l.b16 %v1630
        %v4859 = vunpack.c.h.b16 %v1630
        %v4860 = vunpack.c.l.b16 %v1631
        %v4861 = vunpack.c.h.b16 %v1631
        %v4862 = vunpack.c.l.b16 %v1632
        %v4863 = vunpack.c.h.b16 %v1632
        %v4864 = vunpack.c.l.b16 %v1633
        %v4865 = vunpack.c.h.b16 %v1633
        %v4866 = vunpack.c.l.b16 %v1634
        %v4867 = vunpack.c.h.b16 %v1634
        %v4868 = vunpack.c.l.b16 %v1635
        %v4869 = vunpack.c.h.b16 %v1635
        %v4870 = vunpack.c.l.b16 %v1636
        %v4871 = vunpack.c.h.b16 %v1636
        %v4872 = vunpack.c.l.b16 %v1637
        %v4873 = vunpack.c.h.b16 %v1637
        %v4874 = vunpack.c.l.b16 %v1638
        %v4875 = vunpack.c.h.b16 %v1638
        %v4876 = vunpack.c.l.b16 %v1639
        %v4877 = vunpack.c.h.b16 %v1639
        %v4878 = vunpack.c.l.b16 %v1640
        %v4879 = vunpack.c.h.b16 %v1640
        %v4880 = vunpack.c.l.b16 %v1641
        %v4881 = vunpack.c.h.b16 %v1641
        %v4882 = vunpack.c.l.b16 %v1642
        %v4883 = vunpack.c.h.b16 %v1642
        %v4884 = vunpack.c.l.b16 %v1643
        %v4885 = vunpack.c.h.b16 %v1643
        %v4886 = vunpack.c.l.b16 %v1644
        %v4887 = vunpack.c.h.b16 %v1644
        %v4888 = vunpack.c.l.b16 %v1645
        %v4889 = vunpack.c.h.b16 %v1645
        %v4890 = vunpack.c.l.b16 %v1646
        %v4891 = vunpack.c.h.b16 %v1646
        %v4892 = vunpack.c.l.b16 %v1647
        %v4893 = vunpack.c.h.b16 %v1647
        %v4894 = vunpack.c.l.b16 %v1648
        %v4895 = vunpack.c.h.b16 %v1648
        %v4896 = vunpack.c.l.b16 %v1649
        %v4897 = vunpack.c.h.b16 %v1649
        %v4898 = vunpack.c.l.b16 %v1650
        %v4899 = vunpack.c.h.b16 %v1650
        %v4900 = vunpack.c.l.b16 %v1651
        %v4901 = vunpack.c.h.b16 %v1651
        %v4902 = vunpack.c.l.b16 %v1652
        %v4903 = vunpack.c.h.b16 %v1652
        %v4904 = vunpack.c.l.b16 %v1653
        %v4905 = vunpack.c.h.b16 %v1653
        %v4906 = vunpack.c.l.b16 %v1654
        %v4907 = vunpack.c.h.b16 %v1654
        %v4908 = vunpack.c.l.b16 %v1655
        %v4909 = vunpack.c.h.b16 %v1655
        %v4910 = vunpack.c.l.b16 %v1656
        %v4911 = vunpack.c.h.b16 %v1656
        %v4912 = vunpack.c.l.b16 %v1657
        %v4913 = vunpack.c.h.b16 %v1657
        %v4914 = vunpack.c.l.b16 %v1658
        %v4915 = vunpack.c.h.b16 %v1658
        %v4916 = vunpack.c.l.b16 %v1659
        %v4917 = vunpack.c.h.b16 %v1659
        %v4918 = vunpack.c.l.b16 %v1660
        %v4919 = vunpack.c.h.b16 %v1660
        %v4920 = vunpack.c.l.b16 %v1661
        %v4921 = vunpack.c.h.b16 %v1661
        %v4922 = vunpack.c.l.b16 %v1662
        %v4923 = vunpack.c.h.b16 %v1662
        %v4924 = vunpack.c.l.b16 %v1663
        %v4925 = vunpack.c.h.b16 %v1663
        %v4926 = vunpack.c.l.b16 %v1664
        %v4927 = vunpack.c.h.b16 %v1664
        %v4928 = vunpack.c.l.b16 %v1665
        %v4929 = vunpack.c.h.b16 %v1665
        %v4930 = vunpack.c.l.b16 %v1666
        %v4931 = vunpack.c.h.b16 %v1666
        %v4932 = vunpack.c.l.b16 %v1667
        %v4933 = vunpack.c.h.b16 %v1667
        %v4934 = vunpack.c.l.b16 %v1668
        %v4935 = vunpack.c.h.b16 %v1668
        %v4936 = vunpack.c.l.b16 %v1669
        %v4937 = vunpack.c.h.b16 %v1669
        %v4938 = vunpack.c.l.b16 %v1670
        %v4939 = vunpack.c.h.b16 %v1670
        %v4940 = vunpack.c.l.b16 %v1671
        %v4941 = vunpack.c.h.b16 %v1671
        %v4942 = vunpack.c.l.b16 %v1672
        %v4943 = vunpack.c.h.b16 %v1672
        %v4944 = vunpack.c.l.b16 %v1673
        %v4945 = vunpack.c.h.b16 %v1673
        %v4946 = vunpack.c.l.b16 %v1674
        %v4947 = vunpack.c.h.b16 %v1674
        %v4948 = vunpack.c.l.b16 %v1675
        %v4949 = vunpack.c.h.b16 %v1675
        %v4950 = vunpack.c.l.b16 %v1676
        %v4951 = vunpack.c.h.b16 %v1676
        %v4952 = vunpack.c.l.b16 %v1677
        %v4953 = vunpack.c.h.b16 %v1677
        %v4954 = vunpack.c.l.b16 %v1678
        %v4955 = vunpack.c.h.b16 %v1678
        %v4956 = vunpack.c.l.b16 %v1679
        %v4957 = vunpack.c.h.b16 %v1679
        %v4958 = vunpack.c.l.b16 %v1680
        %v4959 = vunpack.c.h.b16 %v1680
        %v4960 = vunpack.c.l.b16 %v1681
        %v4961 = vunpack.c.h.b16 %v1681
        %v4962 = vunpack.c.l.b16 %v1682
        %v4963 = vunpack.c.h.b16 %v1682
        %v4964 = vunpack.c.l.b16 %v1683
        %v4965 = vunpack.c.h.b16 %v1683
        %v4966 = vunpack.c.l.b16 %v1684
        %v4967 = vunpack.c.h.b16 %v1684
        %v4968 = vunpack.c.l.b16 %v1685
        %v4969 = vunpack.c.h.b16 %v1685
        %v4970 = vunpack.c.l.b16 %v1686
        %v4971 = vunpack.c.h.b16 %v1686
        %v4972 = vunpack.c.l.b16 %v1687
        %v4973 = vunpack.c.h.b16 %v1687
        %v4974 = vunpack.c.l.b16 %v1688
        %v4975 = vunpack.c.h.b16 %v1688
        %v4976 = vunpack.c.l.b16 %v1689
        %v4977 = vunpack.c.h.b16 %v1689
        %v4978 = vunpack.c.l.b16 %v1690
        %v4979 = vunpack.c.h.b16 %v1690
        %v4980 = vunpack.c.l.b16 %v1691
        %v4981 = vunpack.c.h.b16 %v1691
        %v4982 = vunpack.c.l.b16 %v1692
        %v4983 = vunpack.c.h.b16 %v1692
        %v4984 = vunpack.c.l.b16 %v1693
        %v4985 = vunpack.c.h.b16 %v1693
        %v4986 = vunpack.c.l.b16 %v1694
        %v4987 = vunpack.c.h.b16 %v1694
        %v4988 = vunpack.c.l.b16 %v1695
        %v4989 = vunpack.c.h.b16 %v1695
        %v4990 = vunpack.c.l.b16 %v1696
        %v4991 = vunpack.c.h.b16 %v1696
        %v4992 = vunpack.c.l.b16 %v1697
        %v4993 = vunpack.c.h.b16 %v1697
        %v4994 = vunpack.c.l.b16 %v1698
        %v4995 = vunpack.c.h.b16 %v1698
        %v4996 = vunpack.c.l.b16 %v1699
        %v4997 = vunpack.c.h.b16 %v1699
        %v4998 = vunpack.c.l.b16 %v1700
        %v4999 = vunpack.c.h.b16 %v1700
        %v5000 = vunpack.c.l.b16 %v1701
        %v5001 = vunpack.c.h.b16 %v1701
        %v5002 = vunpack.c.l.b16 %v1702
        %v5003 = vunpack.c.h.b16 %v1702
        %v5004 = vunpack.c.l.b16 %v1703
        %v5005 = vunpack.c.h.b16 %v1703
        %v5006 = vunpack.c.l.b16 %v1704
        %v5007 = vunpack.c.h.b16 %v1704
        %v5008 = vunpack.c.l.b16 %v1705
        %v5009 = vunpack.c.h.b16 %v1705
        %v5010 = vunpack.c.l.b16 %v1706
        %v5011 = vunpack.c.h.b16 %v1706
        %v5012 = vunpack.c.l.b16 %v1707
        %v5013 = vunpack.c.h.b16 %v1707
        %v5014 = vunpack.c.l.b16 %v1708
        %v5015 = vunpack.c.h.b16 %v1708
        %v5016 = vunpack.c.l.b16 %v1709
        %v5017 = vunpack.c.h.b16 %v1709
        %v5018 = vunpack.c.l.b16 %v1710
        %v5019 = vunpack.c.h.b16 %v1710
        %v5020 = vunpack.c.l.b16 %v1711
        %v5021 = vunpack.c.h.b16 %v1711
        %v5022 = vunpack.c.l.b16 %v1712
        %v5023 = vunpack.c.h.b16 %v1712
        %v5024 = vunpack.c.l.b16 %v1713
        %v5025 = vunpack.c.h.b16 %v1713
        %v5026 = vunpack.c.l.b16 %v1714
        %v5027 = vunpack.c.h.b16 %v1714
        %v5028 = vunpack.c.l.b16 %v1715
        %v5029 = vunpack.c.h.b16 %v1715
        %v5030 = vunpack.c.l.b16 %v1716
        %v5031 = vunpack.c.h.b16 %v1716
        %v5032 = vunpack.c.l.b16 %v1717
        %v5033 = vunpack.c.h.b16 %v1717
        %v5034 = vunpack.c.l.b16 %v1718
        %v5035 = vunpack.c.h.b16 %v1718
        %v5036 = vunpack.c.l.b16 %v1719
        %v5037 = vunpack.c.h.b16 %v1719
        %v5038 = vunpack.c.l.b16 %v1720
        %v5039 = vunpack.c.h.b16 %v1720
        %v5040 = vunpack.c.l.b16 %v1721
        %v5041 = vunpack.c.h.b16 %v1721
        %v5042 = vunpack.c.l.b16 %v1722
        %v5043 = vunpack.c.h.b16 %v1722
        %v5044 = vunpack.c.l.b16 %v1723
        %v5045 = vunpack.c.h.b16 %v1723
        %v5046 = vunpack.c.l.b16 %v1724
        %v5047 = vunpack.c.h.b16 %v1724
        %v5048 = vunpack.c.l.b16 %v1725
        %v5049 = vunpack.c.h.b16 %v1725
        %v5050 = vunpack.c.l.b16 %v1726
        %v5051 = vunpack.c.h.b16 %v1726
        %v5052 = vunpack.c.l.b16 %v1727
        %v5053 = vunpack.c.h.b16 %v1727
        %v5054 = vunpack.c.l.b16 %v1728
        %v5055 = vunpack.c.h.b16 %v1728
        %v5056 = vunpack.c.l.b16 %v1729
        %v5057 = vunpack.c.h.b16 %v1729
        %v5058 = vunpack.c.l.b16 %v1730
        %v5059 = vunpack.c.h.b16 %v1730
        %v5060 = vunpack.c.l.b16 %v1731
        %v5061 = vunpack.c.h.b16 %v1731
        %v5062 = vunpack.c.l.b16 %v1732
        %v5063 = vunpack.c.h.b16 %v1732
        %v5064 = vunpack.c.l.b16 %v1733
        %v5065 = vunpack.c.h.b16 %v1733
        %v5066 = vunpack.c.l.b16 %v1734
        %v5067 = vunpack.c.h.b16 %v1734
        %v5068 = vunpack.c.l.b16 %v1735
        %v5069 = vunpack.c.h.b16 %v1735
        %v5070 = vunpack.c.l.b16 %v1736
        %v5071 = vunpack.c.h.b16 %v1736
        %v5072 = vunpack.c.l.b16 %v1737
        %v5073 = vunpack.c.h.b16 %v1737
        %v5074 = vunpack.c.l.b16 %v1738
        %v5075 = vunpack.c.h.b16 %v1738
        %v5076 = vunpack.c.l.b16 %v1739
        %v5077 = vunpack.c.h.b16 %v1739
        %v5078 = vunpack.c.l.b16 %v1740
        %v5079 = vunpack.c.h.b16 %v1740
        %v5080 = vunpack.c.l.b16 %v1741
        %v5081 = vunpack.c.h.b16 %v1741
        %v5082 = vunpack.c.l.b16 %v1742
        %v5083 = vunpack.c.h.b16 %v1742
        %v5084 = vunpack.c.l.b16 %v1743
        %v5085 = vunpack.c.h.b16 %v1743
        %v5086 = vunpack.c.l.b16 %v1744
        %v5087 = vunpack.c.h.b16 %v1744
        %v5088 = vunpack.c.l.b16 %v1745
        %v5089 = vunpack.c.h.b16 %v1745
        %v5090 = vunpack.c.l.b16 %v1746
        %v5091 = vunpack.c.h.b16 %v1746
        %v5092 = vunpack.c.l.b16 %v1747
        %v5093 = vunpack.c.h.b16 %v1747
        %v5094 = vunpack.c.l.b16 %v1748
        %v5095 = vunpack.c.h.b16 %v1748
        %v5096 = vunpack.c.l.b16 %v1749
        %v5097 = vunpack.c.h.b16 %v1749
        %v5098 = vunpack.c.l.b16 %v1750
        %v5099 = vunpack.c.h.b16 %v1750
        %v5100 = vunpack.c.l.b16 %v1751
        %v5101 = vunpack.c.h.b16 %v1751
        %v5102 = vunpack.c.l.b16 %v1752
        %v5103 = vunpack.c.h.b16 %v1752
        %v5104 = vunpack.c.l.b16 %v1753
        %v5105 = vunpack.c.h.b16 %v1753
        %v5106 = vunpack.c.l.b16 %v1754
        %v5107 = vunpack.c.h.b16 %v1754
        %v5108 = vunpack.c.l.b16 %v1755
        %v5109 = vunpack.c.h.b16 %v1755
        %v5110 = vunpack.c.l.b16 %v1756
        %v5111 = vunpack.c.h.b16 %v1756
        %v5112 = vunpack.c.l.b16 %v1757
        %v5113 = vunpack.c.h.b16 %v1757
        %v5114 = vunpack.c.l.b16 %v1758
        %v5115 = vunpack.c.h.b16 %v1758
        %v5116 = vunpack.c.l.b16 %v1759
        %v5117 = vunpack.c.h.b16 %v1759
        %v5118 = vunpack.c.l.b16 %v1760
        %v5119 = vunpack.c.h.b16 %v1760
        %v5120 = vunpack.c.l.b16 %v1761
        %v5121 = vunpack.c.h.b16 %v1761
        %v5122 = vunpack.c.l.b16 %v1762
        %v5123 = vunpack.c.h.b16 %v1762
        %v5124 = vunpack.c.l.b16 %v1763
        %v5125 = vunpack.c.h.b16 %v1763
        %v5126 = vunpack.c.l.b16 %v1764
        %v5127 = vunpack.c.h.b16 %v1764
        %v5128 = vunpack.c.l.b16 %v1765
        %v5129 = vunpack.c.h.b16 %v1765
        %v5130 = vunpack.c.l.b16 %v1766
        %v5131 = vunpack.c.h.b16 %v1766
        %v5132 = vunpack.c.l.b16 %v1767
        %v5133 = vunpack.c.h.b16 %v1767
        %v5134 = vunpack.c.l.b16 %v1768
        %v5135 = vunpack.c.h.b16 %v1768
        %v5136 = vunpack.c.l.b16 %v1769
        %v5137 = vunpack.c.h.b16 %v1769
        %v5138 = vunpack.c.l.b16 %v1770
        %v5139 = vunpack.c.h.b16 %v1770
        %v5140 = vunpack.c.l.b16 %v1771
        %v5141 = vunpack.c.h.b16 %v1771
        %v5142 = vunpack.c.l.b16 %v1772
        %v5143 = vunpack.c.h.b16 %v1772
        %v5144 = vunpack.c.l.b16 %v1773
        %v5145 = vunpack.c.h.b16 %v1773
        %v5146 = vunpack.c.l.b16 %v1774
        %v5147 = vunpack.c.h.b16 %v1774
        %v5148 = vunpack.c.l.b16 %v1775
        %v5149 = vunpack.c.h.b16 %v1775
        %v5150 = vunpack.c.l.b16 %v1776
        %v5151 = vunpack.c.h.b16 %v1776
        %v5152 = vunpack.c.l.b16 %v1777
        %v5153 = vunpack.c.h.b16 %v1777
        %v5154 = vunpack.c.l.b16 %v1778
        %v5155 = vunpack.c.h.b16 %v1778
        %v5156 = vunpack.c.l.b16 %v1779
        %v5157 = vunpack.c.h.b16 %v1779
        %v5158 = vunpack.c.l.b16 %v1780
        %v5159 = vunpack.c.h.b16 %v1780
        %v5160 = vunpack.c.l.b16 %v1781
        %v5161 = vunpack.c.h.b16 %v1781
        %v5162 = vunpack.c.l.b16 %v1782
        %v5163 = vunpack.c.h.b16 %v1782
        %v5164 = vunpack.c.l.b16 %v1783
        %v5165 = vunpack.c.h.b16 %v1783
        %v5166 = vunpack.c.l.b16 %v1784
        %v5167 = vunpack.c.h.b16 %v1784
        %v5168 = vunpack.c.l.b16 %v1785
        %v5169 = vunpack.c.h.b16 %v1785
        %v5170 = vunpack.c.l.b16 %v1786
        %v5171 = vunpack.c.h.b16 %v1786
        %v5172 = vunpack.c.l.b16 %v1787
        %v5173 = vunpack.c.h.b16 %v1787
        %v5174 = vunpack.c.l.b16 %v1788
        %v5175 = vunpack.c.h.b16 %v1788
        %v5176 = vunpack.c.l.b16 %v1789
        %v5177 = vunpack.c.h.b16 %v1789
        %v5178 = vunpack.c.l.b16 %v1790
        %v5179 = vunpack.c.h.b16 %v1790
        %v5180 = vunpack.c.l.b16 %v1791
        %v5181 = vunpack.c.h.b16 %v1791
        %v5182 = vunpack.c.l.b16 %v1792
        %v5183 = vunpack.c.h.b16 %v1792
        %v5184 = vunpack.c.l.b16 %v1793
        %v5185 = vunpack.c.h.b16 %v1793
        %v5186 = vunpack.c.l.b16 %v1794
        %v5187 = vunpack.c.h.b16 %v1794
        %v5188 = vunpack.c.l.b16 %v1795
        %v5189 = vunpack.c.h.b16 %v1795
        %v5190 = vunpack.c.l.b16 %v1796
        %v5191 = vunpack.c.h.b16 %v1796
        %v5192 = vunpack.c.l.b16 %v1797
        %v5193 = vunpack.c.h.b16 %v1797
        %v5194 = vunpack.c.l.b16 %v1798
        %v5195 = vunpack.c.h.b16 %v1798
        %v5196 = vunpack.c.l.b16 %v1799
        %v5197 = vunpack.c.h.b16 %v1799
        %v5198 = vunpack.c.l.b16 %v1800
        %v5199 = vunpack.c.h.b16 %v1800
        %v5200 = vunpack.c.l.b16 %v1801
        %v5201 = vunpack.c.h.b16 %v1801
        %v5202 = vunpack.c.l.b16 %v1802
        %v5203 = vunpack.c.h.b16 %v1802
        %v5204 = vunpack.c.l.b16 %v1803
        %v5205 = vunpack.c.h.b16 %v1803
        %v5206 = vunpack.c.l.b16 %v1804
        %v5207 = vunpack.c.h.b16 %v1804
        %v5208 = vunpack.c.l.b16 %v1805
        %v5209 = vunpack.c.h.b16 %v1805
        %v5210 = vunpack.c.l.b16 %v1806
        %v5211 = vunpack.c.h.b16 %v1806
        %v5212 = vunpack.c.l.b16 %v1807
        %v5213 = vunpack.c.h.b16 %v1807
        %v5214 = vunpack.c.l.b16 %v1808
        %v5215 = vunpack.c.h.b16 %v1808
        %v5216 = vunpack.c.l.b16 %v1809
        %v5217 = vunpack.c.h.b16 %v1809
        %v5218 = vunpack.c.l.b16 %v1810
        %v5219 = vunpack.c.h.b16 %v1810
        %v5220 = vunpack.c.l.b16 %v1811
        %v5221 = vunpack.c.h.b16 %v1811
        %v5222 = vunpack.c.l.b16 %v1812
        %v5223 = vunpack.c.h.b16 %v1812
        %v5224 = vunpack.c.l.b16 %v1813
        %v5225 = vunpack.c.h.b16 %v1813
        %v5226 = vunpack.c.l.b16 %v1814
        %v5227 = vunpack.c.h.b16 %v1814
        %v5228 = vunpack.c.l.b16 %v1815
        %v5229 = vunpack.c.h.b16 %v1815
        %v5230 = vunpack.c.l.b16 %v1816
        %v5231 = vunpack.c.h.b16 %v1816
        %v5232 = vunpack.c.l.b16 %v1817
        %v5233 = vunpack.c.h.b16 %v1817
        %v5234 = vunpack.c.l.b16 %v1818
        %v5235 = vunpack.c.h.b16 %v1818
        %v5236 = vunpack.c.l.b16 %v1819
        %v5237 = vunpack.c.h.b16 %v1819
        %v5238 = vunpack.c.l.b16 %v1820
        %v5239 = vunpack.c.h.b16 %v1820
        %v5240 = vunpack.c.l.b16 %v1821
        %v5241 = vunpack.c.h.b16 %v1821
        %v5242 = vunpack.c.l.b16 %v1822
        %v5243 = vunpack.c.h.b16 %v1822
        %v5244 = vunpack.c.l.b16 %v1823
        %v5245 = vunpack.c.h.b16 %v1823
        %v5246 = vunpack.c.l.b16 %v1824
        %v5247 = vunpack.c.h.b16 %v1824
        %v5248 = vunpack.c.l.b16 %v1825
        %v5249 = vunpack.c.h.b16 %v1825
        %v5250 = vunpack.c.l.b16 %v1826
        %v5251 = vunpack.c.h.b16 %v1826
        %v5252 = vunpack.c.l.b16 %v1827
        %v5253 = vunpack.c.h.b16 %v1827
        %v5254 = vunpack.c.l.b16 %v1828
        %v5255 = vunpack.c.h.b16 %v1828
        %v5256 = vunpack.c.l.b16 %v1829
        %v5257 = vunpack.c.h.b16 %v1829
        %v5258 = vunpack.c.l.b16 %v1830
        %v5259 = vunpack.c.h.b16 %v1830
        %v5260 = vunpack.c.l.b16 %v1831
        %v5261 = vunpack.c.h.b16 %v1831
        %v5262 = vunpack.c.l.b16 %v1832
        %v5263 = vunpack.c.h.b16 %v1832
        %v5264 = vunpack.c.l.b16 %v1833
        %v5265 = vunpack.c.h.b16 %v1833
        %v5266 = vunpack.c.l.b16 %v1834
        %v5267 = vunpack.c.h.b16 %v1834
        %v5268 = vunpack.c.l.b16 %v1835
        %v5269 = vunpack.c.h.b16 %v1835
        %v5270 = vunpack.c.l.b16 %v1836
        %v5271 = vunpack.c.h.b16 %v1836
        %v5272 = vunpack.c.l.b16 %v1837
        %v5273 = vunpack.c.h.b16 %v1837
        %v5274 = vunpack.c.l.b16 %v1838
        %v5275 = vunpack.c.h.b16 %v1838
        %v5276 = vunpack.c.l.b16 %v1839
        %v5277 = vunpack.c.h.b16 %v1839
        %v5278 = vunpack.c.l.b16 %v1840
        %v5279 = vunpack.c.h.b16 %v1840
        %v5280 = vunpack.c.l.b16 %v1841
        %v5281 = vunpack.c.h.b16 %v1841
        %v5282 = vunpack.c.l.b16 %v1842
        %v5283 = vunpack.c.h.b16 %v1842
        %v5284 = vunpack.c.l.b16 %v1843
        %v5285 = vunpack.c.h.b16 %v1843
        %v5286 = vunpack.c.l.b16 %v1844
        %v5287 = vunpack.c.h.b16 %v1844
        %v5288 = vunpack.c.l.b16 %v1845
        %v5289 = vunpack.c.h.b16 %v1845
        %v5290 = vunpack.c.l.b16 %v1846
        %v5291 = vunpack.c.h.b16 %v1846
        %v5292 = vunpack.c.l.b16 %v1847
        %v5293 = vunpack.c.h.b16 %v1847
        %v5294 = vunpack.c.l.b16 %v1848
        %v5295 = vunpack.c.h.b16 %v1848
        %v5296 = vunpack.c.l.b16 %v1849
        %v5297 = vunpack.c.h.b16 %v1849
        %v5298 = vunpack.c.l.b16 %v1850
        %v5299 = vunpack.c.h.b16 %v1850
        %v5300 = vunpack.c.l.b16 %v1851
        %v5301 = vunpack.c.h.b16 %v1851
        %v5302 = vunpack.c.l.b16 %v1852
        %v5303 = vunpack.c.h.b16 %v1852
        %v5304 = vunpack.c.l.b16 %v1853
        %v5305 = vunpack.c.h.b16 %v1853
        %v5306 = vunpack.c.l.b16 %v1854
        %v5307 = vunpack.c.h.b16 %v1854
        %v5308 = vunpack.c.l.b16 %v1855
        %v5309 = vunpack.c.h.b16 %v1855
        %v5310 = vunpack.c.l.b16 %v1856
        %v5311 = vunpack.c.h.b16 %v1856
        %v5312 = vunpack.c.l.b16 %v1857
        %v5313 = vunpack.c.h.b16 %v1857
        %v5314 = vunpack.c.l.b16 %v1858
        %v5315 = vunpack.c.h.b16 %v1858
        %v5316 = vunpack.c.l.b16 %v1859
        %v5317 = vunpack.c.h.b16 %v1859
        %v5318 = vunpack.c.l.b16 %v1860
        %v5319 = vunpack.c.h.b16 %v1860
        %v5320 = vunpack.c.l.b16 %v1861
        %v5321 = vunpack.c.h.b16 %v1861
        %v5322 = vunpack.c.l.b16 %v1862
        %v5323 = vunpack.c.h.b16 %v1862
        %v5324 = vunpack.c.l.b16 %v1863
        %v5325 = vunpack.c.h.b16 %v1863
        %v5326 = vunpack.c.l.b16 %v1864
        %v5327 = vunpack.c.h.b16 %v1864
        %v5328 = vunpack.c.l.b16 %v1865
        %v5329 = vunpack.c.h.b16 %v1865
        %v5330 = vunpack.c.l.b16 %v1866
        %v5331 = vunpack.c.h.b16 %v1866
        %v5332 = vunpack.c.l.b16 %v1867
        %v5333 = vunpack.c.h.b16 %v1867
        %v5334 = vunpack.c.l.b16 %v1868
        %v5335 = vunpack.c.h.b16 %v1868
        %v5336 = vunpack.c.l.b16 %v1869
        %v5337 = vunpack.c.h.b16 %v1869
        %v5338 = vpack.c.b16 %v3036, %v3034
        %v5339 = vpack.c.b16 %v3037, %v3035
        %v5340 = vpack.c.b16 %v3040, %v3038
        %v5341 = vpack.c.b16 %v3041, %v3039
        %v5342 = vpack.c.b16 %v3044, %v3042
        %v5343 = vpack.c.b16 %v3045, %v3043
        %v5344 = vpack.c.b16 %v3048, %v3046
        %v5345 = vpack.c.b16 %v3049, %v3047
        %v5346 = vpack.c.b16 %v3052, %v3050
        %v5347 = vpack.c.b16 %v3053, %v3051
        %v5348 = vpack.c.b16 %v3056, %v3054
        %v5349 = vpack.c.b16 %v3057, %v3055
        %v5350 = vpack.c.b16 %v3060, %v3058
        %v5351 = vpack.c.b16 %v3061, %v3059
        %v5352 = vpack.c.b16 %v3064, %v3062
        %v5353 = vpack.c.b16 %v3065, %v3063
        %v5354 = vpack.c.b16 %v3068, %v3066
        %v5355 = vpack.c.b16 %v3069, %v3067
        %v5356 = vpack.c.b16 %v3072, %v3070
        %v5357 = vpack.c.b16 %v3073, %v3071
        %v5358 = vpack.c.b16 %v3076, %v3074
        %v5359 = vpack.c.b16 %v3077, %v3075
        %v5360 = vpack.c.b16 %v3080, %v3078
        %v5361 = vpack.c.b16 %v3081, %v3079
        %v5362 = vpack.c.b16 %v3084, %v3082
        %v5363 = vpack.c.b16 %v3085, %v3083
        %v5364 = vpack.c.b16 %v3088, %v3086
        %v5365 = vpack.c.b16 %v3089, %v3087
        %v5366 = vpack.c.b16 %v3092, %v3090
        %v5367 = vpack.c.b16 %v3093, %v3091
        %v5368 = vpack.c.b16 %v3096, %v3094
        %v5369 = vpack.c.b16 %v3097, %v3095
        %v5370 = vpack.c.b16 %v3100, %v3098
        %v5371 = vpack.c.b16 %v3101, %v3099
        %v5372 = vpack.c.b16 %v3104, %v3102
        %v5373 = vpack.c.b16 %v3105, %v3103
        %v5374 = vpack.c.b16 %v3108, %v3106
        %v5375 = vpack.c.b16 %v3109, %v3107
        %v5376 = vpack.c.b16 %v3112, %v3110
        %v5377 = vpack.c.b16 %v3113, %v3111
        %v5378 = vpack.c.b16 %v3116, %v3114
        %v5379 = vpack.c.b16 %v3117, %v3115
        %v5380 = vpack.c.b16 %v3120, %v3118
        %v5381 = vpack.c.b16 %v3121, %v3119
        %v5382 = vpack.c.b16 %v3124, %v3122
        %v5383 = vpack.c.b16 %v3125, %v3123
        %v5384 = vpack.c.b16 %v3128, %v3126
        %v5385 = vpack.c.b16 %v3129, %v3127
        %v5386 = vpack.c.b16 %v3132, %v3130
        %v5387 = vpack.c.b16 %v3133, %v3131
        %v5388 = vpack.c.b16 %v3136, %v3134
        %v5389 = vpack.c.b16 %v3137, %v3135
        %v5390 = vpack.c.b16 %v3140, %v3138
        %v5391 = vpack.c.b16 %v3141, %v3139
        %v5392 = vpack.c.b16 %v3144, %v3142
        %v5393 = vpack.c.b16 %v3145, %v3143
        %v5394 = vpack.c.b16 %v3148, %v3146
        %v5395 = vpack.c.b16 %v3149, %v3147
        %v5396 = vpack.c.b16 %v3152, %v3150
        %v5397 = vpack.c.b16 %v3153, %v3151
        %v5398 = vpack.c.b16 %v3156, %v3154
        %v5399 = vpack.c.b16 %v3157, %v3155
        %v5400 = vpack.c.b16 %v3160, %v3158
        %v5401 = vpack.c.b16 %v3161, %v3159
        %v5402 = vpack.c.b16 %v3164, %v3162
        %v5403 = vpack.c.b16 %v3165, %v3163
        %v5404 = vpack.c.b16 %v3168, %v3166
        %v5405 = vpack.c.b16 %v3169, %v3167
        %v5406 = vpack.c.b16 %v3172, %v3170
        %v5407 = vpack.c.b16 %v3173, %v3171
        %v5408 = vpack.c.b16 %v3176, %v3174
        %v5409 = vpack.c.b16 %v3177, %v3175
        %v5410 = vpack.c.b16 %v3180, %v3178
        %v5411 = vpack.c.b16 %v3181, %v3179
        %v5412 = vpack.c.b16 %v3184, %v3182
        %v5413 = vpack.c.b16 %v3185, %v3183
        %v5414 = vpack.c.b16 %v3188, %v3186
        %v5415 = vpack.c.b16 %v3189, %v3187
        %v5416 = vpack.c.b16 %v3192, %v3190
        %v5417 = vpack.c.b16 %v3193, %v3191
        %v5418 = vpack.c.b16 %v3196, %v3194
        %v5419 = vpack.c.b16 %v3197, %v3195
        %v5420 = vpack.c.b16 %v3200, %v3198
        %v5421 = vpack.c.b16 %v3201, %v3199
        %v5422 = vpack.c.b16 %v3204, %v3202
        %v5423 = vpack.c.b16 %v3205, %v3203
        %v5424 = vpack.c.b16 %v3208, %v3206
        %v5425 = vpack.c.b16 %v3209, %v3207
        %v5426 = vpack.c.b16 %v3212, %v3210
        %v5427 = vpack.c.b16 %v3213, %v3211
        %v5428 = vpack.c.b16 %v3216, %v3214
        %v5429 = vpack.c.b16 %v3217, %v3215
        %v5430 = vpack.c.b16 %v3220, %v3218
        %v5431 = vpack.c.b16 %v3221, %v3219
        %v5432 = vpack.c.b16 %v3224, %v3222
        %v5433 = vpack.c.b16 %v3225, %v3223
        %v5434 = vpack.c.b16 %v3228, %v3226
        %v5435 = vpack.c.b16 %v3229, %v3227
        %v5436 = vpack.c.b16 %v3232, %v3230
        %v5437 = vpack.c.b16 %v3233, %v3231
        %v5438 = vpack.c.b16 %v3236, %v3234
        %v5439 = vpack.c.b16 %v3237, %v3235
        %v5440 = vpack.c.b16 %v3240, %v3238
        %v5441 = vpack.c.b16 %v3241, %v3239
        %v5442 = vpack.c.b16 %v3244, %v3242
        %v5443 = vpack.c.b16 %v3245, %v3243
        %v5444 = vpack.c.b16 %v3248, %v3246
        %v5445 = vpack.c.b16 %v3249, %v3247
        %v5446 = vpack.c.b16 %v3252, %v3250
        %v5447 = vpack.c.b16 %v3253, %v3251
        %v5448 = vpack.c.b16 %v3256, %v3254
        %v5449 = vpack.c.b16 %v3257, %v3255
        %v5450 = vpack.c.b16 %v3260, %v3258
        %v5451 = vpack.c.b16 %v3261, %v3259
        %v5452 = vpack.c.b16 %v3264, %v3262
        %v5453 = vpack.c.b16 %v3265, %v3263
        %v5454 = vpack.c.b16 %v3268, %v3266
        %v5455 = vpack.c.b16 %v3269, %v3267
        %v5456 = vpack.c.b16 %v3272, %v3270
        %v5457 = vpack.c.b16 %v3273, %v3271
        %v5458 = vpack.c.b16 %v3276, %v3274
        %v5459 = vpack.c.b16 %v3277, %v3275
        %v5460 = vpack.c.b16 %v3280, %v3278
        %v5461 = vpack.c.b16 %v3281, %v3279
        %v5462 = vpack.c.b16 %v3284, %v3282
        %v5463 = vpack.c.b16 %v3285, %v3283
        %v5464 = vpack.c.b16 %v3288, %v3286
        %v5465 = vpack.c.b16 %v3289, %v3287
        %v5466 = vpack.c.b16 %v3292, %v3290
        %v5467 = vpack.c.b16 %v3293, %v3291
        %v5468 = vpack.c.b16 %v3296, %v3294
        %v5469 = vpack.c.b16 %v3297, %v3295
        %v5470 = vpack.c.b16 %v3300, %v3298
        %v5471 = vpack.c.b16 %v3301, %v3299
        %v5472 = vpack.c.b16 %v3304, %v3302
        %v5473 = vpack.c.b16 %v3305, %v3303
        %v5474 = vpack.c.b16 %v3308, %v3306
        %v5475 = vpack.c.b16 %v3309, %v3307
        %v5476 = vpack.c.b16 %v3312, %v3310
        %v5477 = vpack.c.b16 %v3313, %v3311
        %v5478 = vpack.c.b16 %v3316, %v3314
        %v5479 = vpack.c.b16 %v3317, %v3315
        %v5480 = vpack.c.b16 %v3320, %v3318
        %v5481 = vpack.c.b16 %v3321, %v3319
        %v5482 = vpack.c.b16 %v3324, %v3322
        %v5483 = vpack.c.b16 %v3325, %v3323
        %v5484 = vpack.c.b16 %v3328, %v3326
        %v5485 = vpack.c.b16 %v3329, %v3327
        %v5486 = vpack.c.b16 %v3332, %v3330
        %v5487 = vpack.c.b16 %v3333, %v3331
        %v5488 = vpack.c.b16 %v3336, %v3334
        %v5489 = vpack.c.b16 %v3337, %v3335
        %v5490 = vpack.c.b16 %v3340, %v3338
        %v5491 = vpack.c.b16 %v3341, %v3339
        %v5492 = vpack.c.b16 %v3344, %v3342
        %v5493 = vpack.c.b16 %v3345, %v3343
        %v5494 = vpack.c.b16 %v3348, %v3346
        %v5495 = vpack.c.b16 %v3349, %v3347
        %v5496 = vpack.c.b16 %v3352, %v3350
        %v5497 = vpack.c.b16 %v3353, %v3351
        %v5498 = vpack.c.b16 %v3356, %v3354
        %v5499 = vpack.c.b16 %v3357, %v3355
        %v5500 = vpack.c.b16 %v3360, %v3358
        %v5501 = vpack.c.b16 %v3361, %v3359
        %v5502 = vpack.c.b16 %v3364, %v3362
        %v5503 = vpack.c.b16 %v3365, %v3363
        %v5504 = vpack.c.b16 %v3368, %v3366
        %v5505 = vpack.c.b16 %v3369, %v3367
        %v5506 = vpack.c.b16 %v3372, %v3370
        %v5507 = vpack.c.b16 %v3373, %v3371
        %v5508 = vpack.c.b16 %v3376, %v3374
        %v5509 = vpack.c.b16 %v3377, %v3375
        %v5510 = vpack.c.b16 %v3380, %v3378
        %v5511 = vpack.c.b16 %v3381, %v3379
        %v5512 = vpack.c.b16 %v3384, %v3382
        %v5513 = vpack.c.b16 %v3385, %v3383
        %v5514 = vpack.c.b16 %v3388, %v3386
        %v5515 = vpack.c.b16 %v3389, %v3387
        %v5516 = vpack.c.b16 %v3392, %v3390
        %v5517 = vpack.c.b16 %v3393, %v3391
        %v5518 = vpack.c.b16 %v3396, %v3394
        %v5519 = vpack.c.b16 %v3397, %v3395
        %v5520 = vpack.c.b16 %v3400, %v3398
        %v5521 = vpack.c.b16 %v3401, %v3399
        %v5522 = vpack.c.b16 %v3404, %v3402
        %v5523 = vpack.c.b16 %v3405, %v3403
        %v5524 = vpack.c.b16 %v3408, %v3406
        %v5525 = vpack.c.b16 %v3409, %v3407
        %v5526 = vpack.c.b16 %v3412, %v3410
        %v5527 = vpack.c.b16 %v3413, %v3411
        %v5528 = vpack.c.b16 %v3416, %v3414
        %v5529 = vpack.c.b16 %v3417, %v3415
        %v5530 = vpack.c.b16 %v3420, %v3418
        %v5531 = vpack.c.b16 %v3421, %v3419
        %v5532 = vpack.c.b16 %v3424, %v3422
        %v5533 = vpack.c.b16 %v3425, %v3423
        %v5534 = vpack.c.b16 %v3428, %v3426
        %v5535 = vpack.c.b16 %v3429, %v3427
        %v5536 = vpack.c.b16 %v3432, %v3430
        %v5537 = vpack.c.b16 %v3433, %v3431
        %v5538 = vpack.c.b16 %v3436, %v3434
        %v5539 = vpack.c.b16 %v3437, %v3435
        %v5540 = vpack.c.b16 %v3440, %v3438
        %v5541 = vpack.c.b16 %v3441, %v3439
        %v5542 = vpack.c.b16 %v3444, %v3442
        %v5543 = vpack.c.b16 %v3445, %v3443
        %v5544 = vpack.c.b16 %v3448, %v3446
        %v5545 = vpack.c.b16 %v3449, %v3447
        %v5546 = vpack.c.b16 %v3452, %v3450
        %v5547 = vpack.c.b16 %v3453, %v3451
        %v5548 = vpack.c.b16 %v3456, %v3454
        %v5549 = vpack.c.b16 %v3457, %v3455
        %v5550 = vpack.c.b16 %v3460, %v3458
        %v5551 = vpack.c.b16 %v3461, %v3459
        %v5552 = vpack.c.b16 %v3464, %v3462
        %v5553 = vpack.c.b16 %v3465, %v3463
        %v5554 = vpack.c.b16 %v3468, %v3466
        %v5555 = vpack.c.b16 %v3469, %v3467
        %v5556 = vpack.c.b16 %v3472, %v3470
        %v5557 = vpack.c.b16 %v3473, %v3471
        %v5558 = vpack.c.b16 %v3476, %v3474
        %v5559 = vpack.c.b16 %v3477, %v3475
        %v5560 = vpack.c.b16 %v3480, %v3478
        %v5561 = vpack.c.b16 %v3481, %v3479
        %v5562 = vpack.c.b16 %v3484, %v3482
        %v5563 = vpack.c.b16 %v3485, %v3483
        %v5564 = vpack.c.b16 %v3488, %v3486
        %v5565 = vpack.c.b16 %v3489, %v3487
        %v5566 = vpack.c.b16 %v3492, %v3490
        %v5567 = vpack.c.b16 %v3493, %v3491
        %v5568 = vpack.c.b16 %v3496, %v3494
        %v5569 = vpack.c.b16 %v3497, %v3495
        %v5570 = vpack.c.b16 %v3500, %v3498
        %v5571 = vpack.c.b16 %v3501, %v3499
        %v5572 = vpack.c.b16 %v3504, %v3502
        %v5573 = vpack.c.b16 %v3505, %v3503
        %v5574 = vpack.c.b16 %v3508, %v3506
        %v5575 = vpack.c.b16 %v3509, %v3507
        %v5576 = vpack.c.b16 %v3512, %v3510
        %v5577 = vpack.c.b16 %v3513, %v3511
        %v5578 = vpack.c.b16 %v3516, %v3514
        %v5579 = vpack.c.b16 %v3517, %v3515
        %v5580 = vpack.c.b16 %v3520, %v3518
        %v5581 = vpack.c.b16 %v3521, %v3519
        %v5582 = vpack.c.b16 %v3524, %v3522
        %v5583 = vpack.c.b16 %v3525, %v3523
        %v5584 = vpack.c.b16 %v3528, %v3526
        %v5585 = vpack.c.b16 %v3529, %v3527
        %v5586 = vpack.c.b16 %v3532, %v3530
        %v5587 = vpack.c.b16 %v3533, %v3531
        %v5588 = vpack.c.b16 %v3536, %v3534
        %v5589 = vpack.c.b16 %v3537, %v3535
        %v5590 = vpack.c.b16 %v3540, %v3538
        %v5591 = vpack.c.b16 %v3541, %v3539
        %v5592 = vpack.c.b16 %v3544, %v3542
        %v5593 = vpack.c.b16 %v3545, %v3543
        %v5594 = vpack.c.b16 %v3548, %v3546
        %v5595 = vpack.c.b16 %v3549, %v3547
        %v5596 = vpack.c.b16 %v3552, %v3550
        %v5597 = vpack.c.b16 %v3553, %v3551
        %v5598 = vpack.c.b16 %v3556, %v3554
        %v5599 = vpack.c.b16 %v3557, %v3555
        %v5600 = vpack.c.b16 %v3560, %v3558
        %v5601 = vpack.c.b16 %v3561, %v3559
        %v5602 = vpack.c.b16 %v3564, %v3562
        %v5603 = vpack.c.b16 %v3565, %v3563
        %v5604 = vpack.c.b16 %v3568, %v3566
        %v5605 = vpack.c.b16 %v3569, %v3567
        %v5606 = vpack.c.b16 %v3572, %v3570
        %v5607 = vpack.c.b16 %v3573, %v3571
        %v5608 = vpack.c.b16 %v3576, %v3574
        %v5609 = vpack.c.b16 %v3577, %v3575
        %v5610 = vpack.c.b16 %v3580, %v3578
        %v5611 = vpack.c.b16 %v3581, %v3579
        %v5612 = vpack.c.b16 %v3584, %v3582
        %v5613 = vpack.c.b16 %v3585, %v3583
        %v5614 = vpack.c.b16 %v3588, %v3586
        %v5615 = vpack.c.b16 %v3589, %v3587
        %v5616 = vpack.c.b16 %v3592, %v3590
        %v5617 = vpack.c.b16 %v3593, %v3591
        %v5618 = vpack.c.b16 %v3596, %v3594
        %v5619 = vpack.c.b16 %v3597, %v3595
        %v5620 = vpack.c.b16 %v3600, %v3598
        %v5621 = vpack.c.b16 %v3601, %v3599
        %v5622 = vpack.c.b16 %v3604, %v3602
        %v5623 = vpack.c.b16 %v3605, %v3603
        %v5624 = vpack.c.b16 %v3608, %v3606
        %v5625 = vpack.c.b16 %v3609, %v3607
        %v5626 = vpack.c.b16 %v3612, %v3610
        %v5627 = vpack.c.b16 %v3613, %v3611
        %v5628 = vpack.c.b16 %v3616, %v3614
        %v5629 = vpack.c.b16 %v3617, %v3615
        %v5630 = vpack.c.b16 %v3620, %v3618
        %v5631 = vpack.c.b16 %v3621, %v3619
        %v5632 = vpack.c.b16 %v3624, %v3622
        %v5633 = vpack.c.b16 %v3625, %v3623
        %v5634 = vpack.c.b16 %v3628, %v3626
        %v5635 = vpack.c.b16 %v3629, %v3627
        %v5636 = vpack.c.b16 %v3632, %v3630
        %v5637 = vpack.c.b16 %v3633, %v3631
        %v5638 = vpack.c.b16 %v3636, %v3634
        %v5639 = vpack.c.b16 %v3637, %v3635
        %v5640 = vpack.c.b16 %v3640, %v3638
        %v5641 = vpack.c.b16 %v3641, %v3639
        %v5642 = vpack.c.b16 %v3644, %v3642
        %v5643 = vpack.c.b16 %v3645, %v3643
        %v5644 = vpack.c.b16 %v3648, %v3646
        %v5645 = vpack.c.b16 %v3649, %v3647
        %v5646 = vpack.c.b16 %v3652, %v3650
        %v5647 = vpack.c.b16 %v3653, %v3651
        %v5648 = vpack.c.b16 %v3656, %v3654
        %v5649 = vpack.c.b16 %v3657, %v3655
        %v5650 = vpack.c.b16 %v3660, %v3658
        %v5651 = vpack.c.b16 %v3661, %v3659
        %v5652 = vpack.c.b16 %v3664, %v3662
        %v5653 = vpack.c.b16 %v3665, %v3663
        %v5654 = vpack.c.b16 %v3668, %v3666
        %v5655 = vpack.c.b16 %v3669, %v3667
        %v5656 = vpack.c.b16 %v3672, %v3670
        %v5657 = vpack.c.b16 %v3673, %v3671
        %v5658 = vpack.c.b16 %v3676, %v3674
        %v5659 = vpack.c.b16 %v3677, %v3675
        %v5660 = vpack.c.b16 %v3680, %v3678
        %v5661 = vpack.c.b16 %v3681, %v3679
        %v5662 = vpack.c.b16 %v3684, %v3682
        %v5663 = vpack.c.b16 %v3685, %v3683
        %v5664 = vpack.c.b16 %v3688, %v3686
        %v5665 = vpack.c.b16 %v3689, %v3687
        %v5666 = vpack.c.b16 %v3692, %v3690
        %v5667 = vpack.c.b16 %v3693, %v3691
        %v5668 = vpack.c.b16 %v3696, %v3694
        %v5669 = vpack.c.b16 %v3697, %v3695
        %v5670 = vpack.c.b16 %v3700, %v3698
        %v5671 = vpack.c.b16 %v3701, %v3699
        %v5672 = vpack.c.b16 %v3704, %v3702
        %v5673 = vpack.c.b16 %v3705, %v3703
        %v5674 = vpack.c.b16 %v3708, %v3706
        %v5675 = vpack.c.b16 %v3709, %v3707
        %v5676 = vpack.c.b16 %v3712, %v3710
        %v5677 = vpack.c.b16 %v3713, %v3711
        %v5678 = vpack.c.b16 %v3716, %v3714
        %v5679 = vpack.c.b16 %v3717, %v3715
        %v5680 = vpack.c.b16 %v3720, %v3718
        %v5681 = vpack.c.b16 %v3721, %v3719
        %v5682 = vpack.c.b16 %v3724, %v3722
        %v5683 = vpack.c.b16 %v3725, %v3723
        %v5684 = vpack.c.b16 %v3728, %v3726
        %v5685 = vpack.c.b16 %v3729, %v3727
        %v5686 = vpack.c.b16 %v3732, %v3730
        %v5687 = vpack.c.b16 %v3733, %v3731
        %v5688 = vpack.c.b16 %v3736, %v3734
        %v5689 = vpack.c.b16 %v3737, %v3735
        %v5690 = vpack.c.b16 %v3740, %v3738
        %v5691 = vpack.c.b16 %v3741, %v3739
        %v5692 = vpack.c.b16 %v3744, %v3742
        %v5693 = vpack.c.b16 %v3745, %v3743
        %v5694 = vpack.c.b16 %v3748, %v3746
        %v5695 = vpack.c.b16 %v3749, %v3747
        %v5696 = vpack.c.b16 %v3752, %v3750
        %v5697 = vpack.c.b16 %v3753, %v3751
        %v5698 = vpack.c.b16 %v3756, %v3754
        %v5699 = vpack.c.b16 %v3757, %v3755
        %v5700 = vpack.c.b16 %v3760, %v3758
        %v5701 = vpack.c.b16 %v3761, %v3759
        %v5702 = vpack.c.b16 %v3764, %v3762
        %v5703 = vpack.c.b16 %v3765, %v3763
        %v5704 = vpack.c.b16 %v3768, %v3766
        %v5705 = vpack.c.b16 %v3769, %v3767
        %v5706 = vpack.c.b16 %v3772, %v3770
        %v5707 = vpack.c.b16 %v3773, %v3771
        %v5708 = vpack.c.b16 %v3776, %v3774
        %v5709 = vpack.c.b16 %v3777, %v3775
        %v5710 = vpack.c.b16 %v3780, %v3778
        %v5711 = vpack.c.b16 %v3781, %v3779
        %v5712 = vpack.c.b16 %v3784, %v3782
        %v5713 = vpack.c.b16 %v3785, %v3783
        %v5714 = vpack.c.b16 %v3788, %v3786
        %v5715 = vpack.c.b16 %v3789, %v3787
        %v5716 = vpack.c.b16 %v3792, %v3790
        %v5717 = vpack.c.b16 %v3793, %v3791
        %v5718 = vpack.c.b16 %v3796, %v3794
        %v5719 = vpack.c.b16 %v3797, %v3795
        %v5720 = vpack.c.b16 %v3800, %v3798
        %v5721 = vpack.c.b16 %v3801, %v3799
        %v5722 = vpack.c.b16 %v3804, %v3802
        %v5723 = vpack.c.b16 %v3805, %v3803
        %v5724 = vpack.c.b16 %v3808, %v3806
        %v5725 = vpack.c.b16 %v3809, %v3807
        %v5726 = vpack.c.b16 %v3812, %v3810
        %v5727 = vpack.c.b16 %v3813, %v3811
        %v5728 = vpack.c.b16 %v3816, %v3814
        %v5729 = vpack.c.b16 %v3817, %v3815
        %v5730 = vpack.c.b16 %v3820, %v3818
        %v5731 = vpack.c.b16 %v3821, %v3819
        %v5732 = vpack.c.b16 %v3824, %v3822
        %v5733 = vpack.c.b16 %v3825, %v3823
        %v5734 = vpack.c.b16 %v3828, %v3826
        %v5735 = vpack.c.b16 %v3829, %v3827
        %v5736 = vpack.c.b16 %v3832, %v3830
        %v5737 = vpack.c.b16 %v3833, %v3831
        %v5738 = vpack.c.b16 %v3836, %v3834
        %v5739 = vpack.c.b16 %v3837, %v3835
        %v5740 = vpack.c.b16 %v3840, %v3838
        %v5741 = vpack.c.b16 %v3841, %v3839
        %v5742 = vpack.c.b16 %v3844, %v3842
        %v5743 = vpack.c.b16 %v3845, %v3843
        %v5744 = vpack.c.b16 %v3848, %v3846
        %v5745 = vpack.c.b16 %v3849, %v3847
        %v5746 = vpack.c.b16 %v3852, %v3850
        %v5747 = vpack.c.b16 %v3853, %v3851
        %v5748 = vpack.c.b16 %v3856, %v3854
        %v5749 = vpack.c.b16 %v3857, %v3855
        %v5750 = vpack.c.b16 %v3860, %v3858
        %v5751 = vpack.c.b16 %v3861, %v3859
        %v5752 = vpack.c.b16 %v3864, %v3862
        %v5753 = vpack.c.b16 %v3865, %v3863
        %v5754 = vpack.c.b16 %v3868, %v3866
        %v5755 = vpack.c.b16 %v3869, %v3867
        %v5756 = vpack.c.b16 %v3872, %v3870
        %v5757 = vpack.c.b16 %v3873, %v3871
        %v5758 = vpack.c.b16 %v3876, %v3874
        %v5759 = vpack.c.b16 %v3877, %v3875
        %v5760 = vpack.c.b16 %v3880, %v3878
        %v5761 = vpack.c.b16 %v3881, %v3879
        %v5762 = vpack.c.b16 %v3884, %v3882
        %v5763 = vpack.c.b16 %v3885, %v3883
        %v5764 = vpack.c.b16 %v3888, %v3886
        %v5765 = vpack.c.b16 %v3889, %v3887
        %v5766 = vpack.c.b16 %v3892, %v3890
        %v5767 = vpack.c.b16 %v3893, %v3891
        %v5768 = vpack.c.b16 %v3896, %v3894
        %v5769 = vpack.c.b16 %v3897, %v3895
        %v5770 = vpack.c.b16 %v3900, %v3898
        %v5771 = vpack.c.b16 %v3901, %v3899
        %v5772 = vpack.c.b16 %v3904, %v3902
        %v5773 = vpack.c.b16 %v3905, %v3903
        %v5774 = vpack.c.b16 %v3908, %v3906
        %v5775 = vpack.c.b16 %v3909, %v3907
        %v5776 = vpack.c.b16 %v3912, %v3910
        %v5777 = vpack.c.b16 %v3913, %v3911
        %v5778 = vpack.c.b16 %v3916, %v3914
        %v5779 = vpack.c.b16 %v3917, %v3915
        %v5780 = vpack.c.b16 %v3920, %v3918
        %v5781 = vpack.c.b16 %v3921, %v3919
        %v5782 = vpack.c.b16 %v3924, %v3922
        %v5783 = vpack.c.b16 %v3925, %v3923
        %v5784 = vpack.c.b16 %v3928, %v3926
        %v5785 = vpack.c.b16 %v3929, %v3927
        %v5786 = vpack.c.b16 %v3932, %v3930
        %v5787 = vpack.c.b16 %v3933, %v3931
        %v5788 = vpack.c.b16 %v3936, %v3934
        %v5789 = vpack.c.b16 %v3937, %v3935
        %v5790 = vpack.c.b16 %v3940, %v3938
        %v5791 = vpack.c.b16 %v3941, %v3939
        %v5792 = vpack.c.b16 %v3944, %v3942
        %v5793 = vpack.c.b16 %v3945, %v3943
        %v5794 = vpack.c.b16 %v3948, %v3946
        %v5795 = vpack.c.b16 %v3949, %v3947
        %v5796 = vpack.c.b16 %v3952, %v3950
        %v5797 = vpack.c.b16 %v3953, %v3951
        %v5798 = vpack.c.b16 %v3956, %v3954
        %v5799 = vpack.c.b16 %v3957, %v3955
        %v5800 = vpack.c.b16 %v3960, %v3958
        %v5801 = vpack.c.b16 %v3961, %v3959
        %v5802 = vpack.c.b16 %v3964, %v3962
        %v5803 = vpack.c.b16 %v3965, %v3963
        %v5804 = vpack.c.b16 %v3968, %v3966
        %v5805 = vpack.c.b16 %v3969, %v3967
        %v5806 = vpack.c.b16 %v3972, %v3970
        %v5807 = vpack.c.b16 %v3973, %v3971
        %v5808 = vpack.c.b16 %v3976, %v3974
        %v5809 = vpack.c.b16 %v3977, %v3975
        %v5810 = vpack.c.b16 %v3980, %v3978
        %v5811 = vpack.c.b16 %v3981, %v3979
        %v5812 = vpack.c.b16 %v3984, %v3982
        %v5813 = vpack.c.b16 %v3985, %v3983
        %v5814 = vpack.c.b16 %v3988, %v3986
        %v5815 = vpack.c.b16 %v3989, %v3987
        %v5816 = vpack.c.b16 %v3992, %v3990
        %v5817 = vpack.c.b16 %v3993, %v3991
        %v5818 = vpack.c.b16 %v3996, %v3994
        %v5819 = vpack.c.b16 %v3997, %v3995
        %v5820 = vpack.c.b16 %v4000, %v3998
        %v5821 = vpack.c.b16 %v4001, %v3999
        %v5822 = vpack.c.b16 %v4004, %v4002
        %v5823 = vpack.c.b16 %v4005, %v4003
        %v5824 = vpack.c.b16 %v4008, %v4006
        %v5825 = vpack.c.b16 %v4009, %v4007
        %v5826 = vpack.c.b16 %v4012, %v4010
        %v5827 = vpack.c.b16 %v4013, %v4011
        %v5828 = vpack.c.b16 %v4016, %v4014
        %v5829 = vpack.c.b16 %v4017, %v4015
        %v5830 = vpack.c.b16 %v4020, %v4018
        %v5831 = vpack.c.b16 %v4021, %v4019
        %v5832 = vpack.c.b16 %v4024, %v4022
        %v5833 = vpack.c.b16 %v4025, %v4023
        %v5834 = vpack.c.b16 %v4028, %v4026
        %v5835 = vpack.c.b16 %v4029, %v4027
        %v5836 = vpack.c.b16 %v4032, %v4030
        %v5837 = vpack.c.b16 %v4033, %v4031
        %v5838 = vpack.c.b16 %v4036, %v4034
        %v5839 = vpack.c.b16 %v4037, %v4035
        %v5840 = vpack.c.b16 %v4040, %v4038
        %v5841 = vpack.c.b16 %v4041, %v4039
        %v5842 = vpack.c.b16 %v4044, %v4042
        %v5843 = vpack.c.b16 %v4045, %v4043
        %v5844 = vpack.c.b16 %v4048, %v4046
        %v5845 = vpack.c.b16 %v4049, %v4047
        %v5846 = vpack.c.b16 %v4052, %v4050
        %v5847 = vpack.c.b16 %v4053, %v4051
        %v5848 = vpack.c.b16 %v4056, %v4054
        %v5849 = vpack.c.b16 %v4057, %v4055
        %v5850 = vpack.c.b16 %v4060, %v4058
        %v5851 = vpack.c.b16 %v4061, %v4059
        %v5852 = vpack.c.b16 %v4064, %v4062
        %v5853 = vpack.c.b16 %v4065, %v4063
        %v5854 = vpack.c.b16 %v4068, %v4066
        %v5855 = vpack.c.b16 %v4069, %v4067
        %v5856 = vpack.c.b16 %v4072, %v4070
        %v5857 = vpack.c.b16 %v4073, %v4071
        %v5858 = vpack.c.b16 %v4076, %v4074
        %v5859 = vpack.c.b16 %v4077, %v4075
        %v5860 = vpack.c.b16 %v4080, %v4078
        %v5861 = vpack.c.b16 %v4081, %v4079
        %v5862 = vpack.c.b16 %v4084, %v4082
        %v5863 = vpack.c.b16 %v4085, %v4083
        %v5864 = vpack.c.b16 %v4088, %v4086
        %v5865 = vpack.c.b16 %v4089, %v4087
        %v5866 = vpack.c.b16 %v4092, %v4090
        %v5867 = vpack.c.b16 %v4093, %v4091
        %v5868 = vpack.c.b16 %v4096, %v4094
        %v5869 = vpack.c.b16 %v4097, %v4095
        %v5870 = vpack.c.b16 %v4100, %v4098
        %v5871 = vpack.c.b16 %v4101, %v4099
        %v5872 = vpack.c.b16 %v4104, %v4102
        %v5873 = vpack.c.b16 %v4105, %v4103
        %v5874 = vpack.c.b16 %v4108, %v4106
        %v5875 = vpack.c.b16 %v4109, %v4107
        %v5876 = vpack.c.b16 %v4112, %v4110
        %v5877 = vpack.c.b16 %v4113, %v4111
        %v5878 = vpack.c.b16 %v4116, %v4114
        %v5879 = vpack.c.b16 %v4117, %v4115
        %v5880 = vpack.c.b16 %v4120, %v4118
        %v5881 = vpack.c.b16 %v4121, %v4119
        %v5882 = vpack.c.b16 %v4124, %v4122
        %v5883 = vpack.c.b16 %v4125, %v4123
        %v5884 = vpack.c.b16 %v4128, %v4126
        %v5885 = vpack.c.b16 %v4129, %v4127
        %v5886 = vpack.c.b16 %v4132, %v4130
        %v5887 = vpack.c.b16 %v4133, %v4131
        %v5888 = vpack.c.b16 %v4136, %v4134
        %v5889 = vpack.c.b16 %v4137, %v4135
        %v5890 = vpack.c.b16 %v4140, %v4138
        %v5891 = vpack.c.b16 %v4141, %v4139
        %v5892 = vpack.c.b16 %v4144, %v4142
        %v5893 = vpack.c.b16 %v4145, %v4143
        %v5894 = vpack.c.b16 %v4148, %v4146
        %v5895 = vpack.c.b16 %v4149, %v4147
        %v5896 = vpack.c.b16 %v4152, %v4150
        %v5897 = vpack.c.b16 %v4153, %v4151
        %v5898 = vpack.c.b16 %v4156, %v4154
        %v5899 = vpack.c.b16 %v4157, %v4155
        %v5900 = vpack.c.b16 %v4160, %v4158
        %v5901 = vpack.c.b16 %v4161, %v4159
        %v5902 = vpack.c.b16 %v4164, %v4162
        %v5903 = vpack.c.b16 %v4165, %v4163
        %v5904 = vpack.c.b16 %v4168, %v4166
        %v5905 = vpack.c.b16 %v4169, %v4167
        %v5906 = vpack.c.b16 %v4172, %v4170
        %v5907 = vpack.c.b16 %v4173, %v4171
        %v5908 = vpack.c.b16 %v4176, %v4174
        %v5909 = vpack.c.b16 %v4177, %v4175
        %v5910 = vpack.c.b16 %v4180, %v4178
        %v5911 = vpack.c.b16 %v4181, %v4179
        %v5912 = vpack.c.b16 %v4184, %v4182
        %v5913 = vpack.c.b16 %v4185, %v4183
        %v5914 = vpack.c.b16 %v4188, %v4186
        %v5915 = vpack.c.b16 %v4189, %v4187
        %v5916 = vpack.c.b16 %v4192, %v4190
        %v5917 = vpack.c.b16 %v4193, %v4191
        %v5918 = vpack.c.b16 %v4196, %v4194
        %v5919 = vpack.c.b16 %v4197, %v4195
        %v5920 = vpack.c.b16 %v4200, %v4198
        %v5921 = vpack.c.b16 %v4201, %v4199
        %v5922 = vpack.c.b16 %v4204, %v4202
        %v5923 = vpack.c.b16 %v4205, %v4203
        %v5924 = vpack.c.b16 %v4208, %v4206
        %v5925 = vpack.c.b16 %v4209, %v4207
        %v5926 = vpack.c.b16 %v4212, %v4210
        %v5927 = vpack.c.b16 %v4213, %v4211
        %v5928 = vpack.c.b16 %v4216, %v4214
        %v5929 = vpack.c.b16 %v4217, %v4215
        %v5930 = vpack.c.b16 %v4220, %v4218
        %v5931 = vpack.c.b16 %v4221, %v4219
        %v5932 = vpack.c.b16 %v4224, %v4222
        %v5933 = vpack.c.b16 %v4225, %v4223
        %v5934 = vpack.c.b16 %v4228, %v4226
        %v5935 = vpack.c.b16 %v4229, %v4227
        %v5936 = vpack.c.b16 %v4232, %v4230
        %v5937 = vpack.c.b16 %v4233, %v4231
        %v5938 = vpack.c.b16 %v4236, %v4234
        %v5939 = vpack.c.b16 %v4237, %v4235
        %v5940 = vpack.c.b16 %v4240, %v4238
        %v5941 = vpack.c.b16 %v4241, %v4239
        %v5942 = vpack.c.b16 %v4244, %v4242
        %v5943 = vpack.c.b16 %v4245, %v4243
        %v5944 = vpack.c.b16 %v4248, %v4246
        %v5945 = vpack.c.b16 %v4249, %v4247
        %v5946 = vpack.c.b16 %v4252, %v4250
        %v5947 = vpack.c.b16 %v4253, %v4251
        %v5948 = vpack.c.b16 %v4256, %v4254
        %v5949 = vpack.c.b16 %v4257, %v4255
        %v5950 = vpack.c.b16 %v4260, %v4258
        %v5951 = vpack.c.b16 %v4261, %v4259
        %v5952 = vpack.c.b16 %v4264, %v4262
        %v5953 = vpack.c.b16 %v4265, %v4263
        %v5954 = vpack.c.b16 %v4268, %v4266
        %v5955 = vpack.c.b16 %v4269, %v4267
        %v5956 = vpack.c.b16 %v4272, %v4270
        %v5957 = vpack.c.b16 %v4273, %v4271
        %v5958 = vpack.c.b16 %v4276, %v4274
        %v5959 = vpack.c.b16 %v4277, %v4275
        %v5960 = vpack.c.b16 %v4280, %v4278
        %v5961 = vpack.c.b16 %v4281, %v4279
        %v5962 = vpack.c.b16 %v4284, %v4282
        %v5963 = vpack.c.b16 %v4285, %v4283
        %v5964 = vpack.c.b16 %v4288, %v4286
        %v5965 = vpack.c.b16 %v4289, %v4287
        %v5966 = vpack.c.b16 %v4292, %v4290
        %v5967 = vpack.c.b16 %v4293, %v4291
        %v5968 = vpack.c.b16 %v4296, %v4294
        %v5969 = vpack.c.b16 %v4297, %v4295
        %v5970 = vpack.c.b16 %v4300, %v4298
        %v5971 = vpack.c.b16 %v4301, %v4299
        %v5972 = vpack.c.b16 %v4304, %v4302
        %v5973 = vpack.c.b16 %v4305, %v4303
        %v5974 = vpack.c.b16 %v4308, %v4306
        %v5975 = vpack.c.b16 %v4309, %v4307
        %v5976 = vpack.c.b16 %v4312, %v4310
        %v5977 = vpack.c.b16 %v4313, %v4311
        %v5978 = vpack.c.b16 %v4316, %v4314
        %v5979 = vpack.c.b16 %v4317, %v4315
        %v5980 = vpack.c.b16 %v4320, %v4318
        %v5981 = vpack.c.b16 %v4321, %v4319
        %v5982 = vpack.c.b16 %v4324, %v4322
        %v5983 = vpack.c.b16 %v4325, %v4323
        %v5984 = vpack.c.b16 %v4328, %v4326
        %v5985 = vpack.c.b16 %v4329, %v4327
        %v5986 = vpack.c.b16 %v4332, %v4330
        %v5987 = vpack.c.b16 %v4333, %v4331
        %v5988 = vpack.c.b16 %v4336, %v4334
        %v5989 = vpack.c.b16 %v4337, %v4335
        %v5990 = vpack.c.b16 %v4340, %v4338
        %v5991 = vpack.c.b16 %v4341, %v4339
        %v5992 = vpack.c.b16 %v4344, %v4342
        %v5993 = vpack.c.b16 %v4345, %v4343
        %v5994 = vpack.c.b16 %v4348, %v4346
        %v5995 = vpack.c.b16 %v4349, %v4347
        %v5996 = vpack.c.b16 %v4352, %v4350
        %v5997 = vpack.c.b16 %v4353, %v4351
        %v5998 = vpack.c.b16 %v4356, %v4354
        %v5999 = vpack.c.b16 %v4357, %v4355
        %v6000 = vpack.c.b16 %v4360, %v4358
        %v6001 = vpack.c.b16 %v4361, %v4359
        %v6002 = vpack.c.b16 %v4364, %v4362
        %v6003 = vpack.c.b16 %v4365, %v4363
        %v6004 = vpack.c.b16 %v4368, %v4366
        %v6005 = vpack.c.b16 %v4369, %v4367
        %v6006 = vpack.c.b16 %v4372, %v4370
        %v6007 = vpack.c.b16 %v4373, %v4371
        %v6008 = vpack.c.b16 %v4376, %v4374
        %v6009 = vpack.c.b16 %v4377, %v4375
        %v6010 = vpack.c.b16 %v4380, %v4378
        %v6011 = vpack.c.b16 %v4381, %v4379
        %v6012 = vpack.c.b16 %v4384, %v4382
        %v6013 = vpack.c.b16 %v4385, %v4383
        %v6014 = vpack.c.b16 %v4388, %v4386
        %v6015 = vpack.c.b16 %v4389, %v4387
        %v6016 = vpack.c.b16 %v4392, %v4390
        %v6017 = vpack.c.b16 %v4393, %v4391
        %v6018 = vpack.c.b16 %v4396, %v4394
        %v6019 = vpack.c.b16 %v4397, %v4395
        %v6020 = vpack.c.b16 %v4400, %v4398
        %v6021 = vpack.c.b16 %v4401, %v4399
        %v6022 = vpack.c.b16 %v4404, %v4402
        %v6023 = vpack.c.b16 %v4405, %v4403
        %v6024 = vpack.c.b16 %v4408, %v4406
        %v6025 = vpack.c.b16 %v4409, %v4407
        %v6026 = vpack.c.b16 %v4412, %v4410
        %v6027 = vpack.c.b16 %v4413, %v4411
        %v6028 = vpack.c.b16 %v4416, %v4414
        %v6029 = vpack.c.b16 %v4417, %v4415
        %v6030 = vpack.c.b16 %v4420, %v4418
        %v6031 = vpack.c.b16 %v4421, %v4419
        %v6032 = vpack.c.b16 %v4424, %v4422
        %v6033 = vpack.c.b16 %v4425, %v4423
        %v6034 = vpack.c.b16 %v4428, %v4426
        %v6035 = vpack.c.b16 %v4429, %v4427
        %v6036 = vpack.c.b16 %v4432, %v4430
        %v6037 = vpack.c.b16 %v4433, %v4431
        %v6038 = vpack.c.b16 %v4436, %v4434
        %v6039 = vpack.c.b16 %v4437, %v4435
        %v6040 = vpack.c.b16 %v4440, %v4438
        %v6041 = vpack.c.b16 %v4441, %v4439
        %v6042 = vpack.c.b16 %v4444, %v4442
        %v6043 = vpack.c.b16 %v4445, %v4443
        %v6044 = vpack.c.b16 %v4448, %v4446
        %v6045 = vpack.c.b16 %v4449, %v4447
        %v6046 = vpack.c.b16 %v4452, %v4450
        %v6047 = vpack.c.b16 %v4453, %v4451
        %v6048 = vpack.c.b16 %v4456, %v4454
        %v6049 = vpack.c.b16 %v4457, %v4455
        %v6050 = vpack.c.b16 %v4460, %v4458
        %v6051 = vpack.c.b16 %v4461, %v4459
        %v6052 = vpack.c.b16 %v4464, %v4462
        %v6053 = vpack.c.b16 %v4465, %v4463
        %v6054 = vpack.c.b16 %v4468, %v4466
        %v6055 = vpack.c.b16 %v4469, %v4467
        %v6056 = vpack.c.b16 %v4472, %v4470
        %v6057 = vpack.c.b16 %v4473, %v4471
        %v6058 = vpack.c.b16 %v4476, %v4474
        %v6059 = vpack.c.b16 %v4477, %v4475
        %v6060 = vpack.c.b16 %v4480, %v4478
        %v6061 = vpack.c.b16 %v4481, %v4479
        %v6062 = vpack.c.b16 %v4484, %v4482
        %v6063 = vpack.c.b16 %v4485, %v4483
        %v6064 = vpack.c.b16 %v4488, %v4486
        %v6065 = vpack.c.b16 %v4489, %v4487
        %v6066 = vpack.c.b16 %v4492, %v4490
        %v6067 = vpack.c.b16 %v4493, %v4491
        %v6068 = vpack.c.b16 %v4496, %v4494
        %v6069 = vpack.c.b16 %v4497, %v4495
        %v6070 = vpack.c.b16 %v4500, %v4498
        %v6071 = vpack.c.b16 %v4501, %v4499
        %v6072 = vpack.c.b16 %v4504, %v4502
        %v6073 = vpack.c.b16 %v4505, %v4503
        %v6074 = vpack.c.b16 %v4508, %v4506
        %v6075 = vpack.c.b16 %v4509, %v4507
        %v6076 = vpack.c.b16 %v4512, %v4510
        %v6077 = vpack.c.b16 %v4513, %v4511
        %v6078 = vpack.c.b16 %v4516, %v4514
        %v6079 = vpack.c.b16 %v4517, %v4515
        %v6080 = vpack.c.b16 %v4520, %v4518
        %v6081 = vpack.c.b16 %v4521, %v4519
        %v6082 = vpack.c.b16 %v4524, %v4522
        %v6083 = vpack.c.b16 %v4525, %v4523
        %v6084 = vpack.c.b16 %v4528, %v4526
        %v6085 = vpack.c.b16 %v4529, %v4527
        %v6086 = vpack.c.b16 %v4532, %v4530
        %v6087 = vpack.c.b16 %v4533, %v4531
        %v6088 = vpack.c.b16 %v4536, %v4534
        %v6089 = vpack.c.b16 %v4537, %v4535
        %v6090 = vpack.c.b16 %v4540, %v4538
        %v6091 = vpack.c.b16 %v4541, %v4539
        %v6092 = vpack.c.b16 %v4544, %v4542
        %v6093 = vpack.c.b16 %v4545, %v4543
        %v6094 = vpack.c.b16 %v4548, %v4546
        %v6095 = vpack.c.b16 %v4549, %v4547
        %v6096 = vpack.c.b16 %v4552, %v4550
        %v6097 = vpack.c.b16 %v4553, %v4551
        %v6098 = vpack.c.b16 %v4556, %v4554
        %v6099 = vpack.c.b16 %v4557, %v4555
        %v6100 = vpack.c.b16 %v4560, %v4558
        %v6101 = vpack.c.b16 %v4561, %v4559
        %v6102 = vpack.c.b16 %v4564, %v4562
        %v6103 = vpack.c.b16 %v4565, %v4563
        %v6104 = vpack.c.b16 %v4568, %v4566
        %v6105 = vpack.c.b16 %v4569, %v4567
        %v6106 = vpack.c.b16 %v4572, %v4570
        %v6107 = vpack.c.b16 %v4573, %v4571
        %v6108 = vpack.c.b16 %v4576, %v4574
        %v6109 = vpack.c.b16 %v4577, %v4575
        %v6110 = vpack.c.b16 %v4580, %v4578
        %v6111 = vpack.c.b16 %v4581, %v4579
        %v6112 = vpack.c.b16 %v4584, %v4582
        %v6113 = vpack.c.b16 %v4585, %v4583
        %v6114 = vpack.c.b16 %v4588, %v4586
        %v6115 = vpack.c.b16 %v4589, %v4587
        %v6116 = vpack.c.b16 %v4592, %v4590
        %v6117 = vpack.c.b16 %v4593, %v4591
        %v6118 = vpack.c.b16 %v4596, %v4594
        %v6119 = vpack.c.b16 %v4597, %v4595
        %v6120 = vpack.c.b16 %v4600, %v4598
        %v6121 = vpack.c.b16 %v4601, %v4599
        %v6122 = vpack.c.b16 %v4604, %v4602
        %v6123 = vpack.c.b16 %v4605, %v4603
        %v6124 = vpack.c.b16 %v4608, %v4606
        %v6125 = vpack.c.b16 %v4609, %v4607
        %v6126 = vpack.c.b16 %v4612, %v4610
        %v6127 = vpack.c.b16 %v4613, %v4611
        %v6128 = vpack.c.b16 %v4616, %v4614
        %v6129 = vpack.c.b16 %v4617, %v4615
        %v6130 = vpack.c.b16 %v4620, %v4618
        %v6131 = vpack.c.b16 %v4621, %v4619
        %v6132 = vpack.c.b16 %v4624, %v4622
        %v6133 = vpack.c.b16 %v4625, %v4623
        %v6134 = vpack.c.b16 %v4628, %v4626
        %v6135 = vpack.c.b16 %v4629, %v4627
        %v6136 = vpack.c.b16 %v4632, %v4630
        %v6137 = vpack.c.b16 %v4633, %v4631
        %v6138 = vpack.c.b16 %v4636, %v4634
        %v6139 = vpack.c.b16 %v4637, %v4635
        %v6140 = vpack.c.b16 %v4640, %v4638
        %v6141 = vpack.c.b16 %v4641, %v4639
        %v6142 = vpack.c.b16 %v4644, %v4642
        %v6143 = vpack.c.b16 %v4645, %v4643
        %v6144 = vpack.c.b16 %v4648, %v4646
        %v6145 = vpack.c.b16 %v4649, %v4647
        %v6146 = vpack.c.b16 %v4652, %v4650
        %v6147 = vpack.c.b16 %v4653, %v4651
        %v6148 = vpack.c.b16 %v4656, %v4654
        %v6149 = vpack.c.b16 %v4657, %v4655
        %v6150 = vpack.c.b16 %v4660, %v4658
        %v6151 = vpack.c.b16 %v4661, %v4659
        %v6152 = vpack.c.b16 %v4664, %v4662
        %v6153 = vpack.c.b16 %v4665, %v4663
        %v6154 = vpack.c.b16 %v4668, %v4666
        %v6155 = vpack.c.b16 %v4669, %v4667
        %v6156 = vpack.c.b16 %v4672, %v4670
        %v6157 = vpack.c.b16 %v4673, %v4671
        %v6158 = vpack.c.b16 %v4676, %v4674
        %v6159 = vpack.c.b16 %v4677, %v4675
        %v6160 = vpack.c.b16 %v4680, %v4678
        %v6161 = vpack.c.b16 %v4681, %v4679
        %v6162 = vpack.c.b16 %v4684, %v4682
        %v6163 = vpack.c.b16 %v4685, %v4683
        %v6164 = vpack.c.b16 %v4688, %v4686
        %v6165 = vpack.c.b16 %v4689, %v4687
        %v6166 = vpack.c.b16 %v4692, %v4690
        %v6167 = vpack.c.b16 %v4693, %v4691
        %v6168 = vpack.c.b16 %v4696, %v4694
        %v6169 = vpack.c.b16 %v4697, %v4695
        %v6170 = vpack.c.b16 %v4700, %v4698
        %v6171 = vpack.c.b16 %v4701, %v4699
        %v6172 = vpack.c.b16 %v4704, %v4702
        %v6173 = vpack.c.b16 %v4705, %v4703
        %v6174 = vpack.c.b16 %v4708, %v4706
        %v6175 = vpack.c.b16 %v4709, %v4707
        %v6176 = vpack.c.b16 %v4712, %v4710
        %v6177 = vpack.c.b16 %v4713, %v4711
        %v6178 = vpack.c.b16 %v4716, %v4714
        %v6179 = vpack.c.b16 %v4717, %v4715
        %v6180 = vpack.c.b16 %v4720, %v4718
        %v6181 = vpack.c.b16 %v4721, %v4719
        %v6182 = vpack.c.b16 %v4724, %v4722
        %v6183 = vpack.c.b16 %v4725, %v4723
        %v6184 = vpack.c.b16 %v4728, %v4726
        %v6185 = vpack.c.b16 %v4729, %v4727
        %v6186 = vpack.c.b16 %v4732, %v4730
        %v6187 = vpack.c.b16 %v4733, %v4731
        %v6188 = vpack.c.b16 %v4736, %v4734
        %v6189 = vpack.c.b16 %v4737, %v4735
        %v6190 = vpack.c.b16 %v4740, %v4738
        %v6191 = vpack.c.b16 %v4741, %v4739
        %v6192 = vpack.c.b16 %v4744, %v4742
        %v6193 = vpack.c.b16 %v4745, %v4743
        %v6194 = vpack.c.b16 %v4748, %v4746
        %v6195 = vpack.c.b16 %v4749, %v4747
        %v6196 = vpack.c.b16 %v4752, %v4750
        %v6197 = vpack.c.b16 %v4753, %v4751
        %v6198 = vpack.c.b16 %v4756, %v4754
        %v6199 = vpack.c.b16 %v4757, %v4755
        %v6200 = vpack.c.b16 %v4760, %v4758
        %v6201 = vpack.c.b16 %v4761, %v4759
        %v6202 = vpack.c.b16 %v4764, %v4762
        %v6203 = vpack.c.b16 %v4765, %v4763
        %v6204 = vpack.c.b16 %v4768, %v4766
        %v6205 = vpack.c.b16 %v4769, %v4767
        %v6206 = vpack.c.b16 %v4772, %v4770
        %v6207 = vpack.c.b16 %v4773, %v4771
        %v6208 = vpack.c.b16 %v4776, %v4774
        %v6209 = vpack.c.b16 %v4777, %v4775
        %v6210 = vpack.c.b16 %v4780, %v4778
        %v6211 = vpack.c.b16 %v4781, %v4779
        %v6212 = vpack.c.b16 %v4784, %v4782
        %v6213 = vpack.c.b16 %v4785, %v4783
        %v6214 = vpack.c.b16 %v4788, %v4786
        %v6215 = vpack.c.b16 %v4789, %v4787
        %v6216 = vpack.c.b16 %v4792, %v4790
        %v6217 = vpack.c.b16 %v4793, %v4791
        %v6218 = vpack.c.b16 %v4796, %v4794
        %v6219 = vpack.c.b16 %v4797, %v4795
        %v6220 = vpack.c.b16 %v4800, %v4798
        %v6221 = vpack.c.b16 %v4801, %v4799
        %v6222 = vpack.c.b16 %v4804, %v4802
        %v6223 = vpack.c.b16 %v4805, %v4803
        %v6224 = vpack.c.b16 %v4808, %v4806
        %v6225 = vpack.c.b16 %v4809, %v4807
        %v6226 = vpack.c.b16 %v4812, %v4810
        %v6227 = vpack.c.b16 %v4813, %v4811
        %v6228 = vpack.c.b16 %v4816, %v4814
        %v6229 = vpack.c.b16 %v4817, %v4815
        %v6230 = vpack.c.b16 %v4820, %v4818
        %v6231 = vpack.c.b16 %v4821, %v4819
        %v6232 = vpack.c.b16 %v4824, %v4822
        %v6233 = vpack.c.b16 %v4825, %v4823
        %v6234 = vpack.c.b16 %v4828, %v4826
        %v6235 = vpack.c.b16 %v4829, %v4827
        %v6236 = vpack.c.b16 %v4832, %v4830
        %v6237 = vpack.c.b16 %v4833, %v4831
        %v6238 = vpack.c.b16 %v4836, %v4834
        %v6239 = vpack.c.b16 %v4837, %v4835
        %v6240 = vpack.c.b16 %v4840, %v4838
        %v6241 = vpack.c.b16 %v4841, %v4839
        %v6242 = vpack.c.b16 %v4844, %v4842
        %v6243 = vpack.c.b16 %v4845, %v4843
        %v6244 = vpack.c.b16 %v4848, %v4846
        %v6245 = vpack.c.b16 %v4849, %v4847
        %v6246 = vpack.c.b16 %v4852, %v4850
        %v6247 = vpack.c.b16 %v4853, %v4851
        %v6248 = vpack.c.b16 %v4856, %v4854
        %v6249 = vpack.c.b16 %v4857, %v4855
        %v6250 = vpack.c.b16 %v4860, %v4858
        %v6251 = vpack.c.b16 %v4861, %v4859
        %v6252 = vpack.c.b16 %v4864, %v4862
        %v6253 = vpack.c.b16 %v4865, %v4863
        %v6254 = vpack.c.b16 %v4868, %v4866
        %v6255 = vpack.c.b16 %v4869, %v4867
        %v6256 = vpack.c.b16 %v4872, %v4870
        %v6257 = vpack.c.b16 %v4873, %v4871
        %v6258 = vpack.c.b16 %v4876, %v4874
        %v6259 = vpack.c.b16 %v4877, %v4875
        %v6260 = vpack.c.b16 %v4880, %v4878
        %v6261 = vpack.c.b16 %v4881, %v4879
        %v6262 = vpack.c.b16 %v4884, %v4882
        %v6263 = vpack.c.b16 %v4885, %v4883
        %v6264 = vpack.c.b16 %v4888, %v4886
        %v6265 = vpack.c.b16 %v4889, %v4887
        %v6266 = vpack.c.b16 %v4892, %v4890
        %v6267 = vpack.c.b16 %v4893, %v4891
        %v6268 = vpack.c.b16 %v4896, %v4894
        %v6269 = vpack.c.b16 %v4897, %v4895
        %v6270 = vpack.c.b16 %v4900, %v4898
        %v6271 = vpack.c.b16 %v4901, %v4899
        %v6272 = vpack.c.b16 %v4904, %v4902
        %v6273 = vpack.c.b16 %v4905, %v4903
        %v6274 = vpack.c.b16 %v4908, %v4906
        %v6275 = vpack.c.b16 %v4909, %v4907
        %v6276 = vpack.c.b16 %v4912, %v4910
        %v6277 = vpack.c.b16 %v4913, %v4911
        %v6278 = vpack.c.b16 %v4916, %v4914
        %v6279 = vpack.c.b16 %v4917, %v4915
        %v6280 = vpack.c.b16 %v4920, %v4918
        %v6281 = vpack.c.b16 %v4921, %v4919
        %v6282 = vpack.c.b16 %v4924, %v4922
        %v6283 = vpack.c.b16 %v4925, %v4923
        %v6284 = vpack.c.b16 %v4928, %v4926
        %v6285 = vpack.c.b16 %v4929, %v4927
        %v6286 = vpack.c.b16 %v4932, %v4930
        %v6287 = vpack.c.b16 %v4933, %v4931
        %v6288 = vpack.c.b16 %v4936, %v4934
        %v6289 = vpack.c.b16 %v4937, %v4935
        %v6290 = vpack.c.b16 %v4940, %v4938
        %v6291 = vpack.c.b16 %v4941, %v4939
        %v6292 = vpack.c.b16 %v4944, %v4942
        %v6293 = vpack.c.b16 %v4945, %v4943
        %v6294 = vpack.c.b16 %v4948, %v4946
        %v6295 = vpack.c.b16 %v4949, %v4947
        %v6296 = vpack.c.b16 %v4952, %v4950
        %v6297 = vpack.c.b16 %v4953, %v4951
        %v6298 = vpack.c.b16 %v4956, %v4954
        %v6299 = vpack.c.b16 %v4957, %v4955
        %v6300 = vpack.c.b16 %v4960, %v4958
        %v6301 = vpack.c.b16 %v4961, %v4959
        %v6302 = vpack.c.b16 %v4964, %v4962
        %v6303 = vpack.c.b16 %v4965, %v4963
        %v6304 = vpack.c.b16 %v4968, %v4966
        %v6305 = vpack.c.b16 %v4969, %v4967
        %v6306 = vpack.c.b16 %v4972, %v4970
        %v6307 = vpack.c.b16 %v4973, %v4971
        %v6308 = vpack.c.b16 %v4976, %v4974
        %v6309 = vpack.c.b16 %v4977, %v4975
        %v6310 = vpack.c.b16 %v4980, %v4978
        %v6311 = vpack.c.b16 %v4981, %v4979
        %v6312 = vpack.c.b16 %v4984, %v4982
        %v6313 = vpack.c.b16 %v4985, %v4983
        %v6314 = vpack.c.b16 %v4988, %v4986
        %v6315 = vpack.c.b16 %v4989, %v4987
        %v6316 = vpack.c.b16 %v4992, %v4990
        %v6317 = vpack.c.b16 %v4993, %v4991
        %v6318 = vpack.c.b16 %v4996, %v4994
        %v6319 = vpack.c.b16 %v4997, %v4995
        %v6320 = vpack.c.b16 %v5000, %v4998
        %v6321 = vpack.c.b16 %v5001, %v4999
        %v6322 = vpack.c.b16 %v5004, %v5002
        %v6323 = vpack.c.b16 %v5005, %v5003
        %v6324 = vpack.c.b16 %v5008, %v5006
        %v6325 = vpack.c.b16 %v5009, %v5007
        %v6326 = vpack.c.b16 %v5012, %v5010
        %v6327 = vpack.c.b16 %v5013, %v5011
        %v6328 = vpack.c.b16 %v5016, %v5014
        %v6329 = vpack.c.b16 %v5017, %v5015
        %v6330 = vpack.c.b16 %v5020, %v5018
        %v6331 = vpack.c.b16 %v5021, %v5019
        %v6332 = vpack.c.b16 %v5024, %v5022
        %v6333 = vpack.c.b16 %v5025, %v5023
        %v6334 = vpack.c.b16 %v5028, %v5026
        %v6335 = vpack.c.b16 %v5029, %v5027
        %v6336 = vpack.c.b16 %v5032, %v5030
        %v6337 = vpack.c.b16 %v5033, %v5031
        %v6338 = vpack.c.b16 %v5036, %v5034
        %v6339 = vpack.c.b16 %v5037, %v5035
        %v6340 = vpack.c.b16 %v5040, %v5038
        %v6341 = vpack.c.b16 %v5041, %v5039
        %v6342 = vpack.c.b16 %v5044, %v5042
        %v6343 = vpack.c.b16 %v5045, %v5043
        %v6344 = vpack.c.b16 %v5048, %v5046
        %v6345 = vpack.c.b16 %v5049, %v5047
        %v6346 = vpack.c.b16 %v5052, %v5050
        %v6347 = vpack.c.b16 %v5053, %v5051
        %v6348 = vpack.c.b16 %v5056, %v5054
        %v6349 = vpack.c.b16 %v5057, %v5055
        %v6350 = vpack.c.b16 %v5060, %v5058
        %v6351 = vpack.c.b16 %v5061, %v5059
        %v6352 = vpack.c.b16 %v5064, %v5062
        %v6353 = vpack.c.b16 %v5065, %v5063
        %v6354 = vpack.c.b16 %v5068, %v5066
        %v6355 = vpack.c.b16 %v5069, %v5067
        %v6356 = vpack.c.b16 %v5072, %v5070
        %v6357 = vpack.c.b16 %v5073, %v5071
        %v6358 = vpack.c.b16 %v5076, %v5074
        %v6359 = vpack.c.b16 %v5077, %v5075
        %v6360 = vpack.c.b16 %v5080, %v5078
        %v6361 = vpack.c.b16 %v5081, %v5079
        %v6362 = vpack.c.b16 %v5084, %v5082
        %v6363 = vpack.c.b16 %v5085, %v5083
        %v6364 = vpack.c.b16 %v5088, %v5086
        %v6365 = vpack.c.b16 %v5089, %v5087
        %v6366 = vpack.c.b16 %v5092, %v5090
        %v6367 = vpack.c.b16 %v5093, %v5091
        %v6368 = vpack.c.b16 %v5096, %v5094
        %v6369 = vpack.c.b16 %v5097, %v5095
        %v6370 = vpack.c.b16 %v5100, %v5098
        %v6371 = vpack.c.b16 %v5101, %v5099
        %v6372 = vpack.c.b16 %v5104, %v5102
        %v6373 = vpack.c.b16 %v5105, %v5103
        %v6374 = vpack.c.b16 %v5108, %v5106
        %v6375 = vpack.c.b16 %v5109, %v5107
        %v6376 = vpack.c.b16 %v5112, %v5110
        %v6377 = vpack.c.b16 %v5113, %v5111
        %v6378 = vpack.c.b16 %v5116, %v5114
        %v6379 = vpack.c.b16 %v5117, %v5115
        %v6380 = vpack.c.b16 %v5120, %v5118
        %v6381 = vpack.c.b16 %v5121, %v5119
        %v6382 = vpack.c.b16 %v5124, %v5122
        %v6383 = vpack.c.b16 %v5125, %v5123
        %v6384 = vpack.c.b16 %v5128, %v5126
        %v6385 = vpack.c.b16 %v5129, %v5127
        %v6386 = vpack.c.b16 %v5132, %v5130
        %v6387 = vpack.c.b16 %v5133, %v5131
        %v6388 = vpack.c.b16 %v5136, %v5134
        %v6389 = vpack.c.b16 %v5137, %v5135
        %v6390 = vpack.c.b16 %v5140, %v5138
        %v6391 = vpack.c.b16 %v5141, %v5139
        %v6392 = vpack.c.b16 %v5144, %v5142
        %v6393 = vpack.c.b16 %v5145, %v5143
        %v6394 = vpack.c.b16 %v5148, %v5146
        %v6395 = vpack.c.b16 %v5149, %v5147
        %v6396 = vpack.c.b16 %v5152, %v5150
        %v6397 = vpack.c.b16 %v5153, %v5151
        %v6398 = vpack.c.b16 %v5156, %v5154
        %v6399 = vpack.c.b16 %v5157, %v5155
        %v6400 = vpack.c.b16 %v5160, %v5158
        %v6401 = vpack.c.b16 %v5161, %v5159
        %v6402 = vpack.c.b16 %v5164, %v5162
        %v6403 = vpack.c.b16 %v5165, %v5163
        %v6404 = vpack.c.b16 %v5168, %v5166
        %v6405 = vpack.c.b16 %v5169, %v5167
        %v6406 = vpack.c.b16 %v5172, %v5170
        %v6407 = vpack.c.b16 %v5173, %v5171
        %v6408 = vpack.c.b16 %v5176, %v5174
        %v6409 = vpack.c.b16 %v5177, %v5175
        %v6410 = vpack.c.b16 %v5180, %v5178
        %v6411 = vpack.c.b16 %v5181, %v5179
        %v6412 = vpack.c.b16 %v5184, %v5182
        %v6413 = vpack.c.b16 %v5185, %v5183
        %v6414 = vpack.c.b16 %v5188, %v5186
        %v6415 = vpack.c.b16 %v5189, %v5187
        %v6416 = vpack.c.b16 %v5192, %v5190
        %v6417 = vpack.c.b16 %v5193, %v5191
        %v6418 = vpack.c.b16 %v5196, %v5194
        %v6419 = vpack.c.b16 %v5197, %v5195
        %v6420 = vpack.c.b16 %v5200, %v5198
        %v6421 = vpack.c.b16 %v5201, %v5199
        %v6422 = vpack.c.b16 %v5204, %v5202
        %v6423 = vpack.c.b16 %v5205, %v5203
        %v6424 = vpack.c.b16 %v5208, %v5206
        %v6425 = vpack.c.b16 %v5209, %v5207
        %v6426 = vpack.c.b16 %v5212, %v5210
        %v6427 = vpack.c.b16 %v5213, %v5211
        %v6428 = vpack.c.b16 %v5216, %v5214
        %v6429 = vpack.c.b16 %v5217, %v5215
        %v6430 = vpack.c.b16 %v5220, %v5218
        %v6431 = vpack.c.b16 %v5221, %v5219
        %v6432 = vpack.c.b16 %v5224, %v5222
        %v6433 = vpack.c.b16 %v5225, %v5223
        %v6434 = vpack.c.b16 %v5228, %v5226
        %v6435 = vpack.c.b16 %v5229, %v5227
        %v6436 = vpack.c.b16 %v5232, %v5230
        %v6437 = vpack.c.b16 %v5233, %v5231
        %v6438 = vpack.c.b16 %v5236, %v5234
        %v6439 = vpack.c.b16 %v5237, %v5235
        %v6440 = vpack.c.b16 %v5240, %v5238
        %v6441 = vpack.c.b16 %v5241, %v5239
        %v6442 = vpack.c.b16 %v5244, %v5242
        %v6443 = vpack.c.b16 %v5245, %v5243
        %v6444 = vpack.c.b16 %v5248, %v5246
        %v6445 = vpack.c.b16 %v5249, %v5247
        %v6446 = vpack.c.b16 %v5252, %v5250
        %v6447 = vpack.c.b16 %v5253, %v5251
        %v6448 = vpack.c.b16 %v5256, %v5254
        %v6449 = vpack.c.b16 %v5257, %v5255
        %v6450 = vpack.c.b16 %v5260, %v5258
        %v6451 = vpack.c.b16 %v5261, %v5259
        %v6452 = vpack.c.b16 %v5264, %v5262
        %v6453 = vpack.c.b16 %v5265, %v5263
        %v6454 = vpack.c.b16 %v5268, %v5266
        %v6455 = vpack.c.b16 %v5269, %v5267
        %v6456 = vpack.c.b16 %v5272, %v5270
        %v6457 = vpack.c.b16 %v5273, %v5271
        %v6458 = vpack.c.b16 %v5276, %v5274
        %v6459 = vpack.c.b16 %v5277, %v5275
        %v6460 = vpack.c.b16 %v5280, %v5278
        %v6461 = vpack.c.b16 %v5281, %v5279
        %v6462 = vpack.c.b16 %v5284, %v5282
        %v6463 = vpack.c.b16 %v5285, %v5283
        %v6464 = vpack.c.b16 %v5288, %v5286
        %v6465 = vpack.c.b16 %v5289, %v5287
        %v6466 = vpack.c.b16 %v5292, %v5290
        %v6467 = vpack.c.b16 %v5293, %v5291
        %v6468 = vpack.c.b16 %v5296, %v5294
        %v6469 = vpack.c.b16 %v5297, %v5295
        %v6470 = vpack.c.b16 %v5300, %v5298
        %v6471 = vpack.c.b16 %v5301, %v5299
        %v6472 = vpack.c.b16 %v5304, %v5302
        %v6473 = vpack.c.b16 %v5305, %v5303
        %v6474 = vpack.c.b16 %v5308, %v5306
        %v6475 = vpack.c.b16 %v5309, %v5307
        %v6476 = vpack.c.b16 %v5312, %v5310
        %v6477 = vpack.c.b16 %v5313, %v5311
        %v6478 = vpack.c.b16 %v5316, %v5314
        %v6479 = vpack.c.b16 %v5317, %v5315
        %v6480 = vpack.c.b16 %v5320, %v5318
        %v6481 = vpack.c.b16 %v5321, %v5319
        %v6482 = vpack.c.b16 %v5324, %v5322
        %v6483 = vpack.c.b16 %v5325, %v5323
        %v6484 = vpack.c.b16 %v5328, %v5326
        %v6485 = vpack.c.b16 %v5329, %v5327
        %v6486 = vpack.c.b16 %v5332, %v5330
        %v6487 = vpack.c.b16 %v5333, %v5331
        %v6488 = vpack.c.b16 %v5336, %v5334
        %v6489 = vpack.c.b16 %v5337, %v5335
        %7642 = vmatprep.subr.bf16.mxu0 %v5339
        %7643 = vmatpush1.bf16.msra.mxu0 %v5338
        %7644 = vmatprep.subr.bf16.mxu0 %v5341
        %7645 = vmatpush1.bf16.msra.mxu0 %v5340
        %7646 = vmatprep.subr.bf16.mxu0 %v5343
        %7647 = vmatpush1.bf16.msra.mxu0 %v5342
        %7648 = vmatprep.subr.bf16.mxu0 %v5345
        %7649 = vmatpush1.bf16.msra.mxu0 %v5344
        %7650 = vmatprep.subr.bf16.mxu0 %v5347
        %7651 = vmatpush1.bf16.msra.mxu0 %v5346
        %7652 = vmatprep.subr.bf16.mxu0 %v5349
        %7653 = vmatpush1.bf16.msra.mxu0 %v5348
        %7654 = vmatprep.subr.bf16.mxu0 %v5351
        %7655 = vmatpush1.bf16.msra.mxu0 %v5350
        %7656 = vmatprep.subr.bf16.mxu0 %v5353
        %7657 = vmatpush1.bf16.msra.mxu0 %v5352
        %7658 = vmatprep.subr.bf16.mxu0 %v5355
        %7659 = vmatpush1.bf16.msra.mxu0 %v5354
        %7660 = vmatprep.subr.bf16.mxu0 %v5357
        %7661 = vmatpush1.bf16.msra.mxu0 %v5356
        %7662 = vmatprep.subr.bf16.mxu0 %v5359
        %7663 = vmatpush1.bf16.msra.mxu0 %v5358
        %7664 = vmatprep.subr.bf16.mxu0 %v5361
        %7665 = vmatpush1.bf16.msra.mxu0 %v5360
        %7666 = vmatprep.subr.bf16.mxu0 %v5363
        %7667 = vmatpush1.bf16.msra.mxu0 %v5362
        %7668 = vmatprep.subr.bf16.mxu0 %v5365
        %7669 = vmatpush1.bf16.msra.mxu0 %v5364
        %7670 = vmatprep.subr.bf16.mxu0 %v5367
        %7671 = vmatpush1.bf16.msra.mxu0 %v5366
        %7672 = vmatprep.subr.bf16.mxu0 %v5369
        %7673 = vmatpush1.bf16.msra.mxu0 %v5368
        %7674 = vmatprep.mubr.bf16.mxu0 %v647
        %7675 = vmatmul.mubr.bf16.gmra.mrb[0].mxu0 %v646
        %v7676 = vpop.f32.mrb[0].mxu0
        %v7677 = vadd.f32 %v1875, %v7676
        %v7678 = vpop.f32.mrb[0].mxu0
        %v7679 = vadd.f32 %v1879, %v7678
        %v7680 = vpop.f32.mrb[0].mxu0
        %v7681 = vpop.f32.mrb[0].mxu0
        %7682 = vdwg.mxu0
        %7683 = vmatprep.subr.bf16.mxu0 %v5371
        %7684 = vmatpush1.bf16.msra.mxu0 %v5370
        %7685 = vmatprep.subr.bf16.mxu0 %v5373
        %7686 = vmatpush1.bf16.msra.mxu0 %v5372
        %7687 = vmatprep.subr.bf16.mxu0 %v5375
        %7688 = vmatpush1.bf16.msra.mxu0 %v5374
        %7689 = vmatprep.subr.bf16.mxu0 %v5377
        %7690 = vmatpush1.bf16.msra.mxu0 %v5376
        %7691 = vmatprep.subr.bf16.mxu0 %v5379
        %7692 = vmatpush1.bf16.msra.mxu0 %v5378
        %7693 = vmatprep.subr.bf16.mxu0 %v5381
        %7694 = vmatpush1.bf16.msra.mxu0 %v5380
        %7695 = vmatprep.subr.bf16.mxu0 %v5383
        %7696 = vmatpush1.bf16.msra.mxu0 %v5382
        %7697 = vmatprep.subr.bf16.mxu0 %v5385
        %7698 = vmatpush1.bf16.msra.mxu0 %v5384
        %7699 = vmatprep.subr.bf16.mxu0 %v5387
        %7700 = vmatpush1.bf16.msra.mxu0 %v5386
        %7701 = vmatprep.subr.bf16.mxu0 %v5389
        %7702 = vmatpush1.bf16.msra.mxu0 %v5388
        %7703 = vmatprep.subr.bf16.mxu0 %v5391
        %7704 = vmatpush1.bf16.msra.mxu0 %v5390
        %7705 = vmatprep.subr.bf16.mxu0 %v5393
        %7706 = vmatpush1.bf16.msra.mxu0 %v5392
        %7707 = vmatprep.subr.bf16.mxu0 %v5395
        %7708 = vmatpush1.bf16.msra.mxu0 %v5394
        %7709 = vmatprep.subr.bf16.mxu0 %v5397
        %7710 = vmatpush1.bf16.msra.mxu0 %v5396
        %7711 = vmatprep.subr.bf16.mxu0 %v5399
        %7712 = vmatpush1.bf16.msra.mxu0 %v5398
        %7713 = vmatprep.subr.bf16.mxu0 %v5401
        %7714 = vmatpush1.bf16.msra.mxu0 %v5400
        %7715 = vmatprep.mubr.bf16.mxu0 %v649
        %7716 = vmatmul.mubr.bf16.gmra.mrb[0].mxu0 %v648
        %v7717 = vpop.f32.mrb[0].mxu0
        %v7718 = vadd.f32 %v7677, %v7717
        %v7719 = vpop.f32.mrb[0].mxu0
        %v7720 = vadd.f32 %v7679, %v7719
        %v7721 = vpop.f32.mrb[0].mxu0
        %v7722 = vpop.f32.mrb[0].mxu0
        %7723 = vdwg.mxu0
        %7724 = vmatprep.subr.bf16.mxu0 %v5403
        %7725 = vmatpush1.bf16.msra.mxu0 %v5402
        %7726 = vmatprep.subr.bf16.mxu0 %v5405
        %7727 = vmatpush1.bf16.msra.mxu0 %v5404
        %7728 = vmatprep.subr.bf16.mxu0 %v5407
        %7729 = vmatpush1.bf16.msra.mxu0 %v5406
        %7730 = vmatprep.subr.bf16.mxu0 %v5409
        %7731 = vmatpush1.bf16.msra.mxu0 %v5408
        %7732 = vmatprep.subr.bf16.mxu0 %v5411
        %7733 = vmatpush1.bf16.msra.mxu0 %v5410
        %7734 = vmatprep.subr.bf16.mxu0 %v5413
        %7735 = vmatpush1.bf16.msra.mxu0 %v5412
        %7736 = vmatprep.subr.bf16.mxu0 %v5415
        %7737 = vmatpush1.bf16.msra.mxu0 %v5414
        %7738 = vmatprep.subr.bf16.mxu0 %v5417
        %7739 = vmatpush1.bf16.msra.mxu0 %v5416
        %7740 = vmatprep.subr.bf16.mxu0 %v5419
        %7741 = vmatpush1.bf16.msra.mxu0 %v5418
        %7742 = vmatprep.subr.bf16.mxu0 %v5421
        %7743 = vmatpush1.bf16.msra.mxu0 %v5420
        %7744 = vmatprep.subr.bf16.mxu0 %v5423
        %7745 = vmatpush1.bf16.msra.mxu0 %v5422
        %7746 = vmatprep.subr.bf16.mxu0 %v5425
        %7747 = vmatpush1.bf16.msra.mxu0 %v5424
        %7748 = vmatprep.subr.bf16.mxu0 %v5427
        %7749 = vmatpush1.bf16.msra.mxu0 %v5426
        %7750 = vmatprep.subr.bf16.mxu0 %v5429
        %7751 = vmatpush1.bf16.msra.mxu0 %v5428
        %7752 = vmatprep.subr.bf16.mxu0 %v5431
        %7753 = vmatpush1.bf16.msra.mxu0 %v5430
        %7754 = vmatprep.subr.bf16.mxu0 %v5433
        %7755 = vmatpush1.bf16.msra.mxu0 %v5432
        %7756 = vmatprep.mubr.bf16.mxu0 %v651
        %7757 = vmatmul.mubr.bf16.gmra.mrb[0].mxu0 %v650
        %v7758 = vpop.f32.mrb[0].mxu0
        %v7759 = vadd.f32 %v7718, %v7758
        %v7760 = vpop.f32.mrb[0].mxu0
        %v7761 = vadd.f32 %v7720, %v7760
        %v7762 = vpop.f32.mrb[0].mxu0
        %v7763 = vpop.f32.mrb[0].mxu0
        %7764 = vdwg.mxu0
        %7765 = vmatprep.subr.bf16.mxu0 %v5435
        %7766 = vmatpush1.bf16.msra.mxu0 %v5434
        %7767 = vmatprep.subr.bf16.mxu0 %v5437
        %7768 = vmatpush1.bf16.msra.mxu0 %v5436
        %7769 = vmatprep.subr.bf16.mxu0 %v5439
        %7770 = vmatpush1.bf16.msra.mxu0 %v5438
        %7771 = vmatprep.subr.bf16.mxu0 %v5441
        %7772 = vmatpush1.bf16.msra.mxu0 %v5440
        %7773 = vmatprep.subr.bf16.mxu0 %v5443
        %7774 = vmatpush1.bf16.msra.mxu0 %v5442
        %7775 = vmatprep.subr.bf16.mxu0 %v5445
        %7776 = vmatpush1.bf16.msra.mxu0 %v5444
        %7777 = vmatprep.subr.bf16.mxu0 %v5447
        %7778 = vmatpush1.bf16.msra.mxu0 %v5446
        %7779 = vmatprep.subr.bf16.mxu0 %v5449
        %7780 = vmatpush1.bf16.msra.mxu0 %v5448
        %7781 = vmatprep.subr.bf16.mxu0 %v5451
        %7782 = vmatpush1.bf16.msra.mxu0 %v5450
        %7783 = vmatprep.subr.bf16.mxu0 %v5453
        %7784 = vmatpush1.bf16.msra.mxu0 %v5452
        %7785 = vmatprep.subr.bf16.mxu0 %v5455
        %7786 = vmatpush1.bf16.msra.mxu0 %v5454
        %7787 = vmatprep.subr.bf16.mxu0 %v5457
        %7788 = vmatpush1.bf16.msra.mxu0 %v5456
        %7789 = vmatprep.subr.bf16.mxu0 %v5459
        %7790 = vmatpush1.bf16.msra.mxu0 %v5458
        %7791 = vmatprep.subr.bf16.mxu0 %v5461
        %7792 = vmatpush1.bf16.msra.mxu0 %v5460
        %7793 = vmatprep.subr.bf16.mxu0 %v5463
        %7794 = vmatpush1.bf16.msra.mxu0 %v5462
        %7795 = vmatprep.subr.bf16.mxu0 %v5465
        %7796 = vmatpush1.bf16.msra.mxu0 %v5464
        %7797 = vmatprep.mubr.bf16.mxu0 %v653
        %7798 = vmatmul.mubr.bf16.gmra.mrb[0].mxu0 %v652
        %v7799 = vpop.f32.mrb[0].mxu0
        %v7800 = vadd.f32 %v7759, %v7799
        %v7801 = vpop.f32.mrb[0].mxu0
        %v7802 = vadd.f32 %v7761, %v7801
        %v7803 = vpop.f32.mrb[0].mxu0
        %v7804 = vpop.f32.mrb[0].mxu0
        %7805 = vdwg.mxu0
        %7806 = vmatprep.subr.bf16.mxu0 %v5467
        %7807 = vmatpush1.bf16.msra.mxu0 %v5466
        %7808 = vmatprep.subr.bf16.mxu0 %v5469
        %7809 = vmatpush1.bf16.msra.mxu0 %v5468
        %7810 = vmatprep.subr.bf16.mxu0 %v5471
        %7811 = vmatpush1.bf16.msra.mxu0 %v5470
        %7812 = vmatprep.subr.bf16.mxu0 %v5473
        %7813 = vmatpush1.bf16.msra.mxu0 %v5472
        %7814 = vmatprep.subr.bf16.mxu0 %v5475
        %7815 = vmatpush1.bf16.msra.mxu0 %v5474
        %7816 = vmatprep.subr.bf16.mxu0 %v5477
        %7817 = vmatpush1.bf16.msra.mxu0 %v5476
        %7818 = vmatprep.subr.bf16.mxu0 %v5479
        %7819 = vmatpush1.bf16.msra.mxu0 %v5478
        %7820 = vmatprep.subr.bf16.mxu0 %v5481
        %7821 = vmatpush1.bf16.msra.mxu0 %v5480
        %7822 = vmatprep.subr.bf16.mxu0 %v5483
        %7823 = vmatpush1.bf16.msra.mxu0 %v5482
        %7824 = vmatprep.subr.bf16.mxu0 %v5485
        %7825 = vmatpush1.bf16.msra.mxu0 %v5484
        %7826 = vmatprep.subr.bf16.mxu0 %v5487
        %7827 = vmatpush1.bf16.msra.mxu0 %v5486
        %7828 = vmatprep.subr.bf16.mxu0 %v5489
        %7829 = vmatpush1.bf16.msra.mxu0 %v5488
        %7830 = vmatprep.subr.bf16.mxu0 %v5491
        %7831 = vmatpush1.bf16.msra.mxu0 %v5490
        %7832 = vmatprep.subr.bf16.mxu0 %v5493
        %7833 = vmatpush1.bf16.msra.mxu0 %v5492
        %7834 = vmatprep.subr.bf16.mxu0 %v5495
        %7835 = vmatpush1.bf16.msra.mxu0 %v5494
        %7836 = vmatprep.subr.bf16.mxu0 %v5497
        %7837 = vmatpush1.bf16.msra.mxu0 %v5496
        %7838 = vmatprep.mubr.bf16.mxu0 %v655
        %7839 = vmatmul.mubr.bf16.gmra.mrb[0].mxu0 %v654
        %v7840 = vpop.f32.mrb[0].mxu0
        %v7841 = vadd.f32 %v7800, %v7840
        %v7842 = vpop.f32.mrb[0].mxu0
        %v7843 = vadd.f32 %v7802, %v7842
        %v7844 = vpop.f32.mrb[0].mxu0
        %v7845 = vpop.f32.mrb[0].mxu0
        %7846 = vdwg.mxu0
        %7847 = vmatprep.subr.bf16.mxu0 %v5499
        %7848 = vmatpush1.bf16.msra.mxu0 %v5498
        %7849 = vmatprep.subr.bf16.mxu0 %v5501
        %7850 = vmatpush1.bf16.msra.mxu0 %v5500
        %7851 = vmatprep.subr.bf16.mxu0 %v5503
        %7852 = vmatpush1.bf16.msra.mxu0 %v5502
        %7853 = vmatprep.subr.bf16.mxu0 %v5505
        %7854 = vmatpush1.bf16.msra.mxu0 %v5504
        %7855 = vmatprep.subr.bf16.mxu0 %v5507
        %7856 = vmatpush1.bf16.msra.mxu0 %v5506
        %7857 = vmatprep.subr.bf16.mxu0 %v5509
        %7858 = vmatpush1.bf16.msra.mxu0 %v5508
        %7859 = vmatprep.subr.bf16.mxu0 %v5511
        %7860 = vmatpush1.bf16.msra.mxu0 %v5510
        %7861 = vmatprep.subr.bf16.mxu0 %v5513
        %7862 = vmatpush1.bf16.msra.mxu0 %v5512
        %7863 = vmatprep.subr.bf16.mxu0 %v5515
        %7864 = vmatpush1.bf16.msra.mxu0 %v5514
        %7865 = vmatprep.subr.bf16.mxu0 %v5517
        %7866 = vmatpush1.bf16.msra.mxu0 %v5516
        %7867 = vmatprep.subr.bf16.mxu0 %v5519
        %7868 = vmatpush1.bf16.msra.mxu0 %v5518
        %7869 = vmatprep.subr.bf16.mxu0 %v5521
        %7870 = vmatpush1.bf16.msra.mxu0 %v5520
        %7871 = vmatprep.subr.bf16.mxu0 %v5523
        %7872 = vmatpush1.bf16.msra.mxu0 %v5522
        %7873 = vmatprep.subr.bf16.mxu0 %v5525
        %7874 = vmatpush1.bf16.msra.mxu0 %v5524
        %7875 = vmatprep.subr.bf16.mxu0 %v5527
        %7876 = vmatpush1.bf16.msra.mxu0 %v5526
        %7877 = vmatprep.subr.bf16.mxu0 %v5529
        %7878 = vmatpush1.bf16.msra.mxu0 %v5528
        %7879 = vmatprep.mubr.bf16.mxu0 %v657
        %7880 = vmatmul.mubr.bf16.gmra.mrb[0].mxu0 %v656
        %v7881 = vpop.f32.mrb[0].mxu0
        %v7882 = vadd.f32 %v7841, %v7881
        %v7883 = vpop.f32.mrb[0].mxu0
        %v7884 = vadd.f32 %v7843, %v7883
        %v7885 = vpop.f32.mrb[0].mxu0
        %v7886 = vpop.f32.mrb[0].mxu0
        %7887 = vdwg.mxu0
        %7888 = vmatprep.subr.bf16.mxu0 %v5531
        %7889 = vmatpush1.bf16.msra.mxu0 %v5530
        %7890 = vmatprep.subr.bf16.mxu0 %v5533
        %7891 = vmatpush1.bf16.msra.mxu0 %v5532
        %7892 = vmatprep.subr.bf16.mxu0 %v5535
        %7893 = vmatpush1.bf16.msra.mxu0 %v5534
        %7894 = vmatprep.subr.bf16.mxu0 %v5537
        %7895 = vmatpush1.bf16.msra.mxu0 %v5536
        %7896 = vmatprep.subr.bf16.mxu0 %v5539
        %7897 = vmatpush1.bf16.msra.mxu0 %v5538
        %7898 = vmatprep.subr.bf16.mxu0 %v5541
        %7899 = vmatpush1.bf16.msra.mxu0 %v5540
        %7900 = vmatprep.subr.bf16.mxu0 %v5543
        %7901 = vmatpush1.bf16.msra.mxu0 %v5542
        %7902 = vmatprep.subr.bf16.mxu0 %v5545
        %7903 = vmatpush1.bf16.msra.mxu0 %v5544
        %7904 = vmatprep.subr.bf16.mxu0 %v5547
        %7905 = vmatpush1.bf16.msra.mxu0 %v5546
        %7906 = vmatprep.subr.bf16.mxu0 %v5549
        %7907 = vmatpush1.bf16.msra.mxu0 %v5548
        %7908 = vmatprep.subr.bf16.mxu0 %v5551
        %7909 = vmatpush1.bf16.msra.mxu0 %v5550
        %7910 = vmatprep.subr.bf16.mxu0 %v5553
        %7911 = vmatpush1.bf16.msra.mxu0 %v5552
        %7912 = vmatprep.subr.bf16.mxu0 %v5555
        %7913 = vmatpush1.bf16.msra.mxu0 %v5554
        %7914 = vmatprep.subr.bf16.mxu0 %v5557
        %7915 = vmatpush1.bf16.msra.mxu0 %v5556
        %7916 = vmatprep.subr.bf16.mxu0 %v5559
        %7917 = vmatpush1.bf16.msra.mxu0 %v5558
        %7918 = vmatprep.subr.bf16.mxu0 %v5561
        %7919 = vmatpush1.bf16.msra.mxu0 %v5560
        %7920 = vmatprep.mubr.bf16.mxu0 %v659
        %7921 = vmatmul.mubr.bf16.gmra.mrb[0].mxu0 %v658
        %v7922 = vpop.f32.mrb[0].mxu0
        %v7923 = vadd.f32 %v7882, %v7922
        %v7924 = vpop.f32.mrb[0].mxu0
        %v7925 = vadd.f32 %v7884, %v7924
        %v7926 = vpop.f32.mrb[0].mxu0
        %v7927 = vpop.f32.mrb[0].mxu0
        %7928 = vdwg.mxu0
        %7929 = vmatprep.subr.bf16.mxu0 %v5563
        %7930 = vmatpush1.bf16.msra.mxu0 %v5562
        %7931 = vmatprep.subr.bf16.mxu0 %v5565
        %7932 = vmatpush1.bf16.msra.mxu0 %v5564
        %7933 = vmatprep.subr.bf16.mxu0 %v5567
        %7934 = vmatpush1.bf16.msra.mxu0 %v5566
        %7935 = vmatprep.subr.bf16.mxu0 %v5569
        %7936 = vmatpush1.bf16.msra.mxu0 %v5568
        %7937 = vmatprep.subr.bf16.mxu0 %v5571
        %7938 = vmatpush1.bf16.msra.mxu0 %v5570
        %7939 = vmatprep.subr.bf16.mxu0 %v5573
        %7940 = vmatpush1.bf16.msra.mxu0 %v5572
        %7941 = vmatprep.subr.bf16.mxu0 %v5575
        %7942 = vmatpush1.bf16.msra.mxu0 %v5574
        %7943 = vmatprep.subr.bf16.mxu0 %v5577
        %7944 = vmatpush1.bf16.msra.mxu0 %v5576
        %7945 = vmatprep.subr.bf16.mxu0 %v5579
        %7946 = vmatpush1.bf16.msra.mxu0 %v5578
        %7947 = vmatprep.subr.bf16.mxu0 %v5581
        %7948 = vmatpush1.bf16.msra.mxu0 %v5580
        %7949 = vmatprep.subr.bf16.mxu0 %v5583
        %7950 = vmatpush1.bf16.msra.mxu0 %v5582
        %7951 = vmatprep.subr.bf16.mxu0 %v5585
        %7952 = vmatpush1.bf16.msra.mxu0 %v5584
        %7953 = vmatprep.subr.bf16.mxu0 %v5587
        %7954 = vmatpush1.bf16.msra.mxu0 %v5586
        %7955 = vmatprep.subr.bf16.mxu0 %v5589
        %7956 = vmatpush1.bf16.msra.mxu0 %v5588
        %7957 = vmatprep.subr.bf16.mxu0 %v5591
        %7958 = vmatpush1.bf16.msra.mxu0 %v5590
        %7959 = vmatprep.subr.bf16.mxu0 %v5593
        %7960 = vmatpush1.bf16.msra.mxu0 %v5592
        %7961 = vmatprep.mubr.bf16.mxu0 %v661
        %7962 = vmatmul.mubr.bf16.gmra.mrb[0].mxu0 %v660
        %v7963 = vpop.f32.mrb[0].mxu0
        %v7964 = vadd.f32 %v7923, %v7963
        %v7965 = vpop.f32.mrb[0].mxu0
        %v7966 = vadd.f32 %v7925, %v7965
        %v7967 = vpop.f32.mrb[0].mxu0
        %v7968 = vpop.f32.mrb[0].mxu0
        %7969 = vdwg.mxu0
        %7970 = vmatprep.subr.bf16.mxu0 %v5595
        %7971 = vmatpush1.bf16.msra.mxu0 %v5594
        %7972 = vmatprep.subr.bf16.mxu0 %v5597
        %7973 = vmatpush1.bf16.msra.mxu0 %v5596
        %7974 = vmatprep.subr.bf16.mxu0 %v5599
        %7975 = vmatpush1.bf16.msra.mxu0 %v5598
        %7976 = vmatprep.subr.bf16.mxu0 %v5601
        %7977 = vmatpush1.bf16.msra.mxu0 %v5600
        %7978 = vmatprep.subr.bf16.mxu0 %v5603
        %7979 = vmatpush1.bf16.msra.mxu0 %v5602
        %7980 = vmatprep.subr.bf16.mxu0 %v5605
        %7981 = vmatpush1.bf16.msra.mxu0 %v5604
        %7982 = vmatprep.subr.bf16.mxu0 %v5607
        %7983 = vmatpush1.bf16.msra.mxu0 %v5606
        %7984 = vmatprep.subr.bf16.mxu0 %v5609
        %7985 = vmatpush1.bf16.msra.mxu0 %v5608
        %7986 = vmatprep.subr.bf16.mxu0 %v5611
        %7987 = vmatpush1.bf16.msra.mxu0 %v5610
        %7988 = vmatprep.subr.bf16.mxu0 %v5613
        %7989 = vmatpush1.bf16.msra.mxu0 %v5612
        %7990 = vmatprep.subr.bf16.mxu0 %v5615
        %7991 = vmatpush1.bf16.msra.mxu0 %v5614
        %7992 = vmatprep.subr.bf16.mxu0 %v5617
        %7993 = vmatpush1.bf16.msra.mxu0 %v5616
        %7994 = vmatprep.subr.bf16.mxu0 %v5619
        %7995 = vmatpush1.bf16.msra.mxu0 %v5618
        %7996 = vmatprep.subr.bf16.mxu0 %v5621
        %7997 = vmatpush1.bf16.msra.mxu0 %v5620
        %7998 = vmatprep.subr.bf16.mxu0 %v5623
        %7999 = vmatpush1.bf16.msra.mxu0 %v5622
        %8000 = vmatprep.subr.bf16.mxu0 %v5625
        %8001 = vmatpush1.bf16.msra.mxu0 %v5624
        %8002 = vmatprep.mubr.bf16.mxu0 %v663
        %8003 = vmatmul.mubr.bf16.gmra.mrb[0].mxu0 %v662
        %v8004 = vpop.f32.mrb[0].mxu0
        %v8005 = vadd.f32 %v7964, %v8004
        %v8006 = vpop.f32.mrb[0].mxu0
        %v8007 = vadd.f32 %v7966, %v8006
        %v8008 = vpop.f32.mrb[0].mxu0
        %v8009 = vpop.f32.mrb[0].mxu0
        %8010 = vdwg.mxu0
        %8011 = vmatprep.subr.bf16.mxu0 %v5627
        %8012 = vmatpush1.bf16.msra.mxu0 %v5626
        %8013 = vmatprep.subr.bf16.mxu0 %v5629
        %8014 = vmatpush1.bf16.msra.mxu0 %v5628
        %8015 = vmatprep.subr.bf16.mxu0 %v5631
        %8016 = vmatpush1.bf16.msra.mxu0 %v5630
        %8017 = vmatprep.subr.bf16.mxu0 %v5633
        %8018 = vmatpush1.bf16.msra.mxu0 %v5632
        %8019 = vmatprep.subr.bf16.mxu0 %v5635
        %8020 = vmatpush1.bf16.msra.mxu0 %v5634
        %8021 = vmatprep.subr.bf16.mxu0 %v5637
        %8022 = vmatpush1.bf16.msra.mxu0 %v5636
        %8023 = vmatprep.subr.bf16.mxu0 %v5639
        %8024 = vmatpush1.bf16.msra.mxu0 %v5638
        %8025 = vmatprep.subr.bf16.mxu0 %v5641
        %8026 = vmatpush1.bf16.msra.mxu0 %v5640
        %8027 = vmatprep.subr.bf16.mxu0 %v5643
        %8028 = vmatpush1.bf16.msra.mxu0 %v5642
        %8029 = vmatprep.subr.bf16.mxu0 %v5645
        %8030 = vmatpush1.bf16.msra.mxu0 %v5644
        %8031 = vmatprep.subr.bf16.mxu0 %v5647
        %8032 = vmatpush1.bf16.msra.mxu0 %v5646
        %8033 = vmatprep.subr.bf16.mxu0 %v5649
        %8034 = vmatpush1.bf16.msra.mxu0 %v5648
        %8035 = vmatprep.subr.bf16.mxu0 %v5651
        %8036 = vmatpush1.bf16.msra.mxu0 %v5650
        %8037 = vmatprep.subr.bf16.mxu0 %v5653
        %8038 = vmatpush1.bf16.msra.mxu0 %v5652
        %8039 = vmatprep.subr.bf16.mxu0 %v5655
        %8040 = vmatpush1.bf16.msra.mxu0 %v5654
        %8041 = vmatprep.subr.bf16.mxu0 %v5657
        %8042 = vmatpush1.bf16.msra.mxu0 %v5656
        %8043 = vmatprep.mubr.bf16.mxu0 %v665
        %8044 = vmatmul.mubr.bf16.gmra.mrb[0].mxu0 %v664
        %v8045 = vpop.f32.mrb[0].mxu0
        %v8046 = vadd.f32 %v8005, %v8045
        %v8047 = vpop.f32.mrb[0].mxu0
        %v8048 = vadd.f32 %v8007, %v8047
        %v8049 = vpop.f32.mrb[0].mxu0
        %v8050 = vpop.f32.mrb[0].mxu0
        %8051 = vdwg.mxu0
        %8052 = vmatprep.subr.bf16.mxu0 %v5659
        %8053 = vmatpush1.bf16.msra.mxu0 %v5658
        %8054 = vmatprep.subr.bf16.mxu0 %v5661
        %8055 = vmatpush1.bf16.msra.mxu0 %v5660
        %8056 = vmatprep.subr.bf16.mxu0 %v5663
        %8057 = vmatpush1.bf16.msra.mxu0 %v5662
        %8058 = vmatprep.subr.bf16.mxu0 %v5665
        %8059 = vmatpush1.bf16.msra.mxu0 %v5664
        %8060 = vmatprep.subr.bf16.mxu0 %v5667
        %8061 = vmatpush1.bf16.msra.mxu0 %v5666
        %8062 = vmatprep.subr.bf16.mxu0 %v5669
        %8063 = vmatpush1.bf16.msra.mxu0 %v5668
        %8064 = vmatprep.subr.bf16.mxu0 %v5671
        %8065 = vmatpush1.bf16.msra.mxu0 %v5670
        %8066 = vmatprep.subr.bf16.mxu0 %v5673
        %8067 = vmatpush1.bf16.msra.mxu0 %v5672
        %8068 = vmatprep.subr.bf16.mxu0 %v5675
        %8069 = vmatpush1.bf16.msra.mxu0 %v5674
        %8070 = vmatprep.subr.bf16.mxu0 %v5677
        %8071 = vmatpush1.bf16.msra.mxu0 %v5676
        %8072 = vmatprep.subr.bf16.mxu0 %v5679
        %8073 = vmatpush1.bf16.msra.mxu0 %v5678
        %8074 = vmatprep.subr.bf16.mxu0 %v5681
        %8075 = vmatpush1.bf16.msra.mxu0 %v5680
        %8076 = vmatprep.subr.bf16.mxu0 %v5683
        %8077 = vmatpush1.bf16.msra.mxu0 %v5682
        %8078 = vmatprep.subr.bf16.mxu0 %v5685
        %8079 = vmatpush1.bf16.msra.mxu0 %v5684
        %8080 = vmatprep.subr.bf16.mxu0 %v5687
        %8081 = vmatpush1.bf16.msra.mxu0 %v5686
        %8082 = vmatprep.subr.bf16.mxu0 %v5689
        %8083 = vmatpush1.bf16.msra.mxu0 %v5688
        %8084 = vmatprep.mubr.bf16.mxu0 %v667
        %8085 = vmatmul.mubr.bf16.gmra.mrb[0].mxu0 %v666
        %v8086 = vpop.f32.mrb[0].mxu0
        %v8087 = vadd.f32 %v8046, %v8086
        %v8088 = vpop.f32.mrb[0].mxu0
        %v8089 = vadd.f32 %v8048, %v8088
        %v8090 = vpop.f32.mrb[0].mxu0
        %v8091 = vpop.f32.mrb[0].mxu0
        %8092 = vdwg.mxu0
        %8093 = vmatprep.subr.bf16.mxu0 %v5691
        %8094 = vmatpush1.bf16.msra.mxu0 %v5690
        %8095 = vmatprep.subr.bf16.mxu0 %v5693
        %8096 = vmatpush1.bf16.msra.mxu0 %v5692
        %8097 = vmatprep.subr.bf16.mxu0 %v5695
        %8098 = vmatpush1.bf16.msra.mxu0 %v5694
        %8099 = vmatprep.subr.bf16.mxu0 %v5697
        %8100 = vmatpush1.bf16.msra.mxu0 %v5696
        %8101 = vmatprep.subr.bf16.mxu0 %v5699
        %8102 = vmatpush1.bf16.msra.mxu0 %v5698
        %8103 = vmatprep.subr.bf16.mxu0 %v5701
        %8104 = vmatpush1.bf16.msra.mxu0 %v5700
        %8105 = vmatprep.subr.bf16.mxu0 %v5703
        %8106 = vmatpush1.bf16.msra.mxu0 %v5702
        %8107 = vmatprep.subr.bf16.mxu0 %v5705
        %8108 = vmatpush1.bf16.msra.mxu0 %v5704
        %8109 = vmatprep.subr.bf16.mxu0 %v5707
        %8110 = vmatpush1.bf16.msra.mxu0 %v5706
        %8111 = vmatprep.subr.bf16.mxu0 %v5709
        %8112 = vmatpush1.bf16.msra.mxu0 %v5708
        %8113 = vmatprep.subr.bf16.mxu0 %v5711
        %8114 = vmatpush1.bf16.msra.mxu0 %v5710
        %8115 = vmatprep.subr.bf16.mxu0 %v5713
        %8116 = vmatpush1.bf16.msra.mxu0 %v5712
        %8117 = vmatprep.subr.bf16.mxu0 %v5715
        %8118 = vmatpush1.bf16.msra.mxu0 %v5714
        %8119 = vmatprep.subr.bf16.mxu0 %v5717
        %8120 = vmatpush1.bf16.msra.mxu0 %v5716
        %8121 = vmatprep.subr.bf16.mxu0 %v5719
        %8122 = vmatpush1.bf16.msra.mxu0 %v5718
        %8123 = vmatprep.subr.bf16.mxu0 %v5721
        %8124 = vmatpush1.bf16.msra.mxu0 %v5720
        %8125 = vmatprep.mubr.bf16.mxu0 %v669
        %8126 = vmatmul.mubr.bf16.gmra.mrb[0].mxu0 %v668
        %v8127 = vpop.f32.mrb[0].mxu0
        %v8128 = vadd.f32 %v8087, %v8127
        %v8129 = vpop.f32.mrb[0].mxu0
        %v8130 = vadd.f32 %v8089, %v8129
        %v8131 = vpop.f32.mrb[0].mxu0
        %v8132 = vpop.f32.mrb[0].mxu0
        %8133 = vdwg.mxu0
        %8134 = vmatprep.subr.bf16.mxu0 %v5723
        %8135 = vmatpush1.bf16.msra.mxu0 %v5722
        %8136 = vmatprep.subr.bf16.mxu0 %v5725
        %8137 = vmatpush1.bf16.msra.mxu0 %v5724
        %8138 = vmatprep.subr.bf16.mxu0 %v5727
        %8139 = vmatpush1.bf16.msra.mxu0 %v5726
        %8140 = vmatprep.subr.bf16.mxu0 %v5729
        %8141 = vmatpush1.bf16.msra.mxu0 %v5728
        %8142 = vmatprep.subr.bf16.mxu0 %v5731
        %8143 = vmatpush1.bf16.msra.mxu0 %v5730
        %8144 = vmatprep.subr.bf16.mxu0 %v5733
        %8145 = vmatpush1.bf16.msra.mxu0 %v5732
        %8146 = vmatprep.subr.bf16.mxu0 %v5735
        %8147 = vmatpush1.bf16.msra.mxu0 %v5734
        %8148 = vmatprep.subr.bf16.mxu0 %v5737
        %8149 = vmatpush1.bf16.msra.mxu0 %v5736
        %8150 = vmatprep.subr.bf16.mxu0 %v5739
        %8151 = vmatpush1.bf16.msra.mxu0 %v5738
        %8152 = vmatprep.subr.bf16.mxu0 %v5741
        %8153 = vmatpush1.bf16.msra.mxu0 %v5740
        %8154 = vmatprep.subr.bf16.mxu0 %v5743
        %8155 = vmatpush1.bf16.msra.mxu0 %v5742
        %8156 = vmatprep.subr.bf16.mxu0 %v5745
        %8157 = vmatpush1.bf16.msra.mxu0 %v5744
        %8158 = vmatprep.subr.bf16.mxu0 %v5747
        %8159 = vmatpush1.bf16.msra.mxu0 %v5746
        %8160 = vmatprep.subr.bf16.mxu0 %v5749
        %8161 = vmatpush1.bf16.msra.mxu0 %v5748
        %8162 = vmatprep.subr.bf16.mxu0 %v5751
        %8163 = vmatpush1.bf16.msra.mxu0 %v5750
        %8164 = vmatprep.subr.bf16.mxu0 %v5753
        %8165 = vmatpush1.bf16.msra.mxu0 %v5752
        %8166 = vmatprep.mubr.bf16.mxu0 %v671
        %8167 = vmatmul.mubr.bf16.gmra.mrb[0].mxu0 %v670
        %v8168 = vpop.f32.mrb[0].mxu0
        %v8169 = vadd.f32 %v8128, %v8168
        %v8170 = vpop.f32.mrb[0].mxu0
        %v8171 = vadd.f32 %v8130, %v8170
        %v8172 = vpop.f32.mrb[0].mxu0
        %v8173 = vpop.f32.mrb[0].mxu0
        %8174 = vdwg.mxu0
        %8175 = vmatprep.subr.bf16.mxu0 %v5755
        %8176 = vmatpush1.bf16.msra.mxu0 %v5754
        %8177 = vmatprep.subr.bf16.mxu0 %v5757
        %8178 = vmatpush1.bf16.msra.mxu0 %v5756
        %8179 = vmatprep.subr.bf16.mxu0 %v5759
        %8180 = vmatpush1.bf16.msra.mxu0 %v5758
        %8181 = vmatprep.subr.bf16.mxu0 %v5761
        %8182 = vmatpush1.bf16.msra.mxu0 %v5760
        %8183 = vmatprep.subr.bf16.mxu0 %v5763
        %8184 = vmatpush1.bf16.msra.mxu0 %v5762
        %8185 = vmatprep.subr.bf16.mxu0 %v5765
        %8186 = vmatpush1.bf16.msra.mxu0 %v5764
        %8187 = vmatprep.subr.bf16.mxu0 %v5767
        %8188 = vmatpush1.bf16.msra.mxu0 %v5766
        %8189 = vmatprep.subr.bf16.mxu0 %v5769
        %8190 = vmatpush1.bf16.msra.mxu0 %v5768
        %8191 = vmatprep.subr.bf16.mxu0 %v5771
        %8192 = vmatpush1.bf16.msra.mxu0 %v5770
        %8193 = vmatprep.subr.bf16.mxu0 %v5773
        %8194 = vmatpush1.bf16.msra.mxu0 %v5772
        %8195 = vmatprep.subr.bf16.mxu0 %v5775
        %8196 = vmatpush1.bf16.msra.mxu0 %v5774
        %8197 = vmatprep.subr.bf16.mxu0 %v5777
        %8198 = vmatpush1.bf16.msra.mxu0 %v5776
        %8199 = vmatprep.subr.bf16.mxu0 %v5779
        %8200 = vmatpush1.bf16.msra.mxu0 %v5778
        %8201 = vmatprep.subr.bf16.mxu0 %v5781
        %8202 = vmatpush1.bf16.msra.mxu0 %v5780
        %8203 = vmatprep.subr.bf16.mxu0 %v5783
        %8204 = vmatpush1.bf16.msra.mxu0 %v5782
        %8205 = vmatprep.subr.bf16.mxu0 %v5785
        %8206 = vmatpush1.bf16.msra.mxu0 %v5784
        %8207 = vmatprep.mubr.bf16.mxu0 %v673
        %8208 = vmatmul.mubr.bf16.gmra.mrb[0].mxu0 %v672
        %v8209 = vpop.f32.mrb[0].mxu0
        %v8210 = vadd.f32 %v8169, %v8209
        %v8211 = vpop.f32.mrb[0].mxu0
        %v8212 = vadd.f32 %v8171, %v8211
        %v8213 = vpop.f32.mrb[0].mxu0
        %v8214 = vpop.f32.mrb[0].mxu0
        %8215 = vdwg.mxu0
        %8216 = vmatprep.subr.bf16.mxu0 %v5787
        %8217 = vmatpush1.bf16.msra.mxu0 %v5786
        %8218 = vmatprep.subr.bf16.mxu0 %v5789
        %8219 = vmatpush1.bf16.msra.mxu0 %v5788
        %8220 = vmatprep.subr.bf16.mxu0 %v5791
        %8221 = vmatpush1.bf16.msra.mxu0 %v5790
        %8222 = vmatprep.subr.bf16.mxu0 %v5793
        %8223 = vmatpush1.bf16.msra.mxu0 %v5792
        %8224 = vmatprep.subr.bf16.mxu0 %v5795
        %8225 = vmatpush1.bf16.msra.mxu0 %v5794
        %8226 = vmatprep.subr.bf16.mxu0 %v5797
        %8227 = vmatpush1.bf16.msra.mxu0 %v5796
        %8228 = vmatprep.subr.bf16.mxu0 %v5799
        %8229 = vmatpush1.bf16.msra.mxu0 %v5798
        %8230 = vmatprep.subr.bf16.mxu0 %v5801
        %8231 = vmatpush1.bf16.msra.mxu0 %v5800
        %8232 = vmatprep.subr.bf16.mxu0 %v5803
        %8233 = vmatpush1.bf16.msra.mxu0 %v5802
        %8234 = vmatprep.subr.bf16.mxu0 %v5805
        %8235 = vmatpush1.bf16.msra.mxu0 %v5804
        %8236 = vmatprep.subr.bf16.mxu0 %v5807
        %8237 = vmatpush1.bf16.msra.mxu0 %v5806
        %8238 = vmatprep.subr.bf16.mxu0 %v5809
        %8239 = vmatpush1.bf16.msra.mxu0 %v5808
        %8240 = vmatprep.subr.bf16.mxu0 %v5811
        %8241 = vmatpush1.bf16.msra.mxu0 %v5810
        %8242 = vmatprep.subr.bf16.mxu0 %v5813
        %8243 = vmatpush1.bf16.msra.mxu0 %v5812
        %8244 = vmatprep.subr.bf16.mxu0 %v5815
        %8245 = vmatpush1.bf16.msra.mxu0 %v5814
        %8246 = vmatprep.subr.bf16.mxu0 %v5817
        %8247 = vmatpush1.bf16.msra.mxu0 %v5816
        %8248 = vmatprep.mubr.bf16.mxu0 %v675
        %8249 = vmatmul.mubr.bf16.gmra.mrb[0].mxu0 %v674
        %v8250 = vpop.f32.mrb[0].mxu0
        %v8251 = vadd.f32 %v8210, %v8250
        %v8252 = vpop.f32.mrb[0].mxu0
        %v8253 = vadd.f32 %v8212, %v8252
        %v8254 = vpop.f32.mrb[0].mxu0
        %v8255 = vpop.f32.mrb[0].mxu0
        %8256 = vdwg.mxu0
        %8257 = vmatprep.subr.bf16.mxu0 %v5819
        %8258 = vmatpush1.bf16.msra.mxu0 %v5818
        %8259 = vmatprep.subr.bf16.mxu0 %v5821
        %8260 = vmatpush1.bf16.msra.mxu0 %v5820
        %8261 = vmatprep.subr.bf16.mxu0 %v5823
        %8262 = vmatpush1.bf16.msra.mxu0 %v5822
        %8263 = vmatprep.subr.bf16.mxu0 %v5825
        %8264 = vmatpush1.bf16.msra.mxu0 %v5824
        %8265 = vmatprep.subr.bf16.mxu0 %v5827
        %8266 = vmatpush1.bf16.msra.mxu0 %v5826
        %8267 = vmatprep.subr.bf16.mxu0 %v5829
        %8268 = vmatpush1.bf16.msra.mxu0 %v5828
        %8269 = vmatprep.subr.bf16.mxu0 %v5831
        %8270 = vmatpush1.bf16.msra.mxu0 %v5830
        %8271 = vmatprep.subr.bf16.mxu0 %v5833
        %8272 = vmatpush1.bf16.msra.mxu0 %v5832
        %8273 = vmatprep.subr.bf16.mxu0 %v5835
        %8274 = vmatpush1.bf16.msra.mxu0 %v5834
        %8275 = vmatprep.subr.bf16.mxu0 %v5837
        %8276 = vmatpush1.bf16.msra.mxu0 %v5836
        %8277 = vmatprep.subr.bf16.mxu0 %v5839
        %8278 = vmatpush1.bf16.msra.mxu0 %v5838
        %8279 = vmatprep.subr.bf16.mxu0 %v5841
        %8280 = vmatpush1.bf16.msra.mxu0 %v5840
        %8281 = vmatprep.subr.bf16.mxu0 %v5843
        %8282 = vmatpush1.bf16.msra.mxu0 %v5842
        %8283 = vmatprep.subr.bf16.mxu0 %v5845
        %8284 = vmatpush1.bf16.msra.mxu0 %v5844
        %8285 = vmatprep.subr.bf16.mxu0 %v5847
        %8286 = vmatpush1.bf16.msra.mxu0 %v5846
        %8287 = vmatprep.subr.bf16.mxu0 %v5849
        %8288 = vmatpush1.bf16.msra.mxu0 %v5848
        %8289 = vmatprep.mubr.bf16.mxu0 %v677
        %8290 = vmatmul.mubr.bf16.gmra.mrb[0].mxu0 %v676
        %v8291 = vpop.f32.mrb[0].mxu0
        %v8292 = vadd.f32 %v8251, %v8291
        %v8293 = vpop.f32.mrb[0].mxu0
        %v8294 = vadd.f32 %v8253, %v8293
        %v8295 = vpop.f32.mrb[0].mxu0
        %v8296 = vpop.f32.mrb[0].mxu0
        %8297 = vdwg.mxu0
        %8298 = vmatprep.subr.bf16.mxu0 %v5851
        %8299 = vmatpush1.bf16.msra.mxu0 %v5850
        %8300 = vmatprep.subr.bf16.mxu0 %v5853
        %8301 = vmatpush1.bf16.msra.mxu0 %v5852
        %8302 = vmatprep.subr.bf16.mxu0 %v5855
        %8303 = vmatpush1.bf16.msra.mxu0 %v5854
        %8304 = vmatprep.subr.bf16.mxu0 %v5857
        %8305 = vmatpush1.bf16.msra.mxu0 %v5856
        %8306 = vmatprep.subr.bf16.mxu0 %v5859
        %8307 = vmatpush1.bf16.msra.mxu0 %v5858
        %8308 = vmatprep.subr.bf16.mxu0 %v5861
        %8309 = vmatpush1.bf16.msra.mxu0 %v5860
        %8310 = vmatprep.subr.bf16.mxu0 %v5863
        %8311 = vmatpush1.bf16.msra.mxu0 %v5862
        %8312 = vmatprep.subr.bf16.mxu0 %v5865
        %8313 = vmatpush1.bf16.msra.mxu0 %v5864
        %8314 = vmatprep.subr.bf16.mxu0 %v5867
        %8315 = vmatpush1.bf16.msra.mxu0 %v5866
        %8316 = vmatprep.subr.bf16.mxu0 %v5869
        %8317 = vmatpush1.bf16.msra.mxu0 %v5868
        %8318 = vmatprep.subr.bf16.mxu0 %v5871
        %8319 = vmatpush1.bf16.msra.mxu0 %v5870
        %8320 = vmatprep.subr.bf16.mxu0 %v5873
        %8321 = vmatpush1.bf16.msra.mxu0 %v5872
        %8322 = vmatprep.subr.bf16.mxu0 %v5875
        %8323 = vmatpush1.bf16.msra.mxu0 %v5874
        %8324 = vmatprep.subr.bf16.mxu0 %v5877
        %8325 = vmatpush1.bf16.msra.mxu0 %v5876
        %8326 = vmatprep.subr.bf16.mxu0 %v5879
        %8327 = vmatpush1.bf16.msra.mxu0 %v5878
        %8328 = vmatprep.subr.bf16.mxu0 %v5881
        %8329 = vmatpush1.bf16.msra.mxu0 %v5880
        %8330 = vmatprep.mubr.bf16.mxu0 %v679
        %8331 = vmatmul.mubr.bf16.gmra.mrb[0].mxu0 %v678
        %v8332 = vpop.f32.mrb[0].mxu0
        %v8333 = vadd.f32 %v8292, %v8332
        %v8334 = vpop.f32.mrb[0].mxu0
        %v8335 = vadd.f32 %v8294, %v8334
        %v8336 = vpop.f32.mrb[0].mxu0
        %v8337 = vpop.f32.mrb[0].mxu0
        %8338 = vdwg.mxu0
        %8339 = vmatprep.subr.bf16.mxu0 %v5883
        %8340 = vmatpush1.bf16.msra.mxu0 %v5882
        %8341 = vmatprep.subr.bf16.mxu0 %v5885
        %8342 = vmatpush1.bf16.msra.mxu0 %v5884
        %8343 = vmatprep.subr.bf16.mxu0 %v5887
        %8344 = vmatpush1.bf16.msra.mxu0 %v5886
        %8345 = vmatprep.subr.bf16.mxu0 %v5889
        %8346 = vmatpush1.bf16.msra.mxu0 %v5888
        %8347 = vmatprep.subr.bf16.mxu0 %v5891
        %8348 = vmatpush1.bf16.msra.mxu0 %v5890
        %8349 = vmatprep.subr.bf16.mxu0 %v5893
        %8350 = vmatpush1.bf16.msra.mxu0 %v5892
        %8351 = vmatprep.subr.bf16.mxu0 %v5895
        %8352 = vmatpush1.bf16.msra.mxu0 %v5894
        %8353 = vmatprep.subr.bf16.mxu0 %v5897
        %8354 = vmatpush1.bf16.msra.mxu0 %v5896
        %8355 = vmatprep.subr.bf16.mxu0 %v5899
        %8356 = vmatpush1.bf16.msra.mxu0 %v5898
        %8357 = vmatprep.subr.bf16.mxu0 %v5901
        %8358 = vmatpush1.bf16.msra.mxu0 %v5900
        %8359 = vmatprep.subr.bf16.mxu0 %v5903
        %8360 = vmatpush1.bf16.msra.mxu0 %v5902
        %8361 = vmatprep.subr.bf16.mxu0 %v5905
        %8362 = vmatpush1.bf16.msra.mxu0 %v5904
        %8363 = vmatprep.subr.bf16.mxu0 %v5907
        %8364 = vmatpush1.bf16.msra.mxu0 %v5906
        %8365 = vmatprep.subr.bf16.mxu0 %v5909
        %8366 = vmatpush1.bf16.msra.mxu0 %v5908
        %8367 = vmatprep.subr.bf16.mxu0 %v5911
        %8368 = vmatpush1.bf16.msra.mxu0 %v5910
        %8369 = vmatprep.subr.bf16.mxu0 %v5913
        %8370 = vmatpush1.bf16.msra.mxu0 %v5912
        %8371 = vmatprep.mubr.bf16.mxu0 %v681
        %8372 = vmatmul.mubr.bf16.gmra.mrb[0].mxu0 %v680
        %v8373 = vpop.f32.mrb[0].mxu0
        %v8374 = vadd.f32 %v8333, %v8373
        %v8375 = vpop.f32.mrb[0].mxu0
        %v8376 = vadd.f32 %v8335, %v8375
        %v8377 = vpop.f32.mrb[0].mxu0
        %v8378 = vpop.f32.mrb[0].mxu0
        %8379 = vdwg.mxu0
        %8380 = vmatprep.subr.bf16.mxu0 %v5915
        %8381 = vmatpush1.bf16.msra.mxu0 %v5914
        %8382 = vmatprep.subr.bf16.mxu0 %v5917
        %8383 = vmatpush1.bf16.msra.mxu0 %v5916
        %8384 = vmatprep.subr.bf16.mxu0 %v5919
        %8385 = vmatpush1.bf16.msra.mxu0 %v5918
        %8386 = vmatprep.subr.bf16.mxu0 %v5921
        %8387 = vmatpush1.bf16.msra.mxu0 %v5920
        %8388 = vmatprep.subr.bf16.mxu0 %v5923
        %8389 = vmatpush1.bf16.msra.mxu0 %v5922
        %8390 = vmatprep.subr.bf16.mxu0 %v5925
        %8391 = vmatpush1.bf16.msra.mxu0 %v5924
        %8392 = vmatprep.subr.bf16.mxu0 %v5927
        %8393 = vmatpush1.bf16.msra.mxu0 %v5926
        %8394 = vmatprep.subr.bf16.mxu0 %v5929
        %8395 = vmatpush1.bf16.msra.mxu0 %v5928
        %8396 = vmatprep.subr.bf16.mxu0 %v5931
        %8397 = vmatpush1.bf16.msra.mxu0 %v5930
        %8398 = vmatprep.subr.bf16.mxu0 %v5933
        %8399 = vmatpush1.bf16.msra.mxu0 %v5932
        %8400 = vmatprep.subr.bf16.mxu0 %v5935
        %8401 = vmatpush1.bf16.msra.mxu0 %v5934
        %8402 = vmatprep.subr.bf16.mxu0 %v5937
        %8403 = vmatpush1.bf16.msra.mxu0 %v5936
        %8404 = vmatprep.subr.bf16.mxu0 %v5939
        %8405 = vmatpush1.bf16.msra.mxu0 %v5938
        %8406 = vmatprep.subr.bf16.mxu0 %v5941
        %8407 = vmatpush1.bf16.msra.mxu0 %v5940
        %8408 = vmatprep.subr.bf16.mxu0 %v5943
        %8409 = vmatpush1.bf16.msra.mxu0 %v5942
        %8410 = vmatprep.subr.bf16.mxu0 %v5945
        %8411 = vmatpush1.bf16.msra.mxu0 %v5944
        %8412 = vmatprep.mubr.bf16.mxu0 %v683
        %8413 = vmatmul.mubr.bf16.gmra.mrb[0].mxu0 %v682
        %v8414 = vpop.f32.mrb[0].mxu0
        %v8415 = vadd.f32 %v8374, %v8414
        %v8416 = vpop.f32.mrb[0].mxu0
        %v8417 = vadd.f32 %v8376, %v8416
        %v8418 = vpop.f32.mrb[0].mxu0
        %v8419 = vpop.f32.mrb[0].mxu0
        %8420 = vdwg.mxu0
        %8421 = vmatprep.subr.bf16.mxu0 %v5947
        %8422 = vmatpush1.bf16.msra.mxu0 %v5946
        %8423 = vmatprep.subr.bf16.mxu0 %v5949
        %8424 = vmatpush1.bf16.msra.mxu0 %v5948
        %8425 = vmatprep.subr.bf16.mxu0 %v5951
        %8426 = vmatpush1.bf16.msra.mxu0 %v5950
        %8427 = vmatprep.subr.bf16.mxu0 %v5953
        %8428 = vmatpush1.bf16.msra.mxu0 %v5952
        %8429 = vmatprep.subr.bf16.mxu0 %v5955
        %8430 = vmatpush1.bf16.msra.mxu0 %v5954
        %8431 = vmatprep.subr.bf16.mxu0 %v5957
        %8432 = vmatpush1.bf16.msra.mxu0 %v5956
        %8433 = vmatprep.subr.bf16.mxu0 %v5959
        %8434 = vmatpush1.bf16.msra.mxu0 %v5958
        %8435 = vmatprep.subr.bf16.mxu0 %v5961
        %8436 = vmatpush1.bf16.msra.mxu0 %v5960
        %8437 = vmatprep.subr.bf16.mxu0 %v5963
        %8438 = vmatpush1.bf16.msra.mxu0 %v5962
        %8439 = vmatprep.subr.bf16.mxu0 %v5965
        %8440 = vmatpush1.bf16.msra.mxu0 %v5964
        %8441 = vmatprep.subr.bf16.mxu0 %v5967
        %8442 = vmatpush1.bf16.msra.mxu0 %v5966
        %8443 = vmatprep.subr.bf16.mxu0 %v5969
        %8444 = vmatpush1.bf16.msra.mxu0 %v5968
        %8445 = vmatprep.subr.bf16.mxu0 %v5971
        %8446 = vmatpush1.bf16.msra.mxu0 %v5970
        %8447 = vmatprep.subr.bf16.mxu0 %v5973
        %8448 = vmatpush1.bf16.msra.mxu0 %v5972
        %8449 = vmatprep.subr.bf16.mxu0 %v5975
        %8450 = vmatpush1.bf16.msra.mxu0 %v5974
        %8451 = vmatprep.subr.bf16.mxu0 %v5977
        %8452 = vmatpush1.bf16.msra.mxu0 %v5976
        %8453 = vmatprep.mubr.bf16.mxu0 %v685
        %8454 = vmatmul.mubr.bf16.gmra.mrb[0].mxu0 %v684
        %v8455 = vpop.f32.mrb[0].mxu0
        %v8456 = vadd.f32 %v8415, %v8455
        %v8457 = vpop.f32.mrb[0].mxu0
        %v8458 = vadd.f32 %v8417, %v8457
        %v8459 = vpop.f32.mrb[0].mxu0
        %v8460 = vpop.f32.mrb[0].mxu0
        %8461 = vdwg.mxu0
        %8462 = vmatprep.subr.bf16.mxu0 %v5979
        %8463 = vmatpush1.bf16.msra.mxu0 %v5978
        %8464 = vmatprep.subr.bf16.mxu0 %v5981
        %8465 = vmatpush1.bf16.msra.mxu0 %v5980
        %8466 = vmatprep.subr.bf16.mxu0 %v5983
        %8467 = vmatpush1.bf16.msra.mxu0 %v5982
        %8468 = vmatprep.subr.bf16.mxu0 %v5985
        %8469 = vmatpush1.bf16.msra.mxu0 %v5984
        %8470 = vmatprep.subr.bf16.mxu0 %v5987
        %8471 = vmatpush1.bf16.msra.mxu0 %v5986
        %8472 = vmatprep.subr.bf16.mxu0 %v5989
        %8473 = vmatpush1.bf16.msra.mxu0 %v5988
        %8474 = vmatprep.subr.bf16.mxu0 %v5991
        %8475 = vmatpush1.bf16.msra.mxu0 %v5990
        %8476 = vmatprep.subr.bf16.mxu0 %v5993
        %8477 = vmatpush1.bf16.msra.mxu0 %v5992
        %8478 = vmatprep.subr.bf16.mxu0 %v5995
        %8479 = vmatpush1.bf16.msra.mxu0 %v5994
        %8480 = vmatprep.subr.bf16.mxu0 %v5997
        %8481 = vmatpush1.bf16.msra.mxu0 %v5996
        %8482 = vmatprep.subr.bf16.mxu0 %v5999
        %8483 = vmatpush1.bf16.msra.mxu0 %v5998
        %8484 = vmatprep.subr.bf16.mxu0 %v6001
        %8485 = vmatpush1.bf16.msra.mxu0 %v6000
        %8486 = vmatprep.subr.bf16.mxu0 %v6003
        %8487 = vmatpush1.bf16.msra.mxu0 %v6002
        %8488 = vmatprep.subr.bf16.mxu0 %v6005
        %8489 = vmatpush1.bf16.msra.mxu0 %v6004
        %8490 = vmatprep.subr.bf16.mxu0 %v6007
        %8491 = vmatpush1.bf16.msra.mxu0 %v6006
        %8492 = vmatprep.subr.bf16.mxu0 %v6009
        %8493 = vmatpush1.bf16.msra.mxu0 %v6008
        %8494 = vmatprep.mubr.bf16.mxu0 %v687
        %8495 = vmatmul.mubr.bf16.gmra.mrb[0].mxu0 %v686
        %v8496 = vpop.f32.mrb[0].mxu0
        %v8497 = vadd.f32 %v8456, %v8496
        %v8498 = vpop.f32.mrb[0].mxu0
        %v8499 = vadd.f32 %v8458, %v8498
        %v8500 = vpop.f32.mrb[0].mxu0
        %v8501 = vpop.f32.mrb[0].mxu0
        %8502 = vdwg.mxu0
        %8503 = vmatprep.subr.bf16.mxu0 %v6011
        %8504 = vmatpush1.bf16.msra.mxu0 %v6010
        %8505 = vmatprep.subr.bf16.mxu0 %v6013
        %8506 = vmatpush1.bf16.msra.mxu0 %v6012
        %8507 = vmatprep.subr.bf16.mxu0 %v6015
        %8508 = vmatpush1.bf16.msra.mxu0 %v6014
        %8509 = vmatprep.subr.bf16.mxu0 %v6017
        %8510 = vmatpush1.bf16.msra.mxu0 %v6016
        %8511 = vmatprep.subr.bf16.mxu0 %v6019
        %8512 = vmatpush1.bf16.msra.mxu0 %v6018
        %8513 = vmatprep.subr.bf16.mxu0 %v6021
        %8514 = vmatpush1.bf16.msra.mxu0 %v6020
        %8515 = vmatprep.subr.bf16.mxu0 %v6023
        %8516 = vmatpush1.bf16.msra.mxu0 %v6022
        %8517 = vmatprep.subr.bf16.mxu0 %v6025
        %8518 = vmatpush1.bf16.msra.mxu0 %v6024
        %8519 = vmatprep.subr.bf16.mxu0 %v6027
        %8520 = vmatpush1.bf16.msra.mxu0 %v6026
        %8521 = vmatprep.subr.bf16.mxu0 %v6029
        %8522 = vmatpush1.bf16.msra.mxu0 %v6028
        %8523 = vmatprep.subr.bf16.mxu0 %v6031
        %8524 = vmatpush1.bf16.msra.mxu0 %v6030
        %8525 = vmatprep.subr.bf16.mxu0 %v6033
        %8526 = vmatpush1.bf16.msra.mxu0 %v6032
        %8527 = vmatprep.subr.bf16.mxu0 %v6035
        %8528 = vmatpush1.bf16.msra.mxu0 %v6034
        %8529 = vmatprep.subr.bf16.mxu0 %v6037
        %8530 = vmatpush1.bf16.msra.mxu0 %v6036
        %8531 = vmatprep.subr.bf16.mxu0 %v6039
        %8532 = vmatpush1.bf16.msra.mxu0 %v6038
        %8533 = vmatprep.subr.bf16.mxu0 %v6041
        %8534 = vmatpush1.bf16.msra.mxu0 %v6040
        %8535 = vmatprep.mubr.bf16.mxu0 %v689
        %8536 = vmatmul.mubr.bf16.gmra.mrb[0].mxu0 %v688
        %v8537 = vpop.f32.mrb[0].mxu0
        %v8538 = vadd.f32 %v8497, %v8537
        %v8539 = vpop.f32.mrb[0].mxu0
        %v8540 = vadd.f32 %v8499, %v8539
        %v8541 = vpop.f32.mrb[0].mxu0
        %v8542 = vpop.f32.mrb[0].mxu0
        %8543 = vdwg.mxu0
        %8544 = vmatprep.subr.bf16.mxu0 %v6043
        %8545 = vmatpush1.bf16.msra.mxu0 %v6042
        %8546 = vmatprep.subr.bf16.mxu0 %v6045
        %8547 = vmatpush1.bf16.msra.mxu0 %v6044
        %8548 = vmatprep.subr.bf16.mxu0 %v6047
        %8549 = vmatpush1.bf16.msra.mxu0 %v6046
        %8550 = vmatprep.subr.bf16.mxu0 %v6049
        %8551 = vmatpush1.bf16.msra.mxu0 %v6048
        %8552 = vmatprep.subr.bf16.mxu0 %v6051
        %8553 = vmatpush1.bf16.msra.mxu0 %v6050
        %8554 = vmatprep.subr.bf16.mxu0 %v6053
        %8555 = vmatpush1.bf16.msra.mxu0 %v6052
        %8556 = vmatprep.subr.bf16.mxu0 %v6055
        %8557 = vmatpush1.bf16.msra.mxu0 %v6054
        %8558 = vmatprep.subr.bf16.mxu0 %v6057
        %8559 = vmatpush1.bf16.msra.mxu0 %v6056
        %8560 = vmatprep.subr.bf16.mxu0 %v6059
        %8561 = vmatpush1.bf16.msra.mxu0 %v6058
        %8562 = vmatprep.subr.bf16.mxu0 %v6061
        %8563 = vmatpush1.bf16.msra.mxu0 %v6060
        %8564 = vmatprep.subr.bf16.mxu0 %v6063
        %8565 = vmatpush1.bf16.msra.mxu0 %v6062
        %8566 = vmatprep.subr.bf16.mxu0 %v6065
        %8567 = vmatpush1.bf16.msra.mxu0 %v6064
        %8568 = vmatprep.subr.bf16.mxu0 %v6067
        %8569 = vmatpush1.bf16.msra.mxu0 %v6066
        %8570 = vmatprep.subr.bf16.mxu0 %v6069
        %8571 = vmatpush1.bf16.msra.mxu0 %v6068
        %8572 = vmatprep.subr.bf16.mxu0 %v6071
        %8573 = vmatpush1.bf16.msra.mxu0 %v6070
        %8574 = vmatprep.subr.bf16.mxu0 %v6073
        %8575 = vmatpush1.bf16.msra.mxu0 %v6072
        %8576 = vmatprep.mubr.bf16.mxu0 %v691
        %8577 = vmatmul.mubr.bf16.gmra.mrb[0].mxu0 %v690
        %v8578 = vpop.f32.mrb[0].mxu0
        %v8579 = vadd.f32 %v8538, %v8578
        %v8580 = vpop.f32.mrb[0].mxu0
        %v8581 = vadd.f32 %v8540, %v8580
        %v8582 = vpop.f32.mrb[0].mxu0
        %v8583 = vpop.f32.mrb[0].mxu0
        %8584 = vdwg.mxu0
        %8585 = vmatprep.subr.bf16.mxu0 %v6075
        %8586 = vmatpush1.bf16.msra.mxu0 %v6074
        %8587 = vmatprep.subr.bf16.mxu0 %v6077
        %8588 = vmatpush1.bf16.msra.mxu0 %v6076
        %8589 = vmatprep.subr.bf16.mxu0 %v6079
        %8590 = vmatpush1.bf16.msra.mxu0 %v6078
        %8591 = vmatprep.subr.bf16.mxu0 %v6081
        %8592 = vmatpush1.bf16.msra.mxu0 %v6080
        %8593 = vmatprep.subr.bf16.mxu0 %v6083
        %8594 = vmatpush1.bf16.msra.mxu0 %v6082
        %8595 = vmatprep.subr.bf16.mxu0 %v6085
        %8596 = vmatpush1.bf16.msra.mxu0 %v6084
        %8597 = vmatprep.subr.bf16.mxu0 %v6087
        %8598 = vmatpush1.bf16.msra.mxu0 %v6086
        %8599 = vmatprep.subr.bf16.mxu0 %v6089
        %8600 = vmatpush1.bf16.msra.mxu0 %v6088
        %8601 = vmatprep.subr.bf16.mxu0 %v6091
        %8602 = vmatpush1.bf16.msra.mxu0 %v6090
        %8603 = vmatprep.subr.bf16.mxu0 %v6093
        %8604 = vmatpush1.bf16.msra.mxu0 %v6092
        %8605 = vmatprep.subr.bf16.mxu0 %v6095
        %8606 = vmatpush1.bf16.msra.mxu0 %v6094
        %8607 = vmatprep.subr.bf16.mxu0 %v6097
        %8608 = vmatpush1.bf16.msra.mxu0 %v6096
        %8609 = vmatprep.subr.bf16.mxu0 %v6099
        %8610 = vmatpush1.bf16.msra.mxu0 %v6098
        %8611 = vmatprep.subr.bf16.mxu0 %v6101
        %8612 = vmatpush1.bf16.msra.mxu0 %v6100
        %8613 = vmatprep.subr.bf16.mxu0 %v6103
        %8614 = vmatpush1.bf16.msra.mxu0 %v6102
        %8615 = vmatprep.subr.bf16.mxu0 %v6105
        %8616 = vmatpush1.bf16.msra.mxu0 %v6104
        %8617 = vmatprep.mubr.bf16.mxu0 %v693
        %8618 = vmatmul.mubr.bf16.gmra.mrb[0].mxu0 %v692
        %v8619 = vpop.f32.mrb[0].mxu0
        %v8620 = vadd.f32 %v8579, %v8619
        %v8621 = vpop.f32.mrb[0].mxu0
        %v8622 = vadd.f32 %v8581, %v8621
        %v8623 = vpop.f32.mrb[0].mxu0
        %v8624 = vpop.f32.mrb[0].mxu0
        %8625 = vdwg.mxu0
        %8626 = vmatprep.subr.bf16.mxu0 %v6107
        %8627 = vmatpush1.bf16.msra.mxu0 %v6106
        %8628 = vmatprep.subr.bf16.mxu0 %v6109
        %8629 = vmatpush1.bf16.msra.mxu0 %v6108
        %8630 = vmatprep.subr.bf16.mxu0 %v6111
        %8631 = vmatpush1.bf16.msra.mxu0 %v6110
        %8632 = vmatprep.subr.bf16.mxu0 %v6113
        %8633 = vmatpush1.bf16.msra.mxu0 %v6112
        %8634 = vmatprep.subr.bf16.mxu0 %v6115
        %8635 = vmatpush1.bf16.msra.mxu0 %v6114
        %8636 = vmatprep.subr.bf16.mxu0 %v6117
        %8637 = vmatpush1.bf16.msra.mxu0 %v6116
        %8638 = vmatprep.subr.bf16.mxu0 %v6119
        %8639 = vmatpush1.bf16.msra.mxu0 %v6118
        %8640 = vmatprep.subr.bf16.mxu0 %v6121
        %8641 = vmatpush1.bf16.msra.mxu0 %v6120
        %8642 = vmatprep.subr.bf16.mxu0 %v6123
        %8643 = vmatpush1.bf16.msra.mxu0 %v6122
        %8644 = vmatprep.subr.bf16.mxu0 %v6125
        %8645 = vmatpush1.bf16.msra.mxu0 %v6124
        %8646 = vmatprep.subr.bf16.mxu0 %v6127
        %8647 = vmatpush1.bf16.msra.mxu0 %v6126
        %8648 = vmatprep.subr.bf16.mxu0 %v6129
        %8649 = vmatpush1.bf16.msra.mxu0 %v6128
        %8650 = vmatprep.subr.bf16.mxu0 %v6131
        %8651 = vmatpush1.bf16.msra.mxu0 %v6130
        %8652 = vmatprep.subr.bf16.mxu0 %v6133
        %8653 = vmatpush1.bf16.msra.mxu0 %v6132
        %8654 = vmatprep.subr.bf16.mxu0 %v6135
        %8655 = vmatpush1.bf16.msra.mxu0 %v6134
        %8656 = vmatprep.subr.bf16.mxu0 %v6137
        %8657 = vmatpush1.bf16.msra.mxu0 %v6136
        %8658 = vmatprep.mubr.bf16.mxu0 %v695
        %8659 = vmatmul.mubr.bf16.gmra.mrb[0].mxu0 %v694
        %v8660 = vpop.f32.mrb[0].mxu0
        %v8661 = vadd.f32 %v8620, %v8660
        %v8662 = vpop.f32.mrb[0].mxu0
        %v8663 = vadd.f32 %v8622, %v8662
        %v8664 = vpop.f32.mrb[0].mxu0
        %v8665 = vpop.f32.mrb[0].mxu0
        %8666 = vdwg.mxu0
        %8667 = vmatprep.subr.bf16.mxu0 %v6139
        %8668 = vmatpush1.bf16.msra.mxu0 %v6138
        %8669 = vmatprep.subr.bf16.mxu0 %v6141
        %8670 = vmatpush1.bf16.msra.mxu0 %v6140
        %8671 = vmatprep.subr.bf16.mxu0 %v6143
        %8672 = vmatpush1.bf16.msra.mxu0 %v6142
        %8673 = vmatprep.subr.bf16.mxu0 %v6145
        %8674 = vmatpush1.bf16.msra.mxu0 %v6144
        %8675 = vmatprep.subr.bf16.mxu0 %v6147
        %8676 = vmatpush1.bf16.msra.mxu0 %v6146
        %8677 = vmatprep.subr.bf16.mxu0 %v6149
        %8678 = vmatpush1.bf16.msra.mxu0 %v6148
        %8679 = vmatprep.subr.bf16.mxu0 %v6151
        %8680 = vmatpush1.bf16.msra.mxu0 %v6150
        %8681 = vmatprep.subr.bf16.mxu0 %v6153
        %8682 = vmatpush1.bf16.msra.mxu0 %v6152
        %8683 = vmatprep.subr.bf16.mxu0 %v6155
        %8684 = vmatpush1.bf16.msra.mxu0 %v6154
        %8685 = vmatprep.subr.bf16.mxu0 %v6157
        %8686 = vmatpush1.bf16.msra.mxu0 %v6156
        %8687 = vmatprep.subr.bf16.mxu0 %v6159
        %8688 = vmatpush1.bf16.msra.mxu0 %v6158
        %8689 = vmatprep.subr.bf16.mxu0 %v6161
        %8690 = vmatpush1.bf16.msra.mxu0 %v6160
        %8691 = vmatprep.subr.bf16.mxu0 %v6163
        %8692 = vmatpush1.bf16.msra.mxu0 %v6162
        %8693 = vmatprep.subr.bf16.mxu0 %v6165
        %8694 = vmatpush1.bf16.msra.mxu0 %v6164
        %8695 = vmatprep.subr.bf16.mxu0 %v6167
        %8696 = vmatpush1.bf16.msra.mxu0 %v6166
        %8697 = vmatprep.subr.bf16.mxu0 %v6169
        %8698 = vmatpush1.bf16.msra.mxu0 %v6168
        %8699 = vmatprep.mubr.bf16.mxu0 %v697
        %8700 = vmatmul.mubr.bf16.gmra.mrb[0].mxu0 %v696
        %v8701 = vpop.f32.mrb[0].mxu0
        %v8702 = vadd.f32 %v8661, %v8701
        %v8703 = vpop.f32.mrb[0].mxu0
        %v8704 = vadd.f32 %v8663, %v8703
        %v8705 = vpop.f32.mrb[0].mxu0
        %v8706 = vpop.f32.mrb[0].mxu0
        %8707 = vdwg.mxu0
        %8708 = vmatprep.subr.bf16.mxu0 %v6171
        %8709 = vmatpush1.bf16.msra.mxu0 %v6170
        %8710 = vmatprep.subr.bf16.mxu0 %v6173
        %8711 = vmatpush1.bf16.msra.mxu0 %v6172
        %8712 = vmatprep.subr.bf16.mxu0 %v6175
        %8713 = vmatpush1.bf16.msra.mxu0 %v6174
        %8714 = vmatprep.subr.bf16.mxu0 %v6177
        %8715 = vmatpush1.bf16.msra.mxu0 %v6176
        %8716 = vmatprep.subr.bf16.mxu0 %v6179
        %8717 = vmatpush1.bf16.msra.mxu0 %v6178
        %8718 = vmatprep.subr.bf16.mxu0 %v6181
        %8719 = vmatpush1.bf16.msra.mxu0 %v6180
        %8720 = vmatprep.subr.bf16.mxu0 %v6183
        %8721 = vmatpush1.bf16.msra.mxu0 %v6182
        %8722 = vmatprep.subr.bf16.mxu0 %v6185
        %8723 = vmatpush1.bf16.msra.mxu0 %v6184
        %8724 = vmatprep.subr.bf16.mxu0 %v6187
        %8725 = vmatpush1.bf16.msra.mxu0 %v6186
        %8726 = vmatprep.subr.bf16.mxu0 %v6189
        %8727 = vmatpush1.bf16.msra.mxu0 %v6188
        %8728 = vmatprep.subr.bf16.mxu0 %v6191
        %8729 = vmatpush1.bf16.msra.mxu0 %v6190
        %8730 = vmatprep.subr.bf16.mxu0 %v6193
        %8731 = vmatpush1.bf16.msra.mxu0 %v6192
        %8732 = vmatprep.subr.bf16.mxu0 %v6195
        %8733 = vmatpush1.bf16.msra.mxu0 %v6194
        %8734 = vmatprep.subr.bf16.mxu0 %v6197
        %8735 = vmatpush1.bf16.msra.mxu0 %v6196
        %8736 = vmatprep.subr.bf16.mxu0 %v6199
        %8737 = vmatpush1.bf16.msra.mxu0 %v6198
        %8738 = vmatprep.subr.bf16.mxu0 %v6201
        %8739 = vmatpush1.bf16.msra.mxu0 %v6200
        %8740 = vmatprep.mubr.bf16.mxu0 %v699
        %8741 = vmatmul.mubr.bf16.gmra.mrb[0].mxu0 %v698
        %v8742 = vpop.f32.mrb[0].mxu0
        %v8743 = vadd.f32 %v8702, %v8742
        %v8744 = vpop.f32.mrb[0].mxu0
        %v8745 = vadd.f32 %v8704, %v8744
        %v8746 = vpop.f32.mrb[0].mxu0
        %v8747 = vpop.f32.mrb[0].mxu0
        %8748 = vdwg.mxu0
        %8749 = vmatprep.subr.bf16.mxu0 %v6203
        %8750 = vmatpush1.bf16.msra.mxu0 %v6202
        %8751 = vmatprep.subr.bf16.mxu0 %v6205
        %8752 = vmatpush1.bf16.msra.mxu0 %v6204
        %8753 = vmatprep.subr.bf16.mxu0 %v6207
        %8754 = vmatpush1.bf16.msra.mxu0 %v6206
        %8755 = vmatprep.subr.bf16.mxu0 %v6209
        %8756 = vmatpush1.bf16.msra.mxu0 %v6208
        %8757 = vmatprep.subr.bf16.mxu0 %v6211
        %8758 = vmatpush1.bf16.msra.mxu0 %v6210
        %8759 = vmatprep.subr.bf16.mxu0 %v6213
        %8760 = vmatpush1.bf16.msra.mxu0 %v6212
        %8761 = vmatprep.subr.bf16.mxu0 %v6215
        %8762 = vmatpush1.bf16.msra.mxu0 %v6214
        %8763 = vmatprep.subr.bf16.mxu0 %v6217
        %8764 = vmatpush1.bf16.msra.mxu0 %v6216
        %8765 = vmatprep.subr.bf16.mxu0 %v6219
        %8766 = vmatpush1.bf16.msra.mxu0 %v6218
        %8767 = vmatprep.subr.bf16.mxu0 %v6221
        %8768 = vmatpush1.bf16.msra.mxu0 %v6220
        %8769 = vmatprep.subr.bf16.mxu0 %v6223
        %8770 = vmatpush1.bf16.msra.mxu0 %v6222
        %8771 = vmatprep.subr.bf16.mxu0 %v6225
        %8772 = vmatpush1.bf16.msra.mxu0 %v6224
        %8773 = vmatprep.subr.bf16.mxu0 %v6227
        %8774 = vmatpush1.bf16.msra.mxu0 %v6226
        %8775 = vmatprep.subr.bf16.mxu0 %v6229
        %8776 = vmatpush1.bf16.msra.mxu0 %v6228
        %8777 = vmatprep.subr.bf16.mxu0 %v6231
        %8778 = vmatpush1.bf16.msra.mxu0 %v6230
        %8779 = vmatprep.subr.bf16.mxu0 %v6233
        %8780 = vmatpush1.bf16.msra.mxu0 %v6232
        %8781 = vmatprep.mubr.bf16.mxu0 %v701
        %8782 = vmatmul.mubr.bf16.gmra.mrb[0].mxu0 %v700
        %v8783 = vpop.f32.mrb[0].mxu0
        %v8784 = vadd.f32 %v8743, %v8783
        %v8785 = vpop.f32.mrb[0].mxu0
        %v8786 = vadd.f32 %v8745, %v8785
        %v8787 = vpop.f32.mrb[0].mxu0
        %v8788 = vpop.f32.mrb[0].mxu0
        %8789 = vdwg.mxu0
        %8790 = vmatprep.subr.bf16.mxu0 %v6235
        %8791 = vmatpush1.bf16.msra.mxu0 %v6234
        %8792 = vmatprep.subr.bf16.mxu0 %v6237
        %8793 = vmatpush1.bf16.msra.mxu0 %v6236
        %8794 = vmatprep.subr.bf16.mxu0 %v6239
        %8795 = vmatpush1.bf16.msra.mxu0 %v6238
        %8796 = vmatprep.subr.bf16.mxu0 %v6241
        %8797 = vmatpush1.bf16.msra.mxu0 %v6240
        %8798 = vmatprep.subr.bf16.mxu0 %v6243
        %8799 = vmatpush1.bf16.msra.mxu0 %v6242
        %8800 = vmatprep.subr.bf16.mxu0 %v6245
        %8801 = vmatpush1.bf16.msra.mxu0 %v6244
        %8802 = vmatprep.subr.bf16.mxu0 %v6247
        %8803 = vmatpush1.bf16.msra.mxu0 %v6246
        %8804 = vmatprep.subr.bf16.mxu0 %v6249
        %8805 = vmatpush1.bf16.msra.mxu0 %v6248
        %8806 = vmatprep.subr.bf16.mxu0 %v6251
        %8807 = vmatpush1.bf16.msra.mxu0 %v6250
        %8808 = vmatprep.subr.bf16.mxu0 %v6253
        %8809 = vmatpush1.bf16.msra.mxu0 %v6252
        %8810 = vmatprep.subr.bf16.mxu0 %v6255
        %8811 = vmatpush1.bf16.msra.mxu0 %v6254
        %8812 = vmatprep.subr.bf16.mxu0 %v6257
        %8813 = vmatpush1.bf16.msra.mxu0 %v6256
        %8814 = vmatprep.subr.bf16.mxu0 %v6259
        %8815 = vmatpush1.bf16.msra.mxu0 %v6258
        %8816 = vmatprep.subr.bf16.mxu0 %v6261
        %8817 = vmatpush1.bf16.msra.mxu0 %v6260
        %8818 = vmatprep.subr.bf16.mxu0 %v6263
        %8819 = vmatpush1.bf16.msra.mxu0 %v6262
        %8820 = vmatprep.subr.bf16.mxu0 %v6265
        %8821 = vmatpush1.bf16.msra.mxu0 %v6264
        %8822 = vmatprep.mubr.bf16.mxu0 %v703
        %8823 = vmatmul.mubr.bf16.gmra.mrb[0].mxu0 %v702
        %v8824 = vpop.f32.mrb[0].mxu0
        %v8825 = vadd.f32 %v8784, %v8824
        %v8826 = vpop.f32.mrb[0].mxu0
        %v8827 = vadd.f32 %v8786, %v8826
        %v8828 = vpop.f32.mrb[0].mxu0
        %v8829 = vpop.f32.mrb[0].mxu0
        %8830 = vdwg.mxu0
        %8831 = vmatprep.subr.bf16.mxu0 %v6267
        %8832 = vmatpush1.bf16.msra.mxu0 %v6266
        %8833 = vmatprep.subr.bf16.mxu0 %v6269
        %8834 = vmatpush1.bf16.msra.mxu0 %v6268
        %8835 = vmatprep.subr.bf16.mxu0 %v6271
        %8836 = vmatpush1.bf16.msra.mxu0 %v6270
        %8837 = vmatprep.subr.bf16.mxu0 %v6273
        %8838 = vmatpush1.bf16.msra.mxu0 %v6272
        %8839 = vmatprep.subr.bf16.mxu0 %v6275
        %8840 = vmatpush1.bf16.msra.mxu0 %v6274
        %8841 = vmatprep.subr.bf16.mxu0 %v6277
        %8842 = vmatpush1.bf16.msra.mxu0 %v6276
        %8843 = vmatprep.subr.bf16.mxu0 %v6279
        %8844 = vmatpush1.bf16.msra.mxu0 %v6278
        %8845 = vmatprep.subr.bf16.mxu0 %v6281
        %8846 = vmatpush1.bf16.msra.mxu0 %v6280
        %8847 = vmatprep.subr.bf16.mxu0 %v6283
        %8848 = vmatpush1.bf16.msra.mxu0 %v6282
        %8849 = vmatprep.subr.bf16.mxu0 %v6285
        %8850 = vmatpush1.bf16.msra.mxu0 %v6284
        %8851 = vmatprep.subr.bf16.mxu0 %v6287
        %8852 = vmatpush1.bf16.msra.mxu0 %v6286
        %8853 = vmatprep.subr.bf16.mxu0 %v6289
        %8854 = vmatpush1.bf16.msra.mxu0 %v6288
        %8855 = vmatprep.subr.bf16.mxu0 %v6291
        %8856 = vmatpush1.bf16.msra.mxu0 %v6290
        %8857 = vmatprep.subr.bf16.mxu0 %v6293
        %8858 = vmatpush1.bf16.msra.mxu0 %v6292
        %8859 = vmatprep.subr.bf16.mxu0 %v6295
        %8860 = vmatpush1.bf16.msra.mxu0 %v6294
        %8861 = vmatprep.subr.bf16.mxu0 %v6297
        %8862 = vmatpush1.bf16.msra.mxu0 %v6296
        %8863 = vmatprep.mubr.bf16.mxu0 %v705
        %8864 = vmatmul.mubr.bf16.gmra.mrb[0].mxu0 %v704
        %v8865 = vpop.f32.mrb[0].mxu0
        %v8866 = vadd.f32 %v8825, %v8865
        %v8867 = vpop.f32.mrb[0].mxu0
        %v8868 = vadd.f32 %v8827, %v8867
        %v8869 = vpop.f32.mrb[0].mxu0
        %v8870 = vpop.f32.mrb[0].mxu0
        %8871 = vdwg.mxu0
        %8872 = vmatprep.subr.bf16.mxu0 %v6299
        %8873 = vmatpush1.bf16.msra.mxu0 %v6298
        %8874 = vmatprep.subr.bf16.mxu0 %v6301
        %8875 = vmatpush1.bf16.msra.mxu0 %v6300
        %8876 = vmatprep.subr.bf16.mxu0 %v6303
        %8877 = vmatpush1.bf16.msra.mxu0 %v6302
        %8878 = vmatprep.subr.bf16.mxu0 %v6305
        %8879 = vmatpush1.bf16.msra.mxu0 %v6304
        %8880 = vmatprep.subr.bf16.mxu0 %v6307
        %8881 = vmatpush1.bf16.msra.mxu0 %v6306
        %8882 = vmatprep.subr.bf16.mxu0 %v6309
        %8883 = vmatpush1.bf16.msra.mxu0 %v6308
        %8884 = vmatprep.subr.bf16.mxu0 %v6311
        %8885 = vmatpush1.bf16.msra.mxu0 %v6310
        %8886 = vmatprep.subr.bf16.mxu0 %v6313
        %8887 = vmatpush1.bf16.msra.mxu0 %v6312
        %8888 = vmatprep.subr.bf16.mxu0 %v6315
        %8889 = vmatpush1.bf16.msra.mxu0 %v6314
        %8890 = vmatprep.subr.bf16.mxu0 %v6317
        %8891 = vmatpush1.bf16.msra.mxu0 %v6316
        %8892 = vmatprep.subr.bf16.mxu0 %v6319
        %8893 = vmatpush1.bf16.msra.mxu0 %v6318
        %8894 = vmatprep.subr.bf16.mxu0 %v6321
        %8895 = vmatpush1.bf16.msra.mxu0 %v6320
        %8896 = vmatprep.subr.bf16.mxu0 %v6323
        %8897 = vmatpush1.bf16.msra.mxu0 %v6322
        %8898 = vmatprep.subr.bf16.mxu0 %v6325
        %8899 = vmatpush1.bf16.msra.mxu0 %v6324
        %8900 = vmatprep.subr.bf16.mxu0 %v6327
        %8901 = vmatpush1.bf16.msra.mxu0 %v6326
        %8902 = vmatprep.subr.bf16.mxu0 %v6329
        %8903 = vmatpush1.bf16.msra.mxu0 %v6328
        %8904 = vmatprep.mubr.bf16.mxu0 %v707
        %8905 = vmatmul.mubr.bf16.gmra.mrb[0].mxu0 %v706
        %v8906 = vpop.f32.mrb[0].mxu0
        %v8907 = vadd.f32 %v8866, %v8906
        %v8908 = vpop.f32.mrb[0].mxu0
        %v8909 = vadd.f32 %v8868, %v8908
        %v8910 = vpop.f32.mrb[0].mxu0
        %v8911 = vpop.f32.mrb[0].mxu0
        %8912 = vdwg.mxu0
        %8913 = vmatprep.subr.bf16.mxu0 %v6331
        %8914 = vmatpush1.bf16.msra.mxu0 %v6330
        %8915 = vmatprep.subr.bf16.mxu0 %v6333
        %8916 = vmatpush1.bf16.msra.mxu0 %v6332
        %8917 = vmatprep.subr.bf16.mxu0 %v6335
        %8918 = vmatpush1.bf16.msra.mxu0 %v6334
        %8919 = vmatprep.subr.bf16.mxu0 %v6337
        %8920 = vmatpush1.bf16.msra.mxu0 %v6336
        %8921 = vmatprep.subr.bf16.mxu0 %v6339
        %8922 = vmatpush1.bf16.msra.mxu0 %v6338
        %8923 = vmatprep.subr.bf16.mxu0 %v6341
        %8924 = vmatpush1.bf16.msra.mxu0 %v6340
        %8925 = vmatprep.subr.bf16.mxu0 %v6343
        %8926 = vmatpush1.bf16.msra.mxu0 %v6342
        %8927 = vmatprep.subr.bf16.mxu0 %v6345
        %8928 = vmatpush1.bf16.msra.mxu0 %v6344
        %8929 = vmatprep.subr.bf16.mxu0 %v6347
        %8930 = vmatpush1.bf16.msra.mxu0 %v6346
        %8931 = vmatprep.subr.bf16.mxu0 %v6349
        %8932 = vmatpush1.bf16.msra.mxu0 %v6348
        %8933 = vmatprep.subr.bf16.mxu0 %v6351
        %8934 = vmatpush1.bf16.msra.mxu0 %v6350
        %8935 = vmatprep.subr.bf16.mxu0 %v6353
        %8936 = vmatpush1.bf16.msra.mxu0 %v6352
        %8937 = vmatprep.subr.bf16.mxu0 %v6355
        %8938 = vmatpush1.bf16.msra.mxu0 %v6354
        %8939 = vmatprep.subr.bf16.mxu0 %v6357
        %8940 = vmatpush1.bf16.msra.mxu0 %v6356
        %8941 = vmatprep.subr.bf16.mxu0 %v6359
        %8942 = vmatpush1.bf16.msra.mxu0 %v6358
        %8943 = vmatprep.subr.bf16.mxu0 %v6361
        %8944 = vmatpush1.bf16.msra.mxu0 %v6360
        %8945 = vmatprep.mubr.bf16.mxu0 %v709
        %8946 = vmatmul.mubr.bf16.gmra.mrb[0].mxu0 %v708
        %v8947 = vpop.f32.mrb[0].mxu0
        %v8948 = vadd.f32 %v8907, %v8947
        %v8949 = vpop.f32.mrb[0].mxu0
        %v8950 = vadd.f32 %v8909, %v8949
        %v8951 = vpop.f32.mrb[0].mxu0
        %v8952 = vpop.f32.mrb[0].mxu0
        %8953 = vdwg.mxu0
        %8954 = vmatprep.subr.bf16.mxu0 %v6363
        %8955 = vmatpush1.bf16.msra.mxu0 %v6362
        %8956 = vmatprep.subr.bf16.mxu0 %v6365
        %8957 = vmatpush1.bf16.msra.mxu0 %v6364
        %8958 = vmatprep.subr.bf16.mxu0 %v6367
        %8959 = vmatpush1.bf16.msra.mxu0 %v6366
        %8960 = vmatprep.subr.bf16.mxu0 %v6369
        %8961 = vmatpush1.bf16.msra.mxu0 %v6368
        %8962 = vmatprep.subr.bf16.mxu0 %v6371
        %8963 = vmatpush1.bf16.msra.mxu0 %v6370
        %8964 = vmatprep.subr.bf16.mxu0 %v6373
        %8965 = vmatpush1.bf16.msra.mxu0 %v6372
        %8966 = vmatprep.subr.bf16.mxu0 %v6375
        %8967 = vmatpush1.bf16.msra.mxu0 %v6374
        %8968 = vmatprep.subr.bf16.mxu0 %v6377
        %8969 = vmatpush1.bf16.msra.mxu0 %v6376
        %8970 = vmatprep.subr.bf16.mxu0 %v6379
        %8971 = vmatpush1.bf16.msra.mxu0 %v6378
        %8972 = vmatprep.subr.bf16.mxu0 %v6381
        %8973 = vmatpush1.bf16.msra.mxu0 %v6380
        %8974 = vmatprep.subr.bf16.mxu0 %v6383
        %8975 = vmatpush1.bf16.msra.mxu0 %v6382
        %8976 = vmatprep.subr.bf16.mxu0 %v6385
        %8977 = vmatpush1.bf16.msra.mxu0 %v6384
        %8978 = vmatprep.subr.bf16.mxu0 %v6387
        %8979 = vmatpush1.bf16.msra.mxu0 %v6386
        %8980 = vmatprep.subr.bf16.mxu0 %v6389
        %8981 = vmatpush1.bf16.msra.mxu0 %v6388
        %8982 = vmatprep.subr.bf16.mxu0 %v6391
        %8983 = vmatpush1.bf16.msra.mxu0 %v6390
        %8984 = vmatprep.subr.bf16.mxu0 %v6393
        %8985 = vmatpush1.bf16.msra.mxu0 %v6392
        %8986 = vmatprep.mubr.bf16.mxu0 %v711
        %8987 = vmatmul.mubr.bf16.gmra.mrb[0].mxu0 %v710
        %v8988 = vpop.f32.mrb[0].mxu0
        %v8989 = vadd.f32 %v8948, %v8988
        %v8990 = vpop.f32.mrb[0].mxu0
        %v8991 = vadd.f32 %v8950, %v8990
        %v8992 = vpop.f32.mrb[0].mxu0
        %v8993 = vpop.f32.mrb[0].mxu0
        %8994 = vdwg.mxu0
        %8995 = vmatprep.subr.bf16.mxu0 %v6395
        %8996 = vmatpush1.bf16.msra.mxu0 %v6394
        %8997 = vmatprep.subr.bf16.mxu0 %v6397
        %8998 = vmatpush1.bf16.msra.mxu0 %v6396
        %8999 = vmatprep.subr.bf16.mxu0 %v6399
        %9000 = vmatpush1.bf16.msra.mxu0 %v6398
        %9001 = vmatprep.subr.bf16.mxu0 %v6401
        %9002 = vmatpush1.bf16.msra.mxu0 %v6400
        %9003 = vmatprep.subr.bf16.mxu0 %v6403
        %9004 = vmatpush1.bf16.msra.mxu0 %v6402
        %9005 = vmatprep.subr.bf16.mxu0 %v6405
        %9006 = vmatpush1.bf16.msra.mxu0 %v6404
        %9007 = vmatprep.subr.bf16.mxu0 %v6407
        %9008 = vmatpush1.bf16.msra.mxu0 %v6406
        %9009 = vmatprep.subr.bf16.mxu0 %v6409
        %9010 = vmatpush1.bf16.msra.mxu0 %v6408
        %9011 = vmatprep.subr.bf16.mxu0 %v6411
        %9012 = vmatpush1.bf16.msra.mxu0 %v6410
        %9013 = vmatprep.subr.bf16.mxu0 %v6413
        %9014 = vmatpush1.bf16.msra.mxu0 %v6412
        %9015 = vmatprep.subr.bf16.mxu0 %v6415
        %9016 = vmatpush1.bf16.msra.mxu0 %v6414
        %9017 = vmatprep.subr.bf16.mxu0 %v6417
        %9018 = vmatpush1.bf16.msra.mxu0 %v6416
        %9019 = vmatprep.subr.bf16.mxu0 %v6419
        %9020 = vmatpush1.bf16.msra.mxu0 %v6418
        %9021 = vmatprep.subr.bf16.mxu0 %v6421
        %9022 = vmatpush1.bf16.msra.mxu0 %v6420
        %9023 = vmatprep.subr.bf16.mxu0 %v6423
        %9024 = vmatpush1.bf16.msra.mxu0 %v6422
        %9025 = vmatprep.subr.bf16.mxu0 %v6425
        %9026 = vmatpush1.bf16.msra.mxu0 %v6424
        %9027 = vmatprep.mubr.bf16.mxu0 %v713
        %9028 = vmatmul.mubr.bf16.gmra.mrb[0].mxu0 %v712
        %v9029 = vpop.f32.mrb[0].mxu0
        %v9030 = vadd.f32 %v8989, %v9029
        %v9031 = vpop.f32.mrb[0].mxu0
        %v9032 = vadd.f32 %v8991, %v9031
        %v9033 = vpop.f32.mrb[0].mxu0
        %v9034 = vpop.f32.mrb[0].mxu0
        %9035 = vdwg.mxu0
        %9036 = vmatprep.subr.bf16.mxu0 %v6427
        %9037 = vmatpush1.bf16.msra.mxu0 %v6426
        %9038 = vmatprep.subr.bf16.mxu0 %v6429
        %9039 = vmatpush1.bf16.msra.mxu0 %v6428
        %9040 = vmatprep.subr.bf16.mxu0 %v6431
        %9041 = vmatpush1.bf16.msra.mxu0 %v6430
        %9042 = vmatprep.subr.bf16.mxu0 %v6433
        %9043 = vmatpush1.bf16.msra.mxu0 %v6432
        %9044 = vmatprep.subr.bf16.mxu0 %v6435
        %9045 = vmatpush1.bf16.msra.mxu0 %v6434
        %9046 = vmatprep.subr.bf16.mxu0 %v6437
        %9047 = vmatpush1.bf16.msra.mxu0 %v6436
        %9048 = vmatprep.subr.bf16.mxu0 %v6439
        %9049 = vmatpush1.bf16.msra.mxu0 %v6438
        %9050 = vmatprep.subr.bf16.mxu0 %v6441
        %9051 = vmatpush1.bf16.msra.mxu0 %v6440
        %9052 = vmatprep.subr.bf16.mxu0 %v6443
        %9053 = vmatpush1.bf16.msra.mxu0 %v6442
        %9054 = vmatprep.subr.bf16.mxu0 %v6445
        %9055 = vmatpush1.bf16.msra.mxu0 %v6444
        %9056 = vmatprep.subr.bf16.mxu0 %v6447
        %9057 = vmatpush1.bf16.msra.mxu0 %v6446
        %9058 = vmatprep.subr.bf16.mxu0 %v6449
        %9059 = vmatpush1.bf16.msra.mxu0 %v6448
        %9060 = vmatprep.subr.bf16.mxu0 %v6451
        %9061 = vmatpush1.bf16.msra.mxu0 %v6450
        %9062 = vmatprep.subr.bf16.mxu0 %v6453
        %9063 = vmatpush1.bf16.msra.mxu0 %v6452
        %9064 = vmatprep.subr.bf16.mxu0 %v6455
        %9065 = vmatpush1.bf16.msra.mxu0 %v6454
        %9066 = vmatprep.subr.bf16.mxu0 %v6457
        %9067 = vmatpush1.bf16.msra.mxu0 %v6456
        %9068 = vmatprep.mubr.bf16.mxu0 %v715
        %9069 = vmatmul.mubr.bf16.gmra.mrb[0].mxu0 %v714
        %v9070 = vpop.f32.mrb[0].mxu0
        %v9071 = vadd.f32 %v9030, %v9070
        %v9072 = vpop.f32.mrb[0].mxu0
        %v9073 = vadd.f32 %v9032, %v9072
        %v9074 = vpop.f32.mrb[0].mxu0
        %v9075 = vpop.f32.mrb[0].mxu0
        %9076 = vdwg.mxu0
        %9077 = vmatprep.subr.bf16.mxu0 %v6459
        %9078 = vmatpush1.bf16.msra.mxu0 %v6458
        %9079 = vmatprep.subr.bf16.mxu0 %v6461
        %9080 = vmatpush1.bf16.msra.mxu0 %v6460
        %9081 = vmatprep.subr.bf16.mxu0 %v6463
        %9082 = vmatpush1.bf16.msra.mxu0 %v6462
        %9083 = vmatprep.subr.bf16.mxu0 %v6465
        %9084 = vmatpush1.bf16.msra.mxu0 %v6464
        %9085 = vmatprep.subr.bf16.mxu0 %v6467
        %9086 = vmatpush1.bf16.msra.mxu0 %v6466
        %9087 = vmatprep.subr.bf16.mxu0 %v6469
        %9088 = vmatpush1.bf16.msra.mxu0 %v6468
        %9089 = vmatprep.subr.bf16.mxu0 %v6471
        %9090 = vmatpush1.bf16.msra.mxu0 %v6470
        %9091 = vmatprep.subr.bf16.mxu0 %v6473
        %9092 = vmatpush1.bf16.msra.mxu0 %v6472
        %9093 = vmatprep.subr.bf16.mxu0 %v6475
        %9094 = vmatpush1.bf16.msra.mxu0 %v6474
        %9095 = vmatprep.subr.bf16.mxu0 %v6477
        %9096 = vmatpush1.bf16.msra.mxu0 %v6476
        %9097 = vmatprep.subr.bf16.mxu0 %v6479
        %9098 = vmatpush1.bf16.msra.mxu0 %v6478
        %9099 = vmatprep.subr.bf16.mxu0 %v6481
        %9100 = vmatpush1.bf16.msra.mxu0 %v6480
        %9101 = vmatprep.subr.bf16.mxu0 %v6483
        %9102 = vmatpush1.bf16.msra.mxu0 %v6482
        %9103 = vmatprep.subr.bf16.mxu0 %v6485
        %9104 = vmatpush1.bf16.msra.mxu0 %v6484
        %9105 = vmatprep.subr.bf16.mxu0 %v6487
        %9106 = vmatpush1.bf16.msra.mxu0 %v6486
        %9107 = vmatprep.subr.bf16.mxu0 %v6489
        %9108 = vmatpush1.bf16.msra.mxu0 %v6488
        %9109 = vmatprep.mubr.bf16.mxu0 %v717
        %9110 = vmatmul.mubr.bf16.gmra.mrb[0].mxu0 %v716
        %v9111 = vpop.f32.mrb[0].mxu0
        %v9112 = vadd.f32 %v9071, %v9111
        %v9113 = vpop.f32.mrb[0].mxu0
        %v9114 = vadd.f32 %v9073, %v9113
        %v9115 = vpop.f32.mrb[0].mxu0
        %v9116 = vpop.f32.mrb[0].mxu0
        %9117 = vdwg.mxu0
        %v9118 = vmax.f32 %v9112, 0.0
        %v9119 = vmax.f32 %v9114, 0.0
        %v9122 = vcombine.low %v9118, %v9119
        %v9124 = vunpack.c.l.s4 1983009808
        %v9125 = vunpack.c.0.s8 %v9124
        %v9126 = vlaneseq
        %v9127 = vshrl.u32 %v9126, 7
        %v9128 = vsub.s32 %v9125, %v9127
        %v9129 = vrot.slane %v9122, %v9128
        %9131 = vst [vmem:[%s230] sm:$0xf] %v9129
        %s9132 = smul.u32 2, %s20
        %p9133 = scmp.lt.s32.totalorder %s9132, 3
        %s9134 = scalar_select %p9133, %s9132, 3
        %s9135 = smul.addr %s9134, 2
        %s9136 = scalar_lea.vmem %s3, %s9135
        // Predicated region
        $region41: #{convnet_forward.4} parent=31 // pred_check
          %p9137 = pneg %p111
        $region42: #{convnet_forward.4} parent=31 // pred_check_branch
          %9139 = sbr.rel (%p9137) target = $region44
        $region43: #{convnet_forward.4} parent=31 // pred_region
          %s9140 = smul.u32 2, %s20
        $region44: #{convnet_forward.4} parent=31 // pred_fallthru
          _
      $region32: #{convnet_forward.4} parent=5 // pred_fallthru
        _
      %p9141 = scmp.le.s32.totalorder 2, %s15
      // Predicated region
      $region45: #{convnet_forward.4} parent=5 // pred_check
        %p9142 = pneg %p9141
      $region46: #{convnet_forward.4} parent=5 // pred_check_branch
        %9144 = sbr.rel (%p9142) target = $region48
      $region47: #{convnet_forward.4} parent=5 // pred_region
        %s9145 = ssub.s32 %s15, 2
        // Predicated region
        $region49: #{convnet_forward.4} parent=47 // pred_check
          %p9146 = pneg %p117
        $region50: #{convnet_forward.4} parent=47 // pred_check_branch
          %9148 = sbr.rel (%p9146) target = $region52
        $region51: #{convnet_forward.4} parent=47 // pred_region
          %s9149 = smul.u32 2, %s21
          %p9150 = scmp.lt.s32.totalorder %s9149, 3
          %s9151 = scalar_select %p9150, %s9149, 3
          %s9152 = smul.addr %s9151, 2
          %s9153 = scalar_lea.vmem %s3, %s9152
        $region52: #{convnet_forward.4} parent=47 // pred_fallthru
          _
      $region48: #{convnet_forward.4} parent=5 // pred_fallthru
        _
    $region6: #{convnet_forward.4} parent=1 // loop_footer
      %s19 = sadd.s32 1, %s15
    $region7: #{convnet_forward.4} parent=1 // loop_footer_branch
      %14 = sbr.rel target = $region3
    $region8: #{convnet_forward.4} parent=1 // loop_exit
      _
    %9154 = vsyncpa [#allocation3], 1
    %s9155 = scalar_lea.sflag [#allocation3], 1
    %9156 = vsyncpa %s9155, 1
    %9157 = vsyncpa [#allocation5], 1
    %s9158 = scalar_lea.sflag [#allocation5], 1
    %9159 = vsyncpa %s9158, 1

</llo_original>
